<compile_context>
chip_gen: v7x
topology: tpu7x:2x2x1
jax: 0.10.0
libtpu: 0.0.40
codegen_flags: <defaults>
</compile_context>

<pallas_src>
import functools

import numpy as np
import jax
import jax.numpy as jnp
from jax import lax
from jax.experimental import pallas as pl
from jax.experimental.pallas import tpu as pltpu


# ----------------------------------------------------------------------------
# The single fused kernel (one grid step == one batch image)
# ----------------------------------------------------------------------------
def _up_fused_kernel(x1_ref, x2_ref, wup_ref, bt_ref, wg_ref, wx_ref, bgx_ref,
                     wpsi_ref, bp_ref, wb1_ref, s1_ref, t1_ref, wb2_ref,
                     s2_ref, t2_ref, o_ref, *, op1, op2, nip):
    f32 = jnp.float32
    x1 = x1_ref[0]                      # (H1, W1*Cin)           row = coarse row p
    x2 = x2_ref[0]                      # (H2//2, 2*W2*Cl)       pair-row layout

    # ConvTranspose2d(k=2, s=2) -> pair-row layout, one structured matmul
    up = jnp.dot(x1, wup_ref[...], preferred_element_type=f32) + bt_ref[...]

    # Attention gate: 1x1 convs (+folded BN) as block-diagonal matmuls
    g1 = jnp.dot(up, wg_ref[...], preferred_element_type=f32)
    xg = jnp.dot(x2, wx_ref[...], preferred_element_type=f32)
    a = jnp.maximum(g1 + xg + bgx_ref[...], 0.0)
    # psi matmul already replicates psi across the Cl channel lanes
    psi = jax.nn.sigmoid(jnp.dot(a, wpsi_ref[...], preferred_element_type=f32)
                         + bp_ref[...])
    a2 = x2 * psi                       # x2 * psi   (pair-row layout)

    # concat [x2*psi, up] per spatial row + zero pair-row border (for conv pad)
    half = x2.shape[1] // 2             # W2 * Cl  (== W2 * Cup)
    xcat = jnp.concatenate([a2[:, :half], up[:, :half],
                            a2[:, half:], up[:, half:]], axis=1)
    zrow = jnp.zeros((1, xcat.shape[1]), f32)
    xcat = jnp.concatenate([zrow, xcat, zrow], axis=0)

    # conv1 (9x9, pad=1) as `nip` pair-band matmuls + folded BN + ReLU
    nmid = s1_ref.shape[1]
    acc1 = jnp.zeros((op1, nmid), f32)
    for ip in range(nip):
        acc1 = acc1 + jnp.dot(xcat[ip:ip + op1, :], wb1_ref[ip],
                              preferred_element_type=f32)
    h1 = jnp.maximum(acc1 * s1_ref[...] + t1_ref[...], 0.0)

    # conv2 (9x9, pad=1), same scheme
    zrow2 = jnp.zeros((1, nmid), f32)
    h1p = jnp.concatenate([zrow2, h1, zrow2], axis=0)
    nout = s2_ref.shape[1]
    acc2 = jnp.zeros((op2, nout), f32)
    for ip in range(nip):
        acc2 = acc2 + jnp.dot(h1p[ip:ip + op2, :], wb2_ref[ip],
                              preferred_element_type=f32)
    o_ref[0] = jnp.maximum(acc2 * s2_ref[...] + t2_ref[...], 0.0)


# ----------------------------------------------------------------------------
# Host-side builders for the structured weights (index math is numpy / static)
# ----------------------------------------------------------------------------
def _sel(w_src, idx, mask):
    """Gather w_src at integer index arrays `idx`, zeroed where ~mask."""
    idx = tuple(np.where(mask, a, 0) for a in idx)
    return w_src[idx] * jnp.asarray(mask, w_src.dtype)


def _bn_fold(d, eps=1e-5):
    scale = d['gamma'] / jnp.sqrt(d['var'] + eps)
    shift = d['beta'] - d['mean'] * scale
    return scale, shift


def _build_up_weight(wt, bt, W1, Cin, Cup, W2):
    # LHS lane: q*Cin + k ; RHS lane: e*(W2*Cup) + w*Cup + c with w = 2q+dj, e = di
    K, Ncol = W1 * Cin, 2 * W2 * Cup
    kk = np.arange(K)[:, None]
    nn = np.arange(Ncol)[None, :]
    q, k = kk // Cin, kk % Cin
    e, rem = nn // (W2 * Cup), nn % (W2 * Cup)
    w, c = rem // Cup, rem % Cup
    mask = (w // 2) == q
    wup = _sel(wt, (k, c, e, w % 2), mask)
    btrow = jnp.tile(bt, 2 * W2).reshape(1, Ncol)
    return wup, btrow


def _build_gate_weight(w_cf, W2, Cg, Fint):
    # in lane: e*(W2*Cg)+w*Cg+c ; out lane: e*(W2*Fint)+w*Fint+f
    K, Ncol = 2 * W2 * Cg, 2 * W2 * Fint
    kk = np.arange(K)[:, None]
    nn = np.arange(Ncol)[None, :]
    e, rem = kk // (W2 * Cg), kk % (W2 * Cg)
    w, c = rem // Cg, rem % Cg
    e2, rem2 = nn // (W2 * Fint), nn % (W2 * Fint)
    w2, f = rem2 // Fint, rem2 % Fint
    mask = (e == e2) & (w == w2)
    return _sel(w_cf, (c, f), mask)


def _build_psi_weight(wp_f, W2, Fint, Cl):
    # in lane: e*(W2*Fint)+w*Fint+f ; out lane: e*(W2*Cl)+w*Cl+c (replicated over c)
    K, Ncol = 2 * W2 * Fint, 2 * W2 * Cl
    kk = np.arange(K)[:, None]
    nn = np.arange(Ncol)[None, :]
    e, rem = kk // (W2 * Fint), kk % (W2 * Fint)
    w, f = rem // Fint, rem % Fint
    e2, rem2 = nn // (W2 * Cl), nn % (W2 * Cl)
    w2 = rem2 // Cl
    mask = (e == e2) & (w == w2)
    return _sel(wp_f, (f,), mask)


def _build_band_weight(w_oihw, e_of, w_of, ch_of, Wout, nip):
    # Pair-band conv weight: scratch row s+ip holds input pair (s+ip-1);
    # kernel row i = 2*ip + e_in - e_out - 1, kernel col j = w_in - u + 1.
    Cout, _, kh, kw = w_oihw.shape
    Nout = 2 * Wout * Cout
    ip = np.arange(nip)[:, None, None]
    e_in = e_of[None, :, None]
    w_in = w_of[None, :, None]
    ch = ch_of[None, :, None]
    nn = np.arange(Nout)[None, None, :]
    e_out, rem = nn // (Wout * Cout), nn % (Wout * Cout)
    u, o = rem // Cout, rem % Cout
    i = 2 * ip + e_in - e_out - 1
    j = w_in - u + 1
    mask = (i >= 0) & (i < kh) & (j >= 0) & (j < kw)
    return _sel(w_oihw, (o, ch, i, j), mask)


# ----------------------------------------------------------------------------
# Full Up.forward using the single fused Pallas kernel
# ----------------------------------------------------------------------------
@jax.jit
def up_forward_pallas(x1_nchw, x2_nchw, p):
    x1_nchw = x1_nchw.astype(jnp.float32)
    x2_nchw = x2_nchw.astype(jnp.float32)
    N, Cin, H1, W1 = x1_nchw.shape
    _, Cl, H2, W2 = x2_nchw.shape
    Cup = p['wt'].shape[1]
    Fint = p['wg'].shape[0]
    Cmid, Ccat, kh, kw = p['conv1_w'].shape
    Cout = p['conv2_w'].shape[0]

    if H2 != 2 * H1 or W2 != 2 * W1:
        # TODO(synk): general F.pad (diffY/diffX != 0) placement not implemented
        raise NotImplementedError("skip connection must be exactly 2x the decoder feature")
    assert Cup == Cl and Ccat == Cl + Cup and kh == kw and kh % 2 == 1

    shrink = kh - 3                              # 9x9 conv, pad=1
    Hmid, Wmid = H2 - shrink, W2 - shrink        # after conv1
    Hout, Wout = Hmid - shrink, Wmid - shrink    # after conv2
    assert Hmid % 2 == 0 and Hout % 2 == 0 and Hout > 0 and Wout > 0
    OP1, OP2 = Hmid // 2, Hout // 2
    NIP = kh // 2 + 2

    # ---- activation layout prep (one transpose + reshape per input) ----
    x1r = jnp.transpose(x1_nchw, (0, 2, 3, 1)).reshape(N, H1, W1 * Cin)
    x2p = jnp.transpose(x2_nchw, (0, 2, 3, 1)).reshape(N, H2 // 2, 2 * W2 * Cl)

    # ---- fold eval-mode BN and build structured weights (host side) ----
    sg, tg = _bn_fold(p['bn_g'])
    sx, tx = _bn_fold(p['bn_x'])
    sp, tp = _bn_fold(p['bn_psi'])
    wg_f = p['wg'][:, :, 0, 0].T * sg            # (Cup, Fint)
    bg_f = p['bg'] * sg + tg
    wx_f = p['wx'][:, :, 0, 0].T * sx            # (Cl, Fint)
    bx_f = p['bx'] * sx + tx
    wp_f = p['wpsi'][0, :, 0, 0] * sp[0]         # (Fint,)
    bp_f = p['bpsi'][0] * sp[0] + tp[0]          # scalar

    WUP, BT = _build_up_weight(p['wt'], p['bt'], W1, Cin, Cup, W2)
    WG = _build_gate_weight(wg_f, W2, Cup, Fint)
    WX = _build_gate_weight(wx_f, W2, Cl, Fint)
    BGX = jnp.tile(bg_f + bx_f, 2 * W2).reshape(1, 2 * W2 * Fint)
    WPSI = _build_psi_weight(wp_f, W2, Fint, Cl)
    BP = jnp.full((1, 2 * W2 * Cl), bp_f, jnp.float32)

    s1, t1 = _bn_fold(p['bn1'])
    s2, t2 = _bn_fold(p['bn2'])

    # conv1 input lane map (per pair row): [a2 (W2*Cl) | up (W2*Cup)] x 2 halves
    half = W2 * Cl
    lanes1 = np.arange(2 * W2 * Ccat)
    e1_of = lanes1 // (2 * half)
    rem1 = lanes1 % (2 * half)
    is_up = rem1 >= half
    w1_of = np.where(is_up, (rem1 - half) // Cup, rem1 // Cl)
    ch1_of = np.where(is_up, Cl + (rem1 - half) % Cup, rem1 % Cl)
    WB1 = _build_band_weight(p['conv1_w'], e1_of, w1_of, ch1_of, Wmid, NIP)
    S1 = jnp.tile(s1, 2 * Wmid).reshape(1, 2 * Wmid * Cmid)
    T1 = jnp.tile(t1, 2 * Wmid).reshape(1, 2 * Wmid * Cmid)

    # conv2 input lane map: e*(Wmid*Cmid) + u*Cmid + ch (natural conv1-output order)
    lanes2 = np.arange(2 * Wmid * Cmid)
    e2_of = lanes2 // (Wmid * Cmid)
    rem2 = lanes2 % (Wmid * Cmid)
    w2_of = rem2 // Cmid
    ch2_of = rem2 % Cmid
    WB2 = _build_band_weight(p['conv2_w'], e2_of, w2_of, ch2_of, Wout, NIP)
    S2 = jnp.tile(s2, 2 * Wout).reshape(1, 2 * Wout * Cout)
    T2 = jnp.tile(t2, 2 * Wout).reshape(1, 2 * Wout * Cout)

    Nout2 = 2 * Wout * Cout
    kern = functools.partial(_up_fused_kernel, op1=OP1, op2=OP2, nip=NIP)
    out = pl.pallas_call(
        kern,
        out_shape=jax.ShapeDtypeStruct((N, OP2, Nout2), jnp.float32),
        grid=(N,),
        in_specs=[
            pl.BlockSpec((1, H1, W1 * Cin), lambda n: (n, 0, 0)),
            pl.BlockSpec((1, H2 // 2, 2 * W2 * Cl), lambda n: (n, 0, 0)),
            pl.BlockSpec(WUP.shape, lambda n: (0, 0)),
            pl.BlockSpec(BT.shape, lambda n: (0, 0)),
            pl.BlockSpec(WG.shape, lambda n: (0, 0)),
            pl.BlockSpec(WX.shape, lambda n: (0, 0)),
            pl.BlockSpec(BGX.shape, lambda n: (0, 0)),
            pl.BlockSpec(WPSI.shape, lambda n: (0, 0)),
            pl.BlockSpec(BP.shape, lambda n: (0, 0)),
            pl.BlockSpec(WB1.shape, lambda n: (0, 0, 0)),
            pl.BlockSpec(S1.shape, lambda n: (0, 0)),
            pl.BlockSpec(T1.shape, lambda n: (0, 0)),
            pl.BlockSpec(WB2.shape, lambda n: (0, 0, 0)),
            pl.BlockSpec(S2.shape, lambda n: (0, 0)),
            pl.BlockSpec(T2.shape, lambda n: (0, 0)),
        ],
        out_specs=pl.BlockSpec((1, OP2, Nout2), lambda n: (n, 0, 0)),
        compiler_params=pltpu.CompilerParams(dimension_semantics=("parallel",)),
    )(x1r, x2p, WUP, BT, WG, WX, BGX, WPSI, BP, WB1, S1, T1, WB2, S2, T2)

    # (N, OP2, 2*Wout*Cout) -> (N, Hout, Wout, Cout) -> NCHW
    out = out.reshape(N, OP2, 2, Wout, Cout).reshape(N, Hout, Wout, Cout)
    return jnp.transpose(out, (0, 3, 1, 2))


# ----------------------------------------------------------------------------
# Parameter construction (eval-mode BN params)
# ----------------------------------------------------------------------------
def make_params(key, in_channels=8, out_channels=8):
    ks = jax.random.split(key, 16)
    Cin, Cup = in_channels, in_channels // 2
    Fint = max(Cup // 2, 1)
    Cmid, Cout = out_channels, out_channels

    def bn(k, c):
        k1, k2, k3, k4 = jax.random.split(k, 4)
        return dict(gamma=1.0 + 0.1 * jax.random.normal(k1, (c,), jnp.float32),
                    beta=0.1 * jax.random.normal(k2, (c,), jnp.float32),
                    mean=0.1 * jax.random.normal(k3, (c,), jnp.float32),
                    var=1.0 + 0.5 * jax.random.uniform(k4, (c,), jnp.float32))

    p = {}
    p['wt'] = 0.1 * jax.random.normal(ks[0], (Cin, Cup, 2, 2), jnp.float32)
    p['bt'] = 0.1 * jax.random.normal(ks[1], (Cup,), jnp.float32)
    p['wg'] = 0.2 * jax.random.normal(ks[2], (Fint, Cup, 1, 1), jnp.float32)
    p['bg'] = 0.1 * jax.random.normal(ks[3], (Fint,), jnp.float32)
    p['wx'] = 0.2 * jax.random.normal(ks[4], (Fint, Cup, 1, 1), jnp.float32)
    p['bx'] = 0.1 * jax.random.normal(ks[5], (Fint,), jnp.float32)
    p['wpsi'] = 0.2 * jax.random.normal(ks[6], (1, Fint, 1, 1), jnp.float32)
    p['bpsi'] = 0.1 * jax.random.normal(ks[7], (1,), jnp.float32)
    p['bn_g'] = bn(ks[8], Fint)
    p['bn_x'] = bn(ks[9], Fint)
    p['bn_psi'] = bn(ks[10], 1)
    p['conv1_w'] = 0.05 * jax.random.normal(ks[11], (Cmid, Cin, 9, 9), jnp.float32)
    p['conv2_w'] = 0.05 * jax.random.normal(ks[12], (Cout, Cmid, 9, 9), jnp.float32)
    p['bn1'] = bn(ks[13], Cmid)
    p['bn2'] = bn(ks[14], Cout)
    return p


# ----------------------------------------------------------------------------
# Pure-JAX reference (same eval-mode BN semantics), for validation
# ----------------------------------------------------------------------------
def up_forward_ref(x1_nchw, x2_nchw, p, eps=1e-5):
    hi = lax.Precision.HIGHEST
    x1 = jnp.transpose(x1_nchw, (0, 2, 3, 1)).astype(jnp.float32)
    x2 = jnp.transpose(x2_nchw, (0, 2, 3, 1)).astype(jnp.float32)
    N, H1, W1, Cin = x1.shape
    Cup = p['wt'].shape[1]
    up = jnp.zeros((N, 2 * H1, 2 * W1, Cup), jnp.float32)
    for di in range(2):
        for dj in range(2):
            yy = jnp.einsum('nhwc,co->nhwo', x1, p['wt'][:, :, di, dj],
                            precision=hi) + p['bt']
            up = up.at[:, di::2, dj::2, :].set(yy)
    diffY = x2.shape[1] - up.shape[1]
    diffX = x2.shape[2] - up.shape[2]
    up = jnp.pad(up, ((0, 0), (diffY // 2, diffY - diffY // 2),
                      (diffX // 2, diffX - diffX // 2), (0, 0)))

    def bn(v, d):
        return (v - d['mean']) / jnp.sqrt(d['var'] + eps) * d['gamma'] + d['beta']

    g1 = bn(jnp.einsum('nhwc,fc->nhwf', up, p['wg'][:, :, 0, 0],
                       precision=hi) + p['bg'], p['bn_g'])
    xx = bn(jnp.einsum('nhwc,fc->nhwf', x2, p['wx'][:, :, 0, 0],
                       precision=hi) + p['bx'], p['bn_x'])
    a = jnp.maximum(g1 + xx, 0.0)
    psi = jax.nn.sigmoid(bn(jnp.einsum('nhwf,of->nhwo', a, p['wpsi'][:, :, 0, 0],
                                       precision=hi) + p['bpsi'], p['bn_psi']))
    x2a = x2 * psi
    xcat = jnp.concatenate([x2a, up], axis=-1)

    def conv_bn_relu(x, w_oihw, bnp):
        w = jnp.transpose(w_oihw, (2, 3, 1, 0))
        yc = lax.conv_general_dilated(x, w, (1, 1), ((1, 1), (1, 1)),
                                      dimension_numbers=('NHWC', 'HWIO', 'NHWC'),
                                      precision=hi)
        return jnp.maximum(bn(yc, bnp), 0.0)

    h = conv_bn_relu(xcat, p['conv1_w'], p['bn1'])
    out = conv_bn_relu(h, p['conv2_w'], p['bn2'])
    return jnp.transpose(out, (0, 3, 1, 2))


if __name__ == "__main__":
    key = jax.random.PRNGKey(0)
    k1, k2, kp = jax.random.split(key, 3)
    # Up(in_channels=8, out_channels=8, bilinear=False, use_attention=True)
    x1 = jax.random.normal(k1, (2, 8, 8, 8), jnp.float32)    # NCHW decoder feature
    x2 = jax.random.normal(k2, (2, 4, 16, 16), jnp.float32)  # NCHW skip connection
    params = make_params(kp, in_channels=8, out_channels=8)

    out = up_forward_pallas(x1, x2, params)
    out = jax.block_until_ready(out)
    assert out.shape == (2, 8, 4, 4), out.shape

    ref = up_forward_ref(x1, x2, params)
    err = float(jnp.max(jnp.abs(out - ref)))
    if not bool(jnp.allclose(out, ref, rtol=5e-3, atol=5e-3)):
        raise AssertionError(f"Pallas output mismatch vs reference, max abs err = {err}")
    print("KERNEL_OK")
</pallas_src>

<mosaic_0001>
module attributes {stable_mosaic.version = 11 : i64} {
  func.func @_up_fused_kernel(%arg0: i32, %arg1: memref<1x8x64xf32, #tpu.memory_space<vmem>>, %arg2: memref<1x8x128xf32, #tpu.memory_space<vmem>>, %arg3: memref<64x128xf32, #tpu.memory_space<vmem>>, %arg4: memref<1x128xf32, #tpu.memory_space<vmem>>, %arg5: memref<128x64xf32, #tpu.memory_space<vmem>>, %arg6: memref<128x64xf32, #tpu.memory_space<vmem>>, %arg7: memref<1x64xf32, #tpu.memory_space<vmem>>, %arg8: memref<64x128xf32, #tpu.memory_space<vmem>>, %arg9: memref<1x128xf32, #tpu.memory_space<vmem>>, %arg10: memref<6x256x160xf32, #tpu.memory_space<vmem>>, %arg11: memref<1x160xf32, #tpu.memory_space<vmem>>, %arg12: memref<1x160xf32, #tpu.memory_space<vmem>>, %arg13: memref<6x160x64xf32, #tpu.memory_space<vmem>>, %arg14: memref<1x64xf32, #tpu.memory_space<vmem>>, %arg15: memref<1x64xf32, #tpu.memory_space<vmem>>, %arg16: memref<1x2x64xf32, #tpu.memory_space<vmem>>) attributes {dimension_semantics = [#tpu.dimension_semantics<parallel>], iteration_bounds = array<i64: 2>, scalar_prefetch = 0 : i64, scratch_operands = 0 : i64, tpu.core_type = #tpu.core_type<tc>, window_params = [{transform_indices = @transform_0, window_bounds = array<i64: 1, 8, 64>}, {transform_indices = @transform_1, window_bounds = array<i64: 1, 8, 128>}, {pipeline_mode = #tpu.pipeline_mode<synchronous>, transform_indices = @transform_2, window_bounds = array<i64: 64, 128>}, {pipeline_mode = #tpu.pipeline_mode<synchronous>, transform_indices = @transform_3, window_bounds = array<i64: 1, 128>}, {pipeline_mode = #tpu.pipeline_mode<synchronous>, transform_indices = @transform_4, window_bounds = array<i64: 128, 64>}, {pipeline_mode = #tpu.pipeline_mode<synchronous>, transform_indices = @transform_5, window_bounds = array<i64: 128, 64>}, {pipeline_mode = #tpu.pipeline_mode<synchronous>, transform_indices = @transform_6, window_bounds = array<i64: 1, 64>}, {pipeline_mode = #tpu.pipeline_mode<synchronous>, transform_indices = @transform_7, window_bounds = array<i64: 64, 128>}, {pipeline_mode = #tpu.pipeline_mode<synchronous>, transform_indices = @transform_8, window_bounds = array<i64: 1, 128>}, {pipeline_mode = #tpu.pipeline_mode<synchronous>, transform_indices = @transform_9, window_bounds = array<i64: 6, 256, 160>}, {pipeline_mode = #tpu.pipeline_mode<synchronous>, transform_indices = @transform_10, window_bounds = array<i64: 1, 160>}, {pipeline_mode = #tpu.pipeline_mode<synchronous>, transform_indices = @transform_11, window_bounds = array<i64: 1, 160>}, {pipeline_mode = #tpu.pipeline_mode<synchronous>, transform_indices = @transform_12, window_bounds = array<i64: 6, 160, 64>}, {pipeline_mode = #tpu.pipeline_mode<synchronous>, transform_indices = @transform_13, window_bounds = array<i64: 1, 64>}, {pipeline_mode = #tpu.pipeline_mode<synchronous>, transform_indices = @transform_14, window_bounds = array<i64: 1, 64>}, {transform_indices = @transform_15, window_bounds = array<i64: 1, 2, 64>}]} {
    %c0 = arith.constant 0 : index
    %c0_0 = arith.constant 0 : index
    %c0_1 = arith.constant 0 : index
    %0 = vector.load %arg1[%c0, %c0_0, %c0_1] : memref<1x8x64xf32, #tpu.memory_space<vmem>>, vector<1x8x64xf32>
    %1 = vector.shape_cast %0 : vector<1x8x64xf32> to vector<8x64xf32>
    %c0_2 = arith.constant 0 : index
    %c0_3 = arith.constant 0 : index
    %c0_4 = arith.constant 0 : index
    %2 = vector.load %arg2[%c0_2, %c0_3, %c0_4] : memref<1x8x128xf32, #tpu.memory_space<vmem>>, vector<1x8x128xf32>
    %3 = vector.shape_cast %2 : vector<1x8x128xf32> to vector<8x128xf32>
    %c0_5 = arith.constant 0 : index
    %c0_6 = arith.constant 0 : index
    %4 = vector.load %arg3[%c0_5, %c0_6] : memref<64x128xf32, #tpu.memory_space<vmem>>, vector<64x128xf32>
    %cst = arith.constant dense<0.000000e+00> : vector<8x128xf32>
    %5 = tpu.matmul %1, %4, %cst {dimension_numbers = #tpu.dot_dimension_numbers<[1], [0], [0], [1], [0, 0, 1, 1], [], []>} : vector<8x64xf32>, vector<64x128xf32>, vector<8x128xf32> -> vector<8x128xf32>
    %c0_7 = arith.constant 0 : index
    %c0_8 = arith.constant 0 : index
    %6 = vector.load %arg4[%c0_7, %c0_8] : memref<1x128xf32, #tpu.memory_space<vmem>>, vector<1x128xf32>
    %7 = vector.broadcast %6 : vector<1x128xf32> to vector<8x128xf32>
    %8 = arith.addf %5, %7 : vector<8x128xf32>
    %c0_9 = arith.constant 0 : index
    %c0_10 = arith.constant 0 : index
    %9 = vector.load %arg5[%c0_9, %c0_10] : memref<128x64xf32, #tpu.memory_space<vmem>>, vector<128x64xf32>
    %cst_11 = arith.constant dense<0.000000e+00> : vector<8x64xf32>
    %10 = tpu.matmul %8, %9, %cst_11 {dimension_numbers = #tpu.dot_dimension_numbers<[1], [0], [0], [1], [0, 0, 1, 1], [], []>} : vector<8x128xf32>, vector<128x64xf32>, vector<8x64xf32> -> vector<8x64xf32>
    %c0_12 = arith.constant 0 : index
    %c0_13 = arith.constant 0 : index
    %11 = vector.load %arg6[%c0_12, %c0_13] : memref<128x64xf32, #tpu.memory_space<vmem>>, vector<128x64xf32>
    %cst_14 = arith.constant dense<0.000000e+00> : vector<8x64xf32>
    %12 = tpu.matmul %3, %11, %cst_14 {dimension_numbers = #tpu.dot_dimension_numbers<[1], [0], [0], [1], [0, 0, 1, 1], [], []>} : vector<8x128xf32>, vector<128x64xf32>, vector<8x64xf32> -> vector<8x64xf32>
    %13 = arith.addf %10, %12 : vector<8x64xf32>
    %c0_15 = arith.constant 0 : index
    %c0_16 = arith.constant 0 : index
    %14 = vector.load %arg7[%c0_15, %c0_16] : memref<1x64xf32, #tpu.memory_space<vmem>>, vector<1x64xf32>
    %15 = vector.broadcast %14 : vector<1x64xf32> to vector<8x64xf32>
    %16 = arith.addf %13, %15 : vector<8x64xf32>
    %cst_17 = arith.constant 0.000000e+00 : f32
    %17 = vector.broadcast %cst_17 : f32 to vector<8x64xf32>
    %18 = arith.maximumf %16, %17 : vector<8x64xf32>
    %c0_18 = arith.constant 0 : index
    %c0_19 = arith.constant 0 : index
    %19 = vector.load %arg8[%c0_18, %c0_19] : memref<64x128xf32, #tpu.memory_space<vmem>>, vector<64x128xf32>
    %cst_20 = arith.constant dense<0.000000e+00> : vector<8x128xf32>
    %20 = tpu.matmul %18, %19, %cst_20 {dimension_numbers = #tpu.dot_dimension_numbers<[1], [0], [0], [1], [0, 0, 1, 1], [], []>} : vector<8x64xf32>, vector<64x128xf32>, vector<8x128xf32> -> vector<8x128xf32>
    %c0_21 = arith.constant 0 : index
    %c0_22 = arith.constant 0 : index
    %21 = vector.load %arg9[%c0_21, %c0_22] : memref<1x128xf32, #tpu.memory_space<vmem>>, vector<1x128xf32>
    %22 = vector.broadcast %21 : vector<1x128xf32> to vector<8x128xf32>
    %23 = arith.addf %20, %22 : vector<8x128xf32>
    %24 = arith.negf %23 : vector<8x128xf32>
    %25 = math.exp %24 : vector<8x128xf32>
    %cst_23 = arith.constant 1.000000e+00 : f32
    %26 = vector.broadcast %cst_23 : f32 to vector<8x128xf32>
    %27 = arith.addf %26, %25 : vector<8x128xf32>
    %28 = arith.divf %26, %27 : vector<8x128xf32>
    %29 = arith.mulf %3, %28 : vector<8x128xf32>
    %30 = vector.extract_strided_slice %29 {offsets = [0, 0], sizes = [8, 64], strides = [1, 1]} : vector<8x128xf32> to vector<8x64xf32>
    %31 = vector.extract_strided_slice %8 {offsets = [0, 0], sizes = [8, 64], strides = [1, 1]} : vector<8x128xf32> to vector<8x64xf32>
    %32 = vector.extract_strided_slice %29 {offsets = [0, 64], sizes = [8, 64], strides = [1, 1]} : vector<8x128xf32> to vector<8x64xf32>
    %33 = vector.extract_strided_slice %8 {offsets = [0, 64], sizes = [8, 64], strides = [1, 1]} : vector<8x128xf32> to vector<8x64xf32>
    %34 = tpu.concatenate %30, %31, %32, %33 in 1 : vector<8x64xf32>, vector<8x64xf32>, vector<8x64xf32>, vector<8x64xf32> -> vector<8x256xf32>
    %cst_24 = arith.constant 0.000000e+00 : f32
    %35 = vector.broadcast %cst_24 : f32 to vector<1x256xf32>
    %36 = tpu.concatenate %35, %34, %35 in 0 : vector<1x256xf32>, vector<8x256xf32>, vector<1x256xf32> -> vector<10x256xf32>
    %cst_25 = arith.constant 0.000000e+00 : f32
    %37 = vector.broadcast %cst_25 : f32 to vector<5x160xf32>
    %38 = vector.extract_strided_slice %36 {offsets = [0, 0], sizes = [5, 256], strides = [1, 1]} : vector<10x256xf32> to vector<5x256xf32>
    %c0_26 = arith.constant 0 : index
    %c0_27 = arith.constant 0 : index
    %c0_28 = arith.constant 0 : index
    %39 = vector.load %arg10[%c0_26, %c0_27, %c0_28] : memref<6x256x160xf32, #tpu.memory_space<vmem>>, vector<1x256x160xf32>
    %40 = vector.shape_cast %39 : vector<1x256x160xf32> to vector<256x160xf32>
    %cst_29 = arith.constant dense<0.000000e+00> : vector<5x160xf32>
    %41 = tpu.matmul %38, %40, %cst_29 {dimension_numbers = #tpu.dot_dimension_numbers<[1], [0], [0], [1], [0, 0, 1, 1], [], []>} : vector<5x256xf32>, vector<256x160xf32>, vector<5x160xf32> -> vector<5x160xf32>
    %42 = arith.addf %37, %41 : vector<5x160xf32>
    %43 = vector.extract_strided_slice %36 {offsets = [1, 0], sizes = [5, 256], strides = [1, 1]} : vector<10x256xf32> to vector<5x256xf32>
    %c1 = arith.constant 1 : index
    %c0_30 = arith.constant 0 : index
    %c0_31 = arith.constant 0 : index
    %44 = vector.load %arg10[%c1, %c0_30, %c0_31] : memref<6x256x160xf32, #tpu.memory_space<vmem>>, vector<1x256x160xf32>
    %45 = vector.shape_cast %44 : vector<1x256x160xf32> to vector<256x160xf32>
    %cst_32 = arith.constant dense<0.000000e+00> : vector<5x160xf32>
    %46 = tpu.matmul %43, %45, %cst_32 {dimension_numbers = #tpu.dot_dimension_numbers<[1], [0], [0], [1], [0, 0, 1, 1], [], []>} : vector<5x256xf32>, vector<256x160xf32>, vector<5x160xf32> -> vector<5x160xf32>
    %47 = arith.addf %42, %46 : vector<5x160xf32>
    %48 = vector.extract_strided_slice %36 {offsets = [2, 0], sizes = [5, 256], strides = [1, 1]} : vector<10x256xf32> to vector<5x256xf32>
    %c2 = arith.constant 2 : index
    %c0_33 = arith.constant 0 : index
    %c0_34 = arith.constant 0 : index
    %49 = vector.load %arg10[%c2, %c0_33, %c0_34] : memref<6x256x160xf32, #tpu.memory_space<vmem>>, vector<1x256x160xf32>
    %50 = vector.shape_cast %49 : vector<1x256x160xf32> to vector<256x160xf32>
    %cst_35 = arith.constant dense<0.000000e+00> : vector<5x160xf32>
    %51 = tpu.matmul %48, %50, %cst_35 {dimension_numbers = #tpu.dot_dimension_numbers<[1], [0], [0], [1], [0, 0, 1, 1], [], []>} : vector<5x256xf32>, vector<256x160xf32>, vector<5x160xf32> -> vector<5x160xf32>
    %52 = arith.addf %47, %51 : vector<5x160xf32>
    %53 = vector.extract_strided_slice %36 {offsets = [3, 0], sizes = [5, 256], strides = [1, 1]} : vector<10x256xf32> to vector<5x256xf32>
    %c3 = arith.constant 3 : index
    %c0_36 = arith.constant 0 : index
    %c0_37 = arith.constant 0 : index
    %54 = vector.load %arg10[%c3, %c0_36, %c0_37] : memref<6x256x160xf32, #tpu.memory_space<vmem>>, vector<1x256x160xf32>
    %55 = vector.shape_cast %54 : vector<1x256x160xf32> to vector<256x160xf32>
    %cst_38 = arith.constant dense<0.000000e+00> : vector<5x160xf32>
    %56 = tpu.matmul %53, %55, %cst_38 {dimension_numbers = #tpu.dot_dimension_numbers<[1], [0], [0], [1], [0, 0, 1, 1], [], []>} : vector<5x256xf32>, vector<256x160xf32>, vector<5x160xf32> -> vector<5x160xf32>
    %57 = arith.addf %52, %56 : vector<5x160xf32>
    %58 = vector.extract_strided_slice %36 {offsets = [4, 0], sizes = [5, 256], strides = [1, 1]} : vector<10x256xf32> to vector<5x256xf32>
    %c4 = arith.constant 4 : index
    %c0_39 = arith.constant 0 : index
    %c0_40 = arith.constant 0 : index
    %59 = vector.load %arg10[%c4, %c0_39, %c0_40] : memref<6x256x160xf32, #tpu.memory_space<vmem>>, vector<1x256x160xf32>
    %60 = vector.shape_cast %59 : vector<1x256x160xf32> to vector<256x160xf32>
    %cst_41 = arith.constant dense<0.000000e+00> : vector<5x160xf32>
    %61 = tpu.matmul %58, %60, %cst_41 {dimension_numbers = #tpu.dot_dimension_numbers<[1], [0], [0], [1], [0, 0, 1, 1], [], []>} : vector<5x256xf32>, vector<256x160xf32>, vector<5x160xf32> -> vector<5x160xf32>
    %62 = arith.addf %57, %61 : vector<5x160xf32>
    %63 = vector.extract_strided_slice %36 {offsets = [5, 0], sizes = [5, 256], strides = [1, 1]} : vector<10x256xf32> to vector<5x256xf32>
    %c5 = arith.constant 5 : index
    %c0_42 = arith.constant 0 : index
    %c0_43 = arith.constant 0 : index
    %64 = vector.load %arg10[%c5, %c0_42, %c0_43] : memref<6x256x160xf32, #tpu.memory_space<vmem>>, vector<1x256x160xf32>
    %65 = vector.shape_cast %64 : vector<1x256x160xf32> to vector<256x160xf32>
    %cst_44 = arith.constant dense<0.000000e+00> : vector<5x160xf32>
    %66 = tpu.matmul %63, %65, %cst_44 {dimension_numbers = #tpu.dot_dimension_numbers<[1], [0], [0], [1], [0, 0, 1, 1], [], []>} : vector<5x256xf32>, vector<256x160xf32>, vector<5x160xf32> -> vector<5x160xf32>
    %67 = arith.addf %62, %66 : vector<5x160xf32>
    %c0_45 = arith.constant 0 : index
    %c0_46 = arith.constant 0 : index
    %68 = vector.load %arg11[%c0_45, %c0_46] : memref<1x160xf32, #tpu.memory_space<vmem>>, vector<1x160xf32>
    %69 = vector.broadcast %68 : vector<1x160xf32> to vector<5x160xf32>
    %70 = arith.mulf %67, %69 : vector<5x160xf32>
    %c0_47 = arith.constant 0 : index
    %c0_48 = arith.constant 0 : index
    %71 = vector.load %arg12[%c0_47, %c0_48] : memref<1x160xf32, #tpu.memory_space<vmem>>, vector<1x160xf32>
    %72 = vector.broadcast %71 : vector<1x160xf32> to vector<5x160xf32>
    %73 = arith.addf %70, %72 : vector<5x160xf32>
    %cst_49 = arith.constant 0.000000e+00 : f32
    %74 = vector.broadcast %cst_49 : f32 to vector<5x160xf32>
    %75 = arith.maximumf %73, %74 : vector<5x160xf32>
    %cst_50 = arith.constant 0.000000e+00 : f32
    %76 = vector.broadcast %cst_50 : f32 to vector<1x160xf32>
    %77 = tpu.concatenate %76, %75, %76 in 0 : vector<1x160xf32>, vector<5x160xf32>, vector<1x160xf32> -> vector<7x160xf32>
    %cst_51 = arith.constant 0.000000e+00 : f32
    %78 = vector.broadcast %cst_51 : f32 to vector<2x64xf32>
    %79 = vector.extract_strided_slice %77 {offsets = [0, 0], sizes = [2, 160], strides = [1, 1]} : vector<7x160xf32> to vector<2x160xf32>
    %c0_52 = arith.constant 0 : index
    %c0_53 = arith.constant 0 : index
    %c0_54 = arith.constant 0 : index
    %80 = vector.load %arg13[%c0_52, %c0_53, %c0_54] : memref<6x160x64xf32, #tpu.memory_space<vmem>>, vector<1x160x64xf32>
    %81 = vector.shape_cast %80 : vector<1x160x64xf32> to vector<160x64xf32>
    %cst_55 = arith.constant dense<0.000000e+00> : vector<2x64xf32>
    %82 = tpu.matmul %79, %81, %cst_55 {dimension_numbers = #tpu.dot_dimension_numbers<[1], [0], [0], [1], [0, 0, 1, 1], [], []>} : vector<2x160xf32>, vector<160x64xf32>, vector<2x64xf32> -> vector<2x64xf32>
    %83 = arith.addf %78, %82 : vector<2x64xf32>
    %84 = vector.extract_strided_slice %77 {offsets = [1, 0], sizes = [2, 160], strides = [1, 1]} : vector<7x160xf32> to vector<2x160xf32>
    %c1_56 = arith.constant 1 : index
    %c0_57 = arith.constant 0 : index
    %c0_58 = arith.constant 0 : index
    %85 = vector.load %arg13[%c1_56, %c0_57, %c0_58] : memref<6x160x64xf32, #tpu.memory_space<vmem>>, vector<1x160x64xf32>
    %86 = vector.shape_cast %85 : vector<1x160x64xf32> to vector<160x64xf32>
    %cst_59 = arith.constant dense<0.000000e+00> : vector<2x64xf32>
    %87 = tpu.matmul %84, %86, %cst_59 {dimension_numbers = #tpu.dot_dimension_numbers<[1], [0], [0], [1], [0, 0, 1, 1], [], []>} : vector<2x160xf32>, vector<160x64xf32>, vector<2x64xf32> -> vector<2x64xf32>
    %88 = arith.addf %83, %87 : vector<2x64xf32>
    %89 = vector.extract_strided_slice %77 {offsets = [2, 0], sizes = [2, 160], strides = [1, 1]} : vector<7x160xf32> to vector<2x160xf32>
    %c2_60 = arith.constant 2 : index
    %c0_61 = arith.constant 0 : index
    %c0_62 = arith.constant 0 : index
    %90 = vector.load %arg13[%c2_60, %c0_61, %c0_62] : memref<6x160x64xf32, #tpu.memory_space<vmem>>, vector<1x160x64xf32>
    %91 = vector.shape_cast %90 : vector<1x160x64xf32> to vector<160x64xf32>
    %cst_63 = arith.constant dense<0.000000e+00> : vector<2x64xf32>
    %92 = tpu.matmul %89, %91, %cst_63 {dimension_numbers = #tpu.dot_dimension_numbers<[1], [0], [0], [1], [0, 0, 1, 1], [], []>} : vector<2x160xf32>, vector<160x64xf32>, vector<2x64xf32> -> vector<2x64xf32>
    %93 = arith.addf %88, %92 : vector<2x64xf32>
    %94 = vector.extract_strided_slice %77 {offsets = [3, 0], sizes = [2, 160], strides = [1, 1]} : vector<7x160xf32> to vector<2x160xf32>
    %c3_64 = arith.constant 3 : index
    %c0_65 = arith.constant 0 : index
    %c0_66 = arith.constant 0 : index
    %95 = vector.load %arg13[%c3_64, %c0_65, %c0_66] : memref<6x160x64xf32, #tpu.memory_space<vmem>>, vector<1x160x64xf32>
    %96 = vector.shape_cast %95 : vector<1x160x64xf32> to vector<160x64xf32>
    %cst_67 = arith.constant dense<0.000000e+00> : vector<2x64xf32>
    %97 = tpu.matmul %94, %96, %cst_67 {dimension_numbers = #tpu.dot_dimension_numbers<[1], [0], [0], [1], [0, 0, 1, 1], [], []>} : vector<2x160xf32>, vector<160x64xf32>, vector<2x64xf32> -> vector<2x64xf32>
    %98 = arith.addf %93, %97 : vector<2x64xf32>
    %99 = vector.extract_strided_slice %77 {offsets = [4, 0], sizes = [2, 160], strides = [1, 1]} : vector<7x160xf32> to vector<2x160xf32>
    %c4_68 = arith.constant 4 : index
    %c0_69 = arith.constant 0 : index
    %c0_70 = arith.constant 0 : index
    %100 = vector.load %arg13[%c4_68, %c0_69, %c0_70] : memref<6x160x64xf32, #tpu.memory_space<vmem>>, vector<1x160x64xf32>
    %101 = vector.shape_cast %100 : vector<1x160x64xf32> to vector<160x64xf32>
    %cst_71 = arith.constant dense<0.000000e+00> : vector<2x64xf32>
    %102 = tpu.matmul %99, %101, %cst_71 {dimension_numbers = #tpu.dot_dimension_numbers<[1], [0], [0], [1], [0, 0, 1, 1], [], []>} : vector<2x160xf32>, vector<160x64xf32>, vector<2x64xf32> -> vector<2x64xf32>
    %103 = arith.addf %98, %102 : vector<2x64xf32>
    %104 = vector.extract_strided_slice %77 {offsets = [5, 0], sizes = [2, 160], strides = [1, 1]} : vector<7x160xf32> to vector<2x160xf32>
    %c5_72 = arith.constant 5 : index
    %c0_73 = arith.constant 0 : index
    %c0_74 = arith.constant 0 : index
    %105 = vector.load %arg13[%c5_72, %c0_73, %c0_74] : memref<6x160x64xf32, #tpu.memory_space<vmem>>, vector<1x160x64xf32>
    %106 = vector.shape_cast %105 : vector<1x160x64xf32> to vector<160x64xf32>
    %cst_75 = arith.constant dense<0.000000e+00> : vector<2x64xf32>
    %107 = tpu.matmul %104, %106, %cst_75 {dimension_numbers = #tpu.dot_dimension_numbers<[1], [0], [0], [1], [0, 0, 1, 1], [], []>} : vector<2x160xf32>, vector<160x64xf32>, vector<2x64xf32> -> vector<2x64xf32>
    %108 = arith.addf %103, %107 : vector<2x64xf32>
    %c0_76 = arith.constant 0 : index
    %c0_77 = arith.constant 0 : index
    %109 = vector.load %arg14[%c0_76, %c0_77] : memref<1x64xf32, #tpu.memory_space<vmem>>, vector<1x64xf32>
    %110 = vector.broadcast %109 : vector<1x64xf32> to vector<2x64xf32>
    %111 = arith.mulf %108, %110 : vector<2x64xf32>
    %c0_78 = arith.constant 0 : index
    %c0_79 = arith.constant 0 : index
    %112 = vector.load %arg15[%c0_78, %c0_79] : memref<1x64xf32, #tpu.memory_space<vmem>>, vector<1x64xf32>
    %113 = vector.broadcast %112 : vector<1x64xf32> to vector<2x64xf32>
    %114 = arith.addf %111, %113 : vector<2x64xf32>
    %cst_80 = arith.constant 0.000000e+00 : f32
    %115 = vector.broadcast %cst_80 : f32 to vector<2x64xf32>
    %116 = arith.maximumf %114, %115 : vector<2x64xf32>
    %c0_81 = arith.constant 0 : index
    %c0_82 = arith.constant 0 : index
    %c0_83 = arith.constant 0 : index
    %117 = vector.load %arg16[%c0_81, %c0_82, %c0_83] : memref<1x2x64xf32, #tpu.memory_space<vmem>>, vector<1x2x64xf32>
    %118 = vector.shape_cast %117 : vector<1x2x64xf32> to vector<2x64xf32>
    %119 = vector.shape_cast %116 : vector<2x64xf32> to vector<1x2x64xf32>
    tpu.vector_store %arg16[%c0_81, %c0_82, %c0_83], %119 {strides = array<i32>} : memref<1x2x64xf32, #tpu.memory_space<vmem>>, vector<1x2x64xf32>,
    return
  }
  func.func @transform_0(%arg0: i32) -> (i32, i32, i32) {
    %c0_i32 = arith.constant 0 : i32
    %c0_i32_0 = arith.constant 0 : i32
    %c0_i32_1 = arith.constant 0 : i32
    return %arg0, %c0_i32, %c0_i32_0 : i32, i32, i32
  }
  func.func @transform_1(%arg0: i32) -> (i32, i32, i32) {
    %c0_i32 = arith.constant 0 : i32
    %c0_i32_0 = arith.constant 0 : i32
    %c0_i32_1 = arith.constant 0 : i32
    return %arg0, %c0_i32, %c0_i32_0 : i32, i32, i32
  }
  func.func @transform_2(%arg0: i32) -> (i32, i32) {
    %c0_i32 = arith.constant 0 : i32
    %c0_i32_0 = arith.constant 0 : i32
    %c0_i32_1 = arith.constant 0 : i32
    return %c0_i32, %c0_i32_0 : i32, i32
  }
  func.func @transform_3(%arg0: i32) -> (i32, i32) {
    %c0_i32 = arith.constant 0 : i32
    %c0_i32_0 = arith.constant 0 : i32
    %c0_i32_1 = arith.constant 0 : i32
    return %c0_i32, %c0_i32_0 : i32, i32
  }
  func.func @transform_4(%arg0: i32) -> (i32, i32) {
    %c0_i32 = arith.constant 0 : i32
    %c0_i32_0 = arith.constant 0 : i32
    %c0_i32_1 = arith.constant 0 : i32
    return %c0_i32, %c0_i32_0 : i32, i32
  }
  func.func @transform_5(%arg0: i32) -> (i32, i32) {
    %c0_i32 = arith.constant 0 : i32
    %c0_i32_0 = arith.constant 0 : i32
    %c0_i32_1 = arith.constant 0 : i32
    return %c0_i32, %c0_i32_0 : i32, i32
  }
  func.func @transform_6(%arg0: i32) -> (i32, i32) {
    %c0_i32 = arith.constant 0 : i32
    %c0_i32_0 = arith.constant 0 : i32
    %c0_i32_1 = arith.constant 0 : i32
    return %c0_i32, %c0_i32_0 : i32, i32
  }
  func.func @transform_7(%arg0: i32) -> (i32, i32) {
    %c0_i32 = arith.constant 0 : i32
    %c0_i32_0 = arith.constant 0 : i32
    %c0_i32_1 = arith.constant 0 : i32
    return %c0_i32, %c0_i32_0 : i32, i32
  }
  func.func @transform_8(%arg0: i32) -> (i32, i32) {
    %c0_i32 = arith.constant 0 : i32
    %c0_i32_0 = arith.constant 0 : i32
    %c0_i32_1 = arith.constant 0 : i32
    return %c0_i32, %c0_i32_0 : i32, i32
  }
  func.func @transform_9(%arg0: i32) -> (i32, i32, i32) {
    %c0_i32 = arith.constant 0 : i32
    %c0_i32_0 = arith.constant 0 : i32
    %c0_i32_1 = arith.constant 0 : i32
    %c0_i32_2 = arith.constant 0 : i32
    return %c0_i32, %c0_i32_0, %c0_i32_1 : i32, i32, i32
  }
  func.func @transform_10(%arg0: i32) -> (i32, i32) {
    %c0_i32 = arith.constant 0 : i32
    %c0_i32_0 = arith.constant 0 : i32
    %c0_i32_1 = arith.constant 0 : i32
    return %c0_i32, %c0_i32_0 : i32, i32
  }
  func.func @transform_11(%arg0: i32) -> (i32, i32) {
    %c0_i32 = arith.constant 0 : i32
    %c0_i32_0 = arith.constant 0 : i32
    %c0_i32_1 = arith.constant 0 : i32
    return %c0_i32, %c0_i32_0 : i32, i32
  }
  func.func @transform_12(%arg0: i32) -> (i32, i32, i32) {
    %c0_i32 = arith.constant 0 : i32
    %c0_i32_0 = arith.constant 0 : i32
    %c0_i32_1 = arith.constant 0 : i32
    %c0_i32_2 = arith.constant 0 : i32
    return %c0_i32, %c0_i32_0, %c0_i32_1 : i32, i32, i32
  }
  func.func @transform_13(%arg0: i32) -> (i32, i32) {
    %c0_i32 = arith.constant 0 : i32
    %c0_i32_0 = arith.constant 0 : i32
    %c0_i32_1 = arith.constant 0 : i32
    return %c0_i32, %c0_i32_0 : i32, i32
  }
  func.func @transform_14(%arg0: i32) -> (i32, i32) {
    %c0_i32 = arith.constant 0 : i32
    %c0_i32_0 = arith.constant 0 : i32
    %c0_i32_1 = arith.constant 0 : i32
    return %c0_i32, %c0_i32_0 : i32, i32
  }
  func.func @transform_15(%arg0: i32) -> (i32, i32, i32) {
    %c0_i32 = arith.constant 0 : i32
    %c0_i32_0 = arith.constant 0 : i32
    %c0_i32_1 = arith.constant 0 : i32
    return %arg0, %c0_i32, %c0_i32_0 : i32, i32, i32
  }
}

</mosaic_0001>

<llo_original>
// kernel: tile.38
$region0: #{tile.38}
  #allocation0 [shape = 's32[1]{0}', space=sflag, size = 0x4, scoped, tag = 'scoped memory for tile.38']
  %s0 = inlined_call_operand.vmem [shape: f32[2], index: 0, kind: input, shape index: {}]
  %s1 = inlined_call_operand.vmem [shape: f32[32,2], index: 1, kind: output, shape index: {}]
  // Predicated region
  $region2: #{tile.38} parent=0 // pred_check
    _
  $region3: #{tile.38} parent=0 // pred_check_branch
    %3 = sbr.rel (0) target = $region5
  $region4: #{tile.38} parent=0 // pred_region
    _
  $region5: #{tile.38} parent=0 // pred_fallthru
    _
  %v4 = vld [vmem:[%s0] ss:$0 sm:$0xff]
  %5 = vst [vmem:[%s1] sm:$0xff] %v4
  %s6 = scalar_lea.vmem %s1, 8
  %7 = vst [vmem:[%s6] sm:$0xff] %v4
  %s8 = scalar_lea.vmem %s1, 16
  %9 = vst [vmem:[%s8] sm:$0xff] %v4
  %s10 = scalar_lea.vmem %s1, 24
  %11 = vst [vmem:[%s10] sm:$0xff] %v4

// kernel: tile.43
$region0: #{tile.43}
  #allocation0 [shape = 's32[1]{0}', space=sflag, size = 0x4, scoped, tag = 'scoped memory for tile.43']
  %s0 = inlined_call_operand.vmem [shape: f32[8], index: 0, kind: input, shape index: {}]
  %s1 = inlined_call_operand.vmem [shape: f32[20,8], index: 1, kind: output, shape index: {}]
  // Predicated region
  $region2: #{tile.43} parent=0 // pred_check
    _
  $region3: #{tile.43} parent=0 // pred_check_branch
    %3 = sbr.rel (0) target = $region5
  $region4: #{tile.43} parent=0 // pred_region
    _
  $region5: #{tile.43} parent=0 // pred_fallthru
    _
  %v4 = vld [vmem:[%s0] ss:$0 sm:$0xff]
  %5 = vst [vmem:[%s1] sm:$0xff] %v4
  %s6 = scalar_lea.vmem %s1, 8
  %7 = vst [vmem:[%s6] sm:$0xff] %v4
  %s8 = scalar_lea.vmem %s1, 16
  %9 = vst [vmem:[%s8] sm:$0xff] %v4

// kernel: tile.39
$region0: #{tile.39}
  %s0 = inlined_call_operand.vmem [shape: f32[32,2], index: 0, kind: input, shape index: {}]
  %s1 = inlined_call_operand.hbm [shape: f32[1,64], index: 1, kind: output, shape index: {}]
  $region1: #{tile.39} parent=0
    #allocation0 [shape = 'u8[512]{0}', space=vmem, size = 0x400, scoped, tag = 'operand span for operand 1']
    #allocation1 [shape = 's32[1]{0}', space=sflag, size = 0x4, scoped, tag = 'scoped memory for tile.39']
    #allocation2 [shape = 'u8[4096]{0}', space=vmem, size = 0x1000, scoped, tag = 'scoped mem for output reshape']
    %2 = vsyncpa [#allocation1], 0
    %v3 = vld [vmem:[%s0] sm:$0x1]
    %vm4 = vcmask 15360
    %5 = vst.msk [vmem:[#allocation2] sm:$0x1] %vm4, %v3
    %s6 = scalar_lea.vmem %s0, 31
    %v7 = vld [vmem:[%s6] sm:$0x1]
    %8 = vrot.lane.b32.xlu0 %v7, 62
    %v9 = vpop.permute.xlu0 %8
    %vm10 = vcmask 523760
    %11 = vst.msk [vmem:[#allocation2] sm:$0x1] %vm10, %v9
    %s12 = scalar_lea.vmem %s0, 30
    %v13 = vld [vmem:[%s12] sm:$0x1]
    %14 = vrot.lane.b32.xlu0 %v13, 60
    %v15 = vpop.permute.xlu0 %14
    %vm16 = vcmask 507360
    %17 = vst.msk [vmem:[#allocation2] sm:$0x1] %vm16, %v15
    %s18 = scalar_lea.vmem %s0, 29
    %v19 = vld [vmem:[%s18] sm:$0x1]
    %20 = vrot.lane.b32.xlu0 %v19, 58
    %v21 = vpop.permute.xlu0 %20
    %vm22 = vcmask 490960
    %23 = vst.msk [vmem:[#allocation2] sm:$0x1] %vm22, %v21
    %s24 = scalar_lea.vmem %s0, 28
    %v25 = vld [vmem:[%s24] sm:$0x1]
    %26 = vrot.lane.b32.xlu0 %v25, 56
    %v27 = vpop.permute.xlu0 %26
    %vm28 = vcmask 474560
    %29 = vst.msk [vmem:[#allocation2] sm:$0x1] %vm28, %v27
    %s30 = scalar_lea.vmem %s0, 27
    %v31 = vld [vmem:[%s30] sm:$0x1]
    %32 = vrot.lane.b32.xlu0 %v31, 54
    %v33 = vpop.permute.xlu0 %32
    %vm34 = vcmask 458160
    %35 = vst.msk [vmem:[#allocation2] sm:$0x1] %vm34, %v33
    %s36 = scalar_lea.vmem %s0, 26
    %v37 = vld [vmem:[%s36] sm:$0x1]
    %38 = vrot.lane.b32.xlu0 %v37, 52
    %v39 = vpop.permute.xlu0 %38
    %vm40 = vcmask 441760
    %41 = vst.msk [vmem:[#allocation2] sm:$0x1] %vm40, %v39
    %s42 = scalar_lea.vmem %s0, 25
    %v43 = vld [vmem:[%s42] sm:$0x1]
    %44 = vrot.lane.b32.xlu0 %v43, 50
    %v45 = vpop.permute.xlu0 %44
    %vm46 = vcmask 425360
    %47 = vst.msk [vmem:[#allocation2] sm:$0x1] %vm46, %v45
    %s48 = scalar_lea.vmem %s0, 24
    %v49 = vld [vmem:[%s48] sm:$0x1]
    %50 = vrot.lane.b32.xlu0 %v49, 48
    %v51 = vpop.permute.xlu0 %50
    %vm52 = vcmask 408960
    %53 = vst.msk [vmem:[#allocation2] sm:$0x1] %vm52, %v51
    %s54 = scalar_lea.vmem %s0, 23
    %v55 = vld [vmem:[%s54] sm:$0x1]
    %56 = vrot.lane.b32.xlu0 %v55, 46
    %v57 = vpop.permute.xlu0 %56
    %vm58 = vcmask 392560
    %59 = vst.msk [vmem:[#allocation2] sm:$0x1] %vm58, %v57
    %s60 = scalar_lea.vmem %s0, 22
    %v61 = vld [vmem:[%s60] sm:$0x1]
    %62 = vrot.lane.b32.xlu0 %v61, 44
    %v63 = vpop.permute.xlu0 %62
    %vm64 = vcmask 376160
    %65 = vst.msk [vmem:[#allocation2] sm:$0x1] %vm64, %v63
    %s66 = scalar_lea.vmem %s0, 21
    %v67 = vld [vmem:[%s66] sm:$0x1]
    %68 = vrot.lane.b32.xlu0 %v67, 42
    %v69 = vpop.permute.xlu0 %68
    %vm70 = vcmask 359760
    %71 = vst.msk [vmem:[#allocation2] sm:$0x1] %vm70, %v69
    %s72 = scalar_lea.vmem %s0, 20
    %v73 = vld [vmem:[%s72] sm:$0x1]
    %74 = vrot.lane.b32.xlu0 %v73, 40
    %v75 = vpop.permute.xlu0 %74
    %vm76 = vcmask 343360
    %77 = vst.msk [vmem:[#allocation2] sm:$0x1] %vm76, %v75
    %s78 = scalar_lea.vmem %s0, 19
    %v79 = vld [vmem:[%s78] sm:$0x1]
    %80 = vrot.lane.b32.xlu0 %v79, 38
    %v81 = vpop.permute.xlu0 %80
    %vm82 = vcmask 326960
    %83 = vst.msk [vmem:[#allocation2] sm:$0x1] %vm82, %v81
    %s84 = scalar_lea.vmem %s0, 18
    %v85 = vld [vmem:[%s84] sm:$0x1]
    %86 = vrot.lane.b32.xlu0 %v85, 36
    %v87 = vpop.permute.xlu0 %86
    %vm88 = vcmask 310560
    %89 = vst.msk [vmem:[#allocation2] sm:$0x1] %vm88, %v87
    %s90 = scalar_lea.vmem %s0, 17
    %v91 = vld [vmem:[%s90] sm:$0x1]
    %92 = vrot.lane.b32.xlu0 %v91, 34
    %v93 = vpop.permute.xlu0 %92
    %vm94 = vcmask 294160
    %95 = vst.msk [vmem:[#allocation2] sm:$0x1] %vm94, %v93
    %s96 = scalar_lea.vmem %s0, 16
    %v97 = vld [vmem:[%s96] sm:$0x1]
    %98 = vrot.lane.b32.xlu0 %v97, 32
    %v99 = vpop.permute.xlu0 %98
    %vm100 = vcmask 277760
    %101 = vst.msk [vmem:[#allocation2] sm:$0x1] %vm100, %v99
    %s102 = scalar_lea.vmem %s0, 15
    %v103 = vld [vmem:[%s102] sm:$0x1]
    %104 = vrot.lane.b32.xlu0 %v103, 30
    %v105 = vpop.permute.xlu0 %104
    %vm106 = vcmask 261360
    %107 = vst.msk [vmem:[#allocation2] sm:$0x1] %vm106, %v105
    %s108 = scalar_lea.vmem %s0, 14
    %v109 = vld [vmem:[%s108] sm:$0x1]
    %110 = vrot.lane.b32.xlu0 %v109, 28
    %v111 = vpop.permute.xlu0 %110
    %vm112 = vcmask 244960
    %113 = vst.msk [vmem:[#allocation2] sm:$0x1] %vm112, %v111
    %s114 = scalar_lea.vmem %s0, 13
    %v115 = vld [vmem:[%s114] sm:$0x1]
    %116 = vrot.lane.b32.xlu0 %v115, 26
    %v117 = vpop.permute.xlu0 %116
    %vm118 = vcmask 228560
    %119 = vst.msk [vmem:[#allocation2] sm:$0x1] %vm118, %v117
    %s120 = scalar_lea.vmem %s0, 12
    %v121 = vld [vmem:[%s120] sm:$0x1]
    %122 = vrot.lane.b32.xlu0 %v121, 24
    %v123 = vpop.permute.xlu0 %122
    %vm124 = vcmask 212160
    %125 = vst.msk [vmem:[#allocation2] sm:$0x1] %vm124, %v123
    %s126 = scalar_lea.vmem %s0, 11
    %v127 = vld [vmem:[%s126] sm:$0x1]
    %128 = vrot.lane.b32.xlu0 %v127, 22
    %v129 = vpop.permute.xlu0 %128
    %vm130 = vcmask 195760
    %131 = vst.msk [vmem:[#allocation2] sm:$0x1] %vm130, %v129
    %s132 = scalar_lea.vmem %s0, 10
    %v133 = vld [vmem:[%s132] sm:$0x1]
    %134 = vrot.lane.b32.xlu0 %v133, 20
    %v135 = vpop.permute.xlu0 %134
    %vm136 = vcmask 179360
    %137 = vst.msk [vmem:[#allocation2] sm:$0x1] %vm136, %v135
    %s138 = scalar_lea.vmem %s0, 9
    %v139 = vld [vmem:[%s138] sm:$0x1]
    %140 = vrot.lane.b32.xlu0 %v139, 18
    %v141 = vpop.permute.xlu0 %140
    %vm142 = vcmask 162960
    %143 = vst.msk [vmem:[#allocation2] sm:$0x1] %vm142, %v141
    %s144 = scalar_lea.vmem %s0, 8
    %v145 = vld [vmem:[%s144] sm:$0x1]
    %146 = vrot.lane.b32.xlu0 %v145, 16
    %v147 = vpop.permute.xlu0 %146
    %vm148 = vcmask 146560
    %149 = vst.msk [vmem:[#allocation2] sm:$0x1] %vm148, %v147
    %s150 = scalar_lea.vmem %s0, 7
    %v151 = vld [vmem:[%s150] sm:$0x1]
    %152 = vrot.lane.b32.xlu0 %v151, 14
    %v153 = vpop.permute.xlu0 %152
    %vm154 = vcmask 130160
    %155 = vst.msk [vmem:[#allocation2] sm:$0x1] %vm154, %v153
    %s156 = scalar_lea.vmem %s0, 6
    %v157 = vld [vmem:[%s156] sm:$0x1]
    %158 = vrot.lane.b32.xlu0 %v157, 12
    %v159 = vpop.permute.xlu0 %158
    %vm160 = vcmask 113760
    %161 = vst.msk [vmem:[#allocation2] sm:$0x1] %vm160, %v159
    %s162 = scalar_lea.vmem %s0, 5
    %v163 = vld [vmem:[%s162] sm:$0x1]
    %164 = vrot.lane.b32.xlu0 %v163, 10
    %v165 = vpop.permute.xlu0 %164
    %vm166 = vcmask 97360
    %167 = vst.msk [vmem:[#allocation2] sm:$0x1] %vm166, %v165
    %s168 = scalar_lea.vmem %s0, 4
    %v169 = vld [vmem:[%s168] sm:$0x1]
    %170 = vrot.lane.b32.xlu0 %v169, 8
    %v171 = vpop.permute.xlu0 %170
    %vm172 = vcmask 80960
    %173 = vst.msk [vmem:[#allocation2] sm:$0x1] %vm172, %v171
    %s174 = scalar_lea.vmem %s0, 3
    %v175 = vld [vmem:[%s174] sm:$0x1]
    %176 = vrot.lane.b32.xlu0 %v175, 6
    %v177 = vpop.permute.xlu0 %176
    %vm178 = vcmask 64560
    %179 = vst.msk [vmem:[#allocation2] sm:$0x1] %vm178, %v177
    %s180 = scalar_lea.vmem %s0, 2
    %v181 = vld [vmem:[%s180] sm:$0x1]
    %182 = vrot.lane.b32.xlu0 %v181, 4
    %v183 = vpop.permute.xlu0 %182
    %vm184 = vcmask 48160
    %185 = vst.msk [vmem:[#allocation2] sm:$0x1] %vm184, %v183
    %s186 = scalar_lea.vmem %s0, 1
    %v187 = vld [vmem:[%s186] sm:$0x1]
    %188 = vrot.lane.b32.xlu0 %v187, 2
    %v189 = vpop.permute.xlu0 %188
    %vm190 = vcmask 31760
    %191 = vst.msk [vmem:[#allocation2] sm:$0x1] %vm190, %v189
    %s193 = sshllo.u32 0, 1
    %v195 = vld [vmem:[#allocation2] sm:%s193]
    %s196 = sshllo.u32 0, 1
    %197 = vst [vmem:[#allocation0] sm:%s196] %v195
    %s199 = ssub.s32 16, 16
    %200 = vsyncadd [#allocation1], %s199
    %s202 = sshll.u32 [#allocation0], 4
    %s203 = int_to_ptr.vmem [resolvable:$true] %s202
    %205 = dma.vmem_to_hbm [thread:$0]  %s203, 16, %s1, [#allocation1]
    %206 = dma.done [#allocation1], 16
    %207 = vsyncpa [#allocation1], 1

// kernel: tile.44
$region0: #{tile.44}
  %s0 = inlined_call_operand.vmem [shape: f32[20,8], index: 0, kind: input, shape index: {}]
  %s1 = inlined_call_operand.hbm [shape: f32[1,160], index: 1, kind: output, shape index: {}]
  $region1: #{tile.44} parent=0
    #allocation0 [shape = 'u8[1024]{0}', space=vmem, size = 0x400, scoped, tag = 'operand span for operand 1']
    #allocation1 [shape = 's32[1]{0}', space=sflag, size = 0x4, scoped, tag = 'scoped memory for tile.44']
    #allocation2 [shape = 'u8[8192]{0}', space=vmem, size = 0x2000, scoped, tag = 'scoped mem for output reshape']
    %2 = vsyncpa [#allocation1], 0
    %s3 = smov 3
    %v4 = vld [vmem:[%s0] ss:$16 sm:%s3]
    %vm5 = vcmask 64512
    %6 = vst.msk [vmem:[#allocation2] ss:$8 sm:$0x3] %vm5, %v4
    %s7 = scalar_lea.vmem %s0, 15
    %v8 = vld [vmem:[%s7] sm:$0x1]
    %9 = vrot.lane.b32.xlu0 %v8, 120
    %v10 = vpop.permute.xlu0 %9
    %vm11 = vcmask 1048512
    %12 = vst.msk [vmem:[#allocation2] sm:$0x1] %vm11, %v10
    %s13 = scalar_lea.vmem %s0, 14
    %v14 = vld [vmem:[%s13] sm:$0x1]
    %15 = vrot.lane.b32.xlu0 %v14, 112
    %v16 = vpop.permute.xlu0 %15
    %vm17 = vcmask 982912
    %18 = vst.msk [vmem:[#allocation2] sm:$0x1] %vm17, %v16
    %s19 = scalar_lea.vmem %s0, 13
    %v20 = vld [vmem:[%s19] sm:$0x1]
    %21 = vrot.lane.b32.xlu0 %v20, 104
    %v22 = vpop.permute.xlu0 %21
    %vm23 = vcmask 917312
    %24 = vst.msk [vmem:[#allocation2] sm:$0x1] %vm23, %v22
    %s25 = scalar_lea.vmem %s0, 12
    %v26 = vld [vmem:[%s25] sm:$0x1]
    %27 = vrot.lane.b32.xlu0 %v26, 96
    %v28 = vpop.permute.xlu0 %27
    %vm29 = vcmask 851712
    %30 = vst.msk [vmem:[#allocation2] sm:$0x1] %vm29, %v28
    %s31 = scalar_lea.vmem %s0, 11
    %v32 = vld [vmem:[%s31] sm:$0x1]
    %33 = vrot.lane.b32.xlu0 %v32, 88
    %v34 = vpop.permute.xlu0 %33
    %vm35 = vcmask 786112
    %36 = vst.msk [vmem:[#allocation2] sm:$0x1] %vm35, %v34
    %s37 = scalar_lea.vmem %s0, 10
    %v38 = vld [vmem:[%s37] sm:$0x1]
    %39 = vrot.lane.b32.xlu0 %v38, 80
    %v40 = vpop.permute.xlu0 %39
    %vm41 = vcmask 720512
    %42 = vst.msk [vmem:[#allocation2] sm:$0x1] %vm41, %v40
    %s43 = scalar_lea.vmem %s0, 9
    %v44 = vld [vmem:[%s43] sm:$0x1]
    %45 = vrot.lane.b32.xlu0 %v44, 72
    %v46 = vpop.permute.xlu0 %45
    %vm47 = vcmask 654912
    %48 = vst.msk [vmem:[#allocation2] sm:$0x1] %vm47, %v46
    %s49 = scalar_lea.vmem %s0, 8
    %v50 = vld [vmem:[%s49] sm:$0x1]
    %51 = vrot.lane.b32.xlu0 %v50, 64
    %v52 = vpop.permute.xlu0 %51
    %vm53 = vcmask 589312
    %54 = vst.msk [vmem:[#allocation2] sm:$0x1] %vm53, %v52
    %s55 = scalar_lea.vmem %s0, 7
    %v56 = vld [vmem:[%s55] sm:$0x1]
    %57 = vrot.lane.b32.xlu0 %v56, 56
    %v58 = vpop.permute.xlu0 %57
    %vm59 = vcmask 523712
    %60 = vst.msk [vmem:[#allocation2] sm:$0x1] %vm59, %v58
    %s61 = scalar_lea.vmem %s0, 6
    %v62 = vld [vmem:[%s61] sm:$0x1]
    %63 = vrot.lane.b32.xlu0 %v62, 48
    %v64 = vpop.permute.xlu0 %63
    %vm65 = vcmask 458112
    %66 = vst.msk [vmem:[#allocation2] sm:$0x1] %vm65, %v64
    %s67 = scalar_lea.vmem %s0, 5
    %v68 = vld [vmem:[%s67] sm:$0x1]
    %69 = vrot.lane.b32.xlu0 %v68, 40
    %v70 = vpop.permute.xlu0 %69
    %vm71 = vcmask 392512
    %72 = vst.msk [vmem:[#allocation2] sm:$0x1] %vm71, %v70
    %s73 = scalar_lea.vmem %s0, 4
    %v74 = vld [vmem:[%s73] sm:$0x1]
    %75 = vrot.lane.b32.xlu0 %v74, 32
    %v76 = vpop.permute.xlu0 %75
    %vm77 = vcmask 326912
    %78 = vst.msk [vmem:[#allocation2] sm:$0x1] %vm77, %v76
    %s79 = scalar_lea.vmem %s0, 3
    %s80 = smov 3
    %v81 = vld [vmem:[%s79] ss:$16 sm:%s80]
    %82 = vrot.lane.b32.xlu0 %v81, 24
    %v83 = vpop.permute.xlu0 %82
    %vm84 = vcmask 261312
    %85 = vst.msk [vmem:[#allocation2] ss:$8 sm:$0x3] %vm84, %v83
    %s86 = scalar_lea.vmem %s0, 2
    %s87 = smov 3
    %v88 = vld [vmem:[%s86] ss:$16 sm:%s87]
    %89 = vrot.lane.b32.xlu0 %v88, 16
    %v90 = vpop.permute.xlu0 %89
    %vm91 = vcmask 195712
    %92 = vst.msk [vmem:[#allocation2] ss:$8 sm:$0x3] %vm91, %v90
    %s93 = scalar_lea.vmem %s0, 1
    %s94 = smov 3
    %v95 = vld [vmem:[%s93] ss:$16 sm:%s94]
    %96 = vrot.lane.b32.xlu0 %v95, 8
    %v97 = vpop.permute.xlu0 %96
    %vm98 = vcmask 130112
    %99 = vst.msk [vmem:[#allocation2] ss:$8 sm:$0x3] %vm98, %v97
    %s101 = sshllo.u32 0, 1
    %v103 = vld [vmem:[#allocation2] sm:%s101]
    %s104 = sshllo.u32 0, 1
    %105 = vst [vmem:[#allocation0] sm:%s104] %v103
    %s106 = scalar_lea.vmem [#allocation2], 8
    %v107 = vld [vmem:[%s106] sm:%s101]
    %s108 = sshllo.u32 0, 1
    %s109 = scalar_lea.vmem [#allocation0], 1
    %110 = vst [vmem:[%s109] sm:%s108] %v107
    %s112 = ssub.s32 32, 32
    %113 = vsyncadd [#allocation1], %s112
    %s115 = sshll.u32 [#allocation0], 4
    %s116 = int_to_ptr.vmem [resolvable:$true] %s115
    %118 = dma.vmem_to_hbm [thread:$0]  %s116, 32, %s1, [#allocation1]
    %119 = dma.done [#allocation1], 32
    %120 = vsyncpa [#allocation1], 1

// kernel: tile.53
$region0: #{tile.53}
  #allocation0 [shape = 's32[1]{0}', space=sflag, size = 0x4, scoped, tag = 'scoped memory for tile.53']
  %s0 = inlined_call_operand.vmem [shape: f32[8], index: 0, kind: input, shape index: {}]
  %s1 = inlined_call_operand.vmem [shape: f32[8,8], index: 1, kind: output, shape index: {}]
  // Predicated region
  $region2: #{tile.53} parent=0 // pred_check
    _
  $region3: #{tile.53} parent=0 // pred_check_branch
    %3 = sbr.rel (0) target = $region5
  $region4: #{tile.53} parent=0 // pred_region
    _
  $region5: #{tile.53} parent=0 // pred_fallthru
    _
  %v4 = vld [vmem:[%s0] ss:$0 sm:$0xff]
  %5 = vst [vmem:[%s1] sm:$0xff] %v4

// kernel: tile.54
$region0: #{tile.54}
  %s0 = inlined_call_operand.vmem [shape: f32[8,8], index: 0, kind: input, shape index: {}]
  %s1 = inlined_call_operand.hbm [shape: f32[1,64], index: 1, kind: output, shape index: {}]
  $region1: #{tile.54} parent=0
    #allocation0 [shape = 'u8[512]{0}', space=vmem, size = 0x400, scoped, tag = 'operand span for operand 1']
    #allocation1 [shape = 's32[1]{0}', space=sflag, size = 0x4, scoped, tag = 'scoped memory for tile.54']
    #allocation2 [shape = 'u8[4096]{0}', space=vmem, size = 0x1000, scoped, tag = 'scoped mem for output reshape']
    %2 = vsyncpa [#allocation1], 0
    %v3 = vld [vmem:[%s0] sm:$0x1]
    %vm4 = vcmask 64512
    %5 = vst.msk [vmem:[#allocation2] sm:$0x1] %vm4, %v3
    %s6 = scalar_lea.vmem %s0, 7
    %v7 = vld [vmem:[%s6] sm:$0x1]
    %8 = vrot.lane.b32.xlu0 %v7, 56
    %v9 = vpop.permute.xlu0 %8
    %vm10 = vcmask 523712
    %11 = vst.msk [vmem:[#allocation2] sm:$0x1] %vm10, %v9
    %s12 = scalar_lea.vmem %s0, 6
    %v13 = vld [vmem:[%s12] sm:$0x1]
    %14 = vrot.lane.b32.xlu0 %v13, 48
    %v15 = vpop.permute.xlu0 %14
    %vm16 = vcmask 458112
    %17 = vst.msk [vmem:[#allocation2] sm:$0x1] %vm16, %v15
    %s18 = scalar_lea.vmem %s0, 5
    %v19 = vld [vmem:[%s18] sm:$0x1]
    %20 = vrot.lane.b32.xlu0 %v19, 40
    %v21 = vpop.permute.xlu0 %20
    %vm22 = vcmask 392512
    %23 = vst.msk [vmem:[#allocation2] sm:$0x1] %vm22, %v21
    %s24 = scalar_lea.vmem %s0, 4
    %v25 = vld [vmem:[%s24] sm:$0x1]
    %26 = vrot.lane.b32.xlu0 %v25, 32
    %v27 = vpop.permute.xlu0 %26
    %vm28 = vcmask 326912
    %29 = vst.msk [vmem:[#allocation2] sm:$0x1] %vm28, %v27
    %s30 = scalar_lea.vmem %s0, 3
    %v31 = vld [vmem:[%s30] sm:$0x1]
    %32 = vrot.lane.b32.xlu0 %v31, 24
    %v33 = vpop.permute.xlu0 %32
    %vm34 = vcmask 261312
    %35 = vst.msk [vmem:[#allocation2] sm:$0x1] %vm34, %v33
    %s36 = scalar_lea.vmem %s0, 2
    %v37 = vld [vmem:[%s36] sm:$0x1]
    %38 = vrot.lane.b32.xlu0 %v37, 16
    %v39 = vpop.permute.xlu0 %38
    %vm40 = vcmask 195712
    %41 = vst.msk [vmem:[#allocation2] sm:$0x1] %vm40, %v39
    %s42 = scalar_lea.vmem %s0, 1
    %v43 = vld [vmem:[%s42] sm:$0x1]
    %44 = vrot.lane.b32.xlu0 %v43, 8
    %v45 = vpop.permute.xlu0 %44
    %vm46 = vcmask 130112
    %47 = vst.msk [vmem:[#allocation2] sm:$0x1] %vm46, %v45
    %s49 = sshllo.u32 0, 1
    %v51 = vld [vmem:[#allocation2] sm:%s49]
    %s52 = sshllo.u32 0, 1
    %53 = vst [vmem:[#allocation0] sm:%s52] %v51
    %s55 = ssub.s32 16, 16
    %56 = vsyncadd [#allocation1], %s55
    %s58 = sshll.u32 [#allocation0], 4
    %s59 = int_to_ptr.vmem [resolvable:$true] %s58
    %61 = dma.vmem_to_hbm [thread:$0]  %s59, 16, %s1, [#allocation1]
    %62 = dma.done [#allocation1], 16
    %63 = vsyncpa [#allocation1], 1

// kernel: mul.6
$region0: #{mul.6}
  #allocation0 [shape = 's32[1]{0}', space=sflag, size = 0x4, scoped, tag = 'scoped memory for mul.6']
  %s0 = inlined_call_operand.vmem [shape: f32[245760], index: 0, kind: input, shape index: {}]
  %s1 = inlined_call_operand.vmem [shape: f32[245760], index: 1, kind: input, shape index: {}]
  %s2 = inlined_call_operand.vmem [shape: f32[245760], index: 2, kind: output, shape index: {}]
  %v3 = vld [vmem:[%s0] sm:$0xff]
  %v4 = vld [vmem:[%s1] sm:$0xff]
  %5 = xla_tuple %v3, %v4
  %6 = xla_tuple %5
  %v7 = vmul.f32 %v3, %v4
  %8 = xla_tuple %v7
  %9 = vst [vmem:[%s2] sm:$0xff] %v7
  %s10 = scalar_lea.vmem %s0, 8
  %v11 = vld [vmem:[%s10] sm:$0xff]
  %s12 = scalar_lea.vmem %s1, 8
  %v13 = vld [vmem:[%s12] sm:$0xff]
  %14 = xla_tuple %v11, %v13
  %15 = xla_tuple %14
  %v16 = vmul.f32 %v11, %v13
  %17 = xla_tuple %v16
  %s18 = scalar_lea.vmem %s2, 8
  %19 = vst [vmem:[%s18] sm:$0xff] %v16
  %s20 = scalar_lea.vmem %s0, 16
  %v21 = vld [vmem:[%s20] sm:$0xff]
  %s22 = scalar_lea.vmem %s1, 16
  %v23 = vld [vmem:[%s22] sm:$0xff]
  %24 = xla_tuple %v21, %v23
  %25 = xla_tuple %24
  %v26 = vmul.f32 %v21, %v23
  %27 = xla_tuple %v26
  %s28 = scalar_lea.vmem %s2, 16
  %29 = vst [vmem:[%s28] sm:$0xff] %v26
  %s30 = scalar_lea.vmem %s0, 24
  %v31 = vld [vmem:[%s30] sm:$0xff]
  %s32 = scalar_lea.vmem %s1, 24
  %v33 = vld [vmem:[%s32] sm:$0xff]
  %34 = xla_tuple %v31, %v33
  %35 = xla_tuple %34
  %v36 = vmul.f32 %v31, %v33
  %37 = xla_tuple %v36
  %s38 = scalar_lea.vmem %s2, 24
  %39 = vst [vmem:[%s38] sm:$0xff] %v36
  %s40 = scalar_lea.vmem %s0, 32
  %v41 = vld [vmem:[%s40] sm:$0xff]
  %s42 = scalar_lea.vmem %s1, 32
  %v43 = vld [vmem:[%s42] sm:$0xff]
  %44 = xla_tuple %v41, %v43
  %45 = xla_tuple %44
  %v46 = vmul.f32 %v41, %v43
  %47 = xla_tuple %v46
  %s48 = scalar_lea.vmem %s2, 32
  %49 = vst [vmem:[%s48] sm:$0xff] %v46
  %s50 = scalar_lea.vmem %s0, 40
  %v51 = vld [vmem:[%s50] sm:$0xff]
  %s52 = scalar_lea.vmem %s1, 40
  %v53 = vld [vmem:[%s52] sm:$0xff]
  %54 = xla_tuple %v51, %v53
  %55 = xla_tuple %54
  %v56 = vmul.f32 %v51, %v53
  %57 = xla_tuple %v56
  %s58 = scalar_lea.vmem %s2, 40
  %59 = vst [vmem:[%s58] sm:$0xff] %v56
  %s60 = scalar_lea.vmem %s0, 48
  %v61 = vld [vmem:[%s60] sm:$0xff]
  %s62 = scalar_lea.vmem %s1, 48
  %v63 = vld [vmem:[%s62] sm:$0xff]
  %64 = xla_tuple %v61, %v63
  %65 = xla_tuple %64
  %v66 = vmul.f32 %v61, %v63
  %67 = xla_tuple %v66
  %s68 = scalar_lea.vmem %s2, 48
  %69 = vst [vmem:[%s68] sm:$0xff] %v66
  %s70 = scalar_lea.vmem %s0, 56
  %v71 = vld [vmem:[%s70] sm:$0xff]
  %s72 = scalar_lea.vmem %s1, 56
  %v73 = vld [vmem:[%s72] sm:$0xff]
  %74 = xla_tuple %v71, %v73
  %75 = xla_tuple %74
  %v76 = vmul.f32 %v71, %v73
  %77 = xla_tuple %v76
  %s78 = scalar_lea.vmem %s2, 56
  %79 = vst [vmem:[%s78] sm:$0xff] %v76
  %s80 = scalar_lea.vmem %s0, 64
  %v81 = vld [vmem:[%s80] sm:$0xff]
  %s82 = scalar_lea.vmem %s1, 64
  %v83 = vld [vmem:[%s82] sm:$0xff]
  %84 = xla_tuple %v81, %v83
  %85 = xla_tuple %84
  %v86 = vmul.f32 %v81, %v83
  %87 = xla_tuple %v86
  %s88 = scalar_lea.vmem %s2, 64
  %89 = vst [vmem:[%s88] sm:$0xff] %v86
  %s90 = scalar_lea.vmem %s0, 72
  %v91 = vld [vmem:[%s90] sm:$0xff]
  %s92 = scalar_lea.vmem %s1, 72
  %v93 = vld [vmem:[%s92] sm:$0xff]
  %94 = xla_tuple %v91, %v93
  %95 = xla_tuple %94
  %v96 = vmul.f32 %v91, %v93
  %97 = xla_tuple %v96
  %s98 = scalar_lea.vmem %s2, 72
  %99 = vst [vmem:[%s98] sm:$0xff] %v96
  %s100 = scalar_lea.vmem %s0, 80
  %v101 = vld [vmem:[%s100] sm:$0xff]
  %s102 = scalar_lea.vmem %s1, 80
  %v103 = vld [vmem:[%s102] sm:$0xff]
  %104 = xla_tuple %v101, %v103
  %105 = xla_tuple %104
  %v106 = vmul.f32 %v101, %v103
  %107 = xla_tuple %v106
  %s108 = scalar_lea.vmem %s2, 80
  %109 = vst [vmem:[%s108] sm:$0xff] %v106
  %s110 = scalar_lea.vmem %s0, 88
  %v111 = vld [vmem:[%s110] sm:$0xff]
  %s112 = scalar_lea.vmem %s1, 88
  %v113 = vld [vmem:[%s112] sm:$0xff]
  %114 = xla_tuple %v111, %v113
  %115 = xla_tuple %114
  %v116 = vmul.f32 %v111, %v113
  %117 = xla_tuple %v116
  %s118 = scalar_lea.vmem %s2, 88
  %119 = vst [vmem:[%s118] sm:$0xff] %v116
  %s120 = scalar_lea.vmem %s0, 96
  %v121 = vld [vmem:[%s120] sm:$0xff]
  %s122 = scalar_lea.vmem %s1, 96
  %v123 = vld [vmem:[%s122] sm:$0xff]
  %124 = xla_tuple %v121, %v123
  %125 = xla_tuple %124
  %v126 = vmul.f32 %v121, %v123
  %127 = xla_tuple %v126
  %s128 = scalar_lea.vmem %s2, 96
  %129 = vst [vmem:[%s128] sm:$0xff] %v126
  %s130 = scalar_lea.vmem %s0, 104
  %v131 = vld [vmem:[%s130] sm:$0xff]
  %s132 = scalar_lea.vmem %s1, 104
  %v133 = vld [vmem:[%s132] sm:$0xff]
  %134 = xla_tuple %v131, %v133
  %135 = xla_tuple %134
  %v136 = vmul.f32 %v131, %v133
  %137 = xla_tuple %v136
  %s138 = scalar_lea.vmem %s2, 104
  %139 = vst [vmem:[%s138] sm:$0xff] %v136
  %s140 = scalar_lea.vmem %s0, 112
  %v141 = vld [vmem:[%s140] sm:$0xff]
  %s142 = scalar_lea.vmem %s1, 112
  %v143 = vld [vmem:[%s142] sm:$0xff]
  %144 = xla_tuple %v141, %v143
  %145 = xla_tuple %144
  %v146 = vmul.f32 %v141, %v143
  %147 = xla_tuple %v146
  %s148 = scalar_lea.vmem %s2, 112
  %149 = vst [vmem:[%s148] sm:$0xff] %v146
  %s150 = scalar_lea.vmem %s0, 120
  %v151 = vld [vmem:[%s150] sm:$0xff]
  %s152 = scalar_lea.vmem %s1, 120
  %v153 = vld [vmem:[%s152] sm:$0xff]
  %154 = xla_tuple %v151, %v153
  %155 = xla_tuple %154
  %v156 = vmul.f32 %v151, %v153
  %157 = xla_tuple %v156
  %s158 = scalar_lea.vmem %s2, 120
  %159 = vst [vmem:[%s158] sm:$0xff] %v156
  %s160 = scalar_lea.vmem %s0, 128
  %v161 = vld [vmem:[%s160] sm:$0xff]
  %s162 = scalar_lea.vmem %s1, 128
  %v163 = vld [vmem:[%s162] sm:$0xff]
  %164 = xla_tuple %v161, %v163
  %165 = xla_tuple %164
  %v166 = vmul.f32 %v161, %v163
  %167 = xla_tuple %v166
  %s168 = scalar_lea.vmem %s2, 128
  %169 = vst [vmem:[%s168] sm:$0xff] %v166
  %s170 = scalar_lea.vmem %s0, 136
  %v171 = vld [vmem:[%s170] sm:$0xff]
  %s172 = scalar_lea.vmem %s1, 136
  %v173 = vld [vmem:[%s172] sm:$0xff]
  %174 = xla_tuple %v171, %v173
  %175 = xla_tuple %174
  %v176 = vmul.f32 %v171, %v173
  %177 = xla_tuple %v176
  %s178 = scalar_lea.vmem %s2, 136
  %179 = vst [vmem:[%s178] sm:$0xff] %v176
  %s180 = scalar_lea.vmem %s0, 144
  %v181 = vld [vmem:[%s180] sm:$0xff]
  %s182 = scalar_lea.vmem %s1, 144
  %v183 = vld [vmem:[%s182] sm:$0xff]
  %184 = xla_tuple %v181, %v183
  %185 = xla_tuple %184
  %v186 = vmul.f32 %v181, %v183
  %187 = xla_tuple %v186
  %s188 = scalar_lea.vmem %s2, 144
  %189 = vst [vmem:[%s188] sm:$0xff] %v186
  %s190 = scalar_lea.vmem %s0, 152
  %v191 = vld [vmem:[%s190] sm:$0xff]
  %s192 = scalar_lea.vmem %s1, 152
  %v193 = vld [vmem:[%s192] sm:$0xff]
  %194 = xla_tuple %v191, %v193
  %195 = xla_tuple %194
  %v196 = vmul.f32 %v191, %v193
  %197 = xla_tuple %v196
  %s198 = scalar_lea.vmem %s2, 152
  %199 = vst [vmem:[%s198] sm:$0xff] %v196
  %s200 = scalar_lea.vmem %s0, 160
  %v201 = vld [vmem:[%s200] sm:$0xff]
  %s202 = scalar_lea.vmem %s1, 160
  %v203 = vld [vmem:[%s202] sm:$0xff]
  %204 = xla_tuple %v201, %v203
  %205 = xla_tuple %204
  %v206 = vmul.f32 %v201, %v203
  %207 = xla_tuple %v206
  %s208 = scalar_lea.vmem %s2, 160
  %209 = vst [vmem:[%s208] sm:$0xff] %v206
  %s210 = scalar_lea.vmem %s0, 168
  %v211 = vld [vmem:[%s210] sm:$0xff]
  %s212 = scalar_lea.vmem %s1, 168
  %v213 = vld [vmem:[%s212] sm:$0xff]
  %214 = xla_tuple %v211, %v213
  %215 = xla_tuple %214
  %v216 = vmul.f32 %v211, %v213
  %217 = xla_tuple %v216
  %s218 = scalar_lea.vmem %s2, 168
  %219 = vst [vmem:[%s218] sm:$0xff] %v216
  %s220 = scalar_lea.vmem %s0, 176
  %v221 = vld [vmem:[%s220] sm:$0xff]
  %s222 = scalar_lea.vmem %s1, 176
  %v223 = vld [vmem:[%s222] sm:$0xff]
  %224 = xla_tuple %v221, %v223
  %225 = xla_tuple %224
  %v226 = vmul.f32 %v221, %v223
  %227 = xla_tuple %v226
  %s228 = scalar_lea.vmem %s2, 176
  %229 = vst [vmem:[%s228] sm:$0xff] %v226
  %s230 = scalar_lea.vmem %s0, 184
  %v231 = vld [vmem:[%s230] sm:$0xff]
  %s232 = scalar_lea.vmem %s1, 184
  %v233 = vld [vmem:[%s232] sm:$0xff]
  %234 = xla_tuple %v231, %v233
  %235 = xla_tuple %234
  %v236 = vmul.f32 %v231, %v233
  %237 = xla_tuple %v236
  %s238 = scalar_lea.vmem %s2, 184
  %239 = vst [vmem:[%s238] sm:$0xff] %v236
  %s240 = scalar_lea.vmem %s0, 192
  %v241 = vld [vmem:[%s240] sm:$0xff]
  %s242 = scalar_lea.vmem %s1, 192
  %v243 = vld [vmem:[%s242] sm:$0xff]
  %244 = xla_tuple %v241, %v243
  %245 = xla_tuple %244
  %v246 = vmul.f32 %v241, %v243
  %247 = xla_tuple %v246
  %s248 = scalar_lea.vmem %s2, 192
  %249 = vst [vmem:[%s248] sm:$0xff] %v246
  %s250 = scalar_lea.vmem %s0, 200
  %v251 = vld [vmem:[%s250] sm:$0xff]
  %s252 = scalar_lea.vmem %s1, 200
  %v253 = vld [vmem:[%s252] sm:$0xff]
  %254 = xla_tuple %v251, %v253
  %255 = xla_tuple %254
  %v256 = vmul.f32 %v251, %v253
  %257 = xla_tuple %v256
  %s258 = scalar_lea.vmem %s2, 200
  %259 = vst [vmem:[%s258] sm:$0xff] %v256
  %s260 = scalar_lea.vmem %s0, 208
  %v261 = vld [vmem:[%s260] sm:$0xff]
  %s262 = scalar_lea.vmem %s1, 208
  %v263 = vld [vmem:[%s262] sm:$0xff]
  %264 = xla_tuple %v261, %v263
  %265 = xla_tuple %264
  %v266 = vmul.f32 %v261, %v263
  %267 = xla_tuple %v266
  %s268 = scalar_lea.vmem %s2, 208
  %269 = vst [vmem:[%s268] sm:$0xff] %v266
  %s270 = scalar_lea.vmem %s0, 216
  %v271 = vld [vmem:[%s270] sm:$0xff]
  %s272 = scalar_lea.vmem %s1, 216
  %v273 = vld [vmem:[%s272] sm:$0xff]
  %274 = xla_tuple %v271, %v273
  %275 = xla_tuple %274
  %v276 = vmul.f32 %v271, %v273
  %277 = xla_tuple %v276
  %s278 = scalar_lea.vmem %s2, 216
  %279 = vst [vmem:[%s278] sm:$0xff] %v276
  %s280 = scalar_lea.vmem %s0, 224
  %v281 = vld [vmem:[%s280] sm:$0xff]
  %s282 = scalar_lea.vmem %s1, 224
  %v283 = vld [vmem:[%s282] sm:$0xff]
  %284 = xla_tuple %v281, %v283
  %285 = xla_tuple %284
  %v286 = vmul.f32 %v281, %v283
  %287 = xla_tuple %v286
  %s288 = scalar_lea.vmem %s2, 224
  %289 = vst [vmem:[%s288] sm:$0xff] %v286
  %s290 = scalar_lea.vmem %s0, 232
  %v291 = vld [vmem:[%s290] sm:$0xff]
  %s292 = scalar_lea.vmem %s1, 232
  %v293 = vld [vmem:[%s292] sm:$0xff]
  %294 = xla_tuple %v291, %v293
  %295 = xla_tuple %294
  %v296 = vmul.f32 %v291, %v293
  %297 = xla_tuple %v296
  %s298 = scalar_lea.vmem %s2, 232
  %299 = vst [vmem:[%s298] sm:$0xff] %v296
  %s300 = scalar_lea.vmem %s0, 240
  %v301 = vld [vmem:[%s300] sm:$0xff]
  %s302 = scalar_lea.vmem %s1, 240
  %v303 = vld [vmem:[%s302] sm:$0xff]
  %304 = xla_tuple %v301, %v303
  %305 = xla_tuple %304
  %v306 = vmul.f32 %v301, %v303
  %307 = xla_tuple %v306
  %s308 = scalar_lea.vmem %s2, 240
  %309 = vst [vmem:[%s308] sm:$0xff] %v306
  %s310 = scalar_lea.vmem %s0, 248
  %v311 = vld [vmem:[%s310] sm:$0xff]
  %s312 = scalar_lea.vmem %s1, 248
  %v313 = vld [vmem:[%s312] sm:$0xff]
  %314 = xla_tuple %v311, %v313
  %315 = xla_tuple %314
  %v316 = vmul.f32 %v311, %v313
  %317 = xla_tuple %v316
  %s318 = scalar_lea.vmem %s2, 248
  %319 = vst [vmem:[%s318] sm:$0xff] %v316
  %s320 = scalar_lea.vmem %s0, 256
  %v321 = vld [vmem:[%s320] sm:$0xff]
  %s322 = scalar_lea.vmem %s1, 256
  %v323 = vld [vmem:[%s322] sm:$0xff]
  %324 = xla_tuple %v321, %v323
  %325 = xla_tuple %324
  %v326 = vmul.f32 %v321, %v323
  %327 = xla_tuple %v326
  %s328 = scalar_lea.vmem %s2, 256
  %329 = vst [vmem:[%s328] sm:$0xff] %v326
  %s330 = scalar_lea.vmem %s0, 264
  %v331 = vld [vmem:[%s330] sm:$0xff]
  %s332 = scalar_lea.vmem %s1, 264
  %v333 = vld [vmem:[%s332] sm:$0xff]
  %334 = xla_tuple %v331, %v333
  %335 = xla_tuple %334
  %v336 = vmul.f32 %v331, %v333
  %337 = xla_tuple %v336
  %s338 = scalar_lea.vmem %s2, 264
  %339 = vst [vmem:[%s338] sm:$0xff] %v336
  %s340 = scalar_lea.vmem %s0, 272
  %v341 = vld [vmem:[%s340] sm:$0xff]
  %s342 = scalar_lea.vmem %s1, 272
  %v343 = vld [vmem:[%s342] sm:$0xff]
  %344 = xla_tuple %v341, %v343
  %345 = xla_tuple %344
  %v346 = vmul.f32 %v341, %v343
  %347 = xla_tuple %v346
  %s348 = scalar_lea.vmem %s2, 272
  %349 = vst [vmem:[%s348] sm:$0xff] %v346
  %s350 = scalar_lea.vmem %s0, 280
  %v351 = vld [vmem:[%s350] sm:$0xff]
  %s352 = scalar_lea.vmem %s1, 280
  %v353 = vld [vmem:[%s352] sm:$0xff]
  %354 = xla_tuple %v351, %v353
  %355 = xla_tuple %354
  %v356 = vmul.f32 %v351, %v353
  %357 = xla_tuple %v356
  %s358 = scalar_lea.vmem %s2, 280
  %359 = vst [vmem:[%s358] sm:$0xff] %v356
  %s360 = scalar_lea.vmem %s0, 288
  %v361 = vld [vmem:[%s360] sm:$0xff]
  %s362 = scalar_lea.vmem %s1, 288
  %v363 = vld [vmem:[%s362] sm:$0xff]
  %364 = xla_tuple %v361, %v363
  %365 = xla_tuple %364
  %v366 = vmul.f32 %v361, %v363
  %367 = xla_tuple %v366
  %s368 = scalar_lea.vmem %s2, 288
  %369 = vst [vmem:[%s368] sm:$0xff] %v366
  %s370 = scalar_lea.vmem %s0, 296
  %v371 = vld [vmem:[%s370] sm:$0xff]
  %s372 = scalar_lea.vmem %s1, 296
  %v373 = vld [vmem:[%s372] sm:$0xff]
  %374 = xla_tuple %v371, %v373
  %375 = xla_tuple %374
  %v376 = vmul.f32 %v371, %v373
  %377 = xla_tuple %v376
  %s378 = scalar_lea.vmem %s2, 296
  %379 = vst [vmem:[%s378] sm:$0xff] %v376
  %s380 = scalar_lea.vmem %s0, 304
  %v381 = vld [vmem:[%s380] sm:$0xff]
  %s382 = scalar_lea.vmem %s1, 304
  %v383 = vld [vmem:[%s382] sm:$0xff]
  %384 = xla_tuple %v381, %v383
  %385 = xla_tuple %384
  %v386 = vmul.f32 %v381, %v383
  %387 = xla_tuple %v386
  %s388 = scalar_lea.vmem %s2, 304
  %389 = vst [vmem:[%s388] sm:$0xff] %v386
  %s390 = scalar_lea.vmem %s0, 312
  %v391 = vld [vmem:[%s390] sm:$0xff]
  %s392 = scalar_lea.vmem %s1, 312
  %v393 = vld [vmem:[%s392] sm:$0xff]
  %394 = xla_tuple %v391, %v393
  %395 = xla_tuple %394
  %v396 = vmul.f32 %v391, %v393
  %397 = xla_tuple %v396
  %s398 = scalar_lea.vmem %s2, 312
  %399 = vst [vmem:[%s398] sm:$0xff] %v396
  %s400 = scalar_lea.vmem %s0, 320
  %v401 = vld [vmem:[%s400] sm:$0xff]
  %s402 = scalar_lea.vmem %s1, 320
  %v403 = vld [vmem:[%s402] sm:$0xff]
  %404 = xla_tuple %v401, %v403
  %405 = xla_tuple %404
  %v406 = vmul.f32 %v401, %v403
  %407 = xla_tuple %v406
  %s408 = scalar_lea.vmem %s2, 320
  %409 = vst [vmem:[%s408] sm:$0xff] %v406
  %s410 = scalar_lea.vmem %s0, 328
  %v411 = vld [vmem:[%s410] sm:$0xff]
  %s412 = scalar_lea.vmem %s1, 328
  %v413 = vld [vmem:[%s412] sm:$0xff]
  %414 = xla_tuple %v411, %v413
  %415 = xla_tuple %414
  %v416 = vmul.f32 %v411, %v413
  %417 = xla_tuple %v416
  %s418 = scalar_lea.vmem %s2, 328
  %419 = vst [vmem:[%s418] sm:$0xff] %v416
  %s420 = scalar_lea.vmem %s0, 336
  %v421 = vld [vmem:[%s420] sm:$0xff]
  %s422 = scalar_lea.vmem %s1, 336
  %v423 = vld [vmem:[%s422] sm:$0xff]
  %424 = xla_tuple %v421, %v423
  %425 = xla_tuple %424
  %v426 = vmul.f32 %v421, %v423
  %427 = xla_tuple %v426
  %s428 = scalar_lea.vmem %s2, 336
  %429 = vst [vmem:[%s428] sm:$0xff] %v426
  %s430 = scalar_lea.vmem %s0, 344
  %v431 = vld [vmem:[%s430] sm:$0xff]
  %s432 = scalar_lea.vmem %s1, 344
  %v433 = vld [vmem:[%s432] sm:$0xff]
  %434 = xla_tuple %v431, %v433
  %435 = xla_tuple %434
  %v436 = vmul.f32 %v431, %v433
  %437 = xla_tuple %v436
  %s438 = scalar_lea.vmem %s2, 344
  %439 = vst [vmem:[%s438] sm:$0xff] %v436
  %s440 = scalar_lea.vmem %s0, 352
  %v441 = vld [vmem:[%s440] sm:$0xff]
  %s442 = scalar_lea.vmem %s1, 352
  %v443 = vld [vmem:[%s442] sm:$0xff]
  %444 = xla_tuple %v441, %v443
  %445 = xla_tuple %444
  %v446 = vmul.f32 %v441, %v443
  %447 = xla_tuple %v446
  %s448 = scalar_lea.vmem %s2, 352
  %449 = vst [vmem:[%s448] sm:$0xff] %v446
  %s450 = scalar_lea.vmem %s0, 360
  %v451 = vld [vmem:[%s450] sm:$0xff]
  %s452 = scalar_lea.vmem %s1, 360
  %v453 = vld [vmem:[%s452] sm:$0xff]
  %454 = xla_tuple %v451, %v453
  %455 = xla_tuple %454
  %v456 = vmul.f32 %v451, %v453
  %457 = xla_tuple %v456
  %s458 = scalar_lea.vmem %s2, 360
  %459 = vst [vmem:[%s458] sm:$0xff] %v456
  %s460 = scalar_lea.vmem %s0, 368
  %v461 = vld [vmem:[%s460] sm:$0xff]
  %s462 = scalar_lea.vmem %s1, 368
  %v463 = vld [vmem:[%s462] sm:$0xff]
  %464 = xla_tuple %v461, %v463
  %465 = xla_tuple %464
  %v466 = vmul.f32 %v461, %v463
  %467 = xla_tuple %v466
  %s468 = scalar_lea.vmem %s2, 368
  %469 = vst [vmem:[%s468] sm:$0xff] %v466
  %s470 = scalar_lea.vmem %s0, 376
  %v471 = vld [vmem:[%s470] sm:$0xff]
  %s472 = scalar_lea.vmem %s1, 376
  %v473 = vld [vmem:[%s472] sm:$0xff]
  %474 = xla_tuple %v471, %v473
  %475 = xla_tuple %474
  %v476 = vmul.f32 %v471, %v473
  %477 = xla_tuple %v476
  %s478 = scalar_lea.vmem %s2, 376
  %479 = vst [vmem:[%s478] sm:$0xff] %v476
  %s480 = scalar_lea.vmem %s0, 384
  %v481 = vld [vmem:[%s480] sm:$0xff]
  %s482 = scalar_lea.vmem %s1, 384
  %v483 = vld [vmem:[%s482] sm:$0xff]
  %484 = xla_tuple %v481, %v483
  %485 = xla_tuple %484
  %v486 = vmul.f32 %v481, %v483
  %487 = xla_tuple %v486
  %s488 = scalar_lea.vmem %s2, 384
  %489 = vst [vmem:[%s488] sm:$0xff] %v486
  %s490 = scalar_lea.vmem %s0, 392
  %v491 = vld [vmem:[%s490] sm:$0xff]
  %s492 = scalar_lea.vmem %s1, 392
  %v493 = vld [vmem:[%s492] sm:$0xff]
  %494 = xla_tuple %v491, %v493
  %495 = xla_tuple %494
  %v496 = vmul.f32 %v491, %v493
  %497 = xla_tuple %v496
  %s498 = scalar_lea.vmem %s2, 392
  %499 = vst [vmem:[%s498] sm:$0xff] %v496
  %s500 = scalar_lea.vmem %s0, 400
  %v501 = vld [vmem:[%s500] sm:$0xff]
  %s502 = scalar_lea.vmem %s1, 400
  %v503 = vld [vmem:[%s502] sm:$0xff]
  %504 = xla_tuple %v501, %v503
  %505 = xla_tuple %504
  %v506 = vmul.f32 %v501, %v503
  %507 = xla_tuple %v506
  %s508 = scalar_lea.vmem %s2, 400
  %509 = vst [vmem:[%s508] sm:$0xff] %v506
  %s510 = scalar_lea.vmem %s0, 408
  %v511 = vld [vmem:[%s510] sm:$0xff]
  %s512 = scalar_lea.vmem %s1, 408
  %v513 = vld [vmem:[%s512] sm:$0xff]
  %514 = xla_tuple %v511, %v513
  %515 = xla_tuple %514
  %v516 = vmul.f32 %v511, %v513
  %517 = xla_tuple %v516
  %s518 = scalar_lea.vmem %s2, 408
  %519 = vst [vmem:[%s518] sm:$0xff] %v516
  %s520 = scalar_lea.vmem %s0, 416
  %v521 = vld [vmem:[%s520] sm:$0xff]
  %s522 = scalar_lea.vmem %s1, 416
  %v523 = vld [vmem:[%s522] sm:$0xff]
  %524 = xla_tuple %v521, %v523
  %525 = xla_tuple %524
  %v526 = vmul.f32 %v521, %v523
  %527 = xla_tuple %v526
  %s528 = scalar_lea.vmem %s2, 416
  %529 = vst [vmem:[%s528] sm:$0xff] %v526
  %s530 = scalar_lea.vmem %s0, 424
  %v531 = vld [vmem:[%s530] sm:$0xff]
  %s532 = scalar_lea.vmem %s1, 424
  %v533 = vld [vmem:[%s532] sm:$0xff]
  %534 = xla_tuple %v531, %v533
  %535 = xla_tuple %534
  %v536 = vmul.f32 %v531, %v533
  %537 = xla_tuple %v536
  %s538 = scalar_lea.vmem %s2, 424
  %539 = vst [vmem:[%s538] sm:$0xff] %v536
  %s540 = scalar_lea.vmem %s0, 432
  %v541 = vld [vmem:[%s540] sm:$0xff]
  %s542 = scalar_lea.vmem %s1, 432
  %v543 = vld [vmem:[%s542] sm:$0xff]
  %544 = xla_tuple %v541, %v543
  %545 = xla_tuple %544
  %v546 = vmul.f32 %v541, %v543
  %547 = xla_tuple %v546
  %s548 = scalar_lea.vmem %s2, 432
  %549 = vst [vmem:[%s548] sm:$0xff] %v546
  %s550 = scalar_lea.vmem %s0, 440
  %v551 = vld [vmem:[%s550] sm:$0xff]
  %s552 = scalar_lea.vmem %s1, 440
  %v553 = vld [vmem:[%s552] sm:$0xff]
  %554 = xla_tuple %v551, %v553
  %555 = xla_tuple %554
  %v556 = vmul.f32 %v551, %v553
  %557 = xla_tuple %v556
  %s558 = scalar_lea.vmem %s2, 440
  %559 = vst [vmem:[%s558] sm:$0xff] %v556
  %s560 = scalar_lea.vmem %s0, 448
  %v561 = vld [vmem:[%s560] sm:$0xff]
  %s562 = scalar_lea.vmem %s1, 448
  %v563 = vld [vmem:[%s562] sm:$0xff]
  %564 = xla_tuple %v561, %v563
  %565 = xla_tuple %564
  %v566 = vmul.f32 %v561, %v563
  %567 = xla_tuple %v566
  %s568 = scalar_lea.vmem %s2, 448
  %569 = vst [vmem:[%s568] sm:$0xff] %v566
  %s570 = scalar_lea.vmem %s0, 456
  %v571 = vld [vmem:[%s570] sm:$0xff]
  %s572 = scalar_lea.vmem %s1, 456
  %v573 = vld [vmem:[%s572] sm:$0xff]
  %574 = xla_tuple %v571, %v573
  %575 = xla_tuple %574
  %v576 = vmul.f32 %v571, %v573
  %577 = xla_tuple %v576
  %s578 = scalar_lea.vmem %s2, 456
  %579 = vst [vmem:[%s578] sm:$0xff] %v576
  %s580 = scalar_lea.vmem %s0, 464
  %v581 = vld [vmem:[%s580] sm:$0xff]
  %s582 = scalar_lea.vmem %s1, 464
  %v583 = vld [vmem:[%s582] sm:$0xff]
  %584 = xla_tuple %v581, %v583
  %585 = xla_tuple %584
  %v586 = vmul.f32 %v581, %v583
  %587 = xla_tuple %v586
  %s588 = scalar_lea.vmem %s2, 464
  %589 = vst [vmem:[%s588] sm:$0xff] %v586
  %s590 = scalar_lea.vmem %s0, 472
  %v591 = vld [vmem:[%s590] sm:$0xff]
  %s592 = scalar_lea.vmem %s1, 472
  %v593 = vld [vmem:[%s592] sm:$0xff]
  %594 = xla_tuple %v591, %v593
  %595 = xla_tuple %594
  %v596 = vmul.f32 %v591, %v593
  %597 = xla_tuple %v596
  %s598 = scalar_lea.vmem %s2, 472
  %599 = vst [vmem:[%s598] sm:$0xff] %v596
  %s600 = scalar_lea.vmem %s0, 480
  %v601 = vld [vmem:[%s600] sm:$0xff]
  %s602 = scalar_lea.vmem %s1, 480
  %v603 = vld [vmem:[%s602] sm:$0xff]
  %604 = xla_tuple %v601, %v603
  %605 = xla_tuple %604
  %v606 = vmul.f32 %v601, %v603
  %607 = xla_tuple %v606
  %s608 = scalar_lea.vmem %s2, 480
  %609 = vst [vmem:[%s608] sm:$0xff] %v606
  %s610 = scalar_lea.vmem %s0, 488
  %v611 = vld [vmem:[%s610] sm:$0xff]
  %s612 = scalar_lea.vmem %s1, 488
  %v613 = vld [vmem:[%s612] sm:$0xff]
  %614 = xla_tuple %v611, %v613
  %615 = xla_tuple %614
  %v616 = vmul.f32 %v611, %v613
  %617 = xla_tuple %v616
  %s618 = scalar_lea.vmem %s2, 488
  %619 = vst [vmem:[%s618] sm:$0xff] %v616
  %s620 = scalar_lea.vmem %s0, 496
  %v621 = vld [vmem:[%s620] sm:$0xff]
  %s622 = scalar_lea.vmem %s1, 496
  %v623 = vld [vmem:[%s622] sm:$0xff]
  %624 = xla_tuple %v621, %v623
  %625 = xla_tuple %624
  %v626 = vmul.f32 %v621, %v623
  %627 = xla_tuple %v626
  %s628 = scalar_lea.vmem %s2, 496
  %629 = vst [vmem:[%s628] sm:$0xff] %v626
  %s630 = scalar_lea.vmem %s0, 504
  %v631 = vld [vmem:[%s630] sm:$0xff]
  %s632 = scalar_lea.vmem %s1, 504
  %v633 = vld [vmem:[%s632] sm:$0xff]
  %634 = xla_tuple %v631, %v633
  %635 = xla_tuple %634
  %v636 = vmul.f32 %v631, %v633
  %637 = xla_tuple %v636
  %s638 = scalar_lea.vmem %s2, 504
  %639 = vst [vmem:[%s638] sm:$0xff] %v636
  %s640 = scalar_lea.vmem %s0, 512
  %v641 = vld [vmem:[%s640] sm:$0xff]
  %s642 = scalar_lea.vmem %s1, 512
  %v643 = vld [vmem:[%s642] sm:$0xff]
  %644 = xla_tuple %v641, %v643
  %645 = xla_tuple %644
  %v646 = vmul.f32 %v641, %v643
  %647 = xla_tuple %v646
  %s648 = scalar_lea.vmem %s2, 512
  %649 = vst [vmem:[%s648] sm:$0xff] %v646
  %s650 = scalar_lea.vmem %s0, 520
  %v651 = vld [vmem:[%s650] sm:$0xff]
  %s652 = scalar_lea.vmem %s1, 520
  %v653 = vld [vmem:[%s652] sm:$0xff]
  %654 = xla_tuple %v651, %v653
  %655 = xla_tuple %654
  %v656 = vmul.f32 %v651, %v653
  %657 = xla_tuple %v656
  %s658 = scalar_lea.vmem %s2, 520
  %659 = vst [vmem:[%s658] sm:$0xff] %v656
  %s660 = scalar_lea.vmem %s0, 528
  %v661 = vld [vmem:[%s660] sm:$0xff]
  %s662 = scalar_lea.vmem %s1, 528
  %v663 = vld [vmem:[%s662] sm:$0xff]
  %664 = xla_tuple %v661, %v663
  %665 = xla_tuple %664
  %v666 = vmul.f32 %v661, %v663
  %667 = xla_tuple %v666
  %s668 = scalar_lea.vmem %s2, 528
  %669 = vst [vmem:[%s668] sm:$0xff] %v666
  %s670 = scalar_lea.vmem %s0, 536
  %v671 = vld [vmem:[%s670] sm:$0xff]
  %s672 = scalar_lea.vmem %s1, 536
  %v673 = vld [vmem:[%s672] sm:$0xff]
  %674 = xla_tuple %v671, %v673
  %675 = xla_tuple %674
  %v676 = vmul.f32 %v671, %v673
  %677 = xla_tuple %v676
  %s678 = scalar_lea.vmem %s2, 536
  %679 = vst [vmem:[%s678] sm:$0xff] %v676
  %s680 = scalar_lea.vmem %s0, 544
  %v681 = vld [vmem:[%s680] sm:$0xff]
  %s682 = scalar_lea.vmem %s1, 544
  %v683 = vld [vmem:[%s682] sm:$0xff]
  %684 = xla_tuple %v681, %v683
  %685 = xla_tuple %684
  %v686 = vmul.f32 %v681, %v683
  %687 = xla_tuple %v686
  %s688 = scalar_lea.vmem %s2, 544
  %689 = vst [vmem:[%s688] sm:$0xff] %v686
  %s690 = scalar_lea.vmem %s0, 552
  %v691 = vld [vmem:[%s690] sm:$0xff]
  %s692 = scalar_lea.vmem %s1, 552
  %v693 = vld [vmem:[%s692] sm:$0xff]
  %694 = xla_tuple %v691, %v693
  %695 = xla_tuple %694
  %v696 = vmul.f32 %v691, %v693
  %697 = xla_tuple %v696
  %s698 = scalar_lea.vmem %s2, 552
  %699 = vst [vmem:[%s698] sm:$0xff] %v696
  %s700 = scalar_lea.vmem %s0, 560
  %v701 = vld [vmem:[%s700] sm:$0xff]
  %s702 = scalar_lea.vmem %s1, 560
  %v703 = vld [vmem:[%s702] sm:$0xff]
  %704 = xla_tuple %v701, %v703
  %705 = xla_tuple %704
  %v706 = vmul.f32 %v701, %v703
  %707 = xla_tuple %v706
  %s708 = scalar_lea.vmem %s2, 560
  %709 = vst [vmem:[%s708] sm:$0xff] %v706
  %s710 = scalar_lea.vmem %s0, 568
  %v711 = vld [vmem:[%s710] sm:$0xff]
  %s712 = scalar_lea.vmem %s1, 568
  %v713 = vld [vmem:[%s712] sm:$0xff]
  %714 = xla_tuple %v711, %v713
  %715 = xla_tuple %714
  %v716 = vmul.f32 %v711, %v713
  %717 = xla_tuple %v716
  %s718 = scalar_lea.vmem %s2, 568
  %719 = vst [vmem:[%s718] sm:$0xff] %v716
  %s720 = scalar_lea.vmem %s0, 576
  %v721 = vld [vmem:[%s720] sm:$0xff]
  %s722 = scalar_lea.vmem %s1, 576
  %v723 = vld [vmem:[%s722] sm:$0xff]
  %724 = xla_tuple %v721, %v723
  %725 = xla_tuple %724
  %v726 = vmul.f32 %v721, %v723
  %727 = xla_tuple %v726
  %s728 = scalar_lea.vmem %s2, 576
  %729 = vst [vmem:[%s728] sm:$0xff] %v726
  %s730 = scalar_lea.vmem %s0, 584
  %v731 = vld [vmem:[%s730] sm:$0xff]
  %s732 = scalar_lea.vmem %s1, 584
  %v733 = vld [vmem:[%s732] sm:$0xff]
  %734 = xla_tuple %v731, %v733
  %735 = xla_tuple %734
  %v736 = vmul.f32 %v731, %v733
  %737 = xla_tuple %v736
  %s738 = scalar_lea.vmem %s2, 584
  %739 = vst [vmem:[%s738] sm:$0xff] %v736
  %s740 = scalar_lea.vmem %s0, 592
  %v741 = vld [vmem:[%s740] sm:$0xff]
  %s742 = scalar_lea.vmem %s1, 592
  %v743 = vld [vmem:[%s742] sm:$0xff]
  %744 = xla_tuple %v741, %v743
  %745 = xla_tuple %744
  %v746 = vmul.f32 %v741, %v743
  %747 = xla_tuple %v746
  %s748 = scalar_lea.vmem %s2, 592
  %749 = vst [vmem:[%s748] sm:$0xff] %v746
  %s750 = scalar_lea.vmem %s0, 600
  %v751 = vld [vmem:[%s750] sm:$0xff]
  %s752 = scalar_lea.vmem %s1, 600
  %v753 = vld [vmem:[%s752] sm:$0xff]
  %754 = xla_tuple %v751, %v753
  %755 = xla_tuple %754
  %v756 = vmul.f32 %v751, %v753
  %757 = xla_tuple %v756
  %s758 = scalar_lea.vmem %s2, 600
  %759 = vst [vmem:[%s758] sm:$0xff] %v756
  %s760 = scalar_lea.vmem %s0, 608
  %v761 = vld [vmem:[%s760] sm:$0xff]
  %s762 = scalar_lea.vmem %s1, 608
  %v763 = vld [vmem:[%s762] sm:$0xff]
  %764 = xla_tuple %v761, %v763
  %765 = xla_tuple %764
  %v766 = vmul.f32 %v761, %v763
  %767 = xla_tuple %v766
  %s768 = scalar_lea.vmem %s2, 608
  %769 = vst [vmem:[%s768] sm:$0xff] %v766
  %s770 = scalar_lea.vmem %s0, 616
  %v771 = vld [vmem:[%s770] sm:$0xff]
  %s772 = scalar_lea.vmem %s1, 616
  %v773 = vld [vmem:[%s772] sm:$0xff]
  %774 = xla_tuple %v771, %v773
  %775 = xla_tuple %774
  %v776 = vmul.f32 %v771, %v773
  %777 = xla_tuple %v776
  %s778 = scalar_lea.vmem %s2, 616
  %779 = vst [vmem:[%s778] sm:$0xff] %v776
  %s780 = scalar_lea.vmem %s0, 624
  %v781 = vld [vmem:[%s780] sm:$0xff]
  %s782 = scalar_lea.vmem %s1, 624
  %v783 = vld [vmem:[%s782] sm:$0xff]
  %784 = xla_tuple %v781, %v783
  %785 = xla_tuple %784
  %v786 = vmul.f32 %v781, %v783
  %787 = xla_tuple %v786
  %s788 = scalar_lea.vmem %s2, 624
  %789 = vst [vmem:[%s788] sm:$0xff] %v786
  %s790 = scalar_lea.vmem %s0, 632
  %v791 = vld [vmem:[%s790] sm:$0xff]
  %s792 = scalar_lea.vmem %s1, 632
  %v793 = vld [vmem:[%s792] sm:$0xff]
  %794 = xla_tuple %v791, %v793
  %795 = xla_tuple %794
  %v796 = vmul.f32 %v791, %v793
  %797 = xla_tuple %v796
  %s798 = scalar_lea.vmem %s2, 632
  %799 = vst [vmem:[%s798] sm:$0xff] %v796
  %s800 = scalar_lea.vmem %s0, 640
  %v801 = vld [vmem:[%s800] sm:$0xff]
  %s802 = scalar_lea.vmem %s1, 640
  %v803 = vld [vmem:[%s802] sm:$0xff]
  %804 = xla_tuple %v801, %v803
  %805 = xla_tuple %804
  %v806 = vmul.f32 %v801, %v803
  %807 = xla_tuple %v806
  %s808 = scalar_lea.vmem %s2, 640
  %809 = vst [vmem:[%s808] sm:$0xff] %v806
  %s810 = scalar_lea.vmem %s0, 648
  %v811 = vld [vmem:[%s810] sm:$0xff]
  %s812 = scalar_lea.vmem %s1, 648
  %v813 = vld [vmem:[%s812] sm:$0xff]
  %814 = xla_tuple %v811, %v813
  %815 = xla_tuple %814
  %v816 = vmul.f32 %v811, %v813
  %817 = xla_tuple %v816
  %s818 = scalar_lea.vmem %s2, 648
  %819 = vst [vmem:[%s818] sm:$0xff] %v816
  %s820 = scalar_lea.vmem %s0, 656
  %v821 = vld [vmem:[%s820] sm:$0xff]
  %s822 = scalar_lea.vmem %s1, 656
  %v823 = vld [vmem:[%s822] sm:$0xff]
  %824 = xla_tuple %v821, %v823
  %825 = xla_tuple %824
  %v826 = vmul.f32 %v821, %v823
  %827 = xla_tuple %v826
  %s828 = scalar_lea.vmem %s2, 656
  %829 = vst [vmem:[%s828] sm:$0xff] %v826
  %s830 = scalar_lea.vmem %s0, 664
  %v831 = vld [vmem:[%s830] sm:$0xff]
  %s832 = scalar_lea.vmem %s1, 664
  %v833 = vld [vmem:[%s832] sm:$0xff]
  %834 = xla_tuple %v831, %v833
  %835 = xla_tuple %834
  %v836 = vmul.f32 %v831, %v833
  %837 = xla_tuple %v836
  %s838 = scalar_lea.vmem %s2, 664
  %839 = vst [vmem:[%s838] sm:$0xff] %v836
  %s840 = scalar_lea.vmem %s0, 672
  %v841 = vld [vmem:[%s840] sm:$0xff]
  %s842 = scalar_lea.vmem %s1, 672
  %v843 = vld [vmem:[%s842] sm:$0xff]
  %844 = xla_tuple %v841, %v843
  %845 = xla_tuple %844
  %v846 = vmul.f32 %v841, %v843
  %847 = xla_tuple %v846
  %s848 = scalar_lea.vmem %s2, 672
  %849 = vst [vmem:[%s848] sm:$0xff] %v846
  %s850 = scalar_lea.vmem %s0, 680
  %v851 = vld [vmem:[%s850] sm:$0xff]
  %s852 = scalar_lea.vmem %s1, 680
  %v853 = vld [vmem:[%s852] sm:$0xff]
  %854 = xla_tuple %v851, %v853
  %855 = xla_tuple %854
  %v856 = vmul.f32 %v851, %v853
  %857 = xla_tuple %v856
  %s858 = scalar_lea.vmem %s2, 680
  %859 = vst [vmem:[%s858] sm:$0xff] %v856
  %s860 = scalar_lea.vmem %s0, 688
  %v861 = vld [vmem:[%s860] sm:$0xff]
  %s862 = scalar_lea.vmem %s1, 688
  %v863 = vld [vmem:[%s862] sm:$0xff]
  %864 = xla_tuple %v861, %v863
  %865 = xla_tuple %864
  %v866 = vmul.f32 %v861, %v863
  %867 = xla_tuple %v866
  %s868 = scalar_lea.vmem %s2, 688
  %869 = vst [vmem:[%s868] sm:$0xff] %v866
  %s870 = scalar_lea.vmem %s0, 696
  %v871 = vld [vmem:[%s870] sm:$0xff]
  %s872 = scalar_lea.vmem %s1, 696
  %v873 = vld [vmem:[%s872] sm:$0xff]
  %874 = xla_tuple %v871, %v873
  %875 = xla_tuple %874
  %v876 = vmul.f32 %v871, %v873
  %877 = xla_tuple %v876
  %s878 = scalar_lea.vmem %s2, 696
  %879 = vst [vmem:[%s878] sm:$0xff] %v876
  %s880 = scalar_lea.vmem %s0, 704
  %v881 = vld [vmem:[%s880] sm:$0xff]
  %s882 = scalar_lea.vmem %s1, 704
  %v883 = vld [vmem:[%s882] sm:$0xff]
  %884 = xla_tuple %v881, %v883
  %885 = xla_tuple %884
  %v886 = vmul.f32 %v881, %v883
  %887 = xla_tuple %v886
  %s888 = scalar_lea.vmem %s2, 704
  %889 = vst [vmem:[%s888] sm:$0xff] %v886
  %s890 = scalar_lea.vmem %s0, 712
  %v891 = vld [vmem:[%s890] sm:$0xff]
  %s892 = scalar_lea.vmem %s1, 712
  %v893 = vld [vmem:[%s892] sm:$0xff]
  %894 = xla_tuple %v891, %v893
  %895 = xla_tuple %894
  %v896 = vmul.f32 %v891, %v893
  %897 = xla_tuple %v896
  %s898 = scalar_lea.vmem %s2, 712
  %899 = vst [vmem:[%s898] sm:$0xff] %v896
  %s900 = scalar_lea.vmem %s0, 720
  %v901 = vld [vmem:[%s900] sm:$0xff]
  %s902 = scalar_lea.vmem %s1, 720
  %v903 = vld [vmem:[%s902] sm:$0xff]
  %904 = xla_tuple %v901, %v903
  %905 = xla_tuple %904
  %v906 = vmul.f32 %v901, %v903
  %907 = xla_tuple %v906
  %s908 = scalar_lea.vmem %s2, 720
  %909 = vst [vmem:[%s908] sm:$0xff] %v906
  %s910 = scalar_lea.vmem %s0, 728
  %v911 = vld [vmem:[%s910] sm:$0xff]
  %s912 = scalar_lea.vmem %s1, 728
  %v913 = vld [vmem:[%s912] sm:$0xff]
  %914 = xla_tuple %v911, %v913
  %915 = xla_tuple %914
  %v916 = vmul.f32 %v911, %v913
  %917 = xla_tuple %v916
  %s918 = scalar_lea.vmem %s2, 728
  %919 = vst [vmem:[%s918] sm:$0xff] %v916
  %s920 = scalar_lea.vmem %s0, 736
  %v921 = vld [vmem:[%s920] sm:$0xff]
  %s922 = scalar_lea.vmem %s1, 736
  %v923 = vld [vmem:[%s922] sm:$0xff]
  %924 = xla_tuple %v921, %v923
  %925 = xla_tuple %924
  %v926 = vmul.f32 %v921, %v923
  %927 = xla_tuple %v926
  %s928 = scalar_lea.vmem %s2, 736
  %929 = vst [vmem:[%s928] sm:$0xff] %v926
  %s930 = scalar_lea.vmem %s0, 744
  %v931 = vld [vmem:[%s930] sm:$0xff]
  %s932 = scalar_lea.vmem %s1, 744
  %v933 = vld [vmem:[%s932] sm:$0xff]
  %934 = xla_tuple %v931, %v933
  %935 = xla_tuple %934
  %v936 = vmul.f32 %v931, %v933
  %937 = xla_tuple %v936
  %s938 = scalar_lea.vmem %s2, 744
  %939 = vst [vmem:[%s938] sm:$0xff] %v936
  %s940 = scalar_lea.vmem %s0, 752
  %v941 = vld [vmem:[%s940] sm:$0xff]
  %s942 = scalar_lea.vmem %s1, 752
  %v943 = vld [vmem:[%s942] sm:$0xff]
  %944 = xla_tuple %v941, %v943
  %945 = xla_tuple %944
  %v946 = vmul.f32 %v941, %v943
  %947 = xla_tuple %v946
  %s948 = scalar_lea.vmem %s2, 752
  %949 = vst [vmem:[%s948] sm:$0xff] %v946
  %s950 = scalar_lea.vmem %s0, 760
  %v951 = vld [vmem:[%s950] sm:$0xff]
  %s952 = scalar_lea.vmem %s1, 760
  %v953 = vld [vmem:[%s952] sm:$0xff]
  %954 = xla_tuple %v951, %v953
  %955 = xla_tuple %954
  %v956 = vmul.f32 %v951, %v953
  %957 = xla_tuple %v956
  %s958 = scalar_lea.vmem %s2, 760
  %959 = vst [vmem:[%s958] sm:$0xff] %v956
  %s960 = scalar_lea.vmem %s0, 768
  %v961 = vld [vmem:[%s960] sm:$0xff]
  %s962 = scalar_lea.vmem %s1, 768
  %v963 = vld [vmem:[%s962] sm:$0xff]
  %964 = xla_tuple %v961, %v963
  %965 = xla_tuple %964
  %v966 = vmul.f32 %v961, %v963
  %967 = xla_tuple %v966
  %s968 = scalar_lea.vmem %s2, 768
  %969 = vst [vmem:[%s968] sm:$0xff] %v966
  %s970 = scalar_lea.vmem %s0, 776
  %v971 = vld [vmem:[%s970] sm:$0xff]
  %s972 = scalar_lea.vmem %s1, 776
  %v973 = vld [vmem:[%s972] sm:$0xff]
  %974 = xla_tuple %v971, %v973
  %975 = xla_tuple %974
  %v976 = vmul.f32 %v971, %v973
  %977 = xla_tuple %v976
  %s978 = scalar_lea.vmem %s2, 776
  %979 = vst [vmem:[%s978] sm:$0xff] %v976
  %s980 = scalar_lea.vmem %s0, 784
  %v981 = vld [vmem:[%s980] sm:$0xff]
  %s982 = scalar_lea.vmem %s1, 784
  %v983 = vld [vmem:[%s982] sm:$0xff]
  %984 = xla_tuple %v981, %v983
  %985 = xla_tuple %984
  %v986 = vmul.f32 %v981, %v983
  %987 = xla_tuple %v986
  %s988 = scalar_lea.vmem %s2, 784
  %989 = vst [vmem:[%s988] sm:$0xff] %v986
  %s990 = scalar_lea.vmem %s0, 792
  %v991 = vld [vmem:[%s990] sm:$0xff]
  %s992 = scalar_lea.vmem %s1, 792
  %v993 = vld [vmem:[%s992] sm:$0xff]
  %994 = xla_tuple %v991, %v993
  %995 = xla_tuple %994
  %v996 = vmul.f32 %v991, %v993
  %997 = xla_tuple %v996
  %s998 = scalar_lea.vmem %s2, 792
  %999 = vst [vmem:[%s998] sm:$0xff] %v996
  %s1000 = scalar_lea.vmem %s0, 800
  %v1001 = vld [vmem:[%s1000] sm:$0xff]
  %s1002 = scalar_lea.vmem %s1, 800
  %v1003 = vld [vmem:[%s1002] sm:$0xff]
  %1004 = xla_tuple %v1001, %v1003
  %1005 = xla_tuple %1004
  %v1006 = vmul.f32 %v1001, %v1003
  %1007 = xla_tuple %v1006
  %s1008 = scalar_lea.vmem %s2, 800
  %1009 = vst [vmem:[%s1008] sm:$0xff] %v1006
  %s1010 = scalar_lea.vmem %s0, 808
  %v1011 = vld [vmem:[%s1010] sm:$0xff]
  %s1012 = scalar_lea.vmem %s1, 808
  %v1013 = vld [vmem:[%s1012] sm:$0xff]
  %1014 = xla_tuple %v1011, %v1013
  %1015 = xla_tuple %1014
  %v1016 = vmul.f32 %v1011, %v1013
  %1017 = xla_tuple %v1016
  %s1018 = scalar_lea.vmem %s2, 808
  %1019 = vst [vmem:[%s1018] sm:$0xff] %v1016
  %s1020 = scalar_lea.vmem %s0, 816
  %v1021 = vld [vmem:[%s1020] sm:$0xff]
  %s1022 = scalar_lea.vmem %s1, 816
  %v1023 = vld [vmem:[%s1022] sm:$0xff]
  %1024 = xla_tuple %v1021, %v1023
  %1025 = xla_tuple %1024
  %v1026 = vmul.f32 %v1021, %v1023
  %1027 = xla_tuple %v1026
  %s1028 = scalar_lea.vmem %s2, 816
  %1029 = vst [vmem:[%s1028] sm:$0xff] %v1026
  %s1030 = scalar_lea.vmem %s0, 824
  %v1031 = vld [vmem:[%s1030] sm:$0xff]
  %s1032 = scalar_lea.vmem %s1, 824
  %v1033 = vld [vmem:[%s1032] sm:$0xff]
  %1034 = xla_tuple %v1031, %v1033
  %1035 = xla_tuple %1034
  %v1036 = vmul.f32 %v1031, %v1033
  %1037 = xla_tuple %v1036
  %s1038 = scalar_lea.vmem %s2, 824
  %1039 = vst [vmem:[%s1038] sm:$0xff] %v1036
  %s1040 = scalar_lea.vmem %s0, 832
  %v1041 = vld [vmem:[%s1040] sm:$0xff]
  %s1042 = scalar_lea.vmem %s1, 832
  %v1043 = vld [vmem:[%s1042] sm:$0xff]
  %1044 = xla_tuple %v1041, %v1043
  %1045 = xla_tuple %1044
  %v1046 = vmul.f32 %v1041, %v1043
  %1047 = xla_tuple %v1046
  %s1048 = scalar_lea.vmem %s2, 832
  %1049 = vst [vmem:[%s1048] sm:$0xff] %v1046
  %s1050 = scalar_lea.vmem %s0, 840
  %v1051 = vld [vmem:[%s1050] sm:$0xff]
  %s1052 = scalar_lea.vmem %s1, 840
  %v1053 = vld [vmem:[%s1052] sm:$0xff]
  %1054 = xla_tuple %v1051, %v1053
  %1055 = xla_tuple %1054
  %v1056 = vmul.f32 %v1051, %v1053
  %1057 = xla_tuple %v1056
  %s1058 = scalar_lea.vmem %s2, 840
  %1059 = vst [vmem:[%s1058] sm:$0xff] %v1056
  %s1060 = scalar_lea.vmem %s0, 848
  %v1061 = vld [vmem:[%s1060] sm:$0xff]
  %s1062 = scalar_lea.vmem %s1, 848
  %v1063 = vld [vmem:[%s1062] sm:$0xff]
  %1064 = xla_tuple %v1061, %v1063
  %1065 = xla_tuple %1064
  %v1066 = vmul.f32 %v1061, %v1063
  %1067 = xla_tuple %v1066
  %s1068 = scalar_lea.vmem %s2, 848
  %1069 = vst [vmem:[%s1068] sm:$0xff] %v1066
  %s1070 = scalar_lea.vmem %s0, 856
  %v1071 = vld [vmem:[%s1070] sm:$0xff]
  %s1072 = scalar_lea.vmem %s1, 856
  %v1073 = vld [vmem:[%s1072] sm:$0xff]
  %1074 = xla_tuple %v1071, %v1073
  %1075 = xla_tuple %1074
  %v1076 = vmul.f32 %v1071, %v1073
  %1077 = xla_tuple %v1076
  %s1078 = scalar_lea.vmem %s2, 856
  %1079 = vst [vmem:[%s1078] sm:$0xff] %v1076
  %s1080 = scalar_lea.vmem %s0, 864
  %v1081 = vld [vmem:[%s1080] sm:$0xff]
  %s1082 = scalar_lea.vmem %s1, 864
  %v1083 = vld [vmem:[%s1082] sm:$0xff]
  %1084 = xla_tuple %v1081, %v1083
  %1085 = xla_tuple %1084
  %v1086 = vmul.f32 %v1081, %v1083
  %1087 = xla_tuple %v1086
  %s1088 = scalar_lea.vmem %s2, 864
  %1089 = vst [vmem:[%s1088] sm:$0xff] %v1086
  %s1090 = scalar_lea.vmem %s0, 872
  %v1091 = vld [vmem:[%s1090] sm:$0xff]
  %s1092 = scalar_lea.vmem %s1, 872
  %v1093 = vld [vmem:[%s1092] sm:$0xff]
  %1094 = xla_tuple %v1091, %v1093
  %1095 = xla_tuple %1094
  %v1096 = vmul.f32 %v1091, %v1093
  %1097 = xla_tuple %v1096
  %s1098 = scalar_lea.vmem %s2, 872
  %1099 = vst [vmem:[%s1098] sm:$0xff] %v1096
  %s1100 = scalar_lea.vmem %s0, 880
  %v1101 = vld [vmem:[%s1100] sm:$0xff]
  %s1102 = scalar_lea.vmem %s1, 880
  %v1103 = vld [vmem:[%s1102] sm:$0xff]
  %1104 = xla_tuple %v1101, %v1103
  %1105 = xla_tuple %1104
  %v1106 = vmul.f32 %v1101, %v1103
  %1107 = xla_tuple %v1106
  %s1108 = scalar_lea.vmem %s2, 880
  %1109 = vst [vmem:[%s1108] sm:$0xff] %v1106
  %s1110 = scalar_lea.vmem %s0, 888
  %v1111 = vld [vmem:[%s1110] sm:$0xff]
  %s1112 = scalar_lea.vmem %s1, 888
  %v1113 = vld [vmem:[%s1112] sm:$0xff]
  %1114 = xla_tuple %v1111, %v1113
  %1115 = xla_tuple %1114
  %v1116 = vmul.f32 %v1111, %v1113
  %1117 = xla_tuple %v1116
  %s1118 = scalar_lea.vmem %s2, 888
  %1119 = vst [vmem:[%s1118] sm:$0xff] %v1116
  %s1120 = scalar_lea.vmem %s0, 896
  %v1121 = vld [vmem:[%s1120] sm:$0xff]
  %s1122 = scalar_lea.vmem %s1, 896
  %v1123 = vld [vmem:[%s1122] sm:$0xff]
  %1124 = xla_tuple %v1121, %v1123
  %1125 = xla_tuple %1124
  %v1126 = vmul.f32 %v1121, %v1123
  %1127 = xla_tuple %v1126
  %s1128 = scalar_lea.vmem %s2, 896
  %1129 = vst [vmem:[%s1128] sm:$0xff] %v1126
  %s1130 = scalar_lea.vmem %s0, 904
  %v1131 = vld [vmem:[%s1130] sm:$0xff]
  %s1132 = scalar_lea.vmem %s1, 904
  %v1133 = vld [vmem:[%s1132] sm:$0xff]
  %1134 = xla_tuple %v1131, %v1133
  %1135 = xla_tuple %1134
  %v1136 = vmul.f32 %v1131, %v1133
  %1137 = xla_tuple %v1136
  %s1138 = scalar_lea.vmem %s2, 904
  %1139 = vst [vmem:[%s1138] sm:$0xff] %v1136
  %s1140 = scalar_lea.vmem %s0, 912
  %v1141 = vld [vmem:[%s1140] sm:$0xff]
  %s1142 = scalar_lea.vmem %s1, 912
  %v1143 = vld [vmem:[%s1142] sm:$0xff]
  %1144 = xla_tuple %v1141, %v1143
  %1145 = xla_tuple %1144
  %v1146 = vmul.f32 %v1141, %v1143
  %1147 = xla_tuple %v1146
  %s1148 = scalar_lea.vmem %s2, 912
  %1149 = vst [vmem:[%s1148] sm:$0xff] %v1146
  %s1150 = scalar_lea.vmem %s0, 920
  %v1151 = vld [vmem:[%s1150] sm:$0xff]
  %s1152 = scalar_lea.vmem %s1, 920
  %v1153 = vld [vmem:[%s1152] sm:$0xff]
  %1154 = xla_tuple %v1151, %v1153
  %1155 = xla_tuple %1154
  %v1156 = vmul.f32 %v1151, %v1153
  %1157 = xla_tuple %v1156
  %s1158 = scalar_lea.vmem %s2, 920
  %1159 = vst [vmem:[%s1158] sm:$0xff] %v1156
  %s1160 = scalar_lea.vmem %s0, 928
  %v1161 = vld [vmem:[%s1160] sm:$0xff]
  %s1162 = scalar_lea.vmem %s1, 928
  %v1163 = vld [vmem:[%s1162] sm:$0xff]
  %1164 = xla_tuple %v1161, %v1163
  %1165 = xla_tuple %1164
  %v1166 = vmul.f32 %v1161, %v1163
  %1167 = xla_tuple %v1166
  %s1168 = scalar_lea.vmem %s2, 928
  %1169 = vst [vmem:[%s1168] sm:$0xff] %v1166
  %s1170 = scalar_lea.vmem %s0, 936
  %v1171 = vld [vmem:[%s1170] sm:$0xff]
  %s1172 = scalar_lea.vmem %s1, 936
  %v1173 = vld [vmem:[%s1172] sm:$0xff]
  %1174 = xla_tuple %v1171, %v1173
  %1175 = xla_tuple %1174
  %v1176 = vmul.f32 %v1171, %v1173
  %1177 = xla_tuple %v1176
  %s1178 = scalar_lea.vmem %s2, 936
  %1179 = vst [vmem:[%s1178] sm:$0xff] %v1176
  %s1180 = scalar_lea.vmem %s0, 944
  %v1181 = vld [vmem:[%s1180] sm:$0xff]
  %s1182 = scalar_lea.vmem %s1, 944
  %v1183 = vld [vmem:[%s1182] sm:$0xff]
  %1184 = xla_tuple %v1181, %v1183
  %1185 = xla_tuple %1184
  %v1186 = vmul.f32 %v1181, %v1183
  %1187 = xla_tuple %v1186
  %s1188 = scalar_lea.vmem %s2, 944
  %1189 = vst [vmem:[%s1188] sm:$0xff] %v1186
  %s1190 = scalar_lea.vmem %s0, 952
  %v1191 = vld [vmem:[%s1190] sm:$0xff]
  %s1192 = scalar_lea.vmem %s1, 952
  %v1193 = vld [vmem:[%s1192] sm:$0xff]
  %1194 = xla_tuple %v1191, %v1193
  %1195 = xla_tuple %1194
  %v1196 = vmul.f32 %v1191, %v1193
  %1197 = xla_tuple %v1196
  %s1198 = scalar_lea.vmem %s2, 952
  %1199 = vst [vmem:[%s1198] sm:$0xff] %v1196
  %s1200 = scalar_lea.vmem %s0, 960
  %v1201 = vld [vmem:[%s1200] sm:$0xff]
  %s1202 = scalar_lea.vmem %s1, 960
  %v1203 = vld [vmem:[%s1202] sm:$0xff]
  %1204 = xla_tuple %v1201, %v1203
  %1205 = xla_tuple %1204
  %v1206 = vmul.f32 %v1201, %v1203
  %1207 = xla_tuple %v1206
  %s1208 = scalar_lea.vmem %s2, 960
  %1209 = vst [vmem:[%s1208] sm:$0xff] %v1206
  %s1210 = scalar_lea.vmem %s0, 968
  %v1211 = vld [vmem:[%s1210] sm:$0xff]
  %s1212 = scalar_lea.vmem %s1, 968
  %v1213 = vld [vmem:[%s1212] sm:$0xff]
  %1214 = xla_tuple %v1211, %v1213
  %1215 = xla_tuple %1214
  %v1216 = vmul.f32 %v1211, %v1213
  %1217 = xla_tuple %v1216
  %s1218 = scalar_lea.vmem %s2, 968
  %1219 = vst [vmem:[%s1218] sm:$0xff] %v1216
  %s1220 = scalar_lea.vmem %s0, 976
  %v1221 = vld [vmem:[%s1220] sm:$0xff]
  %s1222 = scalar_lea.vmem %s1, 976
  %v1223 = vld [vmem:[%s1222] sm:$0xff]
  %1224 = xla_tuple %v1221, %v1223
  %1225 = xla_tuple %1224
  %v1226 = vmul.f32 %v1221, %v1223
  %1227 = xla_tuple %v1226
  %s1228 = scalar_lea.vmem %s2, 976
  %1229 = vst [vmem:[%s1228] sm:$0xff] %v1226
  %s1230 = scalar_lea.vmem %s0, 984
  %v1231 = vld [vmem:[%s1230] sm:$0xff]
  %s1232 = scalar_lea.vmem %s1, 984
  %v1233 = vld [vmem:[%s1232] sm:$0xff]
  %1234 = xla_tuple %v1231, %v1233
  %1235 = xla_tuple %1234
  %v1236 = vmul.f32 %v1231, %v1233
  %1237 = xla_tuple %v1236
  %s1238 = scalar_lea.vmem %s2, 984
  %1239 = vst [vmem:[%s1238] sm:$0xff] %v1236
  %s1240 = scalar_lea.vmem %s0, 992
  %v1241 = vld [vmem:[%s1240] sm:$0xff]
  %s1242 = scalar_lea.vmem %s1, 992
  %v1243 = vld [vmem:[%s1242] sm:$0xff]
  %1244 = xla_tuple %v1241, %v1243
  %1245 = xla_tuple %1244
  %v1246 = vmul.f32 %v1241, %v1243
  %1247 = xla_tuple %v1246
  %s1248 = scalar_lea.vmem %s2, 992
  %1249 = vst [vmem:[%s1248] sm:$0xff] %v1246
  %s1250 = scalar_lea.vmem %s0, 1000
  %v1251 = vld [vmem:[%s1250] sm:$0xff]
  %s1252 = scalar_lea.vmem %s1, 1000
  %v1253 = vld [vmem:[%s1252] sm:$0xff]
  %1254 = xla_tuple %v1251, %v1253
  %1255 = xla_tuple %1254
  %v1256 = vmul.f32 %v1251, %v1253
  %1257 = xla_tuple %v1256
  %s1258 = scalar_lea.vmem %s2, 1000
  %1259 = vst [vmem:[%s1258] sm:$0xff] %v1256
  %s1260 = scalar_lea.vmem %s0, 1008
  %v1261 = vld [vmem:[%s1260] sm:$0xff]
  %s1262 = scalar_lea.vmem %s1, 1008
  %v1263 = vld [vmem:[%s1262] sm:$0xff]
  %1264 = xla_tuple %v1261, %v1263
  %1265 = xla_tuple %1264
  %v1266 = vmul.f32 %v1261, %v1263
  %1267 = xla_tuple %v1266
  %s1268 = scalar_lea.vmem %s2, 1008
  %1269 = vst [vmem:[%s1268] sm:$0xff] %v1266
  %s1270 = scalar_lea.vmem %s0, 1016
  %v1271 = vld [vmem:[%s1270] sm:$0xff]
  %s1272 = scalar_lea.vmem %s1, 1016
  %v1273 = vld [vmem:[%s1272] sm:$0xff]
  %1274 = xla_tuple %v1271, %v1273
  %1275 = xla_tuple %1274
  %v1276 = vmul.f32 %v1271, %v1273
  %1277 = xla_tuple %v1276
  %s1278 = scalar_lea.vmem %s2, 1016
  %1279 = vst [vmem:[%s1278] sm:$0xff] %v1276
  %s1280 = scalar_lea.vmem %s0, 1024
  %v1281 = vld [vmem:[%s1280] sm:$0xff]
  %s1282 = scalar_lea.vmem %s1, 1024
  %v1283 = vld [vmem:[%s1282] sm:$0xff]
  %1284 = xla_tuple %v1281, %v1283
  %1285 = xla_tuple %1284
  %v1286 = vmul.f32 %v1281, %v1283
  %1287 = xla_tuple %v1286
  %s1288 = scalar_lea.vmem %s2, 1024
  %1289 = vst [vmem:[%s1288] sm:$0xff] %v1286
  %s1290 = scalar_lea.vmem %s0, 1032
  %v1291 = vld [vmem:[%s1290] sm:$0xff]
  %s1292 = scalar_lea.vmem %s1, 1032
  %v1293 = vld [vmem:[%s1292] sm:$0xff]
  %1294 = xla_tuple %v1291, %v1293
  %1295 = xla_tuple %1294
  %v1296 = vmul.f32 %v1291, %v1293
  %1297 = xla_tuple %v1296
  %s1298 = scalar_lea.vmem %s2, 1032
  %1299 = vst [vmem:[%s1298] sm:$0xff] %v1296
  %s1300 = scalar_lea.vmem %s0, 1040
  %v1301 = vld [vmem:[%s1300] sm:$0xff]
  %s1302 = scalar_lea.vmem %s1, 1040
  %v1303 = vld [vmem:[%s1302] sm:$0xff]
  %1304 = xla_tuple %v1301, %v1303
  %1305 = xla_tuple %1304
  %v1306 = vmul.f32 %v1301, %v1303
  %1307 = xla_tuple %v1306
  %s1308 = scalar_lea.vmem %s2, 1040
  %1309 = vst [vmem:[%s1308] sm:$0xff] %v1306
  %s1310 = scalar_lea.vmem %s0, 1048
  %v1311 = vld [vmem:[%s1310] sm:$0xff]
  %s1312 = scalar_lea.vmem %s1, 1048
  %v1313 = vld [vmem:[%s1312] sm:$0xff]
  %1314 = xla_tuple %v1311, %v1313
  %1315 = xla_tuple %1314
  %v1316 = vmul.f32 %v1311, %v1313
  %1317 = xla_tuple %v1316
  %s1318 = scalar_lea.vmem %s2, 1048
  %1319 = vst [vmem:[%s1318] sm:$0xff] %v1316
  %s1320 = scalar_lea.vmem %s0, 1056
  %v1321 = vld [vmem:[%s1320] sm:$0xff]
  %s1322 = scalar_lea.vmem %s1, 1056
  %v1323 = vld [vmem:[%s1322] sm:$0xff]
  %1324 = xla_tuple %v1321, %v1323
  %1325 = xla_tuple %1324
  %v1326 = vmul.f32 %v1321, %v1323
  %1327 = xla_tuple %v1326
  %s1328 = scalar_lea.vmem %s2, 1056
  %1329 = vst [vmem:[%s1328] sm:$0xff] %v1326
  %s1330 = scalar_lea.vmem %s0, 1064
  %v1331 = vld [vmem:[%s1330] sm:$0xff]
  %s1332 = scalar_lea.vmem %s1, 1064
  %v1333 = vld [vmem:[%s1332] sm:$0xff]
  %1334 = xla_tuple %v1331, %v1333
  %1335 = xla_tuple %1334
  %v1336 = vmul.f32 %v1331, %v1333
  %1337 = xla_tuple %v1336
  %s1338 = scalar_lea.vmem %s2, 1064
  %1339 = vst [vmem:[%s1338] sm:$0xff] %v1336
  %s1340 = scalar_lea.vmem %s0, 1072
  %v1341 = vld [vmem:[%s1340] sm:$0xff]
  %s1342 = scalar_lea.vmem %s1, 1072
  %v1343 = vld [vmem:[%s1342] sm:$0xff]
  %1344 = xla_tuple %v1341, %v1343
  %1345 = xla_tuple %1344
  %v1346 = vmul.f32 %v1341, %v1343
  %1347 = xla_tuple %v1346
  %s1348 = scalar_lea.vmem %s2, 1072
  %1349 = vst [vmem:[%s1348] sm:$0xff] %v1346
  %s1350 = scalar_lea.vmem %s0, 1080
  %v1351 = vld [vmem:[%s1350] sm:$0xff]
  %s1352 = scalar_lea.vmem %s1, 1080
  %v1353 = vld [vmem:[%s1352] sm:$0xff]
  %1354 = xla_tuple %v1351, %v1353
  %1355 = xla_tuple %1354
  %v1356 = vmul.f32 %v1351, %v1353
  %1357 = xla_tuple %v1356
  %s1358 = scalar_lea.vmem %s2, 1080
  %1359 = vst [vmem:[%s1358] sm:$0xff] %v1356
  %s1360 = scalar_lea.vmem %s0, 1088
  %v1361 = vld [vmem:[%s1360] sm:$0xff]
  %s1362 = scalar_lea.vmem %s1, 1088
  %v1363 = vld [vmem:[%s1362] sm:$0xff]
  %1364 = xla_tuple %v1361, %v1363
  %1365 = xla_tuple %1364
  %v1366 = vmul.f32 %v1361, %v1363
  %1367 = xla_tuple %v1366
  %s1368 = scalar_lea.vmem %s2, 1088
  %1369 = vst [vmem:[%s1368] sm:$0xff] %v1366
  %s1370 = scalar_lea.vmem %s0, 1096
  %v1371 = vld [vmem:[%s1370] sm:$0xff]
  %s1372 = scalar_lea.vmem %s1, 1096
  %v1373 = vld [vmem:[%s1372] sm:$0xff]
  %1374 = xla_tuple %v1371, %v1373
  %1375 = xla_tuple %1374
  %v1376 = vmul.f32 %v1371, %v1373
  %1377 = xla_tuple %v1376
  %s1378 = scalar_lea.vmem %s2, 1096
  %1379 = vst [vmem:[%s1378] sm:$0xff] %v1376
  %s1380 = scalar_lea.vmem %s0, 1104
  %v1381 = vld [vmem:[%s1380] sm:$0xff]
  %s1382 = scalar_lea.vmem %s1, 1104
  %v1383 = vld [vmem:[%s1382] sm:$0xff]
  %1384 = xla_tuple %v1381, %v1383
  %1385 = xla_tuple %1384
  %v1386 = vmul.f32 %v1381, %v1383
  %1387 = xla_tuple %v1386
  %s1388 = scalar_lea.vmem %s2, 1104
  %1389 = vst [vmem:[%s1388] sm:$0xff] %v1386
  %s1390 = scalar_lea.vmem %s0, 1112
  %v1391 = vld [vmem:[%s1390] sm:$0xff]
  %s1392 = scalar_lea.vmem %s1, 1112
  %v1393 = vld [vmem:[%s1392] sm:$0xff]
  %1394 = xla_tuple %v1391, %v1393
  %1395 = xla_tuple %1394
  %v1396 = vmul.f32 %v1391, %v1393
  %1397 = xla_tuple %v1396
  %s1398 = scalar_lea.vmem %s2, 1112
  %1399 = vst [vmem:[%s1398] sm:$0xff] %v1396
  %s1400 = scalar_lea.vmem %s0, 1120
  %v1401 = vld [vmem:[%s1400] sm:$0xff]
  %s1402 = scalar_lea.vmem %s1, 1120
  %v1403 = vld [vmem:[%s1402] sm:$0xff]
  %1404 = xla_tuple %v1401, %v1403
  %1405 = xla_tuple %1404
  %v1406 = vmul.f32 %v1401, %v1403
  %1407 = xla_tuple %v1406
  %s1408 = scalar_lea.vmem %s2, 1120
  %1409 = vst [vmem:[%s1408] sm:$0xff] %v1406
  %s1410 = scalar_lea.vmem %s0, 1128
  %v1411 = vld [vmem:[%s1410] sm:$0xff]
  %s1412 = scalar_lea.vmem %s1, 1128
  %v1413 = vld [vmem:[%s1412] sm:$0xff]
  %1414 = xla_tuple %v1411, %v1413
  %1415 = xla_tuple %1414
  %v1416 = vmul.f32 %v1411, %v1413
  %1417 = xla_tuple %v1416
  %s1418 = scalar_lea.vmem %s2, 1128
  %1419 = vst [vmem:[%s1418] sm:$0xff] %v1416
  %s1420 = scalar_lea.vmem %s0, 1136
  %v1421 = vld [vmem:[%s1420] sm:$0xff]
  %s1422 = scalar_lea.vmem %s1, 1136
  %v1423 = vld [vmem:[%s1422] sm:$0xff]
  %1424 = xla_tuple %v1421, %v1423
  %1425 = xla_tuple %1424
  %v1426 = vmul.f32 %v1421, %v1423
  %1427 = xla_tuple %v1426
  %s1428 = scalar_lea.vmem %s2, 1136
  %1429 = vst [vmem:[%s1428] sm:$0xff] %v1426
  %s1430 = scalar_lea.vmem %s0, 1144
  %v1431 = vld [vmem:[%s1430] sm:$0xff]
  %s1432 = scalar_lea.vmem %s1, 1144
  %v1433 = vld [vmem:[%s1432] sm:$0xff]
  %1434 = xla_tuple %v1431, %v1433
  %1435 = xla_tuple %1434
  %v1436 = vmul.f32 %v1431, %v1433
  %1437 = xla_tuple %v1436
  %s1438 = scalar_lea.vmem %s2, 1144
  %1439 = vst [vmem:[%s1438] sm:$0xff] %v1436
  %s1440 = scalar_lea.vmem %s0, 1152
  %v1441 = vld [vmem:[%s1440] sm:$0xff]
  %s1442 = scalar_lea.vmem %s1, 1152
  %v1443 = vld [vmem:[%s1442] sm:$0xff]
  %1444 = xla_tuple %v1441, %v1443
  %1445 = xla_tuple %1444
  %v1446 = vmul.f32 %v1441, %v1443
  %1447 = xla_tuple %v1446
  %s1448 = scalar_lea.vmem %s2, 1152
  %1449 = vst [vmem:[%s1448] sm:$0xff] %v1446
  %s1450 = scalar_lea.vmem %s0, 1160
  %v1451 = vld [vmem:[%s1450] sm:$0xff]
  %s1452 = scalar_lea.vmem %s1, 1160
  %v1453 = vld [vmem:[%s1452] sm:$0xff]
  %1454 = xla_tuple %v1451, %v1453
  %1455 = xla_tuple %1454
  %v1456 = vmul.f32 %v1451, %v1453
  %1457 = xla_tuple %v1456
  %s1458 = scalar_lea.vmem %s2, 1160
  %1459 = vst [vmem:[%s1458] sm:$0xff] %v1456
  %s1460 = scalar_lea.vmem %s0, 1168
  %v1461 = vld [vmem:[%s1460] sm:$0xff]
  %s1462 = scalar_lea.vmem %s1, 1168
  %v1463 = vld [vmem:[%s1462] sm:$0xff]
  %1464 = xla_tuple %v1461, %v1463
  %1465 = xla_tuple %1464
  %v1466 = vmul.f32 %v1461, %v1463
  %1467 = xla_tuple %v1466
  %s1468 = scalar_lea.vmem %s2, 1168
  %1469 = vst [vmem:[%s1468] sm:$0xff] %v1466
  %s1470 = scalar_lea.vmem %s0, 1176
  %v1471 = vld [vmem:[%s1470] sm:$0xff]
  %s1472 = scalar_lea.vmem %s1, 1176
  %v1473 = vld [vmem:[%s1472] sm:$0xff]
  %1474 = xla_tuple %v1471, %v1473
  %1475 = xla_tuple %1474
  %v1476 = vmul.f32 %v1471, %v1473
  %1477 = xla_tuple %v1476
  %s1478 = scalar_lea.vmem %s2, 1176
  %1479 = vst [vmem:[%s1478] sm:$0xff] %v1476
  %s1480 = scalar_lea.vmem %s0, 1184
  %v1481 = vld [vmem:[%s1480] sm:$0xff]
  %s1482 = scalar_lea.vmem %s1, 1184
  %v1483 = vld [vmem:[%s1482] sm:$0xff]
  %1484 = xla_tuple %v1481, %v1483
  %1485 = xla_tuple %1484
  %v1486 = vmul.f32 %v1481, %v1483
  %1487 = xla_tuple %v1486
  %s1488 = scalar_lea.vmem %s2, 1184
  %1489 = vst [vmem:[%s1488] sm:$0xff] %v1486
  %s1490 = scalar_lea.vmem %s0, 1192
  %v1491 = vld [vmem:[%s1490] sm:$0xff]
  %s1492 = scalar_lea.vmem %s1, 1192
  %v1493 = vld [vmem:[%s1492] sm:$0xff]
  %1494 = xla_tuple %v1491, %v1493
  %1495 = xla_tuple %1494
  %v1496 = vmul.f32 %v1491, %v1493
  %1497 = xla_tuple %v1496
  %s1498 = scalar_lea.vmem %s2, 1192
  %1499 = vst [vmem:[%s1498] sm:$0xff] %v1496
  %s1500 = scalar_lea.vmem %s0, 1200
  %v1501 = vld [vmem:[%s1500] sm:$0xff]
  %s1502 = scalar_lea.vmem %s1, 1200
  %v1503 = vld [vmem:[%s1502] sm:$0xff]
  %1504 = xla_tuple %v1501, %v1503
  %1505 = xla_tuple %1504
  %v1506 = vmul.f32 %v1501, %v1503
  %1507 = xla_tuple %v1506
  %s1508 = scalar_lea.vmem %s2, 1200
  %1509 = vst [vmem:[%s1508] sm:$0xff] %v1506
  %s1510 = scalar_lea.vmem %s0, 1208
  %v1511 = vld [vmem:[%s1510] sm:$0xff]
  %s1512 = scalar_lea.vmem %s1, 1208
  %v1513 = vld [vmem:[%s1512] sm:$0xff]
  %1514 = xla_tuple %v1511, %v1513
  %1515 = xla_tuple %1514
  %v1516 = vmul.f32 %v1511, %v1513
  %1517 = xla_tuple %v1516
  %s1518 = scalar_lea.vmem %s2, 1208
  %1519 = vst [vmem:[%s1518] sm:$0xff] %v1516
  %s1520 = scalar_lea.vmem %s0, 1216
  %v1521 = vld [vmem:[%s1520] sm:$0xff]
  %s1522 = scalar_lea.vmem %s1, 1216
  %v1523 = vld [vmem:[%s1522] sm:$0xff]
  %1524 = xla_tuple %v1521, %v1523
  %1525 = xla_tuple %1524
  %v1526 = vmul.f32 %v1521, %v1523
  %1527 = xla_tuple %v1526
  %s1528 = scalar_lea.vmem %s2, 1216
  %1529 = vst [vmem:[%s1528] sm:$0xff] %v1526
  %s1530 = scalar_lea.vmem %s0, 1224
  %v1531 = vld [vmem:[%s1530] sm:$0xff]
  %s1532 = scalar_lea.vmem %s1, 1224
  %v1533 = vld [vmem:[%s1532] sm:$0xff]
  %1534 = xla_tuple %v1531, %v1533
  %1535 = xla_tuple %1534
  %v1536 = vmul.f32 %v1531, %v1533
  %1537 = xla_tuple %v1536
  %s1538 = scalar_lea.vmem %s2, 1224
  %1539 = vst [vmem:[%s1538] sm:$0xff] %v1536
  %s1540 = scalar_lea.vmem %s0, 1232
  %v1541 = vld [vmem:[%s1540] sm:$0xff]
  %s1542 = scalar_lea.vmem %s1, 1232
  %v1543 = vld [vmem:[%s1542] sm:$0xff]
  %1544 = xla_tuple %v1541, %v1543
  %1545 = xla_tuple %1544
  %v1546 = vmul.f32 %v1541, %v1543
  %1547 = xla_tuple %v1546
  %s1548 = scalar_lea.vmem %s2, 1232
  %1549 = vst [vmem:[%s1548] sm:$0xff] %v1546
  %s1550 = scalar_lea.vmem %s0, 1240
  %v1551 = vld [vmem:[%s1550] sm:$0xff]
  %s1552 = scalar_lea.vmem %s1, 1240
  %v1553 = vld [vmem:[%s1552] sm:$0xff]
  %1554 = xla_tuple %v1551, %v1553
  %1555 = xla_tuple %1554
  %v1556 = vmul.f32 %v1551, %v1553
  %1557 = xla_tuple %v1556
  %s1558 = scalar_lea.vmem %s2, 1240
  %1559 = vst [vmem:[%s1558] sm:$0xff] %v1556
  %s1560 = scalar_lea.vmem %s0, 1248
  %v1561 = vld [vmem:[%s1560] sm:$0xff]
  %s1562 = scalar_lea.vmem %s1, 1248
  %v1563 = vld [vmem:[%s1562] sm:$0xff]
  %1564 = xla_tuple %v1561, %v1563
  %1565 = xla_tuple %1564
  %v1566 = vmul.f32 %v1561, %v1563
  %1567 = xla_tuple %v1566
  %s1568 = scalar_lea.vmem %s2, 1248
  %1569 = vst [vmem:[%s1568] sm:$0xff] %v1566
  %s1570 = scalar_lea.vmem %s0, 1256
  %v1571 = vld [vmem:[%s1570] sm:$0xff]
  %s1572 = scalar_lea.vmem %s1, 1256
  %v1573 = vld [vmem:[%s1572] sm:$0xff]
  %1574 = xla_tuple %v1571, %v1573
  %1575 = xla_tuple %1574
  %v1576 = vmul.f32 %v1571, %v1573
  %1577 = xla_tuple %v1576
  %s1578 = scalar_lea.vmem %s2, 1256
  %1579 = vst [vmem:[%s1578] sm:$0xff] %v1576
  %s1580 = scalar_lea.vmem %s0, 1264
  %v1581 = vld [vmem:[%s1580] sm:$0xff]
  %s1582 = scalar_lea.vmem %s1, 1264
  %v1583 = vld [vmem:[%s1582] sm:$0xff]
  %1584 = xla_tuple %v1581, %v1583
  %1585 = xla_tuple %1584
  %v1586 = vmul.f32 %v1581, %v1583
  %1587 = xla_tuple %v1586
  %s1588 = scalar_lea.vmem %s2, 1264
  %1589 = vst [vmem:[%s1588] sm:$0xff] %v1586
  %s1590 = scalar_lea.vmem %s0, 1272
  %v1591 = vld [vmem:[%s1590] sm:$0xff]
  %s1592 = scalar_lea.vmem %s1, 1272
  %v1593 = vld [vmem:[%s1592] sm:$0xff]
  %1594 = xla_tuple %v1591, %v1593
  %1595 = xla_tuple %1594
  %v1596 = vmul.f32 %v1591, %v1593
  %1597 = xla_tuple %v1596
  %s1598 = scalar_lea.vmem %s2, 1272
  %1599 = vst [vmem:[%s1598] sm:$0xff] %v1596
  %s1600 = scalar_lea.vmem %s0, 1280
  %v1601 = vld [vmem:[%s1600] sm:$0xff]
  %s1602 = scalar_lea.vmem %s1, 1280
  %v1603 = vld [vmem:[%s1602] sm:$0xff]
  %1604 = xla_tuple %v1601, %v1603
  %1605 = xla_tuple %1604
  %v1606 = vmul.f32 %v1601, %v1603
  %1607 = xla_tuple %v1606
  %s1608 = scalar_lea.vmem %s2, 1280
  %1609 = vst [vmem:[%s1608] sm:$0xff] %v1606
  %s1610 = scalar_lea.vmem %s0, 1288
  %v1611 = vld [vmem:[%s1610] sm:$0xff]
  %s1612 = scalar_lea.vmem %s1, 1288
  %v1613 = vld [vmem:[%s1612] sm:$0xff]
  %1614 = xla_tuple %v1611, %v1613
  %1615 = xla_tuple %1614
  %v1616 = vmul.f32 %v1611, %v1613
  %1617 = xla_tuple %v1616
  %s1618 = scalar_lea.vmem %s2, 1288
  %1619 = vst [vmem:[%s1618] sm:$0xff] %v1616
  %s1620 = scalar_lea.vmem %s0, 1296
  %v1621 = vld [vmem:[%s1620] sm:$0xff]
  %s1622 = scalar_lea.vmem %s1, 1296
  %v1623 = vld [vmem:[%s1622] sm:$0xff]
  %1624 = xla_tuple %v1621, %v1623
  %1625 = xla_tuple %1624
  %v1626 = vmul.f32 %v1621, %v1623
  %1627 = xla_tuple %v1626
  %s1628 = scalar_lea.vmem %s2, 1296
  %1629 = vst [vmem:[%s1628] sm:$0xff] %v1626
  %s1630 = scalar_lea.vmem %s0, 1304
  %v1631 = vld [vmem:[%s1630] sm:$0xff]
  %s1632 = scalar_lea.vmem %s1, 1304
  %v1633 = vld [vmem:[%s1632] sm:$0xff]
  %1634 = xla_tuple %v1631, %v1633
  %1635 = xla_tuple %1634
  %v1636 = vmul.f32 %v1631, %v1633
  %1637 = xla_tuple %v1636
  %s1638 = scalar_lea.vmem %s2, 1304
  %1639 = vst [vmem:[%s1638] sm:$0xff] %v1636
  %s1640 = scalar_lea.vmem %s0, 1312
  %v1641 = vld [vmem:[%s1640] sm:$0xff]
  %s1642 = scalar_lea.vmem %s1, 1312
  %v1643 = vld [vmem:[%s1642] sm:$0xff]
  %1644 = xla_tuple %v1641, %v1643
  %1645 = xla_tuple %1644
  %v1646 = vmul.f32 %v1641, %v1643
  %1647 = xla_tuple %v1646
  %s1648 = scalar_lea.vmem %s2, 1312
  %1649 = vst [vmem:[%s1648] sm:$0xff] %v1646
  %s1650 = scalar_lea.vmem %s0, 1320
  %v1651 = vld [vmem:[%s1650] sm:$0xff]
  %s1652 = scalar_lea.vmem %s1, 1320
  %v1653 = vld [vmem:[%s1652] sm:$0xff]
  %1654 = xla_tuple %v1651, %v1653
  %1655 = xla_tuple %1654
  %v1656 = vmul.f32 %v1651, %v1653
  %1657 = xla_tuple %v1656
  %s1658 = scalar_lea.vmem %s2, 1320
  %1659 = vst [vmem:[%s1658] sm:$0xff] %v1656
  %s1660 = scalar_lea.vmem %s0, 1328
  %v1661 = vld [vmem:[%s1660] sm:$0xff]
  %s1662 = scalar_lea.vmem %s1, 1328
  %v1663 = vld [vmem:[%s1662] sm:$0xff]
  %1664 = xla_tuple %v1661, %v1663
  %1665 = xla_tuple %1664
  %v1666 = vmul.f32 %v1661, %v1663
  %1667 = xla_tuple %v1666
  %s1668 = scalar_lea.vmem %s2, 1328
  %1669 = vst [vmem:[%s1668] sm:$0xff] %v1666
  %s1670 = scalar_lea.vmem %s0, 1336
  %v1671 = vld [vmem:[%s1670] sm:$0xff]
  %s1672 = scalar_lea.vmem %s1, 1336
  %v1673 = vld [vmem:[%s1672] sm:$0xff]
  %1674 = xla_tuple %v1671, %v1673
  %1675 = xla_tuple %1674
  %v1676 = vmul.f32 %v1671, %v1673
  %1677 = xla_tuple %v1676
  %s1678 = scalar_lea.vmem %s2, 1336
  %1679 = vst [vmem:[%s1678] sm:$0xff] %v1676
  %s1680 = scalar_lea.vmem %s0, 1344
  %v1681 = vld [vmem:[%s1680] sm:$0xff]
  %s1682 = scalar_lea.vmem %s1, 1344
  %v1683 = vld [vmem:[%s1682] sm:$0xff]
  %1684 = xla_tuple %v1681, %v1683
  %1685 = xla_tuple %1684
  %v1686 = vmul.f32 %v1681, %v1683
  %1687 = xla_tuple %v1686
  %s1688 = scalar_lea.vmem %s2, 1344
  %1689 = vst [vmem:[%s1688] sm:$0xff] %v1686
  %s1690 = scalar_lea.vmem %s0, 1352
  %v1691 = vld [vmem:[%s1690] sm:$0xff]
  %s1692 = scalar_lea.vmem %s1, 1352
  %v1693 = vld [vmem:[%s1692] sm:$0xff]
  %1694 = xla_tuple %v1691, %v1693
  %1695 = xla_tuple %1694
  %v1696 = vmul.f32 %v1691, %v1693
  %1697 = xla_tuple %v1696
  %s1698 = scalar_lea.vmem %s2, 1352
  %1699 = vst [vmem:[%s1698] sm:$0xff] %v1696
  %s1700 = scalar_lea.vmem %s0, 1360
  %v1701 = vld [vmem:[%s1700] sm:$0xff]
  %s1702 = scalar_lea.vmem %s1, 1360
  %v1703 = vld [vmem:[%s1702] sm:$0xff]
  %1704 = xla_tuple %v1701, %v1703
  %1705 = xla_tuple %1704
  %v1706 = vmul.f32 %v1701, %v1703
  %1707 = xla_tuple %v1706
  %s1708 = scalar_lea.vmem %s2, 1360
  %1709 = vst [vmem:[%s1708] sm:$0xff] %v1706
  %s1710 = scalar_lea.vmem %s0, 1368
  %v1711 = vld [vmem:[%s1710] sm:$0xff]
  %s1712 = scalar_lea.vmem %s1, 1368
  %v1713 = vld [vmem:[%s1712] sm:$0xff]
  %1714 = xla_tuple %v1711, %v1713
  %1715 = xla_tuple %1714
  %v1716 = vmul.f32 %v1711, %v1713
  %1717 = xla_tuple %v1716
  %s1718 = scalar_lea.vmem %s2, 1368
  %1719 = vst [vmem:[%s1718] sm:$0xff] %v1716
  %s1720 = scalar_lea.vmem %s0, 1376
  %v1721 = vld [vmem:[%s1720] sm:$0xff]
  %s1722 = scalar_lea.vmem %s1, 1376
  %v1723 = vld [vmem:[%s1722] sm:$0xff]
  %1724 = xla_tuple %v1721, %v1723
  %1725 = xla_tuple %1724
  %v1726 = vmul.f32 %v1721, %v1723
  %1727 = xla_tuple %v1726
  %s1728 = scalar_lea.vmem %s2, 1376
  %1729 = vst [vmem:[%s1728] sm:$0xff] %v1726
  %s1730 = scalar_lea.vmem %s0, 1384
  %v1731 = vld [vmem:[%s1730] sm:$0xff]
  %s1732 = scalar_lea.vmem %s1, 1384
  %v1733 = vld [vmem:[%s1732] sm:$0xff]
  %1734 = xla_tuple %v1731, %v1733
  %1735 = xla_tuple %1734
  %v1736 = vmul.f32 %v1731, %v1733
  %1737 = xla_tuple %v1736
  %s1738 = scalar_lea.vmem %s2, 1384
  %1739 = vst [vmem:[%s1738] sm:$0xff] %v1736
  %s1740 = scalar_lea.vmem %s0, 1392
  %v1741 = vld [vmem:[%s1740] sm:$0xff]
  %s1742 = scalar_lea.vmem %s1, 1392
  %v1743 = vld [vmem:[%s1742] sm:$0xff]
  %1744 = xla_tuple %v1741, %v1743
  %1745 = xla_tuple %1744
  %v1746 = vmul.f32 %v1741, %v1743
  %1747 = xla_tuple %v1746
  %s1748 = scalar_lea.vmem %s2, 1392
  %1749 = vst [vmem:[%s1748] sm:$0xff] %v1746
  %s1750 = scalar_lea.vmem %s0, 1400
  %v1751 = vld [vmem:[%s1750] sm:$0xff]
  %s1752 = scalar_lea.vmem %s1, 1400
  %v1753 = vld [vmem:[%s1752] sm:$0xff]
  %1754 = xla_tuple %v1751, %v1753
  %1755 = xla_tuple %1754
  %v1756 = vmul.f32 %v1751, %v1753
  %1757 = xla_tuple %v1756
  %s1758 = scalar_lea.vmem %s2, 1400
  %1759 = vst [vmem:[%s1758] sm:$0xff] %v1756
  %s1760 = scalar_lea.vmem %s0, 1408
  %v1761 = vld [vmem:[%s1760] sm:$0xff]
  %s1762 = scalar_lea.vmem %s1, 1408
  %v1763 = vld [vmem:[%s1762] sm:$0xff]
  %1764 = xla_tuple %v1761, %v1763
  %1765 = xla_tuple %1764
  %v1766 = vmul.f32 %v1761, %v1763
  %1767 = xla_tuple %v1766
  %s1768 = scalar_lea.vmem %s2, 1408
  %1769 = vst [vmem:[%s1768] sm:$0xff] %v1766
  %s1770 = scalar_lea.vmem %s0, 1416
  %v1771 = vld [vmem:[%s1770] sm:$0xff]
  %s1772 = scalar_lea.vmem %s1, 1416
  %v1773 = vld [vmem:[%s1772] sm:$0xff]
  %1774 = xla_tuple %v1771, %v1773
  %1775 = xla_tuple %1774
  %v1776 = vmul.f32 %v1771, %v1773
  %1777 = xla_tuple %v1776
  %s1778 = scalar_lea.vmem %s2, 1416
  %1779 = vst [vmem:[%s1778] sm:$0xff] %v1776
  %s1780 = scalar_lea.vmem %s0, 1424
  %v1781 = vld [vmem:[%s1780] sm:$0xff]
  %s1782 = scalar_lea.vmem %s1, 1424
  %v1783 = vld [vmem:[%s1782] sm:$0xff]
  %1784 = xla_tuple %v1781, %v1783
  %1785 = xla_tuple %1784
  %v1786 = vmul.f32 %v1781, %v1783
  %1787 = xla_tuple %v1786
  %s1788 = scalar_lea.vmem %s2, 1424
  %1789 = vst [vmem:[%s1788] sm:$0xff] %v1786
  %s1790 = scalar_lea.vmem %s0, 1432
  %v1791 = vld [vmem:[%s1790] sm:$0xff]
  %s1792 = scalar_lea.vmem %s1, 1432
  %v1793 = vld [vmem:[%s1792] sm:$0xff]
  %1794 = xla_tuple %v1791, %v1793
  %1795 = xla_tuple %1794
  %v1796 = vmul.f32 %v1791, %v1793
  %1797 = xla_tuple %v1796
  %s1798 = scalar_lea.vmem %s2, 1432
  %1799 = vst [vmem:[%s1798] sm:$0xff] %v1796
  %s1800 = scalar_lea.vmem %s0, 1440
  %v1801 = vld [vmem:[%s1800] sm:$0xff]
  %s1802 = scalar_lea.vmem %s1, 1440
  %v1803 = vld [vmem:[%s1802] sm:$0xff]
  %1804 = xla_tuple %v1801, %v1803
  %1805 = xla_tuple %1804
  %v1806 = vmul.f32 %v1801, %v1803
  %1807 = xla_tuple %v1806
  %s1808 = scalar_lea.vmem %s2, 1440
  %1809 = vst [vmem:[%s1808] sm:$0xff] %v1806
  %s1810 = scalar_lea.vmem %s0, 1448
  %v1811 = vld [vmem:[%s1810] sm:$0xff]
  %s1812 = scalar_lea.vmem %s1, 1448
  %v1813 = vld [vmem:[%s1812] sm:$0xff]
  %1814 = xla_tuple %v1811, %v1813
  %1815 = xla_tuple %1814
  %v1816 = vmul.f32 %v1811, %v1813
  %1817 = xla_tuple %v1816
  %s1818 = scalar_lea.vmem %s2, 1448
  %1819 = vst [vmem:[%s1818] sm:$0xff] %v1816
  %s1820 = scalar_lea.vmem %s0, 1456
  %v1821 = vld [vmem:[%s1820] sm:$0xff]
  %s1822 = scalar_lea.vmem %s1, 1456
  %v1823 = vld [vmem:[%s1822] sm:$0xff]
  %1824 = xla_tuple %v1821, %v1823
  %1825 = xla_tuple %1824
  %v1826 = vmul.f32 %v1821, %v1823
  %1827 = xla_tuple %v1826
  %s1828 = scalar_lea.vmem %s2, 1456
  %1829 = vst [vmem:[%s1828] sm:$0xff] %v1826
  %s1830 = scalar_lea.vmem %s0, 1464
  %v1831 = vld [vmem:[%s1830] sm:$0xff]
  %s1832 = scalar_lea.vmem %s1, 1464
  %v1833 = vld [vmem:[%s1832] sm:$0xff]
  %1834 = xla_tuple %v1831, %v1833
  %1835 = xla_tuple %1834
  %v1836 = vmul.f32 %v1831, %v1833
  %1837 = xla_tuple %v1836
  %s1838 = scalar_lea.vmem %s2, 1464
  %1839 = vst [vmem:[%s1838] sm:$0xff] %v1836
  %s1840 = scalar_lea.vmem %s0, 1472
  %v1841 = vld [vmem:[%s1840] sm:$0xff]
  %s1842 = scalar_lea.vmem %s1, 1472
  %v1843 = vld [vmem:[%s1842] sm:$0xff]
  %1844 = xla_tuple %v1841, %v1843
  %1845 = xla_tuple %1844
  %v1846 = vmul.f32 %v1841, %v1843
  %1847 = xla_tuple %v1846
  %s1848 = scalar_lea.vmem %s2, 1472
  %1849 = vst [vmem:[%s1848] sm:$0xff] %v1846
  %s1850 = scalar_lea.vmem %s0, 1480
  %v1851 = vld [vmem:[%s1850] sm:$0xff]
  %s1852 = scalar_lea.vmem %s1, 1480
  %v1853 = vld [vmem:[%s1852] sm:$0xff]
  %1854 = xla_tuple %v1851, %v1853
  %1855 = xla_tuple %1854
  %v1856 = vmul.f32 %v1851, %v1853
  %1857 = xla_tuple %v1856
  %s1858 = scalar_lea.vmem %s2, 1480
  %1859 = vst [vmem:[%s1858] sm:$0xff] %v1856
  %s1860 = scalar_lea.vmem %s0, 1488
  %v1861 = vld [vmem:[%s1860] sm:$0xff]
  %s1862 = scalar_lea.vmem %s1, 1488
  %v1863 = vld [vmem:[%s1862] sm:$0xff]
  %1864 = xla_tuple %v1861, %v1863
  %1865 = xla_tuple %1864
  %v1866 = vmul.f32 %v1861, %v1863
  %1867 = xla_tuple %v1866
  %s1868 = scalar_lea.vmem %s2, 1488
  %1869 = vst [vmem:[%s1868] sm:$0xff] %v1866
  %s1870 = scalar_lea.vmem %s0, 1496
  %v1871 = vld [vmem:[%s1870] sm:$0xff]
  %s1872 = scalar_lea.vmem %s1, 1496
  %v1873 = vld [vmem:[%s1872] sm:$0xff]
  %1874 = xla_tuple %v1871, %v1873
  %1875 = xla_tuple %1874
  %v1876 = vmul.f32 %v1871, %v1873
  %1877 = xla_tuple %v1876
  %s1878 = scalar_lea.vmem %s2, 1496
  %1879 = vst [vmem:[%s1878] sm:$0xff] %v1876
  %s1880 = scalar_lea.vmem %s0, 1504
  %v1881 = vld [vmem:[%s1880] sm:$0xff]
  %s1882 = scalar_lea.vmem %s1, 1504
  %v1883 = vld [vmem:[%s1882] sm:$0xff]
  %1884 = xla_tuple %v1881, %v1883
  %1885 = xla_tuple %1884
  %v1886 = vmul.f32 %v1881, %v1883
  %1887 = xla_tuple %v1886
  %s1888 = scalar_lea.vmem %s2, 1504
  %1889 = vst [vmem:[%s1888] sm:$0xff] %v1886
  %s1890 = scalar_lea.vmem %s0, 1512
  %v1891 = vld [vmem:[%s1890] sm:$0xff]
  %s1892 = scalar_lea.vmem %s1, 1512
  %v1893 = vld [vmem:[%s1892] sm:$0xff]
  %1894 = xla_tuple %v1891, %v1893
  %1895 = xla_tuple %1894
  %v1896 = vmul.f32 %v1891, %v1893
  %1897 = xla_tuple %v1896
  %s1898 = scalar_lea.vmem %s2, 1512
  %1899 = vst [vmem:[%s1898] sm:$0xff] %v1896
  %s1900 = scalar_lea.vmem %s0, 1520
  %v1901 = vld [vmem:[%s1900] sm:$0xff]
  %s1902 = scalar_lea.vmem %s1, 1520
  %v1903 = vld [vmem:[%s1902] sm:$0xff]
  %1904 = xla_tuple %v1901, %v1903
  %1905 = xla_tuple %1904
  %v1906 = vmul.f32 %v1901, %v1903
  %1907 = xla_tuple %v1906
  %s1908 = scalar_lea.vmem %s2, 1520
  %1909 = vst [vmem:[%s1908] sm:$0xff] %v1906
  %s1910 = scalar_lea.vmem %s0, 1528
  %v1911 = vld [vmem:[%s1910] sm:$0xff]
  %s1912 = scalar_lea.vmem %s1, 1528
  %v1913 = vld [vmem:[%s1912] sm:$0xff]
  %1914 = xla_tuple %v1911, %v1913
  %1915 = xla_tuple %1914
  %v1916 = vmul.f32 %v1911, %v1913
  %1917 = xla_tuple %v1916
  %s1918 = scalar_lea.vmem %s2, 1528
  %1919 = vst [vmem:[%s1918] sm:$0xff] %v1916
  %s1920 = scalar_lea.vmem %s0, 1536
  %v1921 = vld [vmem:[%s1920] sm:$0xff]
  %s1922 = scalar_lea.vmem %s1, 1536
  %v1923 = vld [vmem:[%s1922] sm:$0xff]
  %1924 = xla_tuple %v1921, %v1923
  %1925 = xla_tuple %1924
  %v1926 = vmul.f32 %v1921, %v1923
  %1927 = xla_tuple %v1926
  %s1928 = scalar_lea.vmem %s2, 1536
  %1929 = vst [vmem:[%s1928] sm:$0xff] %v1926
  %s1930 = scalar_lea.vmem %s0, 1544
  %v1931 = vld [vmem:[%s1930] sm:$0xff]
  %s1932 = scalar_lea.vmem %s1, 1544
  %v1933 = vld [vmem:[%s1932] sm:$0xff]
  %1934 = xla_tuple %v1931, %v1933
  %1935 = xla_tuple %1934
  %v1936 = vmul.f32 %v1931, %v1933
  %1937 = xla_tuple %v1936
  %s1938 = scalar_lea.vmem %s2, 1544
  %1939 = vst [vmem:[%s1938] sm:$0xff] %v1936
  %s1940 = scalar_lea.vmem %s0, 1552
  %v1941 = vld [vmem:[%s1940] sm:$0xff]
  %s1942 = scalar_lea.vmem %s1, 1552
  %v1943 = vld [vmem:[%s1942] sm:$0xff]
  %1944 = xla_tuple %v1941, %v1943
  %1945 = xla_tuple %1944
  %v1946 = vmul.f32 %v1941, %v1943
  %1947 = xla_tuple %v1946
  %s1948 = scalar_lea.vmem %s2, 1552
  %1949 = vst [vmem:[%s1948] sm:$0xff] %v1946
  %s1950 = scalar_lea.vmem %s0, 1560
  %v1951 = vld [vmem:[%s1950] sm:$0xff]
  %s1952 = scalar_lea.vmem %s1, 1560
  %v1953 = vld [vmem:[%s1952] sm:$0xff]
  %1954 = xla_tuple %v1951, %v1953
  %1955 = xla_tuple %1954
  %v1956 = vmul.f32 %v1951, %v1953
  %1957 = xla_tuple %v1956
  %s1958 = scalar_lea.vmem %s2, 1560
  %1959 = vst [vmem:[%s1958] sm:$0xff] %v1956
  %s1960 = scalar_lea.vmem %s0, 1568
  %v1961 = vld [vmem:[%s1960] sm:$0xff]
  %s1962 = scalar_lea.vmem %s1, 1568
  %v1963 = vld [vmem:[%s1962] sm:$0xff]
  %1964 = xla_tuple %v1961, %v1963
  %1965 = xla_tuple %1964
  %v1966 = vmul.f32 %v1961, %v1963
  %1967 = xla_tuple %v1966
  %s1968 = scalar_lea.vmem %s2, 1568
  %1969 = vst [vmem:[%s1968] sm:$0xff] %v1966
  %s1970 = scalar_lea.vmem %s0, 1576
  %v1971 = vld [vmem:[%s1970] sm:$0xff]
  %s1972 = scalar_lea.vmem %s1, 1576
  %v1973 = vld [vmem:[%s1972] sm:$0xff]
  %1974 = xla_tuple %v1971, %v1973
  %1975 = xla_tuple %1974
  %v1976 = vmul.f32 %v1971, %v1973
  %1977 = xla_tuple %v1976
  %s1978 = scalar_lea.vmem %s2, 1576
  %1979 = vst [vmem:[%s1978] sm:$0xff] %v1976
  %s1980 = scalar_lea.vmem %s0, 1584
  %v1981 = vld [vmem:[%s1980] sm:$0xff]
  %s1982 = scalar_lea.vmem %s1, 1584
  %v1983 = vld [vmem:[%s1982] sm:$0xff]
  %1984 = xla_tuple %v1981, %v1983
  %1985 = xla_tuple %1984
  %v1986 = vmul.f32 %v1981, %v1983
  %1987 = xla_tuple %v1986
  %s1988 = scalar_lea.vmem %s2, 1584
  %1989 = vst [vmem:[%s1988] sm:$0xff] %v1986
  %s1990 = scalar_lea.vmem %s0, 1592
  %v1991 = vld [vmem:[%s1990] sm:$0xff]
  %s1992 = scalar_lea.vmem %s1, 1592
  %v1993 = vld [vmem:[%s1992] sm:$0xff]
  %1994 = xla_tuple %v1991, %v1993
  %1995 = xla_tuple %1994
  %v1996 = vmul.f32 %v1991, %v1993
  %1997 = xla_tuple %v1996
  %s1998 = scalar_lea.vmem %s2, 1592
  %1999 = vst [vmem:[%s1998] sm:$0xff] %v1996
  %s2000 = scalar_lea.vmem %s0, 1600
  %v2001 = vld [vmem:[%s2000] sm:$0xff]
  %s2002 = scalar_lea.vmem %s1, 1600
  %v2003 = vld [vmem:[%s2002] sm:$0xff]
  %2004 = xla_tuple %v2001, %v2003
  %2005 = xla_tuple %2004
  %v2006 = vmul.f32 %v2001, %v2003
  %2007 = xla_tuple %v2006
  %s2008 = scalar_lea.vmem %s2, 1600
  %2009 = vst [vmem:[%s2008] sm:$0xff] %v2006
  %s2010 = scalar_lea.vmem %s0, 1608
  %v2011 = vld [vmem:[%s2010] sm:$0xff]
  %s2012 = scalar_lea.vmem %s1, 1608
  %v2013 = vld [vmem:[%s2012] sm:$0xff]
  %2014 = xla_tuple %v2011, %v2013
  %2015 = xla_tuple %2014
  %v2016 = vmul.f32 %v2011, %v2013
  %2017 = xla_tuple %v2016
  %s2018 = scalar_lea.vmem %s2, 1608
  %2019 = vst [vmem:[%s2018] sm:$0xff] %v2016
  %s2020 = scalar_lea.vmem %s0, 1616
  %v2021 = vld [vmem:[%s2020] sm:$0xff]
  %s2022 = scalar_lea.vmem %s1, 1616
  %v2023 = vld [vmem:[%s2022] sm:$0xff]
  %2024 = xla_tuple %v2021, %v2023
  %2025 = xla_tuple %2024
  %v2026 = vmul.f32 %v2021, %v2023
  %2027 = xla_tuple %v2026
  %s2028 = scalar_lea.vmem %s2, 1616
  %2029 = vst [vmem:[%s2028] sm:$0xff] %v2026
  %s2030 = scalar_lea.vmem %s0, 1624
  %v2031 = vld [vmem:[%s2030] sm:$0xff]
  %s2032 = scalar_lea.vmem %s1, 1624
  %v2033 = vld [vmem:[%s2032] sm:$0xff]
  %2034 = xla_tuple %v2031, %v2033
  %2035 = xla_tuple %2034
  %v2036 = vmul.f32 %v2031, %v2033
  %2037 = xla_tuple %v2036
  %s2038 = scalar_lea.vmem %s2, 1624
  %2039 = vst [vmem:[%s2038] sm:$0xff] %v2036
  %s2040 = scalar_lea.vmem %s0, 1632
  %v2041 = vld [vmem:[%s2040] sm:$0xff]
  %s2042 = scalar_lea.vmem %s1, 1632
  %v2043 = vld [vmem:[%s2042] sm:$0xff]
  %2044 = xla_tuple %v2041, %v2043
  %2045 = xla_tuple %2044
  %v2046 = vmul.f32 %v2041, %v2043
  %2047 = xla_tuple %v2046
  %s2048 = scalar_lea.vmem %s2, 1632
  %2049 = vst [vmem:[%s2048] sm:$0xff] %v2046
  %s2050 = scalar_lea.vmem %s0, 1640
  %v2051 = vld [vmem:[%s2050] sm:$0xff]
  %s2052 = scalar_lea.vmem %s1, 1640
  %v2053 = vld [vmem:[%s2052] sm:$0xff]
  %2054 = xla_tuple %v2051, %v2053
  %2055 = xla_tuple %2054
  %v2056 = vmul.f32 %v2051, %v2053
  %2057 = xla_tuple %v2056
  %s2058 = scalar_lea.vmem %s2, 1640
  %2059 = vst [vmem:[%s2058] sm:$0xff] %v2056
  %s2060 = scalar_lea.vmem %s0, 1648
  %v2061 = vld [vmem:[%s2060] sm:$0xff]
  %s2062 = scalar_lea.vmem %s1, 1648
  %v2063 = vld [vmem:[%s2062] sm:$0xff]
  %2064 = xla_tuple %v2061, %v2063
  %2065 = xla_tuple %2064
  %v2066 = vmul.f32 %v2061, %v2063
  %2067 = xla_tuple %v2066
  %s2068 = scalar_lea.vmem %s2, 1648
  %2069 = vst [vmem:[%s2068] sm:$0xff] %v2066
  %s2070 = scalar_lea.vmem %s0, 1656
  %v2071 = vld [vmem:[%s2070] sm:$0xff]
  %s2072 = scalar_lea.vmem %s1, 1656
  %v2073 = vld [vmem:[%s2072] sm:$0xff]
  %2074 = xla_tuple %v2071, %v2073
  %2075 = xla_tuple %2074
  %v2076 = vmul.f32 %v2071, %v2073
  %2077 = xla_tuple %v2076
  %s2078 = scalar_lea.vmem %s2, 1656
  %2079 = vst [vmem:[%s2078] sm:$0xff] %v2076
  %s2080 = scalar_lea.vmem %s0, 1664
  %v2081 = vld [vmem:[%s2080] sm:$0xff]
  %s2082 = scalar_lea.vmem %s1, 1664
  %v2083 = vld [vmem:[%s2082] sm:$0xff]
  %2084 = xla_tuple %v2081, %v2083
  %2085 = xla_tuple %2084
  %v2086 = vmul.f32 %v2081, %v2083
  %2087 = xla_tuple %v2086
  %s2088 = scalar_lea.vmem %s2, 1664
  %2089 = vst [vmem:[%s2088] sm:$0xff] %v2086
  %s2090 = scalar_lea.vmem %s0, 1672
  %v2091 = vld [vmem:[%s2090] sm:$0xff]
  %s2092 = scalar_lea.vmem %s1, 1672
  %v2093 = vld [vmem:[%s2092] sm:$0xff]
  %2094 = xla_tuple %v2091, %v2093
  %2095 = xla_tuple %2094
  %v2096 = vmul.f32 %v2091, %v2093
  %2097 = xla_tuple %v2096
  %s2098 = scalar_lea.vmem %s2, 1672
  %2099 = vst [vmem:[%s2098] sm:$0xff] %v2096
  %s2100 = scalar_lea.vmem %s0, 1680
  %v2101 = vld [vmem:[%s2100] sm:$0xff]
  %s2102 = scalar_lea.vmem %s1, 1680
  %v2103 = vld [vmem:[%s2102] sm:$0xff]
  %2104 = xla_tuple %v2101, %v2103
  %2105 = xla_tuple %2104
  %v2106 = vmul.f32 %v2101, %v2103
  %2107 = xla_tuple %v2106
  %s2108 = scalar_lea.vmem %s2, 1680
  %2109 = vst [vmem:[%s2108] sm:$0xff] %v2106
  %s2110 = scalar_lea.vmem %s0, 1688
  %v2111 = vld [vmem:[%s2110] sm:$0xff]
  %s2112 = scalar_lea.vmem %s1, 1688
  %v2113 = vld [vmem:[%s2112] sm:$0xff]
  %2114 = xla_tuple %v2111, %v2113
  %2115 = xla_tuple %2114
  %v2116 = vmul.f32 %v2111, %v2113
  %2117 = xla_tuple %v2116
  %s2118 = scalar_lea.vmem %s2, 1688
  %2119 = vst [vmem:[%s2118] sm:$0xff] %v2116
  %s2120 = scalar_lea.vmem %s0, 1696
  %v2121 = vld [vmem:[%s2120] sm:$0xff]
  %s2122 = scalar_lea.vmem %s1, 1696
  %v2123 = vld [vmem:[%s2122] sm:$0xff]
  %2124 = xla_tuple %v2121, %v2123
  %2125 = xla_tuple %2124
  %v2126 = vmul.f32 %v2121, %v2123
  %2127 = xla_tuple %v2126
  %s2128 = scalar_lea.vmem %s2, 1696
  %2129 = vst [vmem:[%s2128] sm:$0xff] %v2126
  %s2130 = scalar_lea.vmem %s0, 1704
  %v2131 = vld [vmem:[%s2130] sm:$0xff]
  %s2132 = scalar_lea.vmem %s1, 1704
  %v2133 = vld [vmem:[%s2132] sm:$0xff]
  %2134 = xla_tuple %v2131, %v2133
  %2135 = xla_tuple %2134
  %v2136 = vmul.f32 %v2131, %v2133
  %2137 = xla_tuple %v2136
  %s2138 = scalar_lea.vmem %s2, 1704
  %2139 = vst [vmem:[%s2138] sm:$0xff] %v2136
  %s2140 = scalar_lea.vmem %s0, 1712
  %v2141 = vld [vmem:[%s2140] sm:$0xff]
  %s2142 = scalar_lea.vmem %s1, 1712
  %v2143 = vld [vmem:[%s2142] sm:$0xff]
  %2144 = xla_tuple %v2141, %v2143
  %2145 = xla_tuple %2144
  %v2146 = vmul.f32 %v2141, %v2143
  %2147 = xla_tuple %v2146
  %s2148 = scalar_lea.vmem %s2, 1712
  %2149 = vst [vmem:[%s2148] sm:$0xff] %v2146
  %s2150 = scalar_lea.vmem %s0, 1720
  %v2151 = vld [vmem:[%s2150] sm:$0xff]
  %s2152 = scalar_lea.vmem %s1, 1720
  %v2153 = vld [vmem:[%s2152] sm:$0xff]
  %2154 = xla_tuple %v2151, %v2153
  %2155 = xla_tuple %2154
  %v2156 = vmul.f32 %v2151, %v2153
  %2157 = xla_tuple %v2156
  %s2158 = scalar_lea.vmem %s2, 1720
  %2159 = vst [vmem:[%s2158] sm:$0xff] %v2156
  %s2160 = scalar_lea.vmem %s0, 1728
  %v2161 = vld [vmem:[%s2160] sm:$0xff]
  %s2162 = scalar_lea.vmem %s1, 1728
  %v2163 = vld [vmem:[%s2162] sm:$0xff]
  %2164 = xla_tuple %v2161, %v2163
  %2165 = xla_tuple %2164
  %v2166 = vmul.f32 %v2161, %v2163
  %2167 = xla_tuple %v2166
  %s2168 = scalar_lea.vmem %s2, 1728
  %2169 = vst [vmem:[%s2168] sm:$0xff] %v2166
  %s2170 = scalar_lea.vmem %s0, 1736
  %v2171 = vld [vmem:[%s2170] sm:$0xff]
  %s2172 = scalar_lea.vmem %s1, 1736
  %v2173 = vld [vmem:[%s2172] sm:$0xff]
  %2174 = xla_tuple %v2171, %v2173
  %2175 = xla_tuple %2174
  %v2176 = vmul.f32 %v2171, %v2173
  %2177 = xla_tuple %v2176
  %s2178 = scalar_lea.vmem %s2, 1736
  %2179 = vst [vmem:[%s2178] sm:$0xff] %v2176
  %s2180 = scalar_lea.vmem %s0, 1744
  %v2181 = vld [vmem:[%s2180] sm:$0xff]
  %s2182 = scalar_lea.vmem %s1, 1744
  %v2183 = vld [vmem:[%s2182] sm:$0xff]
  %2184 = xla_tuple %v2181, %v2183
  %2185 = xla_tuple %2184
  %v2186 = vmul.f32 %v2181, %v2183
  %2187 = xla_tuple %v2186
  %s2188 = scalar_lea.vmem %s2, 1744
  %2189 = vst [vmem:[%s2188] sm:$0xff] %v2186
  %s2190 = scalar_lea.vmem %s0, 1752
  %v2191 = vld [vmem:[%s2190] sm:$0xff]
  %s2192 = scalar_lea.vmem %s1, 1752
  %v2193 = vld [vmem:[%s2192] sm:$0xff]
  %2194 = xla_tuple %v2191, %v2193
  %2195 = xla_tuple %2194
  %v2196 = vmul.f32 %v2191, %v2193
  %2197 = xla_tuple %v2196
  %s2198 = scalar_lea.vmem %s2, 1752
  %2199 = vst [vmem:[%s2198] sm:$0xff] %v2196
  %s2200 = scalar_lea.vmem %s0, 1760
  %v2201 = vld [vmem:[%s2200] sm:$0xff]
  %s2202 = scalar_lea.vmem %s1, 1760
  %v2203 = vld [vmem:[%s2202] sm:$0xff]
  %2204 = xla_tuple %v2201, %v2203
  %2205 = xla_tuple %2204
  %v2206 = vmul.f32 %v2201, %v2203
  %2207 = xla_tuple %v2206
  %s2208 = scalar_lea.vmem %s2, 1760
  %2209 = vst [vmem:[%s2208] sm:$0xff] %v2206
  %s2210 = scalar_lea.vmem %s0, 1768
  %v2211 = vld [vmem:[%s2210] sm:$0xff]
  %s2212 = scalar_lea.vmem %s1, 1768
  %v2213 = vld [vmem:[%s2212] sm:$0xff]
  %2214 = xla_tuple %v2211, %v2213
  %2215 = xla_tuple %2214
  %v2216 = vmul.f32 %v2211, %v2213
  %2217 = xla_tuple %v2216
  %s2218 = scalar_lea.vmem %s2, 1768
  %2219 = vst [vmem:[%s2218] sm:$0xff] %v2216
  %s2220 = scalar_lea.vmem %s0, 1776
  %v2221 = vld [vmem:[%s2220] sm:$0xff]
  %s2222 = scalar_lea.vmem %s1, 1776
  %v2223 = vld [vmem:[%s2222] sm:$0xff]
  %2224 = xla_tuple %v2221, %v2223
  %2225 = xla_tuple %2224
  %v2226 = vmul.f32 %v2221, %v2223
  %2227 = xla_tuple %v2226
  %s2228 = scalar_lea.vmem %s2, 1776
  %2229 = vst [vmem:[%s2228] sm:$0xff] %v2226
  %s2230 = scalar_lea.vmem %s0, 1784
  %v2231 = vld [vmem:[%s2230] sm:$0xff]
  %s2232 = scalar_lea.vmem %s1, 1784
  %v2233 = vld [vmem:[%s2232] sm:$0xff]
  %2234 = xla_tuple %v2231, %v2233
  %2235 = xla_tuple %2234
  %v2236 = vmul.f32 %v2231, %v2233
  %2237 = xla_tuple %v2236
  %s2238 = scalar_lea.vmem %s2, 1784
  %2239 = vst [vmem:[%s2238] sm:$0xff] %v2236
  %s2240 = scalar_lea.vmem %s0, 1792
  %v2241 = vld [vmem:[%s2240] sm:$0xff]
  %s2242 = scalar_lea.vmem %s1, 1792
  %v2243 = vld [vmem:[%s2242] sm:$0xff]
  %2244 = xla_tuple %v2241, %v2243
  %2245 = xla_tuple %2244
  %v2246 = vmul.f32 %v2241, %v2243
  %2247 = xla_tuple %v2246
  %s2248 = scalar_lea.vmem %s2, 1792
  %2249 = vst [vmem:[%s2248] sm:$0xff] %v2246
  %s2250 = scalar_lea.vmem %s0, 1800
  %v2251 = vld [vmem:[%s2250] sm:$0xff]
  %s2252 = scalar_lea.vmem %s1, 1800
  %v2253 = vld [vmem:[%s2252] sm:$0xff]
  %2254 = xla_tuple %v2251, %v2253
  %2255 = xla_tuple %2254
  %v2256 = vmul.f32 %v2251, %v2253
  %2257 = xla_tuple %v2256
  %s2258 = scalar_lea.vmem %s2, 1800
  %2259 = vst [vmem:[%s2258] sm:$0xff] %v2256
  %s2260 = scalar_lea.vmem %s0, 1808
  %v2261 = vld [vmem:[%s2260] sm:$0xff]
  %s2262 = scalar_lea.vmem %s1, 1808
  %v2263 = vld [vmem:[%s2262] sm:$0xff]
  %2264 = xla_tuple %v2261, %v2263
  %2265 = xla_tuple %2264
  %v2266 = vmul.f32 %v2261, %v2263
  %2267 = xla_tuple %v2266
  %s2268 = scalar_lea.vmem %s2, 1808
  %2269 = vst [vmem:[%s2268] sm:$0xff] %v2266
  %s2270 = scalar_lea.vmem %s0, 1816
  %v2271 = vld [vmem:[%s2270] sm:$0xff]
  %s2272 = scalar_lea.vmem %s1, 1816
  %v2273 = vld [vmem:[%s2272] sm:$0xff]
  %2274 = xla_tuple %v2271, %v2273
  %2275 = xla_tuple %2274
  %v2276 = vmul.f32 %v2271, %v2273
  %2277 = xla_tuple %v2276
  %s2278 = scalar_lea.vmem %s2, 1816
  %2279 = vst [vmem:[%s2278] sm:$0xff] %v2276
  %s2280 = scalar_lea.vmem %s0, 1824
  %v2281 = vld [vmem:[%s2280] sm:$0xff]
  %s2282 = scalar_lea.vmem %s1, 1824
  %v2283 = vld [vmem:[%s2282] sm:$0xff]
  %2284 = xla_tuple %v2281, %v2283
  %2285 = xla_tuple %2284
  %v2286 = vmul.f32 %v2281, %v2283
  %2287 = xla_tuple %v2286
  %s2288 = scalar_lea.vmem %s2, 1824
  %2289 = vst [vmem:[%s2288] sm:$0xff] %v2286
  %s2290 = scalar_lea.vmem %s0, 1832
  %v2291 = vld [vmem:[%s2290] sm:$0xff]
  %s2292 = scalar_lea.vmem %s1, 1832
  %v2293 = vld [vmem:[%s2292] sm:$0xff]
  %2294 = xla_tuple %v2291, %v2293
  %2295 = xla_tuple %2294
  %v2296 = vmul.f32 %v2291, %v2293
  %2297 = xla_tuple %v2296
  %s2298 = scalar_lea.vmem %s2, 1832
  %2299 = vst [vmem:[%s2298] sm:$0xff] %v2296
  %s2300 = scalar_lea.vmem %s0, 1840
  %v2301 = vld [vmem:[%s2300] sm:$0xff]
  %s2302 = scalar_lea.vmem %s1, 1840
  %v2303 = vld [vmem:[%s2302] sm:$0xff]
  %2304 = xla_tuple %v2301, %v2303
  %2305 = xla_tuple %2304
  %v2306 = vmul.f32 %v2301, %v2303
  %2307 = xla_tuple %v2306
  %s2308 = scalar_lea.vmem %s2, 1840
  %2309 = vst [vmem:[%s2308] sm:$0xff] %v2306
  %s2310 = scalar_lea.vmem %s0, 1848
  %v2311 = vld [vmem:[%s2310] sm:$0xff]
  %s2312 = scalar_lea.vmem %s1, 1848
  %v2313 = vld [vmem:[%s2312] sm:$0xff]
  %2314 = xla_tuple %v2311, %v2313
  %2315 = xla_tuple %2314
  %v2316 = vmul.f32 %v2311, %v2313
  %2317 = xla_tuple %v2316
  %s2318 = scalar_lea.vmem %s2, 1848
  %2319 = vst [vmem:[%s2318] sm:$0xff] %v2316
  %s2320 = scalar_lea.vmem %s0, 1856
  %v2321 = vld [vmem:[%s2320] sm:$0xff]
  %s2322 = scalar_lea.vmem %s1, 1856
  %v2323 = vld [vmem:[%s2322] sm:$0xff]
  %2324 = xla_tuple %v2321, %v2323
  %2325 = xla_tuple %2324
  %v2326 = vmul.f32 %v2321, %v2323
  %2327 = xla_tuple %v2326
  %s2328 = scalar_lea.vmem %s2, 1856
  %2329 = vst [vmem:[%s2328] sm:$0xff] %v2326
  %s2330 = scalar_lea.vmem %s0, 1864
  %v2331 = vld [vmem:[%s2330] sm:$0xff]
  %s2332 = scalar_lea.vmem %s1, 1864
  %v2333 = vld [vmem:[%s2332] sm:$0xff]
  %2334 = xla_tuple %v2331, %v2333
  %2335 = xla_tuple %2334
  %v2336 = vmul.f32 %v2331, %v2333
  %2337 = xla_tuple %v2336
  %s2338 = scalar_lea.vmem %s2, 1864
  %2339 = vst [vmem:[%s2338] sm:$0xff] %v2336
  %s2340 = scalar_lea.vmem %s0, 1872
  %v2341 = vld [vmem:[%s2340] sm:$0xff]
  %s2342 = scalar_lea.vmem %s1, 1872
  %v2343 = vld [vmem:[%s2342] sm:$0xff]
  %2344 = xla_tuple %v2341, %v2343
  %2345 = xla_tuple %2344
  %v2346 = vmul.f32 %v2341, %v2343
  %2347 = xla_tuple %v2346
  %s2348 = scalar_lea.vmem %s2, 1872
  %2349 = vst [vmem:[%s2348] sm:$0xff] %v2346
  %s2350 = scalar_lea.vmem %s0, 1880
  %v2351 = vld [vmem:[%s2350] sm:$0xff]
  %s2352 = scalar_lea.vmem %s1, 1880
  %v2353 = vld [vmem:[%s2352] sm:$0xff]
  %2354 = xla_tuple %v2351, %v2353
  %2355 = xla_tuple %2354
  %v2356 = vmul.f32 %v2351, %v2353
  %2357 = xla_tuple %v2356
  %s2358 = scalar_lea.vmem %s2, 1880
  %2359 = vst [vmem:[%s2358] sm:$0xff] %v2356
  %s2360 = scalar_lea.vmem %s0, 1888
  %v2361 = vld [vmem:[%s2360] sm:$0xff]
  %s2362 = scalar_lea.vmem %s1, 1888
  %v2363 = vld [vmem:[%s2362] sm:$0xff]
  %2364 = xla_tuple %v2361, %v2363
  %2365 = xla_tuple %2364
  %v2366 = vmul.f32 %v2361, %v2363
  %2367 = xla_tuple %v2366
  %s2368 = scalar_lea.vmem %s2, 1888
  %2369 = vst [vmem:[%s2368] sm:$0xff] %v2366
  %s2370 = scalar_lea.vmem %s0, 1896
  %v2371 = vld [vmem:[%s2370] sm:$0xff]
  %s2372 = scalar_lea.vmem %s1, 1896
  %v2373 = vld [vmem:[%s2372] sm:$0xff]
  %2374 = xla_tuple %v2371, %v2373
  %2375 = xla_tuple %2374
  %v2376 = vmul.f32 %v2371, %v2373
  %2377 = xla_tuple %v2376
  %s2378 = scalar_lea.vmem %s2, 1896
  %2379 = vst [vmem:[%s2378] sm:$0xff] %v2376
  %s2380 = scalar_lea.vmem %s0, 1904
  %v2381 = vld [vmem:[%s2380] sm:$0xff]
  %s2382 = scalar_lea.vmem %s1, 1904
  %v2383 = vld [vmem:[%s2382] sm:$0xff]
  %2384 = xla_tuple %v2381, %v2383
  %2385 = xla_tuple %2384
  %v2386 = vmul.f32 %v2381, %v2383
  %2387 = xla_tuple %v2386
  %s2388 = scalar_lea.vmem %s2, 1904
  %2389 = vst [vmem:[%s2388] sm:$0xff] %v2386
  %s2390 = scalar_lea.vmem %s0, 1912
  %v2391 = vld [vmem:[%s2390] sm:$0xff]
  %s2392 = scalar_lea.vmem %s1, 1912
  %v2393 = vld [vmem:[%s2392] sm:$0xff]
  %2394 = xla_tuple %v2391, %v2393
  %2395 = xla_tuple %2394
  %v2396 = vmul.f32 %v2391, %v2393
  %2397 = xla_tuple %v2396
  %s2398 = scalar_lea.vmem %s2, 1912
  %2399 = vst [vmem:[%s2398] sm:$0xff] %v2396

// kernel: mul.7
$region0: #{mul.7}
  #allocation0 [shape = 's32[1]{0}', space=sflag, size = 0x4, scoped, tag = 'scoped memory for mul.7']
  %s0 = inlined_call_operand.vmem [shape: f32[61440], index: 0, kind: input, shape index: {}]
  %s1 = inlined_call_operand.vmem [shape: f32[61440], index: 1, kind: input, shape index: {}]
  %s2 = inlined_call_operand.vmem [shape: f32[61440], index: 2, kind: output, shape index: {}]
  %v3 = vld [vmem:[%s0] sm:$0xff]
  %v4 = vld [vmem:[%s1] sm:$0xff]
  %5 = xla_tuple %v3, %v4
  %6 = xla_tuple %5
  %v7 = vmul.f32 %v3, %v4
  %8 = xla_tuple %v7
  %9 = vst [vmem:[%s2] sm:$0xff] %v7
  %s10 = scalar_lea.vmem %s0, 8
  %v11 = vld [vmem:[%s10] sm:$0xff]
  %s12 = scalar_lea.vmem %s1, 8
  %v13 = vld [vmem:[%s12] sm:$0xff]
  %14 = xla_tuple %v11, %v13
  %15 = xla_tuple %14
  %v16 = vmul.f32 %v11, %v13
  %17 = xla_tuple %v16
  %s18 = scalar_lea.vmem %s2, 8
  %19 = vst [vmem:[%s18] sm:$0xff] %v16
  %s20 = scalar_lea.vmem %s0, 16
  %v21 = vld [vmem:[%s20] sm:$0xff]
  %s22 = scalar_lea.vmem %s1, 16
  %v23 = vld [vmem:[%s22] sm:$0xff]
  %24 = xla_tuple %v21, %v23
  %25 = xla_tuple %24
  %v26 = vmul.f32 %v21, %v23
  %27 = xla_tuple %v26
  %s28 = scalar_lea.vmem %s2, 16
  %29 = vst [vmem:[%s28] sm:$0xff] %v26
  %s30 = scalar_lea.vmem %s0, 24
  %v31 = vld [vmem:[%s30] sm:$0xff]
  %s32 = scalar_lea.vmem %s1, 24
  %v33 = vld [vmem:[%s32] sm:$0xff]
  %34 = xla_tuple %v31, %v33
  %35 = xla_tuple %34
  %v36 = vmul.f32 %v31, %v33
  %37 = xla_tuple %v36
  %s38 = scalar_lea.vmem %s2, 24
  %39 = vst [vmem:[%s38] sm:$0xff] %v36
  %s40 = scalar_lea.vmem %s0, 32
  %v41 = vld [vmem:[%s40] sm:$0xff]
  %s42 = scalar_lea.vmem %s1, 32
  %v43 = vld [vmem:[%s42] sm:$0xff]
  %44 = xla_tuple %v41, %v43
  %45 = xla_tuple %44
  %v46 = vmul.f32 %v41, %v43
  %47 = xla_tuple %v46
  %s48 = scalar_lea.vmem %s2, 32
  %49 = vst [vmem:[%s48] sm:$0xff] %v46
  %s50 = scalar_lea.vmem %s0, 40
  %v51 = vld [vmem:[%s50] sm:$0xff]
  %s52 = scalar_lea.vmem %s1, 40
  %v53 = vld [vmem:[%s52] sm:$0xff]
  %54 = xla_tuple %v51, %v53
  %55 = xla_tuple %54
  %v56 = vmul.f32 %v51, %v53
  %57 = xla_tuple %v56
  %s58 = scalar_lea.vmem %s2, 40
  %59 = vst [vmem:[%s58] sm:$0xff] %v56
  %s60 = scalar_lea.vmem %s0, 48
  %v61 = vld [vmem:[%s60] sm:$0xff]
  %s62 = scalar_lea.vmem %s1, 48
  %v63 = vld [vmem:[%s62] sm:$0xff]
  %64 = xla_tuple %v61, %v63
  %65 = xla_tuple %64
  %v66 = vmul.f32 %v61, %v63
  %67 = xla_tuple %v66
  %s68 = scalar_lea.vmem %s2, 48
  %69 = vst [vmem:[%s68] sm:$0xff] %v66
  %s70 = scalar_lea.vmem %s0, 56
  %v71 = vld [vmem:[%s70] sm:$0xff]
  %s72 = scalar_lea.vmem %s1, 56
  %v73 = vld [vmem:[%s72] sm:$0xff]
  %74 = xla_tuple %v71, %v73
  %75 = xla_tuple %74
  %v76 = vmul.f32 %v71, %v73
  %77 = xla_tuple %v76
  %s78 = scalar_lea.vmem %s2, 56
  %79 = vst [vmem:[%s78] sm:$0xff] %v76
  %s80 = scalar_lea.vmem %s0, 64
  %v81 = vld [vmem:[%s80] sm:$0xff]
  %s82 = scalar_lea.vmem %s1, 64
  %v83 = vld [vmem:[%s82] sm:$0xff]
  %84 = xla_tuple %v81, %v83
  %85 = xla_tuple %84
  %v86 = vmul.f32 %v81, %v83
  %87 = xla_tuple %v86
  %s88 = scalar_lea.vmem %s2, 64
  %89 = vst [vmem:[%s88] sm:$0xff] %v86
  %s90 = scalar_lea.vmem %s0, 72
  %v91 = vld [vmem:[%s90] sm:$0xff]
  %s92 = scalar_lea.vmem %s1, 72
  %v93 = vld [vmem:[%s92] sm:$0xff]
  %94 = xla_tuple %v91, %v93
  %95 = xla_tuple %94
  %v96 = vmul.f32 %v91, %v93
  %97 = xla_tuple %v96
  %s98 = scalar_lea.vmem %s2, 72
  %99 = vst [vmem:[%s98] sm:$0xff] %v96
  %s100 = scalar_lea.vmem %s0, 80
  %v101 = vld [vmem:[%s100] sm:$0xff]
  %s102 = scalar_lea.vmem %s1, 80
  %v103 = vld [vmem:[%s102] sm:$0xff]
  %104 = xla_tuple %v101, %v103
  %105 = xla_tuple %104
  %v106 = vmul.f32 %v101, %v103
  %107 = xla_tuple %v106
  %s108 = scalar_lea.vmem %s2, 80
  %109 = vst [vmem:[%s108] sm:$0xff] %v106
  %s110 = scalar_lea.vmem %s0, 88
  %v111 = vld [vmem:[%s110] sm:$0xff]
  %s112 = scalar_lea.vmem %s1, 88
  %v113 = vld [vmem:[%s112] sm:$0xff]
  %114 = xla_tuple %v111, %v113
  %115 = xla_tuple %114
  %v116 = vmul.f32 %v111, %v113
  %117 = xla_tuple %v116
  %s118 = scalar_lea.vmem %s2, 88
  %119 = vst [vmem:[%s118] sm:$0xff] %v116
  %s120 = scalar_lea.vmem %s0, 96
  %v121 = vld [vmem:[%s120] sm:$0xff]
  %s122 = scalar_lea.vmem %s1, 96
  %v123 = vld [vmem:[%s122] sm:$0xff]
  %124 = xla_tuple %v121, %v123
  %125 = xla_tuple %124
  %v126 = vmul.f32 %v121, %v123
  %127 = xla_tuple %v126
  %s128 = scalar_lea.vmem %s2, 96
  %129 = vst [vmem:[%s128] sm:$0xff] %v126
  %s130 = scalar_lea.vmem %s0, 104
  %v131 = vld [vmem:[%s130] sm:$0xff]
  %s132 = scalar_lea.vmem %s1, 104
  %v133 = vld [vmem:[%s132] sm:$0xff]
  %134 = xla_tuple %v131, %v133
  %135 = xla_tuple %134
  %v136 = vmul.f32 %v131, %v133
  %137 = xla_tuple %v136
  %s138 = scalar_lea.vmem %s2, 104
  %139 = vst [vmem:[%s138] sm:$0xff] %v136
  %s140 = scalar_lea.vmem %s0, 112
  %v141 = vld [vmem:[%s140] sm:$0xff]
  %s142 = scalar_lea.vmem %s1, 112
  %v143 = vld [vmem:[%s142] sm:$0xff]
  %144 = xla_tuple %v141, %v143
  %145 = xla_tuple %144
  %v146 = vmul.f32 %v141, %v143
  %147 = xla_tuple %v146
  %s148 = scalar_lea.vmem %s2, 112
  %149 = vst [vmem:[%s148] sm:$0xff] %v146
  %s150 = scalar_lea.vmem %s0, 120
  %v151 = vld [vmem:[%s150] sm:$0xff]
  %s152 = scalar_lea.vmem %s1, 120
  %v153 = vld [vmem:[%s152] sm:$0xff]
  %154 = xla_tuple %v151, %v153
  %155 = xla_tuple %154
  %v156 = vmul.f32 %v151, %v153
  %157 = xla_tuple %v156
  %s158 = scalar_lea.vmem %s2, 120
  %159 = vst [vmem:[%s158] sm:$0xff] %v156
  %s160 = scalar_lea.vmem %s0, 128
  %v161 = vld [vmem:[%s160] sm:$0xff]
  %s162 = scalar_lea.vmem %s1, 128
  %v163 = vld [vmem:[%s162] sm:$0xff]
  %164 = xla_tuple %v161, %v163
  %165 = xla_tuple %164
  %v166 = vmul.f32 %v161, %v163
  %167 = xla_tuple %v166
  %s168 = scalar_lea.vmem %s2, 128
  %169 = vst [vmem:[%s168] sm:$0xff] %v166
  %s170 = scalar_lea.vmem %s0, 136
  %v171 = vld [vmem:[%s170] sm:$0xff]
  %s172 = scalar_lea.vmem %s1, 136
  %v173 = vld [vmem:[%s172] sm:$0xff]
  %174 = xla_tuple %v171, %v173
  %175 = xla_tuple %174
  %v176 = vmul.f32 %v171, %v173
  %177 = xla_tuple %v176
  %s178 = scalar_lea.vmem %s2, 136
  %179 = vst [vmem:[%s178] sm:$0xff] %v176
  %s180 = scalar_lea.vmem %s0, 144
  %v181 = vld [vmem:[%s180] sm:$0xff]
  %s182 = scalar_lea.vmem %s1, 144
  %v183 = vld [vmem:[%s182] sm:$0xff]
  %184 = xla_tuple %v181, %v183
  %185 = xla_tuple %184
  %v186 = vmul.f32 %v181, %v183
  %187 = xla_tuple %v186
  %s188 = scalar_lea.vmem %s2, 144
  %189 = vst [vmem:[%s188] sm:$0xff] %v186
  %s190 = scalar_lea.vmem %s0, 152
  %v191 = vld [vmem:[%s190] sm:$0xff]
  %s192 = scalar_lea.vmem %s1, 152
  %v193 = vld [vmem:[%s192] sm:$0xff]
  %194 = xla_tuple %v191, %v193
  %195 = xla_tuple %194
  %v196 = vmul.f32 %v191, %v193
  %197 = xla_tuple %v196
  %s198 = scalar_lea.vmem %s2, 152
  %199 = vst [vmem:[%s198] sm:$0xff] %v196
  %s200 = scalar_lea.vmem %s0, 160
  %v201 = vld [vmem:[%s200] sm:$0xff]
  %s202 = scalar_lea.vmem %s1, 160
  %v203 = vld [vmem:[%s202] sm:$0xff]
  %204 = xla_tuple %v201, %v203
  %205 = xla_tuple %204
  %v206 = vmul.f32 %v201, %v203
  %207 = xla_tuple %v206
  %s208 = scalar_lea.vmem %s2, 160
  %209 = vst [vmem:[%s208] sm:$0xff] %v206
  %s210 = scalar_lea.vmem %s0, 168
  %v211 = vld [vmem:[%s210] sm:$0xff]
  %s212 = scalar_lea.vmem %s1, 168
  %v213 = vld [vmem:[%s212] sm:$0xff]
  %214 = xla_tuple %v211, %v213
  %215 = xla_tuple %214
  %v216 = vmul.f32 %v211, %v213
  %217 = xla_tuple %v216
  %s218 = scalar_lea.vmem %s2, 168
  %219 = vst [vmem:[%s218] sm:$0xff] %v216
  %s220 = scalar_lea.vmem %s0, 176
  %v221 = vld [vmem:[%s220] sm:$0xff]
  %s222 = scalar_lea.vmem %s1, 176
  %v223 = vld [vmem:[%s222] sm:$0xff]
  %224 = xla_tuple %v221, %v223
  %225 = xla_tuple %224
  %v226 = vmul.f32 %v221, %v223
  %227 = xla_tuple %v226
  %s228 = scalar_lea.vmem %s2, 176
  %229 = vst [vmem:[%s228] sm:$0xff] %v226
  %s230 = scalar_lea.vmem %s0, 184
  %v231 = vld [vmem:[%s230] sm:$0xff]
  %s232 = scalar_lea.vmem %s1, 184
  %v233 = vld [vmem:[%s232] sm:$0xff]
  %234 = xla_tuple %v231, %v233
  %235 = xla_tuple %234
  %v236 = vmul.f32 %v231, %v233
  %237 = xla_tuple %v236
  %s238 = scalar_lea.vmem %s2, 184
  %239 = vst [vmem:[%s238] sm:$0xff] %v236
  %s240 = scalar_lea.vmem %s0, 192
  %v241 = vld [vmem:[%s240] sm:$0xff]
  %s242 = scalar_lea.vmem %s1, 192
  %v243 = vld [vmem:[%s242] sm:$0xff]
  %244 = xla_tuple %v241, %v243
  %245 = xla_tuple %244
  %v246 = vmul.f32 %v241, %v243
  %247 = xla_tuple %v246
  %s248 = scalar_lea.vmem %s2, 192
  %249 = vst [vmem:[%s248] sm:$0xff] %v246
  %s250 = scalar_lea.vmem %s0, 200
  %v251 = vld [vmem:[%s250] sm:$0xff]
  %s252 = scalar_lea.vmem %s1, 200
  %v253 = vld [vmem:[%s252] sm:$0xff]
  %254 = xla_tuple %v251, %v253
  %255 = xla_tuple %254
  %v256 = vmul.f32 %v251, %v253
  %257 = xla_tuple %v256
  %s258 = scalar_lea.vmem %s2, 200
  %259 = vst [vmem:[%s258] sm:$0xff] %v256
  %s260 = scalar_lea.vmem %s0, 208
  %v261 = vld [vmem:[%s260] sm:$0xff]
  %s262 = scalar_lea.vmem %s1, 208
  %v263 = vld [vmem:[%s262] sm:$0xff]
  %264 = xla_tuple %v261, %v263
  %265 = xla_tuple %264
  %v266 = vmul.f32 %v261, %v263
  %267 = xla_tuple %v266
  %s268 = scalar_lea.vmem %s2, 208
  %269 = vst [vmem:[%s268] sm:$0xff] %v266
  %s270 = scalar_lea.vmem %s0, 216
  %v271 = vld [vmem:[%s270] sm:$0xff]
  %s272 = scalar_lea.vmem %s1, 216
  %v273 = vld [vmem:[%s272] sm:$0xff]
  %274 = xla_tuple %v271, %v273
  %275 = xla_tuple %274
  %v276 = vmul.f32 %v271, %v273
  %277 = xla_tuple %v276
  %s278 = scalar_lea.vmem %s2, 216
  %279 = vst [vmem:[%s278] sm:$0xff] %v276
  %s280 = scalar_lea.vmem %s0, 224
  %v281 = vld [vmem:[%s280] sm:$0xff]
  %s282 = scalar_lea.vmem %s1, 224
  %v283 = vld [vmem:[%s282] sm:$0xff]
  %284 = xla_tuple %v281, %v283
  %285 = xla_tuple %284
  %v286 = vmul.f32 %v281, %v283
  %287 = xla_tuple %v286
  %s288 = scalar_lea.vmem %s2, 224
  %289 = vst [vmem:[%s288] sm:$0xff] %v286
  %s290 = scalar_lea.vmem %s0, 232
  %v291 = vld [vmem:[%s290] sm:$0xff]
  %s292 = scalar_lea.vmem %s1, 232
  %v293 = vld [vmem:[%s292] sm:$0xff]
  %294 = xla_tuple %v291, %v293
  %295 = xla_tuple %294
  %v296 = vmul.f32 %v291, %v293
  %297 = xla_tuple %v296
  %s298 = scalar_lea.vmem %s2, 232
  %299 = vst [vmem:[%s298] sm:$0xff] %v296
  %s300 = scalar_lea.vmem %s0, 240
  %v301 = vld [vmem:[%s300] sm:$0xff]
  %s302 = scalar_lea.vmem %s1, 240
  %v303 = vld [vmem:[%s302] sm:$0xff]
  %304 = xla_tuple %v301, %v303
  %305 = xla_tuple %304
  %v306 = vmul.f32 %v301, %v303
  %307 = xla_tuple %v306
  %s308 = scalar_lea.vmem %s2, 240
  %309 = vst [vmem:[%s308] sm:$0xff] %v306
  %s310 = scalar_lea.vmem %s0, 248
  %v311 = vld [vmem:[%s310] sm:$0xff]
  %s312 = scalar_lea.vmem %s1, 248
  %v313 = vld [vmem:[%s312] sm:$0xff]
  %314 = xla_tuple %v311, %v313
  %315 = xla_tuple %314
  %v316 = vmul.f32 %v311, %v313
  %317 = xla_tuple %v316
  %s318 = scalar_lea.vmem %s2, 248
  %319 = vst [vmem:[%s318] sm:$0xff] %v316
  %s320 = scalar_lea.vmem %s0, 256
  %v321 = vld [vmem:[%s320] sm:$0xff]
  %s322 = scalar_lea.vmem %s1, 256
  %v323 = vld [vmem:[%s322] sm:$0xff]
  %324 = xla_tuple %v321, %v323
  %325 = xla_tuple %324
  %v326 = vmul.f32 %v321, %v323
  %327 = xla_tuple %v326
  %s328 = scalar_lea.vmem %s2, 256
  %329 = vst [vmem:[%s328] sm:$0xff] %v326
  %s330 = scalar_lea.vmem %s0, 264
  %v331 = vld [vmem:[%s330] sm:$0xff]
  %s332 = scalar_lea.vmem %s1, 264
  %v333 = vld [vmem:[%s332] sm:$0xff]
  %334 = xla_tuple %v331, %v333
  %335 = xla_tuple %334
  %v336 = vmul.f32 %v331, %v333
  %337 = xla_tuple %v336
  %s338 = scalar_lea.vmem %s2, 264
  %339 = vst [vmem:[%s338] sm:$0xff] %v336
  %s340 = scalar_lea.vmem %s0, 272
  %v341 = vld [vmem:[%s340] sm:$0xff]
  %s342 = scalar_lea.vmem %s1, 272
  %v343 = vld [vmem:[%s342] sm:$0xff]
  %344 = xla_tuple %v341, %v343
  %345 = xla_tuple %344
  %v346 = vmul.f32 %v341, %v343
  %347 = xla_tuple %v346
  %s348 = scalar_lea.vmem %s2, 272
  %349 = vst [vmem:[%s348] sm:$0xff] %v346
  %s350 = scalar_lea.vmem %s0, 280
  %v351 = vld [vmem:[%s350] sm:$0xff]
  %s352 = scalar_lea.vmem %s1, 280
  %v353 = vld [vmem:[%s352] sm:$0xff]
  %354 = xla_tuple %v351, %v353
  %355 = xla_tuple %354
  %v356 = vmul.f32 %v351, %v353
  %357 = xla_tuple %v356
  %s358 = scalar_lea.vmem %s2, 280
  %359 = vst [vmem:[%s358] sm:$0xff] %v356
  %s360 = scalar_lea.vmem %s0, 288
  %v361 = vld [vmem:[%s360] sm:$0xff]
  %s362 = scalar_lea.vmem %s1, 288
  %v363 = vld [vmem:[%s362] sm:$0xff]
  %364 = xla_tuple %v361, %v363
  %365 = xla_tuple %364
  %v366 = vmul.f32 %v361, %v363
  %367 = xla_tuple %v366
  %s368 = scalar_lea.vmem %s2, 288
  %369 = vst [vmem:[%s368] sm:$0xff] %v366
  %s370 = scalar_lea.vmem %s0, 296
  %v371 = vld [vmem:[%s370] sm:$0xff]
  %s372 = scalar_lea.vmem %s1, 296
  %v373 = vld [vmem:[%s372] sm:$0xff]
  %374 = xla_tuple %v371, %v373
  %375 = xla_tuple %374
  %v376 = vmul.f32 %v371, %v373
  %377 = xla_tuple %v376
  %s378 = scalar_lea.vmem %s2, 296
  %379 = vst [vmem:[%s378] sm:$0xff] %v376
  %s380 = scalar_lea.vmem %s0, 304
  %v381 = vld [vmem:[%s380] sm:$0xff]
  %s382 = scalar_lea.vmem %s1, 304
  %v383 = vld [vmem:[%s382] sm:$0xff]
  %384 = xla_tuple %v381, %v383
  %385 = xla_tuple %384
  %v386 = vmul.f32 %v381, %v383
  %387 = xla_tuple %v386
  %s388 = scalar_lea.vmem %s2, 304
  %389 = vst [vmem:[%s388] sm:$0xff] %v386
  %s390 = scalar_lea.vmem %s0, 312
  %v391 = vld [vmem:[%s390] sm:$0xff]
  %s392 = scalar_lea.vmem %s1, 312
  %v393 = vld [vmem:[%s392] sm:$0xff]
  %394 = xla_tuple %v391, %v393
  %395 = xla_tuple %394
  %v396 = vmul.f32 %v391, %v393
  %397 = xla_tuple %v396
  %s398 = scalar_lea.vmem %s2, 312
  %399 = vst [vmem:[%s398] sm:$0xff] %v396
  %s400 = scalar_lea.vmem %s0, 320
  %v401 = vld [vmem:[%s400] sm:$0xff]
  %s402 = scalar_lea.vmem %s1, 320
  %v403 = vld [vmem:[%s402] sm:$0xff]
  %404 = xla_tuple %v401, %v403
  %405 = xla_tuple %404
  %v406 = vmul.f32 %v401, %v403
  %407 = xla_tuple %v406
  %s408 = scalar_lea.vmem %s2, 320
  %409 = vst [vmem:[%s408] sm:$0xff] %v406
  %s410 = scalar_lea.vmem %s0, 328
  %v411 = vld [vmem:[%s410] sm:$0xff]
  %s412 = scalar_lea.vmem %s1, 328
  %v413 = vld [vmem:[%s412] sm:$0xff]
  %414 = xla_tuple %v411, %v413
  %415 = xla_tuple %414
  %v416 = vmul.f32 %v411, %v413
  %417 = xla_tuple %v416
  %s418 = scalar_lea.vmem %s2, 328
  %419 = vst [vmem:[%s418] sm:$0xff] %v416
  %s420 = scalar_lea.vmem %s0, 336
  %v421 = vld [vmem:[%s420] sm:$0xff]
  %s422 = scalar_lea.vmem %s1, 336
  %v423 = vld [vmem:[%s422] sm:$0xff]
  %424 = xla_tuple %v421, %v423
  %425 = xla_tuple %424
  %v426 = vmul.f32 %v421, %v423
  %427 = xla_tuple %v426
  %s428 = scalar_lea.vmem %s2, 336
  %429 = vst [vmem:[%s428] sm:$0xff] %v426
  %s430 = scalar_lea.vmem %s0, 344
  %v431 = vld [vmem:[%s430] sm:$0xff]
  %s432 = scalar_lea.vmem %s1, 344
  %v433 = vld [vmem:[%s432] sm:$0xff]
  %434 = xla_tuple %v431, %v433
  %435 = xla_tuple %434
  %v436 = vmul.f32 %v431, %v433
  %437 = xla_tuple %v436
  %s438 = scalar_lea.vmem %s2, 344
  %439 = vst [vmem:[%s438] sm:$0xff] %v436
  %s440 = scalar_lea.vmem %s0, 352
  %v441 = vld [vmem:[%s440] sm:$0xff]
  %s442 = scalar_lea.vmem %s1, 352
  %v443 = vld [vmem:[%s442] sm:$0xff]
  %444 = xla_tuple %v441, %v443
  %445 = xla_tuple %444
  %v446 = vmul.f32 %v441, %v443
  %447 = xla_tuple %v446
  %s448 = scalar_lea.vmem %s2, 352
  %449 = vst [vmem:[%s448] sm:$0xff] %v446
  %s450 = scalar_lea.vmem %s0, 360
  %v451 = vld [vmem:[%s450] sm:$0xff]
  %s452 = scalar_lea.vmem %s1, 360
  %v453 = vld [vmem:[%s452] sm:$0xff]
  %454 = xla_tuple %v451, %v453
  %455 = xla_tuple %454
  %v456 = vmul.f32 %v451, %v453
  %457 = xla_tuple %v456
  %s458 = scalar_lea.vmem %s2, 360
  %459 = vst [vmem:[%s458] sm:$0xff] %v456
  %s460 = scalar_lea.vmem %s0, 368
  %v461 = vld [vmem:[%s460] sm:$0xff]
  %s462 = scalar_lea.vmem %s1, 368
  %v463 = vld [vmem:[%s462] sm:$0xff]
  %464 = xla_tuple %v461, %v463
  %465 = xla_tuple %464
  %v466 = vmul.f32 %v461, %v463
  %467 = xla_tuple %v466
  %s468 = scalar_lea.vmem %s2, 368
  %469 = vst [vmem:[%s468] sm:$0xff] %v466
  %s470 = scalar_lea.vmem %s0, 376
  %v471 = vld [vmem:[%s470] sm:$0xff]
  %s472 = scalar_lea.vmem %s1, 376
  %v473 = vld [vmem:[%s472] sm:$0xff]
  %474 = xla_tuple %v471, %v473
  %475 = xla_tuple %474
  %v476 = vmul.f32 %v471, %v473
  %477 = xla_tuple %v476
  %s478 = scalar_lea.vmem %s2, 376
  %479 = vst [vmem:[%s478] sm:$0xff] %v476
  %s480 = scalar_lea.vmem %s0, 384
  %v481 = vld [vmem:[%s480] sm:$0xff]
  %s482 = scalar_lea.vmem %s1, 384
  %v483 = vld [vmem:[%s482] sm:$0xff]
  %484 = xla_tuple %v481, %v483
  %485 = xla_tuple %484
  %v486 = vmul.f32 %v481, %v483
  %487 = xla_tuple %v486
  %s488 = scalar_lea.vmem %s2, 384
  %489 = vst [vmem:[%s488] sm:$0xff] %v486
  %s490 = scalar_lea.vmem %s0, 392
  %v491 = vld [vmem:[%s490] sm:$0xff]
  %s492 = scalar_lea.vmem %s1, 392
  %v493 = vld [vmem:[%s492] sm:$0xff]
  %494 = xla_tuple %v491, %v493
  %495 = xla_tuple %494
  %v496 = vmul.f32 %v491, %v493
  %497 = xla_tuple %v496
  %s498 = scalar_lea.vmem %s2, 392
  %499 = vst [vmem:[%s498] sm:$0xff] %v496
  %s500 = scalar_lea.vmem %s0, 400
  %v501 = vld [vmem:[%s500] sm:$0xff]
  %s502 = scalar_lea.vmem %s1, 400
  %v503 = vld [vmem:[%s502] sm:$0xff]
  %504 = xla_tuple %v501, %v503
  %505 = xla_tuple %504
  %v506 = vmul.f32 %v501, %v503
  %507 = xla_tuple %v506
  %s508 = scalar_lea.vmem %s2, 400
  %509 = vst [vmem:[%s508] sm:$0xff] %v506
  %s510 = scalar_lea.vmem %s0, 408
  %v511 = vld [vmem:[%s510] sm:$0xff]
  %s512 = scalar_lea.vmem %s1, 408
  %v513 = vld [vmem:[%s512] sm:$0xff]
  %514 = xla_tuple %v511, %v513
  %515 = xla_tuple %514
  %v516 = vmul.f32 %v511, %v513
  %517 = xla_tuple %v516
  %s518 = scalar_lea.vmem %s2, 408
  %519 = vst [vmem:[%s518] sm:$0xff] %v516
  %s520 = scalar_lea.vmem %s0, 416
  %v521 = vld [vmem:[%s520] sm:$0xff]
  %s522 = scalar_lea.vmem %s1, 416
  %v523 = vld [vmem:[%s522] sm:$0xff]
  %524 = xla_tuple %v521, %v523
  %525 = xla_tuple %524
  %v526 = vmul.f32 %v521, %v523
  %527 = xla_tuple %v526
  %s528 = scalar_lea.vmem %s2, 416
  %529 = vst [vmem:[%s528] sm:$0xff] %v526
  %s530 = scalar_lea.vmem %s0, 424
  %v531 = vld [vmem:[%s530] sm:$0xff]
  %s532 = scalar_lea.vmem %s1, 424
  %v533 = vld [vmem:[%s532] sm:$0xff]
  %534 = xla_tuple %v531, %v533
  %535 = xla_tuple %534
  %v536 = vmul.f32 %v531, %v533
  %537 = xla_tuple %v536
  %s538 = scalar_lea.vmem %s2, 424
  %539 = vst [vmem:[%s538] sm:$0xff] %v536
  %s540 = scalar_lea.vmem %s0, 432
  %v541 = vld [vmem:[%s540] sm:$0xff]
  %s542 = scalar_lea.vmem %s1, 432
  %v543 = vld [vmem:[%s542] sm:$0xff]
  %544 = xla_tuple %v541, %v543
  %545 = xla_tuple %544
  %v546 = vmul.f32 %v541, %v543
  %547 = xla_tuple %v546
  %s548 = scalar_lea.vmem %s2, 432
  %549 = vst [vmem:[%s548] sm:$0xff] %v546
  %s550 = scalar_lea.vmem %s0, 440
  %v551 = vld [vmem:[%s550] sm:$0xff]
  %s552 = scalar_lea.vmem %s1, 440
  %v553 = vld [vmem:[%s552] sm:$0xff]
  %554 = xla_tuple %v551, %v553
  %555 = xla_tuple %554
  %v556 = vmul.f32 %v551, %v553
  %557 = xla_tuple %v556
  %s558 = scalar_lea.vmem %s2, 440
  %559 = vst [vmem:[%s558] sm:$0xff] %v556
  %s560 = scalar_lea.vmem %s0, 448
  %v561 = vld [vmem:[%s560] sm:$0xff]
  %s562 = scalar_lea.vmem %s1, 448
  %v563 = vld [vmem:[%s562] sm:$0xff]
  %564 = xla_tuple %v561, %v563
  %565 = xla_tuple %564
  %v566 = vmul.f32 %v561, %v563
  %567 = xla_tuple %v566
  %s568 = scalar_lea.vmem %s2, 448
  %569 = vst [vmem:[%s568] sm:$0xff] %v566
  %s570 = scalar_lea.vmem %s0, 456
  %v571 = vld [vmem:[%s570] sm:$0xff]
  %s572 = scalar_lea.vmem %s1, 456
  %v573 = vld [vmem:[%s572] sm:$0xff]
  %574 = xla_tuple %v571, %v573
  %575 = xla_tuple %574
  %v576 = vmul.f32 %v571, %v573
  %577 = xla_tuple %v576
  %s578 = scalar_lea.vmem %s2, 456
  %579 = vst [vmem:[%s578] sm:$0xff] %v576
  %s580 = scalar_lea.vmem %s0, 464
  %v581 = vld [vmem:[%s580] sm:$0xff]
  %s582 = scalar_lea.vmem %s1, 464
  %v583 = vld [vmem:[%s582] sm:$0xff]
  %584 = xla_tuple %v581, %v583
  %585 = xla_tuple %584
  %v586 = vmul.f32 %v581, %v583
  %587 = xla_tuple %v586
  %s588 = scalar_lea.vmem %s2, 464
  %589 = vst [vmem:[%s588] sm:$0xff] %v586
  %s590 = scalar_lea.vmem %s0, 472
  %v591 = vld [vmem:[%s590] sm:$0xff]
  %s592 = scalar_lea.vmem %s1, 472
  %v593 = vld [vmem:[%s592] sm:$0xff]
  %594 = xla_tuple %v591, %v593
  %595 = xla_tuple %594
  %v596 = vmul.f32 %v591, %v593
  %597 = xla_tuple %v596
  %s598 = scalar_lea.vmem %s2, 472
  %599 = vst [vmem:[%s598] sm:$0xff] %v596

// kernel: tile.33
$region0: #{tile.33}
  #allocation0 [shape = 's32[1]{0}', space=sflag, size = 0x4, scoped, tag = 'scoped memory for tile.33']
  %s0 = inlined_call_operand.vmem [shape: f32[4], index: 0, kind: input, shape index: {}]
  %s1 = inlined_call_operand.vmem [shape: f32[32,4], index: 1, kind: output, shape index: {}]
  // Predicated region
  $region2: #{tile.33} parent=0 // pred_check
    _
  $region3: #{tile.33} parent=0 // pred_check_branch
    %3 = sbr.rel (0) target = $region5
  $region4: #{tile.33} parent=0 // pred_region
    _
  $region5: #{tile.33} parent=0 // pred_fallthru
    _
  %v4 = vld [vmem:[%s0] ss:$0 sm:$0xff]
  %5 = vst [vmem:[%s1] sm:$0xff] %v4
  %s6 = scalar_lea.vmem %s1, 8
  %7 = vst [vmem:[%s6] sm:$0xff] %v4
  %s8 = scalar_lea.vmem %s1, 16
  %9 = vst [vmem:[%s8] sm:$0xff] %v4
  %s10 = scalar_lea.vmem %s1, 24
  %11 = vst [vmem:[%s10] sm:$0xff] %v4

// kernel: tile.34
$region0: #{tile.34}
  %s0 = inlined_call_operand.vmem [shape: f32[32,4], index: 0, kind: input, shape index: {}]
  %s1 = inlined_call_operand.vmem [shape: f32[1,128], index: 1, kind: output, shape index: {}]
  $region1: #{tile.34} parent=0
    #allocation0 [shape = 'u8[4096]{0}', space=vmem, size = 0x1000, scoped, tag = 'scoped mem for output reshape']
    %v2 = vld [vmem:[%s0] sm:$0x1]
    %vm3 = vcmask 31744
    %4 = vst.msk [vmem:[#allocation0] sm:$0x1] %vm3, %v2
    %s5 = scalar_lea.vmem %s0, 31
    %v6 = vld [vmem:[%s5] sm:$0x1]
    %7 = vrot.lane.b32.xlu0 %v6, 124
    %v8 = vpop.permute.xlu0 %7
    %vm9 = vcmask 1048544
    %10 = vst.msk [vmem:[#allocation0] sm:$0x1] %vm9, %v8
    %s11 = scalar_lea.vmem %s0, 30
    %v12 = vld [vmem:[%s11] sm:$0x1]
    %13 = vrot.lane.b32.xlu0 %v12, 120
    %v14 = vpop.permute.xlu0 %13
    %vm15 = vcmask 1015744
    %16 = vst.msk [vmem:[#allocation0] sm:$0x1] %vm15, %v14
    %s17 = scalar_lea.vmem %s0, 29
    %v18 = vld [vmem:[%s17] sm:$0x1]
    %19 = vrot.lane.b32.xlu0 %v18, 116
    %v20 = vpop.permute.xlu0 %19
    %vm21 = vcmask 982944
    %22 = vst.msk [vmem:[#allocation0] sm:$0x1] %vm21, %v20
    %s23 = scalar_lea.vmem %s0, 28
    %v24 = vld [vmem:[%s23] sm:$0x1]
    %25 = vrot.lane.b32.xlu0 %v24, 112
    %v26 = vpop.permute.xlu0 %25
    %vm27 = vcmask 950144
    %28 = vst.msk [vmem:[#allocation0] sm:$0x1] %vm27, %v26
    %s29 = scalar_lea.vmem %s0, 27
    %v30 = vld [vmem:[%s29] sm:$0x1]
    %31 = vrot.lane.b32.xlu0 %v30, 108
    %v32 = vpop.permute.xlu0 %31
    %vm33 = vcmask 917344
    %34 = vst.msk [vmem:[#allocation0] sm:$0x1] %vm33, %v32
    %s35 = scalar_lea.vmem %s0, 26
    %v36 = vld [vmem:[%s35] sm:$0x1]
    %37 = vrot.lane.b32.xlu0 %v36, 104
    %v38 = vpop.permute.xlu0 %37
    %vm39 = vcmask 884544
    %40 = vst.msk [vmem:[#allocation0] sm:$0x1] %vm39, %v38
    %s41 = scalar_lea.vmem %s0, 25
    %v42 = vld [vmem:[%s41] sm:$0x1]
    %43 = vrot.lane.b32.xlu0 %v42, 100
    %v44 = vpop.permute.xlu0 %43
    %vm45 = vcmask 851744
    %46 = vst.msk [vmem:[#allocation0] sm:$0x1] %vm45, %v44
    %s47 = scalar_lea.vmem %s0, 24
    %v48 = vld [vmem:[%s47] sm:$0x1]
    %49 = vrot.lane.b32.xlu0 %v48, 96
    %v50 = vpop.permute.xlu0 %49
    %vm51 = vcmask 818944
    %52 = vst.msk [vmem:[#allocation0] sm:$0x1] %vm51, %v50
    %s53 = scalar_lea.vmem %s0, 23
    %v54 = vld [vmem:[%s53] sm:$0x1]
    %55 = vrot.lane.b32.xlu0 %v54, 92
    %v56 = vpop.permute.xlu0 %55
    %vm57 = vcmask 786144
    %58 = vst.msk [vmem:[#allocation0] sm:$0x1] %vm57, %v56
    %s59 = scalar_lea.vmem %s0, 22
    %v60 = vld [vmem:[%s59] sm:$0x1]
    %61 = vrot.lane.b32.xlu0 %v60, 88
    %v62 = vpop.permute.xlu0 %61
    %vm63 = vcmask 753344
    %64 = vst.msk [vmem:[#allocation0] sm:$0x1] %vm63, %v62
    %s65 = scalar_lea.vmem %s0, 21
    %v66 = vld [vmem:[%s65] sm:$0x1]
    %67 = vrot.lane.b32.xlu0 %v66, 84
    %v68 = vpop.permute.xlu0 %67
    %vm69 = vcmask 720544
    %70 = vst.msk [vmem:[#allocation0] sm:$0x1] %vm69, %v68
    %s71 = scalar_lea.vmem %s0, 20
    %v72 = vld [vmem:[%s71] sm:$0x1]
    %73 = vrot.lane.b32.xlu0 %v72, 80
    %v74 = vpop.permute.xlu0 %73
    %vm75 = vcmask 687744
    %76 = vst.msk [vmem:[#allocation0] sm:$0x1] %vm75, %v74
    %s77 = scalar_lea.vmem %s0, 19
    %v78 = vld [vmem:[%s77] sm:$0x1]
    %79 = vrot.lane.b32.xlu0 %v78, 76
    %v80 = vpop.permute.xlu0 %79
    %vm81 = vcmask 654944
    %82 = vst.msk [vmem:[#allocation0] sm:$0x1] %vm81, %v80
    %s83 = scalar_lea.vmem %s0, 18
    %v84 = vld [vmem:[%s83] sm:$0x1]
    %85 = vrot.lane.b32.xlu0 %v84, 72
    %v86 = vpop.permute.xlu0 %85
    %vm87 = vcmask 622144
    %88 = vst.msk [vmem:[#allocation0] sm:$0x1] %vm87, %v86
    %s89 = scalar_lea.vmem %s0, 17
    %v90 = vld [vmem:[%s89] sm:$0x1]
    %91 = vrot.lane.b32.xlu0 %v90, 68
    %v92 = vpop.permute.xlu0 %91
    %vm93 = vcmask 589344
    %94 = vst.msk [vmem:[#allocation0] sm:$0x1] %vm93, %v92
    %s95 = scalar_lea.vmem %s0, 16
    %v96 = vld [vmem:[%s95] sm:$0x1]
    %97 = vrot.lane.b32.xlu0 %v96, 64
    %v98 = vpop.permute.xlu0 %97
    %vm99 = vcmask 556544
    %100 = vst.msk [vmem:[#allocation0] sm:$0x1] %vm99, %v98
    %s101 = scalar_lea.vmem %s0, 15
    %v102 = vld [vmem:[%s101] sm:$0x1]
    %103 = vrot.lane.b32.xlu0 %v102, 60
    %v104 = vpop.permute.xlu0 %103
    %vm105 = vcmask 523744
    %106 = vst.msk [vmem:[#allocation0] sm:$0x1] %vm105, %v104
    %s107 = scalar_lea.vmem %s0, 14
    %v108 = vld [vmem:[%s107] sm:$0x1]
    %109 = vrot.lane.b32.xlu0 %v108, 56
    %v110 = vpop.permute.xlu0 %109
    %vm111 = vcmask 490944
    %112 = vst.msk [vmem:[#allocation0] sm:$0x1] %vm111, %v110
    %s113 = scalar_lea.vmem %s0, 13
    %v114 = vld [vmem:[%s113] sm:$0x1]
    %115 = vrot.lane.b32.xlu0 %v114, 52
    %v116 = vpop.permute.xlu0 %115
    %vm117 = vcmask 458144
    %118 = vst.msk [vmem:[#allocation0] sm:$0x1] %vm117, %v116
    %s119 = scalar_lea.vmem %s0, 12
    %v120 = vld [vmem:[%s119] sm:$0x1]
    %121 = vrot.lane.b32.xlu0 %v120, 48
    %v122 = vpop.permute.xlu0 %121
    %vm123 = vcmask 425344
    %124 = vst.msk [vmem:[#allocation0] sm:$0x1] %vm123, %v122
    %s125 = scalar_lea.vmem %s0, 11
    %v126 = vld [vmem:[%s125] sm:$0x1]
    %127 = vrot.lane.b32.xlu0 %v126, 44
    %v128 = vpop.permute.xlu0 %127
    %vm129 = vcmask 392544
    %130 = vst.msk [vmem:[#allocation0] sm:$0x1] %vm129, %v128
    %s131 = scalar_lea.vmem %s0, 10
    %v132 = vld [vmem:[%s131] sm:$0x1]
    %133 = vrot.lane.b32.xlu0 %v132, 40
    %v134 = vpop.permute.xlu0 %133
    %vm135 = vcmask 359744
    %136 = vst.msk [vmem:[#allocation0] sm:$0x1] %vm135, %v134
    %s137 = scalar_lea.vmem %s0, 9
    %v138 = vld [vmem:[%s137] sm:$0x1]
    %139 = vrot.lane.b32.xlu0 %v138, 36
    %v140 = vpop.permute.xlu0 %139
    %vm141 = vcmask 326944
    %142 = vst.msk [vmem:[#allocation0] sm:$0x1] %vm141, %v140
    %s143 = scalar_lea.vmem %s0, 8
    %v144 = vld [vmem:[%s143] sm:$0x1]
    %145 = vrot.lane.b32.xlu0 %v144, 32
    %v146 = vpop.permute.xlu0 %145
    %vm147 = vcmask 294144
    %148 = vst.msk [vmem:[#allocation0] sm:$0x1] %vm147, %v146
    %s149 = scalar_lea.vmem %s0, 7
    %v150 = vld [vmem:[%s149] sm:$0x1]
    %151 = vrot.lane.b32.xlu0 %v150, 28
    %v152 = vpop.permute.xlu0 %151
    %vm153 = vcmask 261344
    %154 = vst.msk [vmem:[#allocation0] sm:$0x1] %vm153, %v152
    %s155 = scalar_lea.vmem %s0, 6
    %v156 = vld [vmem:[%s155] sm:$0x1]
    %157 = vrot.lane.b32.xlu0 %v156, 24
    %v158 = vpop.permute.xlu0 %157
    %vm159 = vcmask 228544
    %160 = vst.msk [vmem:[#allocation0] sm:$0x1] %vm159, %v158
    %s161 = scalar_lea.vmem %s0, 5
    %v162 = vld [vmem:[%s161] sm:$0x1]
    %163 = vrot.lane.b32.xlu0 %v162, 20
    %v164 = vpop.permute.xlu0 %163
    %vm165 = vcmask 195744
    %166 = vst.msk [vmem:[#allocation0] sm:$0x1] %vm165, %v164
    %s167 = scalar_lea.vmem %s0, 4
    %v168 = vld [vmem:[%s167] sm:$0x1]
    %169 = vrot.lane.b32.xlu0 %v168, 16
    %v170 = vpop.permute.xlu0 %169
    %vm171 = vcmask 162944
    %172 = vst.msk [vmem:[#allocation0] sm:$0x1] %vm171, %v170
    %s173 = scalar_lea.vmem %s0, 3
    %v174 = vld [vmem:[%s173] sm:$0x1]
    %175 = vrot.lane.b32.xlu0 %v174, 12
    %v176 = vpop.permute.xlu0 %175
    %vm177 = vcmask 130144
    %178 = vst.msk [vmem:[#allocation0] sm:$0x1] %vm177, %v176
    %s179 = scalar_lea.vmem %s0, 2
    %v180 = vld [vmem:[%s179] sm:$0x1]
    %181 = vrot.lane.b32.xlu0 %v180, 8
    %v182 = vpop.permute.xlu0 %181
    %vm183 = vcmask 97344
    %184 = vst.msk [vmem:[#allocation0] sm:$0x1] %vm183, %v182
    %s185 = scalar_lea.vmem %s0, 1
    %v186 = vld [vmem:[%s185] sm:$0x1]
    %187 = vrot.lane.b32.xlu0 %v186, 4
    %v188 = vpop.permute.xlu0 %187
    %vm189 = vcmask 64544
    %190 = vst.msk [vmem:[#allocation0] sm:$0x1] %vm189, %v188
    %s192 = sshllo.u32 0, 1
    %v194 = vld [vmem:[#allocation0] sm:%s192]
    %s195 = sshllo.u32 0, 1
    %196 = vst [vmem:[%s1] sm:%s195] %v194

// kernel: up_forward_pallas.1
$region0: #{up_forward_pallas.1}
  #allocation0 [shape = 'u32[]', space=smem, size = 0x4, offset = 0x4, fixed_abs, tag = 'smem constant byte address 0x4 - core index']
  #allocation1 [shape = 'u32[144,128]{1,0:T(1,128)}', space=vmem, size = 0x12000, scoped, tag = 'internal scratch']
  %s0 = inlined_call_operand.vmem [shape: f32[2,8,64], index: 0, kind: input, shape index: {}]
  %s1 = inlined_call_operand.vmem [shape: f32[2,8,128], index: 1, kind: input, shape index: {}]
  %s2 = inlined_call_operand.vmem [shape: f32[64,128], index: 2, kind: input, shape index: {}]
  %s3 = inlined_call_operand.vmem [shape: f32[1,128], index: 3, kind: input, shape index: {}]
  %s4 = inlined_call_operand.vmem [shape: f32[128,64], index: 4, kind: input, shape index: {}]
  %s5 = inlined_call_operand.vmem [shape: f32[128,64], index: 5, kind: input, shape index: {}]
  %s6 = inlined_call_operand.vmem [shape: f32[1,64], index: 6, kind: input, shape index: {}]
  %s7 = inlined_call_operand.vmem [shape: f32[64,128], index: 7, kind: input, shape index: {}]
  %s8 = inlined_call_operand.vmem [shape: f32[1,128], index: 8, kind: input, shape index: {}]
  %s9 = inlined_call_operand.vmem [shape: f32[6,256,160], index: 9, kind: input, shape index: {}]
  %s10 = inlined_call_operand.vmem [shape: f32[1,160], index: 10, kind: input, shape index: {}]
  %s11 = inlined_call_operand.vmem [shape: f32[1,160], index: 11, kind: input, shape index: {}]
  %s12 = inlined_call_operand.vmem [shape: f32[6,160,64], index: 12, kind: input, shape index: {}]
  %s13 = inlined_call_operand.vmem [shape: f32[1,64], index: 13, kind: input, shape index: {}]
  %s14 = inlined_call_operand.vmem [shape: f32[1,64], index: 14, kind: input, shape index: {}]
  %s15 = inlined_call_operand.vmem [shape: f32[2,2,64], index: 15, kind: output, shape index: {}]
  %s16 = sld [smem:[#allocation0]]
  $region93: #{up_forward_pallas.1} parent=0
    _
  %s18 = ssub.s32 1, %s16
  %s19 = scalar_select 0, %s18, %s16
  loop: start=0, step=1, limit=4
  $region2: #{up_forward_pallas.1} parent=0 // loop_pre_header
    _
  $region3: #{up_forward_pallas.1} parent=0 // loop_header
    %s21 = sphi 0, %s25
    %p22 = scmp.ge.s32.totalorder %s21, 4
    %s31 = sphi 0, %s33
    %s34 = sphi 0, %s31
    %s35 = sphi 0, %s34
    %s51 = sphi 0, %s35
    %s57 = sphi 0, %s59
    %s60 = sphi 0, %s57
    %s61 = sphi 0, %s60
    %s77 = sphi 0, %s61
    %s81 = sphi 0, %s81
    %s83 = sphi 0, %s81
    %s84 = sphi 0, %s83
    %s98 = sphi 0, %s84
    %s102 = sphi 0, %s102
    %s104 = sphi 0, %s102
    %s105 = sphi 0, %s104
    %s119 = sphi 0, %s105
    %s123 = sphi 0, %s123
    %s125 = sphi 0, %s123
    %s126 = sphi 0, %s125
    %s140 = sphi 0, %s126
    %s144 = sphi 0, %s144
    %s146 = sphi 0, %s144
    %s147 = sphi 0, %s146
    %s161 = sphi 0, %s147
    %s165 = sphi 0, %s165
    %s167 = sphi 0, %s165
    %s168 = sphi 0, %s167
    %s182 = sphi 0, %s168
    %s186 = sphi 0, %s186
    %s188 = sphi 0, %s186
    %s189 = sphi 0, %s188
    %s203 = sphi 0, %s189
    %s207 = sphi 0, %s207
    %s209 = sphi 0, %s207
    %s210 = sphi 0, %s209
    %s224 = sphi 0, %s210
    %s228 = sphi 0, %s228
    %s230 = sphi 0, %s228
    %s231 = sphi 0, %s230
    %s245 = sphi 0, %s231
    %s249 = sphi 0, %s249
    %s251 = sphi 0, %s249
    %s252 = sphi 0, %s251
    %s266 = sphi 0, %s252
    %s270 = sphi 0, %s270
    %s272 = sphi 0, %s270
    %s273 = sphi 0, %s272
    %s287 = sphi 0, %s273
    %s291 = sphi 0, %s291
    %s293 = sphi 0, %s291
    %s294 = sphi 0, %s293
    %s308 = sphi 0, %s294
    %s312 = sphi 0, %s312
    %s314 = sphi 0, %s312
    %s315 = sphi 0, %s314
    %s329 = sphi 0, %s315
    %s333 = sphi 0, %s333
    %s335 = sphi 0, %s333
    %s336 = sphi 0, %s335
    %s350 = sphi 0, %s336
    %s356 = sphi 0, %s358
    %s359 = sphi 0, %s356
    %s360 = sphi 0, %s359
    %s376 = sphi 0, %s360
  $region4: #{up_forward_pallas.1} parent=0 // loop_header_branch
    %24 = sbr.rel (%p22) target = $region8
  $region5: #{up_forward_pallas.1} parent=0 // loop_body
    %s26 = ssub.s32 %s21, 1
    %s27 = ssub.s32 %s21, 2
    %s28 = sadd.s32 %s21, 1
    %s29 = ssub.s32 %s21, %s28
    %p30 = scmp.eq.s32.totalorder %s29, 0
    %s32 = sadd.s32 %s31, 1
    %s33 = scalar_select %p30, %s31, %s32
    %p36 = pneg %p30
    %p37 = scmp.eq.s32.totalorder %s21, 1
    %p38 = por %p36, %p37
    %p39 = scmp.ne.s32.totalorder %s31, %s34
    %p40 = scmp.eq.s32.totalorder %s21, 0
    %p41 = por %p39, %p40
    %p42 = scmp.ne.s32.totalorder %s31, %s34
    %p43 = scmp.eq.s32.totalorder %s26, 1
    %p44 = por %p42, %p43
    %p45 = scmp.ne.s32.totalorder %s34, %s35
    %p46 = scmp.eq.s32.totalorder %s26, 0
    %p47 = por %p45, %p46
    %p48 = scmp.ne.s32.totalorder %s34, %s35
    %p49 = scmp.eq.s32.totalorder %s27, 1
    %p50 = por %p48, %p49
    %p52 = scmp.ne.s32.totalorder %s35, %s51
    %p53 = scmp.eq.s32.totalorder %s27, 0
    %p54 = por %p52, %p53
    %s55 = ssub.s32 %s21, %s28
    %p56 = scmp.eq.s32.totalorder %s55, 0
    %s58 = sadd.s32 %s57, 1
    %s59 = scalar_select %p56, %s57, %s58
    %p62 = pneg %p56
    %p63 = scmp.eq.s32.totalorder %s21, 1
    %p64 = por %p62, %p63
    %p65 = scmp.ne.s32.totalorder %s57, %s60
    %p66 = scmp.eq.s32.totalorder %s21, 0
    %p67 = por %p65, %p66
    %p68 = scmp.ne.s32.totalorder %s57, %s60
    %p69 = scmp.eq.s32.totalorder %s26, 1
    %p70 = por %p68, %p69
    %p71 = scmp.ne.s32.totalorder %s60, %s61
    %p72 = scmp.eq.s32.totalorder %s26, 0
    %p73 = por %p71, %p72
    %p74 = scmp.ne.s32.totalorder %s60, %s61
    %p75 = scmp.eq.s32.totalorder %s27, 1
    %p76 = por %p74, %p75
    %p78 = scmp.ne.s32.totalorder %s61, %s77
    %p79 = scmp.eq.s32.totalorder %s27, 0
    %p80 = por %p78, %p79
    %s82 = sadd.s32 %s81, 1
    %p85 = scmp.eq.s32.totalorder %s21, 1
    %p86 = scmp.ne.s32.totalorder %s81, %s83
    %p87 = scmp.eq.s32.totalorder %s21, 0
    %p88 = por %p86, %p87
    %p89 = scmp.ne.s32.totalorder %s81, %s83
    %p90 = scmp.eq.s32.totalorder %s26, 1
    %p91 = por %p89, %p90
    %p92 = scmp.ne.s32.totalorder %s83, %s84
    %p93 = scmp.eq.s32.totalorder %s26, 0
    %p94 = por %p92, %p93
    %p95 = scmp.ne.s32.totalorder %s83, %s84
    %p96 = scmp.eq.s32.totalorder %s27, 1
    %p97 = por %p95, %p96
    %p99 = scmp.ne.s32.totalorder %s84, %s98
    %p100 = scmp.eq.s32.totalorder %s27, 0
    %p101 = por %p99, %p100
    %s103 = sadd.s32 %s102, 1
    %p106 = scmp.eq.s32.totalorder %s21, 1
    %p107 = scmp.ne.s32.totalorder %s102, %s104
    %p108 = scmp.eq.s32.totalorder %s21, 0
    %p109 = por %p107, %p108
    %p110 = scmp.ne.s32.totalorder %s102, %s104
    %p111 = scmp.eq.s32.totalorder %s26, 1
    %p112 = por %p110, %p111
    %p113 = scmp.ne.s32.totalorder %s104, %s105
    %p114 = scmp.eq.s32.totalorder %s26, 0
    %p115 = por %p113, %p114
    %p116 = scmp.ne.s32.totalorder %s104, %s105
    %p117 = scmp.eq.s32.totalorder %s27, 1
    %p118 = por %p116, %p117
    %p120 = scmp.ne.s32.totalorder %s105, %s119
    %p121 = scmp.eq.s32.totalorder %s27, 0
    %p122 = por %p120, %p121
    %s124 = sadd.s32 %s123, 1
    %p127 = scmp.eq.s32.totalorder %s21, 1
    %p128 = scmp.ne.s32.totalorder %s123, %s125
    %p129 = scmp.eq.s32.totalorder %s21, 0
    %p130 = por %p128, %p129
    %p131 = scmp.ne.s32.totalorder %s123, %s125
    %p132 = scmp.eq.s32.totalorder %s26, 1
    %p133 = por %p131, %p132
    %p134 = scmp.ne.s32.totalorder %s125, %s126
    %p135 = scmp.eq.s32.totalorder %s26, 0
    %p136 = por %p134, %p135
    %p137 = scmp.ne.s32.totalorder %s125, %s126
    %p138 = scmp.eq.s32.totalorder %s27, 1
    %p139 = por %p137, %p138
    %p141 = scmp.ne.s32.totalorder %s126, %s140
    %p142 = scmp.eq.s32.totalorder %s27, 0
    %p143 = por %p141, %p142
    %s145 = sadd.s32 %s144, 1
    %p148 = scmp.eq.s32.totalorder %s21, 1
    %p149 = scmp.ne.s32.totalorder %s144, %s146
    %p150 = scmp.eq.s32.totalorder %s21, 0
    %p151 = por %p149, %p150
    %p152 = scmp.ne.s32.totalorder %s144, %s146
    %p153 = scmp.eq.s32.totalorder %s26, 1
    %p154 = por %p152, %p153
    %p155 = scmp.ne.s32.totalorder %s146, %s147
    %p156 = scmp.eq.s32.totalorder %s26, 0
    %p157 = por %p155, %p156
    %p158 = scmp.ne.s32.totalorder %s146, %s147
    %p159 = scmp.eq.s32.totalorder %s27, 1
    %p160 = por %p158, %p159
    %p162 = scmp.ne.s32.totalorder %s147, %s161
    %p163 = scmp.eq.s32.totalorder %s27, 0
    %p164 = por %p162, %p163
    %s166 = sadd.s32 %s165, 1
    %p169 = scmp.eq.s32.totalorder %s21, 1
    %p170 = scmp.ne.s32.totalorder %s165, %s167
    %p171 = scmp.eq.s32.totalorder %s21, 0
    %p172 = por %p170, %p171
    %p173 = scmp.ne.s32.totalorder %s165, %s167
    %p174 = scmp.eq.s32.totalorder %s26, 1
    %p175 = por %p173, %p174
    %p176 = scmp.ne.s32.totalorder %s167, %s168
    %p177 = scmp.eq.s32.totalorder %s26, 0
    %p178 = por %p176, %p177
    %p179 = scmp.ne.s32.totalorder %s167, %s168
    %p180 = scmp.eq.s32.totalorder %s27, 1
    %p181 = por %p179, %p180
    %p183 = scmp.ne.s32.totalorder %s168, %s182
    %p184 = scmp.eq.s32.totalorder %s27, 0
    %p185 = por %p183, %p184
    %s187 = sadd.s32 %s186, 1
    %p190 = scmp.eq.s32.totalorder %s21, 1
    %p191 = scmp.ne.s32.totalorder %s186, %s188
    %p192 = scmp.eq.s32.totalorder %s21, 0
    %p193 = por %p191, %p192
    %p194 = scmp.ne.s32.totalorder %s186, %s188
    %p195 = scmp.eq.s32.totalorder %s26, 1
    %p196 = por %p194, %p195
    %p197 = scmp.ne.s32.totalorder %s188, %s189
    %p198 = scmp.eq.s32.totalorder %s26, 0
    %p199 = por %p197, %p198
    %p200 = scmp.ne.s32.totalorder %s188, %s189
    %p201 = scmp.eq.s32.totalorder %s27, 1
    %p202 = por %p200, %p201
    %p204 = scmp.ne.s32.totalorder %s189, %s203
    %p205 = scmp.eq.s32.totalorder %s27, 0
    %p206 = por %p204, %p205
    %s208 = sadd.s32 %s207, 1
    %p211 = scmp.eq.s32.totalorder %s21, 1
    %p212 = scmp.ne.s32.totalorder %s207, %s209
    %p213 = scmp.eq.s32.totalorder %s21, 0
    %p214 = por %p212, %p213
    %p215 = scmp.ne.s32.totalorder %s207, %s209
    %p216 = scmp.eq.s32.totalorder %s26, 1
    %p217 = por %p215, %p216
    %p218 = scmp.ne.s32.totalorder %s209, %s210
    %p219 = scmp.eq.s32.totalorder %s26, 0
    %p220 = por %p218, %p219
    %p221 = scmp.ne.s32.totalorder %s209, %s210
    %p222 = scmp.eq.s32.totalorder %s27, 1
    %p223 = por %p221, %p222
    %p225 = scmp.ne.s32.totalorder %s210, %s224
    %p226 = scmp.eq.s32.totalorder %s27, 0
    %p227 = por %p225, %p226
    %s229 = sadd.s32 %s228, 1
    %p232 = scmp.eq.s32.totalorder %s21, 1
    %p233 = scmp.ne.s32.totalorder %s228, %s230
    %p234 = scmp.eq.s32.totalorder %s21, 0
    %p235 = por %p233, %p234
    %p236 = scmp.ne.s32.totalorder %s228, %s230
    %p237 = scmp.eq.s32.totalorder %s26, 1
    %p238 = por %p236, %p237
    %p239 = scmp.ne.s32.totalorder %s230, %s231
    %p240 = scmp.eq.s32.totalorder %s26, 0
    %p241 = por %p239, %p240
    %p242 = scmp.ne.s32.totalorder %s230, %s231
    %p243 = scmp.eq.s32.totalorder %s27, 1
    %p244 = por %p242, %p243
    %p246 = scmp.ne.s32.totalorder %s231, %s245
    %p247 = scmp.eq.s32.totalorder %s27, 0
    %p248 = por %p246, %p247
    %s250 = sadd.s32 %s249, 1
    %p253 = scmp.eq.s32.totalorder %s21, 1
    %p254 = scmp.ne.s32.totalorder %s249, %s251
    %p255 = scmp.eq.s32.totalorder %s21, 0
    %p256 = por %p254, %p255
    %p257 = scmp.ne.s32.totalorder %s249, %s251
    %p258 = scmp.eq.s32.totalorder %s26, 1
    %p259 = por %p257, %p258
    %p260 = scmp.ne.s32.totalorder %s251, %s252
    %p261 = scmp.eq.s32.totalorder %s26, 0
    %p262 = por %p260, %p261
    %p263 = scmp.ne.s32.totalorder %s251, %s252
    %p264 = scmp.eq.s32.totalorder %s27, 1
    %p265 = por %p263, %p264
    %p267 = scmp.ne.s32.totalorder %s252, %s266
    %p268 = scmp.eq.s32.totalorder %s27, 0
    %p269 = por %p267, %p268
    %s271 = sadd.s32 %s270, 1
    %p274 = scmp.eq.s32.totalorder %s21, 1
    %p275 = scmp.ne.s32.totalorder %s270, %s272
    %p276 = scmp.eq.s32.totalorder %s21, 0
    %p277 = por %p275, %p276
    %p278 = scmp.ne.s32.totalorder %s270, %s272
    %p279 = scmp.eq.s32.totalorder %s26, 1
    %p280 = por %p278, %p279
    %p281 = scmp.ne.s32.totalorder %s272, %s273
    %p282 = scmp.eq.s32.totalorder %s26, 0
    %p283 = por %p281, %p282
    %p284 = scmp.ne.s32.totalorder %s272, %s273
    %p285 = scmp.eq.s32.totalorder %s27, 1
    %p286 = por %p284, %p285
    %p288 = scmp.ne.s32.totalorder %s273, %s287
    %p289 = scmp.eq.s32.totalorder %s27, 0
    %p290 = por %p288, %p289
    %s292 = sadd.s32 %s291, 1
    %p295 = scmp.eq.s32.totalorder %s21, 1
    %p296 = scmp.ne.s32.totalorder %s291, %s293
    %p297 = scmp.eq.s32.totalorder %s21, 0
    %p298 = por %p296, %p297
    %p299 = scmp.ne.s32.totalorder %s291, %s293
    %p300 = scmp.eq.s32.totalorder %s26, 1
    %p301 = por %p299, %p300
    %p302 = scmp.ne.s32.totalorder %s293, %s294
    %p303 = scmp.eq.s32.totalorder %s26, 0
    %p304 = por %p302, %p303
    %p305 = scmp.ne.s32.totalorder %s293, %s294
    %p306 = scmp.eq.s32.totalorder %s27, 1
    %p307 = por %p305, %p306
    %p309 = scmp.ne.s32.totalorder %s294, %s308
    %p310 = scmp.eq.s32.totalorder %s27, 0
    %p311 = por %p309, %p310
    %s313 = sadd.s32 %s312, 1
    %p316 = scmp.eq.s32.totalorder %s21, 1
    %p317 = scmp.ne.s32.totalorder %s312, %s314
    %p318 = scmp.eq.s32.totalorder %s21, 0
    %p319 = por %p317, %p318
    %p320 = scmp.ne.s32.totalorder %s312, %s314
    %p321 = scmp.eq.s32.totalorder %s26, 1
    %p322 = por %p320, %p321
    %p323 = scmp.ne.s32.totalorder %s314, %s315
    %p324 = scmp.eq.s32.totalorder %s26, 0
    %p325 = por %p323, %p324
    %p326 = scmp.ne.s32.totalorder %s314, %s315
    %p327 = scmp.eq.s32.totalorder %s27, 1
    %p328 = por %p326, %p327
    %p330 = scmp.ne.s32.totalorder %s315, %s329
    %p331 = scmp.eq.s32.totalorder %s27, 0
    %p332 = por %p330, %p331
    %s334 = sadd.s32 %s333, 1
    %p337 = scmp.eq.s32.totalorder %s21, 1
    %p338 = scmp.ne.s32.totalorder %s333, %s335
    %p339 = scmp.eq.s32.totalorder %s21, 0
    %p340 = por %p338, %p339
    %p341 = scmp.ne.s32.totalorder %s333, %s335
    %p342 = scmp.eq.s32.totalorder %s26, 1
    %p343 = por %p341, %p342
    %p344 = scmp.ne.s32.totalorder %s335, %s336
    %p345 = scmp.eq.s32.totalorder %s26, 0
    %p346 = por %p344, %p345
    %p347 = scmp.ne.s32.totalorder %s335, %s336
    %p348 = scmp.eq.s32.totalorder %s27, 1
    %p349 = por %p347, %p348
    %p351 = scmp.ne.s32.totalorder %s336, %s350
    %p352 = scmp.eq.s32.totalorder %s27, 0
    %p353 = por %p351, %p352
    %s354 = ssub.s32 %s21, %s28
    %p355 = scmp.eq.s32.totalorder %s354, 0
    %s357 = sadd.s32 %s356, 1
    %s358 = scalar_select %p355, %s356, %s357
    %p361 = pneg %p355
    %p362 = scmp.eq.s32.totalorder %s21, 1
    %p363 = por %p361, %p362
    %p364 = scmp.ne.s32.totalorder %s356, %s359
    %p365 = scmp.eq.s32.totalorder %s21, 0
    %p366 = por %p364, %p365
    %p367 = scmp.ne.s32.totalorder %s356, %s359
    %p368 = scmp.eq.s32.totalorder %s26, 1
    %p369 = por %p367, %p368
    %p370 = scmp.ne.s32.totalorder %s359, %s360
    %p371 = scmp.eq.s32.totalorder %s26, 0
    %p372 = por %p370, %p371
    %p373 = scmp.ne.s32.totalorder %s359, %s360
    %p374 = scmp.eq.s32.totalorder %s27, 1
    %p375 = por %p373, %p374
    %p377 = scmp.ne.s32.totalorder %s360, %s376
    %p378 = scmp.eq.s32.totalorder %s27, 0
    %p379 = por %p377, %p378
    %p380 = scmp.le.s32.totalorder 1, %s21
    %p381 = scmp.lt.s32.totalorder %s21, 3
    %p382 = pnand %p380, %p381
    %p383 = pneg %p382
    // Predicated region
    $region9: #{up_forward_pallas.1} parent=5 // pred_check
      _
    $region10: #{up_forward_pallas.1} parent=5 // pred_check_branch
      %385 = sbr.rel (%p382) target = $region12
    $region11: #{up_forward_pallas.1} parent=5 // pred_region
      %s386 = ssub.s32 %s21, 1
      // Predicated region
      $region13: #{up_forward_pallas.1} parent=11 // pred_check
        %p387 = pneg %p94
      $region14: #{up_forward_pallas.1} parent=11 // pred_check_branch
        %389 = sbr.rel (%p387) target = $region16
      $region15: #{up_forward_pallas.1} parent=11 // pred_region
        _
      $region16: #{up_forward_pallas.1} parent=11 // pred_fallthru
        _
      // Predicated region
      $region17: #{up_forward_pallas.1} parent=11 // pred_check
        %p390 = pneg %p115
      $region18: #{up_forward_pallas.1} parent=11 // pred_check_branch
        %392 = sbr.rel (%p390) target = $region20
      $region19: #{up_forward_pallas.1} parent=11 // pred_region
        _
      $region20: #{up_forward_pallas.1} parent=11 // pred_fallthru
        _
      // Predicated region
      $region21: #{up_forward_pallas.1} parent=11 // pred_check
        %p393 = pneg %p136
      $region22: #{up_forward_pallas.1} parent=11 // pred_check_branch
        %395 = sbr.rel (%p393) target = $region24
      $region23: #{up_forward_pallas.1} parent=11 // pred_region
        _
      $region24: #{up_forward_pallas.1} parent=11 // pred_fallthru
        _
      // Predicated region
      $region25: #{up_forward_pallas.1} parent=11 // pred_check
        %p396 = pneg %p157
      $region26: #{up_forward_pallas.1} parent=11 // pred_check_branch
        %398 = sbr.rel (%p396) target = $region28
      $region27: #{up_forward_pallas.1} parent=11 // pred_region
        _
      $region28: #{up_forward_pallas.1} parent=11 // pred_fallthru
        _
      // Predicated region
      $region29: #{up_forward_pallas.1} parent=11 // pred_check
        %p399 = pneg %p178
      $region30: #{up_forward_pallas.1} parent=11 // pred_check_branch
        %401 = sbr.rel (%p399) target = $region32
      $region31: #{up_forward_pallas.1} parent=11 // pred_region
        _
      $region32: #{up_forward_pallas.1} parent=11 // pred_fallthru
        _
      // Predicated region
      $region33: #{up_forward_pallas.1} parent=11 // pred_check
        %p402 = pneg %p199
      $region34: #{up_forward_pallas.1} parent=11 // pred_check_branch
        %404 = sbr.rel (%p402) target = $region36
      $region35: #{up_forward_pallas.1} parent=11 // pred_region
        _
      $region36: #{up_forward_pallas.1} parent=11 // pred_fallthru
        _
      // Predicated region
      $region37: #{up_forward_pallas.1} parent=11 // pred_check
        %p405 = pneg %p220
      $region38: #{up_forward_pallas.1} parent=11 // pred_check_branch
        %407 = sbr.rel (%p405) target = $region40
      $region39: #{up_forward_pallas.1} parent=11 // pred_region
        _
      $region40: #{up_forward_pallas.1} parent=11 // pred_fallthru
        _
      // Predicated region
      $region41: #{up_forward_pallas.1} parent=11 // pred_check
        %p408 = pneg %p241
      $region42: #{up_forward_pallas.1} parent=11 // pred_check_branch
        %410 = sbr.rel (%p408) target = $region44
      $region43: #{up_forward_pallas.1} parent=11 // pred_region
        _
      $region44: #{up_forward_pallas.1} parent=11 // pred_fallthru
        _
      // Predicated region
      $region45: #{up_forward_pallas.1} parent=11 // pred_check
        %p411 = pneg %p262
      $region46: #{up_forward_pallas.1} parent=11 // pred_check_branch
        %413 = sbr.rel (%p411) target = $region48
      $region47: #{up_forward_pallas.1} parent=11 // pred_region
        _
      $region48: #{up_forward_pallas.1} parent=11 // pred_fallthru
        _
      // Predicated region
      $region49: #{up_forward_pallas.1} parent=11 // pred_check
        %p414 = pneg %p283
      $region50: #{up_forward_pallas.1} parent=11 // pred_check_branch
        %416 = sbr.rel (%p414) target = $region52
      $region51: #{up_forward_pallas.1} parent=11 // pred_region
        _
      $region52: #{up_forward_pallas.1} parent=11 // pred_fallthru
        _
      // Predicated region
      $region53: #{up_forward_pallas.1} parent=11 // pred_check
        %p417 = pneg %p304
      $region54: #{up_forward_pallas.1} parent=11 // pred_check_branch
        %419 = sbr.rel (%p417) target = $region56
      $region55: #{up_forward_pallas.1} parent=11 // pred_region
        _
      $region56: #{up_forward_pallas.1} parent=11 // pred_fallthru
        _
      // Predicated region
      $region57: #{up_forward_pallas.1} parent=11 // pred_check
        %p420 = pneg %p325
      $region58: #{up_forward_pallas.1} parent=11 // pred_check_branch
        %422 = sbr.rel (%p420) target = $region60
      $region59: #{up_forward_pallas.1} parent=11 // pred_region
        _
      $region60: #{up_forward_pallas.1} parent=11 // pred_fallthru
        _
      // Predicated region
      $region61: #{up_forward_pallas.1} parent=11 // pred_check
        %p423 = pneg %p346
      $region62: #{up_forward_pallas.1} parent=11 // pred_check_branch
        %425 = sbr.rel (%p423) target = $region64
      $region63: #{up_forward_pallas.1} parent=11 // pred_region
        _
      $region64: #{up_forward_pallas.1} parent=11 // pred_fallthru
        _
    $region12: #{up_forward_pallas.1} parent=5 // pred_fallthru
      _
    %p426 = scmp.lt.s32.totalorder %s21, 2
    // Predicated region
    $region65: #{up_forward_pallas.1} parent=5 // pred_check
      %p427 = pneg %p426
    $region66: #{up_forward_pallas.1} parent=5 // pred_check_branch
      %429 = sbr.rel (%p427) target = $region68
    $region67: #{up_forward_pallas.1} parent=5 // pred_region
      // Predicated region
      $region69: #{up_forward_pallas.1} parent=67 // pred_check
        %p430 = pneg %p41
      $region70: #{up_forward_pallas.1} parent=67 // pred_check_branch
        %432 = sbr.rel (%p430) target = $region72
      $region71: #{up_forward_pallas.1} parent=67 // pred_region
        %p433 = scmp.lt.s32.totalorder %s21, 1
        %s434 = scalar_select %p433, %s21, 1
        %s435 = smul.addr %s434, 8
        %s436 = scalar_lea.vmem %s0, %s435
      $region72: #{up_forward_pallas.1} parent=67 // pred_fallthru
        _
      // Predicated region
      $region73: #{up_forward_pallas.1} parent=67 // pred_check
        %p437 = pneg %p67
      $region74: #{up_forward_pallas.1} parent=67 // pred_check_branch
        %439 = sbr.rel (%p437) target = $region76
      $region75: #{up_forward_pallas.1} parent=67 // pred_region
        %p440 = scmp.lt.s32.totalorder %s21, 1
        %s441 = scalar_select %p440, %s21, 1
        %s442 = smul.addr %s441, 8
        %s443 = scalar_lea.vmem %s1, %s442
      $region76: #{up_forward_pallas.1} parent=67 // pred_fallthru
        _
    $region68: #{up_forward_pallas.1} parent=5 // pred_fallthru
      _
    %p444 = scmp.le.s32.totalorder 1, %s21
    %p445 = scmp.lt.s32.totalorder %s21, 3
    %p446 = pnand %p444, %p445
    %p447 = pneg %p446
    // Predicated region
    $region77: #{up_forward_pallas.1} parent=5 // pred_check
      _
    $region78: #{up_forward_pallas.1} parent=5 // pred_check_branch
      %449 = sbr.rel (%p446) target = $region80
    $region79: #{up_forward_pallas.1} parent=5 // pred_region
      %s450 = ssub.s32 %s21, 1
      %p451 = scmp.lt.s32.totalorder %s26, 1
      %s452 = scalar_select %p451, %s26, 1
      %s453 = smul.addr %s452, 8
      %s454 = scalar_lea.vmem %s0, %s453
      %p455 = pneg %p47
      %p456 = pneg %p44
      %p457 = scmp.lt.s32.totalorder %s26, 1
      %s458 = scalar_select %p457, %s26, 1
      %s459 = smul.addr %s458, 8
      %s460 = scalar_lea.vmem %s1, %s459
      %p461 = pneg %p73
      %p462 = pneg %p70
      %p463 = pneg %p94
      %p464 = pneg %p91
      %p465 = pneg %p115
      %p466 = pneg %p112
      %p467 = pneg %p136
      %p468 = pneg %p133
      %p469 = pneg %p157
      %p470 = pneg %p154
      %p471 = pneg %p178
      %p472 = pneg %p175
      %p473 = pneg %p199
      %p474 = pneg %p196
      %p475 = pneg %p220
      %p476 = pneg %p217
      %p477 = pneg %p241
      %p478 = pneg %p238
      %p479 = pneg %p262
      %p480 = pneg %p259
      %p481 = pneg %p283
      %p482 = pneg %p280
      %p483 = pneg %p304
      %p484 = pneg %p301
      %p485 = pneg %p325
      %p486 = pneg %p322
      %p487 = pneg %p346
      %p488 = pneg %p343
      %p489 = pneg %p372
      %p490 = pneg %p369
      %p491 = scmp.lt.s32.totalorder %s26, 1
      %s492 = scalar_select %p491, %s26, 1
      %s493 = smul.addr %s492, 2
      %s494 = scalar_lea.vmem %s15, %s493
      %p495 = scmp.lt.s32.totalorder %s26, 1
      %s496 = scalar_select %p495, %s26, 1
      %s497 = smul.addr %s496, 8
      %s498 = scalar_lea.vmem %s0, %s497
      %p499 = scmp.lt.s32.totalorder %s26, 1
      %s500 = scalar_select %p499, %s26, 1
      %s501 = smul.addr %s500, 8
      %s502 = scalar_lea.vmem %s1, %s501
      %p503 = scmp.lt.s32.totalorder %s26, 1
      %s504 = scalar_select %p503, %s26, 1
      %s505 = smul.addr %s504, 2
      %s506 = scalar_lea.vmem %s15, %s505
      %v507 = vld [vmem:[%s498] sm:$0xff]
      %v508 = vld [vmem:[%s502] sm:$0xff]
      %v509 = vld [vmem:[%s2] sm:$0xff]
      %v510 = vld [vmem:[%s2 + $0x8] sm:$0xff]
      %v511 = vld [vmem:[%s2 + $0x10] sm:$0xff]
      %v512 = vld [vmem:[%s2 + $0x18] sm:$0xff]
      %v513 = vld [vmem:[%s2 + $0x20] sm:$0xff]
      %v514 = vld [vmem:[%s2 + $0x28] sm:$0xff]
      %v515 = vld [vmem:[%s2 + $0x30] sm:$0xff]
      %v516 = vld [vmem:[%s2 + $0x38] sm:$0xff]
      %v517 = vld [vmem:[%s3] sm:$0x1]
      %v519 = vlaneseq
      %v520 = vshrl.u32 %v519, 7
      %v521 = vsub.s32 0, %v520
      %v522 = vrot.slane %v517, %v521
      %vm524 = vcmask 523264
      %v526 = vsel %vm524, %v507, 0
      %528 = vmatprep.subr.mxu0 0.0
      %529 = vmatpush1.msra.mxu0 %v509
      %530 = vmatprep.subr.mxu0 0.0
      %531 = vmatpush1.msra.mxu0 %v510
      %532 = vmatprep.subr.mxu0 0.0
      %533 = vmatpush1.msra.mxu0 %v511
      %534 = vmatprep.subr.mxu0 0.0
      %535 = vmatpush1.msra.mxu0 %v512
      %536 = vmatprep.subr.mxu0 0.0
      %537 = vmatpush1.msra.mxu0 %v513
      %538 = vmatprep.subr.mxu0 0.0
      %539 = vmatpush1.msra.mxu0 %v514
      %540 = vmatprep.subr.mxu0 0.0
      %541 = vmatpush1.msra.mxu0 %v515
      %542 = vmatprep.subr.mxu0 0.0
      %543 = vmatpush1.msra.mxu0 %v516
      %544 = vmatprep.subr.mxu0 0.0
      %545 = vmatpush1.msra.mxu0 0.0
      %546 = vmatprep.subr.mxu0 0.0
      %547 = vmatpush1.msra.mxu0 0.0
      %548 = vmatprep.subr.mxu0 0.0
      %549 = vmatpush1.msra.mxu0 0.0
      %550 = vmatprep.subr.mxu0 0.0
      %551 = vmatpush1.msra.mxu0 0.0
      %552 = vmatprep.subr.mxu0 0.0
      %553 = vmatpush1.msra.mxu0 0.0
      %554 = vmatprep.subr.mxu0 0.0
      %555 = vmatpush1.msra.mxu0 0.0
      %556 = vmatprep.subr.mxu0 0.0
      %557 = vmatpush1.msra.mxu0 0.0
      %558 = vmatprep.subr.mxu0 0.0
      %559 = vmatpush1.msra.mxu0 0.0
      %560 = vmatprep.subr.mxu0 0.0
      %561 = vmatpush1.msra.mxu0 0.0
      %562 = vmatprep.subr.mxu0 0.0
      %563 = vmatpush1.msra.mxu0 0.0
      %564 = vmatprep.subr.mxu0 0.0
      %565 = vmatpush1.msra.mxu0 0.0
      %566 = vmatprep.subr.mxu0 0.0
      %567 = vmatpush1.msra.mxu0 0.0
      %568 = vmatprep.subr.mxu0 0.0
      %569 = vmatpush1.msra.mxu0 0.0
      %570 = vmatprep.subr.mxu0 0.0
      %571 = vmatpush1.msra.mxu0 0.0
      %572 = vmatprep.subr.mxu0 0.0
      %573 = vmatpush1.msra.mxu0 0.0
      %574 = vmatprep.subr.mxu0 0.0
      %575 = vmatpush1.msra.mxu0 0.0
      %576 = vmatprep.subr.mxu0 0.0
      %577 = vmatpush1.msra.mxu0 0.0
      %578 = vmatprep.subr.mxu0 0.0
      %579 = vmatpush1.msra.mxu0 0.0
      %580 = vmatprep.subr.mxu0 0.0
      %581 = vmatpush1.msra.mxu0 0.0
      %582 = vmatprep.subr.mxu0 0.0
      %583 = vmatpush1.msra.mxu0 0.0
      %584 = vmatprep.subr.mxu0 0.0
      %585 = vmatpush1.msra.mxu0 0.0
      %586 = vmatprep.subr.mxu0 0.0
      %587 = vmatpush1.msra.mxu0 0.0
      %588 = vmatprep.subr.mxu0 0.0
      %589 = vmatpush1.msra.mxu0 0.0
      %590 = vmatprep.subr.mxu0 0.0
      %591 = vmatpush1.msra.mxu0 0.0
      %592 = vmatprep.mubr.f32.mxu0 0.0
      %593 = vmatmul.mubr.f32.gmra.mrb[0].mxu0 %v526
      %v594 = vpop.f32.mrb[0].mxu0
      %v595 = vadd.f32 %v522, %v594
      %v596 = vpop.f32.mrb[0].mxu0
      %597 = vdwg.mxu0
      %v598 = vld [vmem:[%s4] sm:$0xff]
      %v599 = vld [vmem:[%s4 + $0x8] sm:$0xff]
      %v600 = vld [vmem:[%s4 + $0x10] sm:$0xff]
      %v601 = vld [vmem:[%s4 + $0x18] sm:$0xff]
      %v602 = vld [vmem:[%s4 + $0x20] sm:$0xff]
      %v603 = vld [vmem:[%s4 + $0x28] sm:$0xff]
      %v604 = vld [vmem:[%s4 + $0x30] sm:$0xff]
      %v605 = vld [vmem:[%s4 + $0x38] sm:$0xff]
      %v606 = vld [vmem:[%s4 + $0x40] sm:$0xff]
      %v607 = vld [vmem:[%s4 + $0x48] sm:$0xff]
      %v608 = vld [vmem:[%s4 + $0x50] sm:$0xff]
      %v609 = vld [vmem:[%s4 + $0x58] sm:$0xff]
      %v610 = vld [vmem:[%s4 + $0x60] sm:$0xff]
      %v611 = vld [vmem:[%s4 + $0x68] sm:$0xff]
      %v612 = vld [vmem:[%s4 + $0x70] sm:$0xff]
      %v613 = vld [vmem:[%s4 + $0x78] sm:$0xff]
      %v614 = vld [vmem:[%s5] sm:$0xff]
      %v615 = vld [vmem:[%s5 + $0x8] sm:$0xff]
      %v616 = vld [vmem:[%s5 + $0x10] sm:$0xff]
      %v617 = vld [vmem:[%s5 + $0x18] sm:$0xff]
      %v618 = vld [vmem:[%s5 + $0x20] sm:$0xff]
      %v619 = vld [vmem:[%s5 + $0x28] sm:$0xff]
      %v620 = vld [vmem:[%s5 + $0x30] sm:$0xff]
      %v621 = vld [vmem:[%s5 + $0x38] sm:$0xff]
      %v622 = vld [vmem:[%s5 + $0x40] sm:$0xff]
      %v623 = vld [vmem:[%s5 + $0x48] sm:$0xff]
      %v624 = vld [vmem:[%s5 + $0x50] sm:$0xff]
      %v625 = vld [vmem:[%s5 + $0x58] sm:$0xff]
      %v626 = vld [vmem:[%s5 + $0x60] sm:$0xff]
      %v627 = vld [vmem:[%s5 + $0x68] sm:$0xff]
      %v628 = vld [vmem:[%s5 + $0x70] sm:$0xff]
      %v629 = vld [vmem:[%s5 + $0x78] sm:$0xff]
      %630 = vmatprep.subr.mxu0 0.0
      %631 = vmatpush1.msra.mxu0 %v614
      %632 = vmatprep.subr.mxu0 0.0
      %633 = vmatpush1.msra.mxu0 %v615
      %634 = vmatprep.subr.mxu0 0.0
      %635 = vmatpush1.msra.mxu0 %v616
      %636 = vmatprep.subr.mxu0 0.0
      %637 = vmatpush1.msra.mxu0 %v617
      %638 = vmatprep.subr.mxu0 0.0
      %639 = vmatpush1.msra.mxu0 %v618
      %640 = vmatprep.subr.mxu0 0.0
      %641 = vmatpush1.msra.mxu0 %v619
      %642 = vmatprep.subr.mxu0 0.0
      %643 = vmatpush1.msra.mxu0 %v620
      %644 = vmatprep.subr.mxu0 0.0
      %645 = vmatpush1.msra.mxu0 %v621
      %646 = vmatprep.subr.mxu0 0.0
      %647 = vmatpush1.msra.mxu0 %v622
      %648 = vmatprep.subr.mxu0 0.0
      %649 = vmatpush1.msra.mxu0 %v623
      %650 = vmatprep.subr.mxu0 0.0
      %651 = vmatpush1.msra.mxu0 %v624
      %652 = vmatprep.subr.mxu0 0.0
      %653 = vmatpush1.msra.mxu0 %v625
      %654 = vmatprep.subr.mxu0 0.0
      %655 = vmatpush1.msra.mxu0 %v626
      %656 = vmatprep.subr.mxu0 0.0
      %657 = vmatpush1.msra.mxu0 %v627
      %658 = vmatprep.subr.mxu0 0.0
      %659 = vmatpush1.msra.mxu0 %v628
      %660 = vmatprep.subr.mxu0 0.0
      %661 = vmatpush1.msra.mxu0 %v629
      %662 = vmatprep.subr.mxu0 0.0
      %663 = vmatpush1.msra.mxu0 0.0
      %664 = vmatprep.subr.mxu0 0.0
      %665 = vmatpush1.msra.mxu0 0.0
      %666 = vmatprep.subr.mxu0 0.0
      %667 = vmatpush1.msra.mxu0 0.0
      %668 = vmatprep.subr.mxu0 0.0
      %669 = vmatpush1.msra.mxu0 0.0
      %670 = vmatprep.subr.mxu0 0.0
      %671 = vmatpush1.msra.mxu0 0.0
      %672 = vmatprep.subr.mxu0 0.0
      %673 = vmatpush1.msra.mxu0 0.0
      %674 = vmatprep.subr.mxu0 0.0
      %675 = vmatpush1.msra.mxu0 0.0
      %676 = vmatprep.subr.mxu0 0.0
      %677 = vmatpush1.msra.mxu0 0.0
      %678 = vmatprep.subr.mxu0 0.0
      %679 = vmatpush1.msra.mxu0 0.0
      %680 = vmatprep.subr.mxu0 0.0
      %681 = vmatpush1.msra.mxu0 0.0
      %682 = vmatprep.subr.mxu0 0.0
      %683 = vmatpush1.msra.mxu0 0.0
      %684 = vmatprep.subr.mxu0 0.0
      %685 = vmatpush1.msra.mxu0 0.0
      %686 = vmatprep.subr.mxu0 0.0
      %687 = vmatpush1.msra.mxu0 0.0
      %688 = vmatprep.subr.mxu0 0.0
      %689 = vmatpush1.msra.mxu0 0.0
      %690 = vmatprep.subr.mxu0 0.0
      %691 = vmatpush1.msra.mxu0 0.0
      %692 = vmatprep.subr.mxu0 0.0
      %693 = vmatpush1.msra.mxu0 0.0
      %694 = vmatprep.mubr.f32.mxu0 0.0
      %695 = vmatmul.mubr.f32.gmra.mrb[0].mxu0 %v508
      %v696 = vpop.f32.mrb[0].mxu0
      %v697 = vadd.f32 0.0, %v696
      %v698 = vpop.f32.mrb[0].mxu0
      %699 = vdwg.mxu0
      %700 = vmatprep.subr.mxu0 0.0
      %701 = vmatpush1.msra.mxu0 %v598
      %702 = vmatprep.subr.mxu0 0.0
      %703 = vmatpush1.msra.mxu0 %v599
      %704 = vmatprep.subr.mxu0 0.0
      %705 = vmatpush1.msra.mxu0 %v600
      %706 = vmatprep.subr.mxu0 0.0
      %707 = vmatpush1.msra.mxu0 %v601
      %708 = vmatprep.subr.mxu0 0.0
      %709 = vmatpush1.msra.mxu0 %v602
      %710 = vmatprep.subr.mxu0 0.0
      %711 = vmatpush1.msra.mxu0 %v603
      %712 = vmatprep.subr.mxu0 0.0
      %713 = vmatpush1.msra.mxu0 %v604
      %714 = vmatprep.subr.mxu0 0.0
      %715 = vmatpush1.msra.mxu0 %v605
      %716 = vmatprep.subr.mxu0 0.0
      %717 = vmatpush1.msra.mxu0 %v606
      %718 = vmatprep.subr.mxu0 0.0
      %719 = vmatpush1.msra.mxu0 %v607
      %720 = vmatprep.subr.mxu0 0.0
      %721 = vmatpush1.msra.mxu0 %v608
      %722 = vmatprep.subr.mxu0 0.0
      %723 = vmatpush1.msra.mxu0 %v609
      %724 = vmatprep.subr.mxu0 0.0
      %725 = vmatpush1.msra.mxu0 %v610
      %726 = vmatprep.subr.mxu0 0.0
      %727 = vmatpush1.msra.mxu0 %v611
      %728 = vmatprep.subr.mxu0 0.0
      %729 = vmatpush1.msra.mxu0 %v612
      %730 = vmatprep.subr.mxu0 0.0
      %731 = vmatpush1.msra.mxu0 %v613
      %732 = vmatprep.subr.mxu0 0.0
      %733 = vmatpush1.msra.mxu0 0.0
      %734 = vmatprep.subr.mxu0 0.0
      %735 = vmatpush1.msra.mxu0 0.0
      %736 = vmatprep.subr.mxu0 0.0
      %737 = vmatpush1.msra.mxu0 0.0
      %738 = vmatprep.subr.mxu0 0.0
      %739 = vmatpush1.msra.mxu0 0.0
      %740 = vmatprep.subr.mxu0 0.0
      %741 = vmatpush1.msra.mxu0 0.0
      %742 = vmatprep.subr.mxu0 0.0
      %743 = vmatpush1.msra.mxu0 0.0
      %744 = vmatprep.subr.mxu0 0.0
      %745 = vmatpush1.msra.mxu0 0.0
      %746 = vmatprep.subr.mxu0 0.0
      %747 = vmatpush1.msra.mxu0 0.0
      %748 = vmatprep.subr.mxu0 0.0
      %749 = vmatpush1.msra.mxu0 0.0
      %750 = vmatprep.subr.mxu0 0.0
      %751 = vmatpush1.msra.mxu0 0.0
      %752 = vmatprep.subr.mxu0 0.0
      %753 = vmatpush1.msra.mxu0 0.0
      %754 = vmatprep.subr.mxu0 0.0
      %755 = vmatpush1.msra.mxu0 0.0
      %756 = vmatprep.subr.mxu0 0.0
      %757 = vmatpush1.msra.mxu0 0.0
      %758 = vmatprep.subr.mxu0 0.0
      %759 = vmatpush1.msra.mxu0 0.0
      %760 = vmatprep.subr.mxu0 0.0
      %761 = vmatpush1.msra.mxu0 0.0
      %762 = vmatprep.subr.mxu0 0.0
      %763 = vmatpush1.msra.mxu0 0.0
      %764 = vmatprep.mubr.f32.mxu0 0.0
      %765 = vmatmul.mubr.f32.gmra.mrb[0].mxu0 %v595
      %v766 = vpop.f32.mrb[0].mxu0
      %v767 = vadd.f32 %v697, %v766
      %v768 = vpop.f32.mrb[0].mxu0
      %769 = vdwg.mxu0
      %v770 = vld [vmem:[%s6] sm:$0x1]
      %v772 = vlaneseq
      %v773 = vshrl.u32 %v772, 7
      %v774 = vsub.s32 0, %v773
      %v775 = vrot.slane %v770, %v774
      %v777 = vadd.f32 %v767, %v775
      %v778 = vmax.f32 %v777, 0.0
      %v779 = vld [vmem:[%s7] sm:$0xff]
      %v780 = vld [vmem:[%s7 + $0x8] sm:$0xff]
      %v781 = vld [vmem:[%s7 + $0x10] sm:$0xff]
      %v782 = vld [vmem:[%s7 + $0x18] sm:$0xff]
      %v783 = vld [vmem:[%s7 + $0x20] sm:$0xff]
      %v784 = vld [vmem:[%s7 + $0x28] sm:$0xff]
      %v785 = vld [vmem:[%s7 + $0x30] sm:$0xff]
      %v786 = vld [vmem:[%s7 + $0x38] sm:$0xff]
      %v787 = vld [vmem:[%s8] sm:$0x1]
      %v789 = vlaneseq
      %v790 = vshrl.u32 %v789, 7
      %v791 = vsub.s32 0, %v790
      %v792 = vrot.slane %v787, %v791
      %v795 = vsel %vm524, %v778, 0
      %797 = vmatprep.subr.mxu0 0.0
      %798 = vmatpush1.msra.mxu0 %v779
      %799 = vmatprep.subr.mxu0 0.0
      %800 = vmatpush1.msra.mxu0 %v780
      %801 = vmatprep.subr.mxu0 0.0
      %802 = vmatpush1.msra.mxu0 %v781
      %803 = vmatprep.subr.mxu0 0.0
      %804 = vmatpush1.msra.mxu0 %v782
      %805 = vmatprep.subr.mxu0 0.0
      %806 = vmatpush1.msra.mxu0 %v783
      %807 = vmatprep.subr.mxu0 0.0
      %808 = vmatpush1.msra.mxu0 %v784
      %809 = vmatprep.subr.mxu0 0.0
      %810 = vmatpush1.msra.mxu0 %v785
      %811 = vmatprep.subr.mxu0 0.0
      %812 = vmatpush1.msra.mxu0 %v786
      %813 = vmatprep.subr.mxu0 0.0
      %814 = vmatpush1.msra.mxu0 0.0
      %815 = vmatprep.subr.mxu0 0.0
      %816 = vmatpush1.msra.mxu0 0.0
      %817 = vmatprep.subr.mxu0 0.0
      %818 = vmatpush1.msra.mxu0 0.0
      %819 = vmatprep.subr.mxu0 0.0
      %820 = vmatpush1.msra.mxu0 0.0
      %821 = vmatprep.subr.mxu0 0.0
      %822 = vmatpush1.msra.mxu0 0.0
      %823 = vmatprep.subr.mxu0 0.0
      %824 = vmatpush1.msra.mxu0 0.0
      %825 = vmatprep.subr.mxu0 0.0
      %826 = vmatpush1.msra.mxu0 0.0
      %827 = vmatprep.subr.mxu0 0.0
      %828 = vmatpush1.msra.mxu0 0.0
      %829 = vmatprep.subr.mxu0 0.0
      %830 = vmatpush1.msra.mxu0 0.0
      %831 = vmatprep.subr.mxu0 0.0
      %832 = vmatpush1.msra.mxu0 0.0
      %833 = vmatprep.subr.mxu0 0.0
      %834 = vmatpush1.msra.mxu0 0.0
      %835 = vmatprep.subr.mxu0 0.0
      %836 = vmatpush1.msra.mxu0 0.0
      %837 = vmatprep.subr.mxu0 0.0
      %838 = vmatpush1.msra.mxu0 0.0
      %839 = vmatprep.subr.mxu0 0.0
      %840 = vmatpush1.msra.mxu0 0.0
      %841 = vmatprep.subr.mxu0 0.0
      %842 = vmatpush1.msra.mxu0 0.0
      %843 = vmatprep.subr.mxu0 0.0
      %844 = vmatpush1.msra.mxu0 0.0
      %845 = vmatprep.subr.mxu0 0.0
      %846 = vmatpush1.msra.mxu0 0.0
      %847 = vmatprep.subr.mxu0 0.0
      %848 = vmatpush1.msra.mxu0 0.0
      %849 = vmatprep.subr.mxu0 0.0
      %850 = vmatpush1.msra.mxu0 0.0
      %851 = vmatprep.subr.mxu0 0.0
      %852 = vmatpush1.msra.mxu0 0.0
      %853 = vmatprep.subr.mxu0 0.0
      %854 = vmatpush1.msra.mxu0 0.0
      %855 = vmatprep.subr.mxu0 0.0
      %856 = vmatpush1.msra.mxu0 0.0
      %857 = vmatprep.subr.mxu0 0.0
      %858 = vmatpush1.msra.mxu0 0.0
      %859 = vmatprep.subr.mxu0 0.0
      %860 = vmatpush1.msra.mxu0 0.0
      %861 = vmatprep.mubr.f32.mxu0 0.0
      %862 = vmatmul.mubr.f32.gmra.mrb[0].mxu0 %v795
      %v863 = vpop.f32.mrb[0].mxu0
      %v864 = vadd.f32 %v792, %v863
      %v865 = vpop.f32.mrb[0].mxu0
      %866 = vdwg.mxu0
      %v867 = vxor.u32 %v864, 2147483648
      %v868 = vmul.f32 %v867, 1.442695
      %v869 = vpow.pop %v868
      %v870 = vadd.f32 %v869, 1.0
      %v871 = vrcp.pop %v870
      %v872 = vmul.f32 1.0, %v871
      %v873 = vmul.f32 %v508, %v872
      %875 = vrot.lane.b32.xlu0 %v595, 64
      %v876 = vpop.permute.xlu0 %875
      %879 = vrot.lane.b32.xlu0 %v873, 64
      %v880 = vpop.permute.xlu0 %879
      %v882 = vsel %vm524, %v873, %v876
      %v883 = vsel %vm524, %v880, %v595
      %v886 = vrot.slane %v882, 7
      %v887 = vrot.slane %v883, 7
      %vm890 = vcmask 1040384
      %v891 = vsel %vm890, 0.0, %v886
      %v892 = vsel %vm890, 0.0, %v887
      %v893 = vsel %vm890, %v886, 0.0
      %v894 = vsel %vm890, %v887, 0.0
      %v895 = vld [vmem:[%s9] sm:$0xff]
      %v896 = vld [vmem:[%s9 + $0x8] sm:$0xff]
      %v897 = vld [vmem:[%s9 + $0x10] sm:$0xff]
      %v898 = vld [vmem:[%s9 + $0x18] sm:$0xff]
      %v899 = vld [vmem:[%s9 + $0x20] sm:$0xff]
      %v900 = vld [vmem:[%s9 + $0x28] sm:$0xff]
      %v901 = vld [vmem:[%s9 + $0x30] sm:$0xff]
      %v902 = vld [vmem:[%s9 + $0x38] sm:$0xff]
      %v903 = vld [vmem:[%s9 + $0x40] sm:$0xff]
      %v904 = vld [vmem:[%s9 + $0x48] sm:$0xff]
      %v905 = vld [vmem:[%s9 + $0x50] sm:$0xff]
      %v906 = vld [vmem:[%s9 + $0x58] sm:$0xff]
      %v907 = vld [vmem:[%s9 + $0x60] sm:$0xff]
      %v908 = vld [vmem:[%s9 + $0x68] sm:$0xff]
      %v909 = vld [vmem:[%s9 + $0x70] sm:$0xff]
      %v910 = vld [vmem:[%s9 + $0x78] sm:$0xff]
      %v911 = vld [vmem:[%s9 + $0x80] sm:$0xff]
      %v912 = vld [vmem:[%s9 + $0x88] sm:$0xff]
      %v913 = vld [vmem:[%s9 + $0x90] sm:$0xff]
      %v914 = vld [vmem:[%s9 + $0x98] sm:$0xff]
      %v915 = vld [vmem:[%s9 + $0xa0] sm:$0xff]
      %v916 = vld [vmem:[%s9 + $0xa8] sm:$0xff]
      %v917 = vld [vmem:[%s9 + $0xb0] sm:$0xff]
      %v918 = vld [vmem:[%s9 + $0xb8] sm:$0xff]
      %v919 = vld [vmem:[%s9 + $0xc0] sm:$0xff]
      %v920 = vld [vmem:[%s9 + $0xc8] sm:$0xff]
      %v921 = vld [vmem:[%s9 + $0xd0] sm:$0xff]
      %v922 = vld [vmem:[%s9 + $0xd8] sm:$0xff]
      %v923 = vld [vmem:[%s9 + $0xe0] sm:$0xff]
      %v924 = vld [vmem:[%s9 + $0xe8] sm:$0xff]
      %v925 = vld [vmem:[%s9 + $0xf0] sm:$0xff]
      %v926 = vld [vmem:[%s9 + $0xf8] sm:$0xff]
      %v927 = vld [vmem:[%s9 + $0x100] sm:$0xff]
      %v928 = vld [vmem:[%s9 + $0x108] sm:$0xff]
      %v929 = vld [vmem:[%s9 + $0x110] sm:$0xff]
      %v930 = vld [vmem:[%s9 + $0x118] sm:$0xff]
      %v931 = vld [vmem:[%s9 + $0x120] sm:$0xff]
      %v932 = vld [vmem:[%s9 + $0x128] sm:$0xff]
      %v933 = vld [vmem:[%s9 + $0x130] sm:$0xff]
      %v934 = vld [vmem:[%s9 + $0x138] sm:$0xff]
      %v935 = vld [vmem:[%s9 + $0x140] sm:$0xff]
      %v936 = vld [vmem:[%s9 + $0x148] sm:$0xff]
      %v937 = vld [vmem:[%s9 + $0x150] sm:$0xff]
      %v938 = vld [vmem:[%s9 + $0x158] sm:$0xff]
      %v939 = vld [vmem:[%s9 + $0x160] sm:$0xff]
      %v940 = vld [vmem:[%s9 + $0x168] sm:$0xff]
      %v941 = vld [vmem:[%s9 + $0x170] sm:$0xff]
      %v942 = vld [vmem:[%s9 + $0x178] sm:$0xff]
      %v943 = vld [vmem:[%s9 + $0x180] sm:$0xff]
      %v944 = vld [vmem:[%s9 + $0x188] sm:$0xff]
      %v945 = vld [vmem:[%s9 + $0x190] sm:$0xff]
      %v946 = vld [vmem:[%s9 + $0x198] sm:$0xff]
      %v947 = vld [vmem:[%s9 + $0x1a0] sm:$0xff]
      %v948 = vld [vmem:[%s9 + $0x1a8] sm:$0xff]
      %v949 = vld [vmem:[%s9 + $0x1b0] sm:$0xff]
      %v950 = vld [vmem:[%s9 + $0x1b8] sm:$0xff]
      %v951 = vld [vmem:[%s9 + $0x1c0] sm:$0xff]
      %v952 = vld [vmem:[%s9 + $0x1c8] sm:$0xff]
      %v953 = vld [vmem:[%s9 + $0x1d0] sm:$0xff]
      %v954 = vld [vmem:[%s9 + $0x1d8] sm:$0xff]
      %v955 = vld [vmem:[%s9 + $0x1e0] sm:$0xff]
      %v956 = vld [vmem:[%s9 + $0x1e8] sm:$0xff]
      %v957 = vld [vmem:[%s9 + $0x1f0] sm:$0xff]
      %v958 = vld [vmem:[%s9 + $0x1f8] sm:$0xff]
      %s959 = scalar_lea.vmem %s9, 512
      %v960 = vld [vmem:[%s959] sm:$0xff]
      %v961 = vld [vmem:[%s959 + $0x8] sm:$0xff]
      %v962 = vld [vmem:[%s959 + $0x10] sm:$0xff]
      %v963 = vld [vmem:[%s959 + $0x18] sm:$0xff]
      %v964 = vld [vmem:[%s959 + $0x20] sm:$0xff]
      %v965 = vld [vmem:[%s959 + $0x28] sm:$0xff]
      %v966 = vld [vmem:[%s959 + $0x30] sm:$0xff]
      %v967 = vld [vmem:[%s959 + $0x38] sm:$0xff]
      %v968 = vld [vmem:[%s959 + $0x40] sm:$0xff]
      %v969 = vld [vmem:[%s959 + $0x48] sm:$0xff]
      %v970 = vld [vmem:[%s959 + $0x50] sm:$0xff]
      %v971 = vld [vmem:[%s959 + $0x58] sm:$0xff]
      %v972 = vld [vmem:[%s959 + $0x60] sm:$0xff]
      %v973 = vld [vmem:[%s959 + $0x68] sm:$0xff]
      %v974 = vld [vmem:[%s959 + $0x70] sm:$0xff]
      %v975 = vld [vmem:[%s959 + $0x78] sm:$0xff]
      %v976 = vld [vmem:[%s959 + $0x80] sm:$0xff]
      %v977 = vld [vmem:[%s959 + $0x88] sm:$0xff]
      %v978 = vld [vmem:[%s959 + $0x90] sm:$0xff]
      %v979 = vld [vmem:[%s959 + $0x98] sm:$0xff]
      %v980 = vld [vmem:[%s959 + $0xa0] sm:$0xff]
      %v981 = vld [vmem:[%s959 + $0xa8] sm:$0xff]
      %v982 = vld [vmem:[%s959 + $0xb0] sm:$0xff]
      %v983 = vld [vmem:[%s959 + $0xb8] sm:$0xff]
      %v984 = vld [vmem:[%s959 + $0xc0] sm:$0xff]
      %v985 = vld [vmem:[%s959 + $0xc8] sm:$0xff]
      %v986 = vld [vmem:[%s959 + $0xd0] sm:$0xff]
      %v987 = vld [vmem:[%s959 + $0xd8] sm:$0xff]
      %v988 = vld [vmem:[%s959 + $0xe0] sm:$0xff]
      %v989 = vld [vmem:[%s959 + $0xe8] sm:$0xff]
      %v990 = vld [vmem:[%s959 + $0xf0] sm:$0xff]
      %v991 = vld [vmem:[%s959 + $0xf8] sm:$0xff]
      %v992 = vld [vmem:[%s959 + $0x100] sm:$0xff]
      %v993 = vld [vmem:[%s959 + $0x108] sm:$0xff]
      %v994 = vld [vmem:[%s959 + $0x110] sm:$0xff]
      %v995 = vld [vmem:[%s959 + $0x118] sm:$0xff]
      %v996 = vld [vmem:[%s959 + $0x120] sm:$0xff]
      %v997 = vld [vmem:[%s959 + $0x128] sm:$0xff]
      %v998 = vld [vmem:[%s959 + $0x130] sm:$0xff]
      %v999 = vld [vmem:[%s959 + $0x138] sm:$0xff]
      %v1000 = vld [vmem:[%s959 + $0x140] sm:$0xff]
      %v1001 = vld [vmem:[%s959 + $0x148] sm:$0xff]
      %v1002 = vld [vmem:[%s959 + $0x150] sm:$0xff]
      %v1003 = vld [vmem:[%s959 + $0x158] sm:$0xff]
      %v1004 = vld [vmem:[%s959 + $0x160] sm:$0xff]
      %v1005 = vld [vmem:[%s959 + $0x168] sm:$0xff]
      %v1006 = vld [vmem:[%s959 + $0x170] sm:$0xff]
      %v1007 = vld [vmem:[%s959 + $0x178] sm:$0xff]
      %v1008 = vld [vmem:[%s959 + $0x180] sm:$0xff]
      %v1009 = vld [vmem:[%s959 + $0x188] sm:$0xff]
      %v1010 = vld [vmem:[%s959 + $0x190] sm:$0xff]
      %v1011 = vld [vmem:[%s959 + $0x198] sm:$0xff]
      %v1012 = vld [vmem:[%s959 + $0x1a0] sm:$0xff]
      %v1013 = vld [vmem:[%s959 + $0x1a8] sm:$0xff]
      %v1014 = vld [vmem:[%s959 + $0x1b0] sm:$0xff]
      %v1015 = vld [vmem:[%s959 + $0x1b8] sm:$0xff]
      %v1016 = vld [vmem:[%s959 + $0x1c0] sm:$0xff]
      %v1017 = vld [vmem:[%s959 + $0x1c8] sm:$0xff]
      %v1018 = vld [vmem:[%s959 + $0x1d0] sm:$0xff]
      %v1019 = vld [vmem:[%s959 + $0x1d8] sm:$0xff]
      %v1020 = vld [vmem:[%s959 + $0x1e0] sm:$0xff]
      %v1021 = vld [vmem:[%s959 + $0x1e8] sm:$0xff]
      %v1022 = vld [vmem:[%s959 + $0x1f0] sm:$0xff]
      %v1023 = vld [vmem:[%s959 + $0x1f8] sm:$0xff]
      %v1026 = vrot.slane %v891, 1
      %v1027 = vrot.slane %v892, 1
      %1030 = vmatprep.subr.mxu0 %v961
      %1031 = vmatpush1.msra.mxu0 %v960
      %1032 = vmatprep.subr.mxu0 %v963
      %1033 = vmatpush1.msra.mxu0 %v962
      %1034 = vmatprep.subr.mxu0 %v965
      %1035 = vmatpush1.msra.mxu0 %v964
      %1036 = vmatprep.subr.mxu0 %v967
      %1037 = vmatpush1.msra.mxu0 %v966
      %1038 = vmatprep.subr.mxu0 %v969
      %1039 = vmatpush1.msra.mxu0 %v968
      %1040 = vmatprep.subr.mxu0 %v971
      %1041 = vmatpush1.msra.mxu0 %v970
      %1042 = vmatprep.subr.mxu0 %v973
      %1043 = vmatpush1.msra.mxu0 %v972
      %1044 = vmatprep.subr.mxu0 %v975
      %1045 = vmatpush1.msra.mxu0 %v974
      %1046 = vmatprep.subr.mxu0 %v977
      %1047 = vmatpush1.msra.mxu0 %v976
      %1048 = vmatprep.subr.mxu0 %v979
      %1049 = vmatpush1.msra.mxu0 %v978
      %1050 = vmatprep.subr.mxu0 %v981
      %1051 = vmatpush1.msra.mxu0 %v980
      %1052 = vmatprep.subr.mxu0 %v983
      %1053 = vmatpush1.msra.mxu0 %v982
      %1054 = vmatprep.subr.mxu0 %v985
      %1055 = vmatpush1.msra.mxu0 %v984
      %1056 = vmatprep.subr.mxu0 %v987
      %1057 = vmatpush1.msra.mxu0 %v986
      %1058 = vmatprep.subr.mxu0 %v989
      %1059 = vmatpush1.msra.mxu0 %v988
      %1060 = vmatprep.subr.mxu0 %v991
      %1061 = vmatpush1.msra.mxu0 %v990
      %1062 = vmatprep.subr.mxu0 %v993
      %1063 = vmatpush1.msra.mxu0 %v992
      %1064 = vmatprep.subr.mxu0 %v995
      %1065 = vmatpush1.msra.mxu0 %v994
      %1066 = vmatprep.subr.mxu0 %v997
      %1067 = vmatpush1.msra.mxu0 %v996
      %1068 = vmatprep.subr.mxu0 %v999
      %1069 = vmatpush1.msra.mxu0 %v998
      %1070 = vmatprep.subr.mxu0 %v1001
      %1071 = vmatpush1.msra.mxu0 %v1000
      %1072 = vmatprep.subr.mxu0 %v1003
      %1073 = vmatpush1.msra.mxu0 %v1002
      %1074 = vmatprep.subr.mxu0 %v1005
      %1075 = vmatpush1.msra.mxu0 %v1004
      %1076 = vmatprep.subr.mxu0 %v1007
      %1077 = vmatpush1.msra.mxu0 %v1006
      %1078 = vmatprep.subr.mxu0 %v1009
      %1079 = vmatpush1.msra.mxu0 %v1008
      %1080 = vmatprep.subr.mxu0 %v1011
      %1081 = vmatpush1.msra.mxu0 %v1010
      %1082 = vmatprep.subr.mxu0 %v1013
      %1083 = vmatpush1.msra.mxu0 %v1012
      %1084 = vmatprep.subr.mxu0 %v1015
      %1085 = vmatpush1.msra.mxu0 %v1014
      %1086 = vmatprep.subr.mxu0 %v1017
      %1087 = vmatpush1.msra.mxu0 %v1016
      %1088 = vmatprep.subr.mxu0 %v1019
      %1089 = vmatpush1.msra.mxu0 %v1018
      %1090 = vmatprep.subr.mxu0 %v1021
      %1091 = vmatpush1.msra.mxu0 %v1020
      %1092 = vmatprep.subr.mxu0 %v1023
      %1093 = vmatpush1.msra.mxu0 %v1022
      %1094 = vmatprep.mubr.f32.mxu0 %v1027
      %1095 = vmatmul.mubr.f32.gmra.mrb[0].mxu0 %v1026
      %v1096 = vpop.f32.mrb[0].mxu0
      %v1097 = vadd.f32 0.0, %v1096
      %v1098 = vpop.f32.mrb[0].mxu0
      %v1099 = vadd.f32 0.0, %v1098
      %1100 = vdwg.mxu0
      %1101 = vmatprep.subr.mxu0 %v896
      %1102 = vmatpush1.msra.mxu0 %v895
      %1103 = vmatprep.subr.mxu0 %v898
      %1104 = vmatpush1.msra.mxu0 %v897
      %1105 = vmatprep.subr.mxu0 %v900
      %1106 = vmatpush1.msra.mxu0 %v899
      %1107 = vmatprep.subr.mxu0 %v902
      %1108 = vmatpush1.msra.mxu0 %v901
      %1109 = vmatprep.subr.mxu0 %v904
      %1110 = vmatpush1.msra.mxu0 %v903
      %1111 = vmatprep.subr.mxu0 %v906
      %1112 = vmatpush1.msra.mxu0 %v905
      %1113 = vmatprep.subr.mxu0 %v908
      %1114 = vmatpush1.msra.mxu0 %v907
      %1115 = vmatprep.subr.mxu0 %v910
      %1116 = vmatpush1.msra.mxu0 %v909
      %1117 = vmatprep.subr.mxu0 %v912
      %1118 = vmatpush1.msra.mxu0 %v911
      %1119 = vmatprep.subr.mxu0 %v914
      %1120 = vmatpush1.msra.mxu0 %v913
      %1121 = vmatprep.subr.mxu0 %v916
      %1122 = vmatpush1.msra.mxu0 %v915
      %1123 = vmatprep.subr.mxu0 %v918
      %1124 = vmatpush1.msra.mxu0 %v917
      %1125 = vmatprep.subr.mxu0 %v920
      %1126 = vmatpush1.msra.mxu0 %v919
      %1127 = vmatprep.subr.mxu0 %v922
      %1128 = vmatpush1.msra.mxu0 %v921
      %1129 = vmatprep.subr.mxu0 %v924
      %1130 = vmatpush1.msra.mxu0 %v923
      %1131 = vmatprep.subr.mxu0 %v926
      %1132 = vmatpush1.msra.mxu0 %v925
      %1133 = vmatprep.subr.mxu0 %v928
      %1134 = vmatpush1.msra.mxu0 %v927
      %1135 = vmatprep.subr.mxu0 %v930
      %1136 = vmatpush1.msra.mxu0 %v929
      %1137 = vmatprep.subr.mxu0 %v932
      %1138 = vmatpush1.msra.mxu0 %v931
      %1139 = vmatprep.subr.mxu0 %v934
      %1140 = vmatpush1.msra.mxu0 %v933
      %1141 = vmatprep.subr.mxu0 %v936
      %1142 = vmatpush1.msra.mxu0 %v935
      %1143 = vmatprep.subr.mxu0 %v938
      %1144 = vmatpush1.msra.mxu0 %v937
      %1145 = vmatprep.subr.mxu0 %v940
      %1146 = vmatpush1.msra.mxu0 %v939
      %1147 = vmatprep.subr.mxu0 %v942
      %1148 = vmatpush1.msra.mxu0 %v941
      %1149 = vmatprep.subr.mxu0 %v944
      %1150 = vmatpush1.msra.mxu0 %v943
      %1151 = vmatprep.subr.mxu0 %v946
      %1152 = vmatpush1.msra.mxu0 %v945
      %1153 = vmatprep.subr.mxu0 %v948
      %1154 = vmatpush1.msra.mxu0 %v947
      %1155 = vmatprep.subr.mxu0 %v950
      %1156 = vmatpush1.msra.mxu0 %v949
      %1157 = vmatprep.subr.mxu0 %v952
      %1158 = vmatpush1.msra.mxu0 %v951
      %1159 = vmatprep.subr.mxu0 %v954
      %1160 = vmatpush1.msra.mxu0 %v953
      %1161 = vmatprep.subr.mxu0 %v956
      %1162 = vmatpush1.msra.mxu0 %v955
      %1163 = vmatprep.subr.mxu0 %v958
      %1164 = vmatpush1.msra.mxu0 %v957
      %1165 = vmatprep.mubr.f32.mxu0 %v892
      %1166 = vmatmul.mubr.f32.gmra.mrb[0].mxu0 %v891
      %v1167 = vpop.f32.mrb[0].mxu0
      %v1168 = vadd.f32 %v1097, %v1167
      %v1169 = vpop.f32.mrb[0].mxu0
      %v1170 = vadd.f32 %v1099, %v1169
      %1171 = vdwg.mxu0
      %s1172 = scalar_lea.vmem %s9, 1024
      %v1173 = vld [vmem:[%s1172] sm:$0xff]
      %v1174 = vld [vmem:[%s1172 + $0x8] sm:$0xff]
      %v1175 = vld [vmem:[%s1172 + $0x10] sm:$0xff]
      %v1176 = vld [vmem:[%s1172 + $0x18] sm:$0xff]
      %v1177 = vld [vmem:[%s1172 + $0x20] sm:$0xff]
      %v1178 = vld [vmem:[%s1172 + $0x28] sm:$0xff]
      %v1179 = vld [vmem:[%s1172 + $0x30] sm:$0xff]
      %v1180 = vld [vmem:[%s1172 + $0x38] sm:$0xff]
      %v1181 = vld [vmem:[%s1172 + $0x40] sm:$0xff]
      %v1182 = vld [vmem:[%s1172 + $0x48] sm:$0xff]
      %v1183 = vld [vmem:[%s1172 + $0x50] sm:$0xff]
      %v1184 = vld [vmem:[%s1172 + $0x58] sm:$0xff]
      %v1185 = vld [vmem:[%s1172 + $0x60] sm:$0xff]
      %v1186 = vld [vmem:[%s1172 + $0x68] sm:$0xff]
      %v1187 = vld [vmem:[%s1172 + $0x70] sm:$0xff]
      %v1188 = vld [vmem:[%s1172 + $0x78] sm:$0xff]
      %v1189 = vld [vmem:[%s1172 + $0x80] sm:$0xff]
      %v1190 = vld [vmem:[%s1172 + $0x88] sm:$0xff]
      %v1191 = vld [vmem:[%s1172 + $0x90] sm:$0xff]
      %v1192 = vld [vmem:[%s1172 + $0x98] sm:$0xff]
      %v1193 = vld [vmem:[%s1172 + $0xa0] sm:$0xff]
      %v1194 = vld [vmem:[%s1172 + $0xa8] sm:$0xff]
      %v1195 = vld [vmem:[%s1172 + $0xb0] sm:$0xff]
      %v1196 = vld [vmem:[%s1172 + $0xb8] sm:$0xff]
      %v1197 = vld [vmem:[%s1172 + $0xc0] sm:$0xff]
      %v1198 = vld [vmem:[%s1172 + $0xc8] sm:$0xff]
      %v1199 = vld [vmem:[%s1172 + $0xd0] sm:$0xff]
      %v1200 = vld [vmem:[%s1172 + $0xd8] sm:$0xff]
      %v1201 = vld [vmem:[%s1172 + $0xe0] sm:$0xff]
      %v1202 = vld [vmem:[%s1172 + $0xe8] sm:$0xff]
      %v1203 = vld [vmem:[%s1172 + $0xf0] sm:$0xff]
      %v1204 = vld [vmem:[%s1172 + $0xf8] sm:$0xff]
      %v1205 = vld [vmem:[%s1172 + $0x100] sm:$0xff]
      %v1206 = vld [vmem:[%s1172 + $0x108] sm:$0xff]
      %v1207 = vld [vmem:[%s1172 + $0x110] sm:$0xff]
      %v1208 = vld [vmem:[%s1172 + $0x118] sm:$0xff]
      %v1209 = vld [vmem:[%s1172 + $0x120] sm:$0xff]
      %v1210 = vld [vmem:[%s1172 + $0x128] sm:$0xff]
      %v1211 = vld [vmem:[%s1172 + $0x130] sm:$0xff]
      %v1212 = vld [vmem:[%s1172 + $0x138] sm:$0xff]
      %v1213 = vld [vmem:[%s1172 + $0x140] sm:$0xff]
      %v1214 = vld [vmem:[%s1172 + $0x148] sm:$0xff]
      %v1215 = vld [vmem:[%s1172 + $0x150] sm:$0xff]
      %v1216 = vld [vmem:[%s1172 + $0x158] sm:$0xff]
      %v1217 = vld [vmem:[%s1172 + $0x160] sm:$0xff]
      %v1218 = vld [vmem:[%s1172 + $0x168] sm:$0xff]
      %v1219 = vld [vmem:[%s1172 + $0x170] sm:$0xff]
      %v1220 = vld [vmem:[%s1172 + $0x178] sm:$0xff]
      %v1221 = vld [vmem:[%s1172 + $0x180] sm:$0xff]
      %v1222 = vld [vmem:[%s1172 + $0x188] sm:$0xff]
      %v1223 = vld [vmem:[%s1172 + $0x190] sm:$0xff]
      %v1224 = vld [vmem:[%s1172 + $0x198] sm:$0xff]
      %v1225 = vld [vmem:[%s1172 + $0x1a0] sm:$0xff]
      %v1226 = vld [vmem:[%s1172 + $0x1a8] sm:$0xff]
      %v1227 = vld [vmem:[%s1172 + $0x1b0] sm:$0xff]
      %v1228 = vld [vmem:[%s1172 + $0x1b8] sm:$0xff]
      %v1229 = vld [vmem:[%s1172 + $0x1c0] sm:$0xff]
      %v1230 = vld [vmem:[%s1172 + $0x1c8] sm:$0xff]
      %v1231 = vld [vmem:[%s1172 + $0x1d0] sm:$0xff]
      %v1232 = vld [vmem:[%s1172 + $0x1d8] sm:$0xff]
      %v1233 = vld [vmem:[%s1172 + $0x1e0] sm:$0xff]
      %v1234 = vld [vmem:[%s1172 + $0x1e8] sm:$0xff]
      %v1235 = vld [vmem:[%s1172 + $0x1f0] sm:$0xff]
      %v1236 = vld [vmem:[%s1172 + $0x1f8] sm:$0xff]
      %v1237 = vrot.slane %v891, 2
      %v1238 = vrot.slane %v892, 2
      %1241 = vmatprep.subr.mxu0 %v1174
      %1242 = vmatpush1.msra.mxu0 %v1173
      %1243 = vmatprep.subr.mxu0 %v1176
      %1244 = vmatpush1.msra.mxu0 %v1175
      %1245 = vmatprep.subr.mxu0 %v1178
      %1246 = vmatpush1.msra.mxu0 %v1177
      %1247 = vmatprep.subr.mxu0 %v1180
      %1248 = vmatpush1.msra.mxu0 %v1179
      %1249 = vmatprep.subr.mxu0 %v1182
      %1250 = vmatpush1.msra.mxu0 %v1181
      %1251 = vmatprep.subr.mxu0 %v1184
      %1252 = vmatpush1.msra.mxu0 %v1183
      %1253 = vmatprep.subr.mxu0 %v1186
      %1254 = vmatpush1.msra.mxu0 %v1185
      %1255 = vmatprep.subr.mxu0 %v1188
      %1256 = vmatpush1.msra.mxu0 %v1187
      %1257 = vmatprep.subr.mxu0 %v1190
      %1258 = vmatpush1.msra.mxu0 %v1189
      %1259 = vmatprep.subr.mxu0 %v1192
      %1260 = vmatpush1.msra.mxu0 %v1191
      %1261 = vmatprep.subr.mxu0 %v1194
      %1262 = vmatpush1.msra.mxu0 %v1193
      %1263 = vmatprep.subr.mxu0 %v1196
      %1264 = vmatpush1.msra.mxu0 %v1195
      %1265 = vmatprep.subr.mxu0 %v1198
      %1266 = vmatpush1.msra.mxu0 %v1197
      %1267 = vmatprep.subr.mxu0 %v1200
      %1268 = vmatpush1.msra.mxu0 %v1199
      %1269 = vmatprep.subr.mxu0 %v1202
      %1270 = vmatpush1.msra.mxu0 %v1201
      %1271 = vmatprep.subr.mxu0 %v1204
      %1272 = vmatpush1.msra.mxu0 %v1203
      %1273 = vmatprep.subr.mxu0 %v1206
      %1274 = vmatpush1.msra.mxu0 %v1205
      %1275 = vmatprep.subr.mxu0 %v1208
      %1276 = vmatpush1.msra.mxu0 %v1207
      %1277 = vmatprep.subr.mxu0 %v1210
      %1278 = vmatpush1.msra.mxu0 %v1209
      %1279 = vmatprep.subr.mxu0 %v1212
      %1280 = vmatpush1.msra.mxu0 %v1211
      %1281 = vmatprep.subr.mxu0 %v1214
      %1282 = vmatpush1.msra.mxu0 %v1213
      %1283 = vmatprep.subr.mxu0 %v1216
      %1284 = vmatpush1.msra.mxu0 %v1215
      %1285 = vmatprep.subr.mxu0 %v1218
      %1286 = vmatpush1.msra.mxu0 %v1217
      %1287 = vmatprep.subr.mxu0 %v1220
      %1288 = vmatpush1.msra.mxu0 %v1219
      %1289 = vmatprep.subr.mxu0 %v1222
      %1290 = vmatpush1.msra.mxu0 %v1221
      %1291 = vmatprep.subr.mxu0 %v1224
      %1292 = vmatpush1.msra.mxu0 %v1223
      %1293 = vmatprep.subr.mxu0 %v1226
      %1294 = vmatpush1.msra.mxu0 %v1225
      %1295 = vmatprep.subr.mxu0 %v1228
      %1296 = vmatpush1.msra.mxu0 %v1227
      %1297 = vmatprep.subr.mxu0 %v1230
      %1298 = vmatpush1.msra.mxu0 %v1229
      %1299 = vmatprep.subr.mxu0 %v1232
      %1300 = vmatpush1.msra.mxu0 %v1231
      %1301 = vmatprep.subr.mxu0 %v1234
      %1302 = vmatpush1.msra.mxu0 %v1233
      %1303 = vmatprep.subr.mxu0 %v1236
      %1304 = vmatpush1.msra.mxu0 %v1235
      %1305 = vmatprep.mubr.f32.mxu0 %v1238
      %1306 = vmatmul.mubr.f32.gmra.mrb[0].mxu0 %v1237
      %v1307 = vpop.f32.mrb[0].mxu0
      %v1308 = vadd.f32 0.0, %v1307
      %v1309 = vpop.f32.mrb[0].mxu0
      %v1310 = vadd.f32 0.0, %v1309
      %1311 = vdwg.mxu0
      %v1312 = vadd.f32 %v1168, %v1308
      %v1313 = vadd.f32 %v1170, %v1310
      %s1314 = scalar_lea.vmem %s9, 1536
      %v1315 = vld [vmem:[%s1314] sm:$0xff]
      %v1316 = vld [vmem:[%s1314 + $0x8] sm:$0xff]
      %v1317 = vld [vmem:[%s1314 + $0x10] sm:$0xff]
      %v1318 = vld [vmem:[%s1314 + $0x18] sm:$0xff]
      %v1319 = vld [vmem:[%s1314 + $0x20] sm:$0xff]
      %v1320 = vld [vmem:[%s1314 + $0x28] sm:$0xff]
      %v1321 = vld [vmem:[%s1314 + $0x30] sm:$0xff]
      %v1322 = vld [vmem:[%s1314 + $0x38] sm:$0xff]
      %v1323 = vld [vmem:[%s1314 + $0x40] sm:$0xff]
      %v1324 = vld [vmem:[%s1314 + $0x48] sm:$0xff]
      %v1325 = vld [vmem:[%s1314 + $0x50] sm:$0xff]
      %v1326 = vld [vmem:[%s1314 + $0x58] sm:$0xff]
      %v1327 = vld [vmem:[%s1314 + $0x60] sm:$0xff]
      %v1328 = vld [vmem:[%s1314 + $0x68] sm:$0xff]
      %v1329 = vld [vmem:[%s1314 + $0x70] sm:$0xff]
      %v1330 = vld [vmem:[%s1314 + $0x78] sm:$0xff]
      %v1331 = vld [vmem:[%s1314 + $0x80] sm:$0xff]
      %v1332 = vld [vmem:[%s1314 + $0x88] sm:$0xff]
      %v1333 = vld [vmem:[%s1314 + $0x90] sm:$0xff]
      %v1334 = vld [vmem:[%s1314 + $0x98] sm:$0xff]
      %v1335 = vld [vmem:[%s1314 + $0xa0] sm:$0xff]
      %v1336 = vld [vmem:[%s1314 + $0xa8] sm:$0xff]
      %v1337 = vld [vmem:[%s1314 + $0xb0] sm:$0xff]
      %v1338 = vld [vmem:[%s1314 + $0xb8] sm:$0xff]
      %v1339 = vld [vmem:[%s1314 + $0xc0] sm:$0xff]
      %v1340 = vld [vmem:[%s1314 + $0xc8] sm:$0xff]
      %v1341 = vld [vmem:[%s1314 + $0xd0] sm:$0xff]
      %v1342 = vld [vmem:[%s1314 + $0xd8] sm:$0xff]
      %v1343 = vld [vmem:[%s1314 + $0xe0] sm:$0xff]
      %v1344 = vld [vmem:[%s1314 + $0xe8] sm:$0xff]
      %v1345 = vld [vmem:[%s1314 + $0xf0] sm:$0xff]
      %v1346 = vld [vmem:[%s1314 + $0xf8] sm:$0xff]
      %v1347 = vld [vmem:[%s1314 + $0x100] sm:$0xff]
      %v1348 = vld [vmem:[%s1314 + $0x108] sm:$0xff]
      %v1349 = vld [vmem:[%s1314 + $0x110] sm:$0xff]
      %v1350 = vld [vmem:[%s1314 + $0x118] sm:$0xff]
      %v1351 = vld [vmem:[%s1314 + $0x120] sm:$0xff]
      %v1352 = vld [vmem:[%s1314 + $0x128] sm:$0xff]
      %v1353 = vld [vmem:[%s1314 + $0x130] sm:$0xff]
      %v1354 = vld [vmem:[%s1314 + $0x138] sm:$0xff]
      %v1355 = vld [vmem:[%s1314 + $0x140] sm:$0xff]
      %v1356 = vld [vmem:[%s1314 + $0x148] sm:$0xff]
      %v1357 = vld [vmem:[%s1314 + $0x150] sm:$0xff]
      %v1358 = vld [vmem:[%s1314 + $0x158] sm:$0xff]
      %v1359 = vld [vmem:[%s1314 + $0x160] sm:$0xff]
      %v1360 = vld [vmem:[%s1314 + $0x168] sm:$0xff]
      %v1361 = vld [vmem:[%s1314 + $0x170] sm:$0xff]
      %v1362 = vld [vmem:[%s1314 + $0x178] sm:$0xff]
      %v1363 = vld [vmem:[%s1314 + $0x180] sm:$0xff]
      %v1364 = vld [vmem:[%s1314 + $0x188] sm:$0xff]
      %v1365 = vld [vmem:[%s1314 + $0x190] sm:$0xff]
      %v1366 = vld [vmem:[%s1314 + $0x198] sm:$0xff]
      %v1367 = vld [vmem:[%s1314 + $0x1a0] sm:$0xff]
      %v1368 = vld [vmem:[%s1314 + $0x1a8] sm:$0xff]
      %v1369 = vld [vmem:[%s1314 + $0x1b0] sm:$0xff]
      %v1370 = vld [vmem:[%s1314 + $0x1b8] sm:$0xff]
      %v1371 = vld [vmem:[%s1314 + $0x1c0] sm:$0xff]
      %v1372 = vld [vmem:[%s1314 + $0x1c8] sm:$0xff]
      %v1373 = vld [vmem:[%s1314 + $0x1d0] sm:$0xff]
      %v1374 = vld [vmem:[%s1314 + $0x1d8] sm:$0xff]
      %v1375 = vld [vmem:[%s1314 + $0x1e0] sm:$0xff]
      %v1376 = vld [vmem:[%s1314 + $0x1e8] sm:$0xff]
      %v1377 = vld [vmem:[%s1314 + $0x1f0] sm:$0xff]
      %v1378 = vld [vmem:[%s1314 + $0x1f8] sm:$0xff]
      %v1379 = vrot.slane %v891, 3
      %v1380 = vrot.slane %v892, 3
      %1383 = vmatprep.subr.mxu0 %v1316
      %1384 = vmatpush1.msra.mxu0 %v1315
      %1385 = vmatprep.subr.mxu0 %v1318
      %1386 = vmatpush1.msra.mxu0 %v1317
      %1387 = vmatprep.subr.mxu0 %v1320
      %1388 = vmatpush1.msra.mxu0 %v1319
      %1389 = vmatprep.subr.mxu0 %v1322
      %1390 = vmatpush1.msra.mxu0 %v1321
      %1391 = vmatprep.subr.mxu0 %v1324
      %1392 = vmatpush1.msra.mxu0 %v1323
      %1393 = vmatprep.subr.mxu0 %v1326
      %1394 = vmatpush1.msra.mxu0 %v1325
      %1395 = vmatprep.subr.mxu0 %v1328
      %1396 = vmatpush1.msra.mxu0 %v1327
      %1397 = vmatprep.subr.mxu0 %v1330
      %1398 = vmatpush1.msra.mxu0 %v1329
      %1399 = vmatprep.subr.mxu0 %v1332
      %1400 = vmatpush1.msra.mxu0 %v1331
      %1401 = vmatprep.subr.mxu0 %v1334
      %1402 = vmatpush1.msra.mxu0 %v1333
      %1403 = vmatprep.subr.mxu0 %v1336
      %1404 = vmatpush1.msra.mxu0 %v1335
      %1405 = vmatprep.subr.mxu0 %v1338
      %1406 = vmatpush1.msra.mxu0 %v1337
      %1407 = vmatprep.subr.mxu0 %v1340
      %1408 = vmatpush1.msra.mxu0 %v1339
      %1409 = vmatprep.subr.mxu0 %v1342
      %1410 = vmatpush1.msra.mxu0 %v1341
      %1411 = vmatprep.subr.mxu0 %v1344
      %1412 = vmatpush1.msra.mxu0 %v1343
      %1413 = vmatprep.subr.mxu0 %v1346
      %1414 = vmatpush1.msra.mxu0 %v1345
      %1415 = vmatprep.subr.mxu0 %v1348
      %1416 = vmatpush1.msra.mxu0 %v1347
      %1417 = vmatprep.subr.mxu0 %v1350
      %1418 = vmatpush1.msra.mxu0 %v1349
      %1419 = vmatprep.subr.mxu0 %v1352
      %1420 = vmatpush1.msra.mxu0 %v1351
      %1421 = vmatprep.subr.mxu0 %v1354
      %1422 = vmatpush1.msra.mxu0 %v1353
      %1423 = vmatprep.subr.mxu0 %v1356
      %1424 = vmatpush1.msra.mxu0 %v1355
      %1425 = vmatprep.subr.mxu0 %v1358
      %1426 = vmatpush1.msra.mxu0 %v1357
      %1427 = vmatprep.subr.mxu0 %v1360
      %1428 = vmatpush1.msra.mxu0 %v1359
      %1429 = vmatprep.subr.mxu0 %v1362
      %1430 = vmatpush1.msra.mxu0 %v1361
      %1431 = vmatprep.subr.mxu0 %v1364
      %1432 = vmatpush1.msra.mxu0 %v1363
      %1433 = vmatprep.subr.mxu0 %v1366
      %1434 = vmatpush1.msra.mxu0 %v1365
      %1435 = vmatprep.subr.mxu0 %v1368
      %1436 = vmatpush1.msra.mxu0 %v1367
      %1437 = vmatprep.subr.mxu0 %v1370
      %1438 = vmatpush1.msra.mxu0 %v1369
      %1439 = vmatprep.subr.mxu0 %v1372
      %1440 = vmatpush1.msra.mxu0 %v1371
      %1441 = vmatprep.subr.mxu0 %v1374
      %1442 = vmatpush1.msra.mxu0 %v1373
      %1443 = vmatprep.subr.mxu0 %v1376
      %1444 = vmatpush1.msra.mxu0 %v1375
      %1445 = vmatprep.subr.mxu0 %v1378
      %1446 = vmatpush1.msra.mxu0 %v1377
      %1447 = vmatprep.mubr.f32.mxu0 %v1380
      %1448 = vmatmul.mubr.f32.gmra.mrb[0].mxu0 %v1379
      %v1449 = vpop.f32.mrb[0].mxu0
      %v1450 = vadd.f32 0.0, %v1449
      %v1451 = vpop.f32.mrb[0].mxu0
      %v1452 = vadd.f32 0.0, %v1451
      %1453 = vdwg.mxu0
      %v1454 = vadd.f32 %v1312, %v1450
      %v1455 = vadd.f32 %v1313, %v1452
      %s1456 = scalar_lea.vmem %s9, 2048
      %v1457 = vld [vmem:[%s1456] sm:$0xff]
      %v1458 = vld [vmem:[%s1456 + $0x8] sm:$0xff]
      %v1459 = vld [vmem:[%s1456 + $0x10] sm:$0xff]
      %v1460 = vld [vmem:[%s1456 + $0x18] sm:$0xff]
      %v1461 = vld [vmem:[%s1456 + $0x20] sm:$0xff]
      %v1462 = vld [vmem:[%s1456 + $0x28] sm:$0xff]
      %v1463 = vld [vmem:[%s1456 + $0x30] sm:$0xff]
      %v1464 = vld [vmem:[%s1456 + $0x38] sm:$0xff]
      %v1465 = vld [vmem:[%s1456 + $0x40] sm:$0xff]
      %v1466 = vld [vmem:[%s1456 + $0x48] sm:$0xff]
      %v1467 = vld [vmem:[%s1456 + $0x50] sm:$0xff]
      %v1468 = vld [vmem:[%s1456 + $0x58] sm:$0xff]
      %v1469 = vld [vmem:[%s1456 + $0x60] sm:$0xff]
      %v1470 = vld [vmem:[%s1456 + $0x68] sm:$0xff]
      %v1471 = vld [vmem:[%s1456 + $0x70] sm:$0xff]
      %v1472 = vld [vmem:[%s1456 + $0x78] sm:$0xff]
      %v1473 = vld [vmem:[%s1456 + $0x80] sm:$0xff]
      %v1474 = vld [vmem:[%s1456 + $0x88] sm:$0xff]
      %v1475 = vld [vmem:[%s1456 + $0x90] sm:$0xff]
      %v1476 = vld [vmem:[%s1456 + $0x98] sm:$0xff]
      %v1477 = vld [vmem:[%s1456 + $0xa0] sm:$0xff]
      %v1478 = vld [vmem:[%s1456 + $0xa8] sm:$0xff]
      %v1479 = vld [vmem:[%s1456 + $0xb0] sm:$0xff]
      %v1480 = vld [vmem:[%s1456 + $0xb8] sm:$0xff]
      %v1481 = vld [vmem:[%s1456 + $0xc0] sm:$0xff]
      %v1482 = vld [vmem:[%s1456 + $0xc8] sm:$0xff]
      %v1483 = vld [vmem:[%s1456 + $0xd0] sm:$0xff]
      %v1484 = vld [vmem:[%s1456 + $0xd8] sm:$0xff]
      %v1485 = vld [vmem:[%s1456 + $0xe0] sm:$0xff]
      %v1486 = vld [vmem:[%s1456 + $0xe8] sm:$0xff]
      %v1487 = vld [vmem:[%s1456 + $0xf0] sm:$0xff]
      %v1488 = vld [vmem:[%s1456 + $0xf8] sm:$0xff]
      %v1489 = vld [vmem:[%s1456 + $0x100] sm:$0xff]
      %v1490 = vld [vmem:[%s1456 + $0x108] sm:$0xff]
      %v1491 = vld [vmem:[%s1456 + $0x110] sm:$0xff]
      %v1492 = vld [vmem:[%s1456 + $0x118] sm:$0xff]
      %v1493 = vld [vmem:[%s1456 + $0x120] sm:$0xff]
      %v1494 = vld [vmem:[%s1456 + $0x128] sm:$0xff]
      %v1495 = vld [vmem:[%s1456 + $0x130] sm:$0xff]
      %v1496 = vld [vmem:[%s1456 + $0x138] sm:$0xff]
      %v1497 = vld [vmem:[%s1456 + $0x140] sm:$0xff]
      %v1498 = vld [vmem:[%s1456 + $0x148] sm:$0xff]
      %v1499 = vld [vmem:[%s1456 + $0x150] sm:$0xff]
      %v1500 = vld [vmem:[%s1456 + $0x158] sm:$0xff]
      %v1501 = vld [vmem:[%s1456 + $0x160] sm:$0xff]
      %v1502 = vld [vmem:[%s1456 + $0x168] sm:$0xff]
      %v1503 = vld [vmem:[%s1456 + $0x170] sm:$0xff]
      %v1504 = vld [vmem:[%s1456 + $0x178] sm:$0xff]
      %v1505 = vld [vmem:[%s1456 + $0x180] sm:$0xff]
      %v1506 = vld [vmem:[%s1456 + $0x188] sm:$0xff]
      %v1507 = vld [vmem:[%s1456 + $0x190] sm:$0xff]
      %v1508 = vld [vmem:[%s1456 + $0x198] sm:$0xff]
      %v1509 = vld [vmem:[%s1456 + $0x1a0] sm:$0xff]
      %v1510 = vld [vmem:[%s1456 + $0x1a8] sm:$0xff]
      %v1511 = vld [vmem:[%s1456 + $0x1b0] sm:$0xff]
      %v1512 = vld [vmem:[%s1456 + $0x1b8] sm:$0xff]
      %v1513 = vld [vmem:[%s1456 + $0x1c0] sm:$0xff]
      %v1514 = vld [vmem:[%s1456 + $0x1c8] sm:$0xff]
      %v1515 = vld [vmem:[%s1456 + $0x1d0] sm:$0xff]
      %v1516 = vld [vmem:[%s1456 + $0x1d8] sm:$0xff]
      %v1517 = vld [vmem:[%s1456 + $0x1e0] sm:$0xff]
      %v1518 = vld [vmem:[%s1456 + $0x1e8] sm:$0xff]
      %v1519 = vld [vmem:[%s1456 + $0x1f0] sm:$0xff]
      %v1520 = vld [vmem:[%s1456 + $0x1f8] sm:$0xff]
      %vm1523 = vcmask 1043456
      %v1524 = vrot.slane %v891, 4
      %v1525 = vrot.slane %v893, 4
      %v1526 = vsel %vm1523, %v1524, %v1525
      %v1527 = vrot.slane %v892, 4
      %v1528 = vrot.slane %v894, 4
      %v1529 = vsel %vm1523, %v1527, %v1528
      %1532 = vmatprep.subr.mxu0 %v1458
      %1533 = vmatpush1.msra.mxu0 %v1457
      %1534 = vmatprep.subr.mxu0 %v1460
      %1535 = vmatpush1.msra.mxu0 %v1459
      %1536 = vmatprep.subr.mxu0 %v1462
      %1537 = vmatpush1.msra.mxu0 %v1461
      %1538 = vmatprep.subr.mxu0 %v1464
      %1539 = vmatpush1.msra.mxu0 %v1463
      %1540 = vmatprep.subr.mxu0 %v1466
      %1541 = vmatpush1.msra.mxu0 %v1465
      %1542 = vmatprep.subr.mxu0 %v1468
      %1543 = vmatpush1.msra.mxu0 %v1467
      %1544 = vmatprep.subr.mxu0 %v1470
      %1545 = vmatpush1.msra.mxu0 %v1469
      %1546 = vmatprep.subr.mxu0 %v1472
      %1547 = vmatpush1.msra.mxu0 %v1471
      %1548 = vmatprep.subr.mxu0 %v1474
      %1549 = vmatpush1.msra.mxu0 %v1473
      %1550 = vmatprep.subr.mxu0 %v1476
      %1551 = vmatpush1.msra.mxu0 %v1475
      %1552 = vmatprep.subr.mxu0 %v1478
      %1553 = vmatpush1.msra.mxu0 %v1477
      %1554 = vmatprep.subr.mxu0 %v1480
      %1555 = vmatpush1.msra.mxu0 %v1479
      %1556 = vmatprep.subr.mxu0 %v1482
      %1557 = vmatpush1.msra.mxu0 %v1481
      %1558 = vmatprep.subr.mxu0 %v1484
      %1559 = vmatpush1.msra.mxu0 %v1483
      %1560 = vmatprep.subr.mxu0 %v1486
      %1561 = vmatpush1.msra.mxu0 %v1485
      %1562 = vmatprep.subr.mxu0 %v1488
      %1563 = vmatpush1.msra.mxu0 %v1487
      %1564 = vmatprep.subr.mxu0 %v1490
      %1565 = vmatpush1.msra.mxu0 %v1489
      %1566 = vmatprep.subr.mxu0 %v1492
      %1567 = vmatpush1.msra.mxu0 %v1491
      %1568 = vmatprep.subr.mxu0 %v1494
      %1569 = vmatpush1.msra.mxu0 %v1493
      %1570 = vmatprep.subr.mxu0 %v1496
      %1571 = vmatpush1.msra.mxu0 %v1495
      %1572 = vmatprep.subr.mxu0 %v1498
      %1573 = vmatpush1.msra.mxu0 %v1497
      %1574 = vmatprep.subr.mxu0 %v1500
      %1575 = vmatpush1.msra.mxu0 %v1499
      %1576 = vmatprep.subr.mxu0 %v1502
      %1577 = vmatpush1.msra.mxu0 %v1501
      %1578 = vmatprep.subr.mxu0 %v1504
      %1579 = vmatpush1.msra.mxu0 %v1503
      %1580 = vmatprep.subr.mxu0 %v1506
      %1581 = vmatpush1.msra.mxu0 %v1505
      %1582 = vmatprep.subr.mxu0 %v1508
      %1583 = vmatpush1.msra.mxu0 %v1507
      %1584 = vmatprep.subr.mxu0 %v1510
      %1585 = vmatpush1.msra.mxu0 %v1509
      %1586 = vmatprep.subr.mxu0 %v1512
      %1587 = vmatpush1.msra.mxu0 %v1511
      %1588 = vmatprep.subr.mxu0 %v1514
      %1589 = vmatpush1.msra.mxu0 %v1513
      %1590 = vmatprep.subr.mxu0 %v1516
      %1591 = vmatpush1.msra.mxu0 %v1515
      %1592 = vmatprep.subr.mxu0 %v1518
      %1593 = vmatpush1.msra.mxu0 %v1517
      %1594 = vmatprep.subr.mxu0 %v1520
      %1595 = vmatpush1.msra.mxu0 %v1519
      %1596 = vmatprep.mubr.f32.mxu0 %v1529
      %1597 = vmatmul.mubr.f32.gmra.mrb[0].mxu0 %v1526
      %v1598 = vpop.f32.mrb[0].mxu0
      %v1599 = vadd.f32 0.0, %v1598
      %v1600 = vpop.f32.mrb[0].mxu0
      %v1601 = vadd.f32 0.0, %v1600
      %1602 = vdwg.mxu0
      %v1603 = vadd.f32 %v1454, %v1599
      %v1604 = vadd.f32 %v1455, %v1601
      %s1605 = scalar_lea.vmem %s9, 2560
      %v1606 = vld [vmem:[%s1605] sm:$0xff]
      %v1607 = vld [vmem:[%s1605 + $0x8] sm:$0xff]
      %v1608 = vld [vmem:[%s1605 + $0x10] sm:$0xff]
      %v1609 = vld [vmem:[%s1605 + $0x18] sm:$0xff]
      %v1610 = vld [vmem:[%s1605 + $0x20] sm:$0xff]
      %v1611 = vld [vmem:[%s1605 + $0x28] sm:$0xff]
      %v1612 = vld [vmem:[%s1605 + $0x30] sm:$0xff]
      %v1613 = vld [vmem:[%s1605 + $0x38] sm:$0xff]
      %v1614 = vld [vmem:[%s1605 + $0x40] sm:$0xff]
      %v1615 = vld [vmem:[%s1605 + $0x48] sm:$0xff]
      %v1616 = vld [vmem:[%s1605 + $0x50] sm:$0xff]
      %v1617 = vld [vmem:[%s1605 + $0x58] sm:$0xff]
      %v1618 = vld [vmem:[%s1605 + $0x60] sm:$0xff]
      %v1619 = vld [vmem:[%s1605 + $0x68] sm:$0xff]
      %v1620 = vld [vmem:[%s1605 + $0x70] sm:$0xff]
      %v1621 = vld [vmem:[%s1605 + $0x78] sm:$0xff]
      %v1622 = vld [vmem:[%s1605 + $0x80] sm:$0xff]
      %v1623 = vld [vmem:[%s1605 + $0x88] sm:$0xff]
      %v1624 = vld [vmem:[%s1605 + $0x90] sm:$0xff]
      %v1625 = vld [vmem:[%s1605 + $0x98] sm:$0xff]
      %v1626 = vld [vmem:[%s1605 + $0xa0] sm:$0xff]
      %v1627 = vld [vmem:[%s1605 + $0xa8] sm:$0xff]
      %v1628 = vld [vmem:[%s1605 + $0xb0] sm:$0xff]
      %v1629 = vld [vmem:[%s1605 + $0xb8] sm:$0xff]
      %v1630 = vld [vmem:[%s1605 + $0xc0] sm:$0xff]
      %v1631 = vld [vmem:[%s1605 + $0xc8] sm:$0xff]
      %v1632 = vld [vmem:[%s1605 + $0xd0] sm:$0xff]
      %v1633 = vld [vmem:[%s1605 + $0xd8] sm:$0xff]
      %v1634 = vld [vmem:[%s1605 + $0xe0] sm:$0xff]
      %v1635 = vld [vmem:[%s1605 + $0xe8] sm:$0xff]
      %v1636 = vld [vmem:[%s1605 + $0xf0] sm:$0xff]
      %v1637 = vld [vmem:[%s1605 + $0xf8] sm:$0xff]
      %v1638 = vld [vmem:[%s1605 + $0x100] sm:$0xff]
      %v1639 = vld [vmem:[%s1605 + $0x108] sm:$0xff]
      %v1640 = vld [vmem:[%s1605 + $0x110] sm:$0xff]
      %v1641 = vld [vmem:[%s1605 + $0x118] sm:$0xff]
      %v1642 = vld [vmem:[%s1605 + $0x120] sm:$0xff]
      %v1643 = vld [vmem:[%s1605 + $0x128] sm:$0xff]
      %v1644 = vld [vmem:[%s1605 + $0x130] sm:$0xff]
      %v1645 = vld [vmem:[%s1605 + $0x138] sm:$0xff]
      %v1646 = vld [vmem:[%s1605 + $0x140] sm:$0xff]
      %v1647 = vld [vmem:[%s1605 + $0x148] sm:$0xff]
      %v1648 = vld [vmem:[%s1605 + $0x150] sm:$0xff]
      %v1649 = vld [vmem:[%s1605 + $0x158] sm:$0xff]
      %v1650 = vld [vmem:[%s1605 + $0x160] sm:$0xff]
      %v1651 = vld [vmem:[%s1605 + $0x168] sm:$0xff]
      %v1652 = vld [vmem:[%s1605 + $0x170] sm:$0xff]
      %v1653 = vld [vmem:[%s1605 + $0x178] sm:$0xff]
      %v1654 = vld [vmem:[%s1605 + $0x180] sm:$0xff]
      %v1655 = vld [vmem:[%s1605 + $0x188] sm:$0xff]
      %v1656 = vld [vmem:[%s1605 + $0x190] sm:$0xff]
      %v1657 = vld [vmem:[%s1605 + $0x198] sm:$0xff]
      %v1658 = vld [vmem:[%s1605 + $0x1a0] sm:$0xff]
      %v1659 = vld [vmem:[%s1605 + $0x1a8] sm:$0xff]
      %v1660 = vld [vmem:[%s1605 + $0x1b0] sm:$0xff]
      %v1661 = vld [vmem:[%s1605 + $0x1b8] sm:$0xff]
      %v1662 = vld [vmem:[%s1605 + $0x1c0] sm:$0xff]
      %v1663 = vld [vmem:[%s1605 + $0x1c8] sm:$0xff]
      %v1664 = vld [vmem:[%s1605 + $0x1d0] sm:$0xff]
      %v1665 = vld [vmem:[%s1605 + $0x1d8] sm:$0xff]
      %v1666 = vld [vmem:[%s1605 + $0x1e0] sm:$0xff]
      %v1667 = vld [vmem:[%s1605 + $0x1e8] sm:$0xff]
      %v1668 = vld [vmem:[%s1605 + $0x1f0] sm:$0xff]
      %v1669 = vld [vmem:[%s1605 + $0x1f8] sm:$0xff]
      %vm1670 = vcmask 1042432
      %v1671 = vrot.slane %v891, 5
      %v1672 = vrot.slane %v893, 5
      %v1673 = vsel %vm1670, %v1671, %v1672
      %v1674 = vrot.slane %v892, 5
      %v1675 = vrot.slane %v894, 5
      %v1676 = vsel %vm1670, %v1674, %v1675
      %1679 = vmatprep.subr.mxu0 %v1607
      %1680 = vmatpush1.msra.mxu0 %v1606
      %1681 = vmatprep.subr.mxu0 %v1609
      %1682 = vmatpush1.msra.mxu0 %v1608
      %1683 = vmatprep.subr.mxu0 %v1611
      %1684 = vmatpush1.msra.mxu0 %v1610
      %1685 = vmatprep.subr.mxu0 %v1613
      %1686 = vmatpush1.msra.mxu0 %v1612
      %1687 = vmatprep.subr.mxu0 %v1615
      %1688 = vmatpush1.msra.mxu0 %v1614
      %1689 = vmatprep.subr.mxu0 %v1617
      %1690 = vmatpush1.msra.mxu0 %v1616
      %1691 = vmatprep.subr.mxu0 %v1619
      %1692 = vmatpush1.msra.mxu0 %v1618
      %1693 = vmatprep.subr.mxu0 %v1621
      %1694 = vmatpush1.msra.mxu0 %v1620
      %1695 = vmatprep.subr.mxu0 %v1623
      %1696 = vmatpush1.msra.mxu0 %v1622
      %1697 = vmatprep.subr.mxu0 %v1625
      %1698 = vmatpush1.msra.mxu0 %v1624
      %1699 = vmatprep.subr.mxu0 %v1627
      %1700 = vmatpush1.msra.mxu0 %v1626
      %1701 = vmatprep.subr.mxu0 %v1629
      %1702 = vmatpush1.msra.mxu0 %v1628
      %1703 = vmatprep.subr.mxu0 %v1631
      %1704 = vmatpush1.msra.mxu0 %v1630
      %1705 = vmatprep.subr.mxu0 %v1633
      %1706 = vmatpush1.msra.mxu0 %v1632
      %1707 = vmatprep.subr.mxu0 %v1635
      %1708 = vmatpush1.msra.mxu0 %v1634
      %1709 = vmatprep.subr.mxu0 %v1637
      %1710 = vmatpush1.msra.mxu0 %v1636
      %1711 = vmatprep.subr.mxu0 %v1639
      %1712 = vmatpush1.msra.mxu0 %v1638
      %1713 = vmatprep.subr.mxu0 %v1641
      %1714 = vmatpush1.msra.mxu0 %v1640
      %1715 = vmatprep.subr.mxu0 %v1643
      %1716 = vmatpush1.msra.mxu0 %v1642
      %1717 = vmatprep.subr.mxu0 %v1645
      %1718 = vmatpush1.msra.mxu0 %v1644
      %1719 = vmatprep.subr.mxu0 %v1647
      %1720 = vmatpush1.msra.mxu0 %v1646
      %1721 = vmatprep.subr.mxu0 %v1649
      %1722 = vmatpush1.msra.mxu0 %v1648
      %1723 = vmatprep.subr.mxu0 %v1651
      %1724 = vmatpush1.msra.mxu0 %v1650
      %1725 = vmatprep.subr.mxu0 %v1653
      %1726 = vmatpush1.msra.mxu0 %v1652
      %1727 = vmatprep.subr.mxu0 %v1655
      %1728 = vmatpush1.msra.mxu0 %v1654
      %1729 = vmatprep.subr.mxu0 %v1657
      %1730 = vmatpush1.msra.mxu0 %v1656
      %1731 = vmatprep.subr.mxu0 %v1659
      %1732 = vmatpush1.msra.mxu0 %v1658
      %1733 = vmatprep.subr.mxu0 %v1661
      %1734 = vmatpush1.msra.mxu0 %v1660
      %1735 = vmatprep.subr.mxu0 %v1663
      %1736 = vmatpush1.msra.mxu0 %v1662
      %1737 = vmatprep.subr.mxu0 %v1665
      %1738 = vmatpush1.msra.mxu0 %v1664
      %1739 = vmatprep.subr.mxu0 %v1667
      %1740 = vmatpush1.msra.mxu0 %v1666
      %1741 = vmatprep.subr.mxu0 %v1669
      %1742 = vmatpush1.msra.mxu0 %v1668
      %1743 = vmatprep.mubr.f32.mxu0 %v1676
      %1744 = vmatmul.mubr.f32.gmra.mrb[0].mxu0 %v1673
      %v1745 = vpop.f32.mrb[0].mxu0
      %v1746 = vadd.f32 0.0, %v1745
      %v1747 = vpop.f32.mrb[0].mxu0
      %v1748 = vadd.f32 0.0, %v1747
      %1749 = vdwg.mxu0
      %v1750 = vadd.f32 %v1603, %v1746
      %v1751 = vadd.f32 %v1604, %v1748
      %v1752 = vld [vmem:[%s10] sm:$0x3]
      %v1754 = vlaneseq
      %v1755 = vshrl.u32 %v1754, 7
      %v1756 = vsub.s32 0, %v1755
      %v1757 = vrot.slane %v1752, %v1756
      %v1758 = vlaneseq
      %v1759 = vshrl.u32 %v1758, 7
      %v1760 = vsub.s32 1, %v1759
      %v1761 = vrot.slane %v1752, %v1760
      %v1764 = vmul.f32 %v1750, %v1757
      %v1765 = vmul.f32 %v1751, %v1761
      %v1766 = vld [vmem:[%s11] sm:$0x3]
      %v1768 = vlaneseq
      %v1769 = vshrl.u32 %v1768, 7
      %v1770 = vsub.s32 0, %v1769
      %v1771 = vrot.slane %v1766, %v1770
      %v1772 = vlaneseq
      %v1773 = vshrl.u32 %v1772, 7
      %v1774 = vsub.s32 1, %v1773
      %v1775 = vrot.slane %v1766, %v1774
      %v1778 = vadd.f32 %v1764, %v1771
      %v1779 = vadd.f32 %v1765, %v1775
      %v1780 = vmax.f32 %v1778, 0.0
      %v1781 = vmax.f32 %v1779, 0.0
      %v1784 = vrot.slane %v1780, 7
      %v1785 = vrot.slane %v1781, 7
      %v1788 = vsel %vm890, 0.0, %v1784
      %v1789 = vsel %vm890, 0.0, %v1785
      %vm1790 = vcmask 1045504
      %v1791 = vsel %vm1790, %v1788, 0.0
      %v1792 = vsel %vm1790, %v1789, 0.0
      %v1793 = vld [vmem:[%s12] sm:$0xff]
      %v1794 = vld [vmem:[%s12 + $0x8] sm:$0xff]
      %v1795 = vld [vmem:[%s12 + $0x10] sm:$0xff]
      %v1796 = vld [vmem:[%s12 + $0x18] sm:$0xff]
      %v1797 = vld [vmem:[%s12 + $0x20] sm:$0xff]
      %v1798 = vld [vmem:[%s12 + $0x28] sm:$0xff]
      %v1799 = vld [vmem:[%s12 + $0x30] sm:$0xff]
      %v1800 = vld [vmem:[%s12 + $0x38] sm:$0xff]
      %v1801 = vld [vmem:[%s12 + $0x40] sm:$0xff]
      %v1802 = vld [vmem:[%s12 + $0x48] sm:$0xff]
      %v1803 = vld [vmem:[%s12 + $0x50] sm:$0xff]
      %v1804 = vld [vmem:[%s12 + $0x58] sm:$0xff]
      %v1805 = vld [vmem:[%s12 + $0x60] sm:$0xff]
      %v1806 = vld [vmem:[%s12 + $0x68] sm:$0xff]
      %v1807 = vld [vmem:[%s12 + $0x70] sm:$0xff]
      %v1808 = vld [vmem:[%s12 + $0x78] sm:$0xff]
      %v1809 = vld [vmem:[%s12 + $0x80] sm:$0xff]
      %v1810 = vld [vmem:[%s12 + $0x88] sm:$0xff]
      %v1811 = vld [vmem:[%s12 + $0x90] sm:$0xff]
      %v1812 = vld [vmem:[%s12 + $0x98] sm:$0xff]
      %s1813 = scalar_lea.vmem %s12, 160
      %v1814 = vld [vmem:[%s1813] sm:$0xff]
      %v1815 = vld [vmem:[%s1813 + $0x8] sm:$0xff]
      %v1816 = vld [vmem:[%s1813 + $0x10] sm:$0xff]
      %v1817 = vld [vmem:[%s1813 + $0x18] sm:$0xff]
      %v1818 = vld [vmem:[%s1813 + $0x20] sm:$0xff]
      %v1819 = vld [vmem:[%s1813 + $0x28] sm:$0xff]
      %v1820 = vld [vmem:[%s1813 + $0x30] sm:$0xff]
      %v1821 = vld [vmem:[%s1813 + $0x38] sm:$0xff]
      %v1822 = vld [vmem:[%s1813 + $0x40] sm:$0xff]
      %v1823 = vld [vmem:[%s1813 + $0x48] sm:$0xff]
      %v1824 = vld [vmem:[%s1813 + $0x50] sm:$0xff]
      %v1825 = vld [vmem:[%s1813 + $0x58] sm:$0xff]
      %v1826 = vld [vmem:[%s1813 + $0x60] sm:$0xff]
      %v1827 = vld [vmem:[%s1813 + $0x68] sm:$0xff]
      %v1828 = vld [vmem:[%s1813 + $0x70] sm:$0xff]
      %v1829 = vld [vmem:[%s1813 + $0x78] sm:$0xff]
      %v1830 = vld [vmem:[%s1813 + $0x80] sm:$0xff]
      %v1831 = vld [vmem:[%s1813 + $0x88] sm:$0xff]
      %v1832 = vld [vmem:[%s1813 + $0x90] sm:$0xff]
      %v1833 = vld [vmem:[%s1813 + $0x98] sm:$0xff]
      %v1836 = vrot.slane %v1791, 1
      %v1837 = vrot.slane %v1792, 1
      %vm1839 = vcmask 261120
      %v1840 = vsel %vm1839, %v1837, 0
      %1842 = vmatprep.subr.mxu0 0.0
      %1843 = vmatpush1.msra.mxu0 %v1814
      %1844 = vmatprep.subr.mxu0 0.0
      %1845 = vmatpush1.msra.mxu0 %v1815
      %1846 = vmatprep.subr.mxu0 0.0
      %1847 = vmatpush1.msra.mxu0 %v1816
      %1848 = vmatprep.subr.mxu0 0.0
      %1849 = vmatpush1.msra.mxu0 %v1817
      %1850 = vmatprep.subr.mxu0 0.0
      %1851 = vmatpush1.msra.mxu0 %v1818
      %1852 = vmatprep.subr.mxu0 0.0
      %1853 = vmatpush1.msra.mxu0 %v1819
      %1854 = vmatprep.subr.mxu0 0.0
      %1855 = vmatpush1.msra.mxu0 %v1820
      %1856 = vmatprep.subr.mxu0 0.0
      %1857 = vmatpush1.msra.mxu0 %v1821
      %1858 = vmatprep.subr.mxu0 0.0
      %1859 = vmatpush1.msra.mxu0 %v1822
      %1860 = vmatprep.subr.mxu0 0.0
      %1861 = vmatpush1.msra.mxu0 %v1823
      %1862 = vmatprep.subr.mxu0 0.0
      %1863 = vmatpush1.msra.mxu0 %v1824
      %1864 = vmatprep.subr.mxu0 0.0
      %1865 = vmatpush1.msra.mxu0 %v1825
      %1866 = vmatprep.subr.mxu0 0.0
      %1867 = vmatpush1.msra.mxu0 %v1826
      %1868 = vmatprep.subr.mxu0 0.0
      %1869 = vmatpush1.msra.mxu0 %v1827
      %1870 = vmatprep.subr.mxu0 0.0
      %1871 = vmatpush1.msra.mxu0 %v1828
      %1872 = vmatprep.subr.mxu0 0.0
      %1873 = vmatpush1.msra.mxu0 %v1829
      %1874 = vmatprep.subr.mxu0 0.0
      %1875 = vmatpush1.msra.mxu0 %v1830
      %1876 = vmatprep.subr.mxu0 0.0
      %1877 = vmatpush1.msra.mxu0 %v1831
      %1878 = vmatprep.subr.mxu0 0.0
      %1879 = vmatpush1.msra.mxu0 %v1832
      %1880 = vmatprep.subr.mxu0 0.0
      %1881 = vmatpush1.msra.mxu0 %v1833
      %1882 = vmatprep.subr.mxu0 0.0
      %1883 = vmatpush1.msra.mxu0 0.0
      %1884 = vmatprep.subr.mxu0 0.0
      %1885 = vmatpush1.msra.mxu0 0.0
      %1886 = vmatprep.subr.mxu0 0.0
      %1887 = vmatpush1.msra.mxu0 0.0
      %1888 = vmatprep.subr.mxu0 0.0
      %1889 = vmatpush1.msra.mxu0 0.0
      %1890 = vmatprep.subr.mxu0 0.0
      %1891 = vmatpush1.msra.mxu0 0.0
      %1892 = vmatprep.subr.mxu0 0.0
      %1893 = vmatpush1.msra.mxu0 0.0
      %1894 = vmatprep.subr.mxu0 0.0
      %1895 = vmatpush1.msra.mxu0 0.0
      %1896 = vmatprep.subr.mxu0 0.0
      %1897 = vmatpush1.msra.mxu0 0.0
      %1898 = vmatprep.subr.mxu0 0.0
      %1899 = vmatpush1.msra.mxu0 0.0
      %1900 = vmatprep.subr.mxu0 0.0
      %1901 = vmatpush1.msra.mxu0 0.0
      %1902 = vmatprep.subr.mxu0 0.0
      %1903 = vmatpush1.msra.mxu0 0.0
      %1904 = vmatprep.subr.mxu0 0.0
      %1905 = vmatpush1.msra.mxu0 0.0
      %1906 = vmatprep.mubr.f32.mxu0 %v1840
      %1907 = vmatmul.mubr.f32.gmra.mrb[0].mxu0 %v1836
      %v1908 = vpop.f32.mrb[0].mxu0
      %v1909 = vadd.f32 0.0, %v1908
      %v1910 = vpop.f32.mrb[0].mxu0
      %1911 = vdwg.mxu0
      %v1912 = vsel %vm1839, %v1792, 0
      %1914 = vmatprep.subr.mxu0 0.0
      %1915 = vmatpush1.msra.mxu0 %v1793
      %1916 = vmatprep.subr.mxu0 0.0
      %1917 = vmatpush1.msra.mxu0 %v1794
      %1918 = vmatprep.subr.mxu0 0.0
      %1919 = vmatpush1.msra.mxu0 %v1795
      %1920 = vmatprep.subr.mxu0 0.0
      %1921 = vmatpush1.msra.mxu0 %v1796
      %1922 = vmatprep.subr.mxu0 0.0
      %1923 = vmatpush1.msra.mxu0 %v1797
      %1924 = vmatprep.subr.mxu0 0.0
      %1925 = vmatpush1.msra.mxu0 %v1798
      %1926 = vmatprep.subr.mxu0 0.0
      %1927 = vmatpush1.msra.mxu0 %v1799
      %1928 = vmatprep.subr.mxu0 0.0
      %1929 = vmatpush1.msra.mxu0 %v1800
      %1930 = vmatprep.subr.mxu0 0.0
      %1931 = vmatpush1.msra.mxu0 %v1801
      %1932 = vmatprep.subr.mxu0 0.0
      %1933 = vmatpush1.msra.mxu0 %v1802
      %1934 = vmatprep.subr.mxu0 0.0
      %1935 = vmatpush1.msra.mxu0 %v1803
      %1936 = vmatprep.subr.mxu0 0.0
      %1937 = vmatpush1.msra.mxu0 %v1804
      %1938 = vmatprep.subr.mxu0 0.0
      %1939 = vmatpush1.msra.mxu0 %v1805
      %1940 = vmatprep.subr.mxu0 0.0
      %1941 = vmatpush1.msra.mxu0 %v1806
      %1942 = vmatprep.subr.mxu0 0.0
      %1943 = vmatpush1.msra.mxu0 %v1807
      %1944 = vmatprep.subr.mxu0 0.0
      %1945 = vmatpush1.msra.mxu0 %v1808
      %1946 = vmatprep.subr.mxu0 0.0
      %1947 = vmatpush1.msra.mxu0 %v1809
      %1948 = vmatprep.subr.mxu0 0.0
      %1949 = vmatpush1.msra.mxu0 %v1810
      %1950 = vmatprep.subr.mxu0 0.0
      %1951 = vmatpush1.msra.mxu0 %v1811
      %1952 = vmatprep.subr.mxu0 0.0
      %1953 = vmatpush1.msra.mxu0 %v1812
      %1954 = vmatprep.subr.mxu0 0.0
      %1955 = vmatpush1.msra.mxu0 0.0
      %1956 = vmatprep.subr.mxu0 0.0
      %1957 = vmatpush1.msra.mxu0 0.0
      %1958 = vmatprep.subr.mxu0 0.0
      %1959 = vmatpush1.msra.mxu0 0.0
      %1960 = vmatprep.subr.mxu0 0.0
      %1961 = vmatpush1.msra.mxu0 0.0
      %1962 = vmatprep.subr.mxu0 0.0
      %1963 = vmatpush1.msra.mxu0 0.0
      %1964 = vmatprep.subr.mxu0 0.0
      %1965 = vmatpush1.msra.mxu0 0.0
      %1966 = vmatprep.subr.mxu0 0.0
      %1967 = vmatpush1.msra.mxu0 0.0
      %1968 = vmatprep.subr.mxu0 0.0
      %1969 = vmatpush1.msra.mxu0 0.0
      %1970 = vmatprep.subr.mxu0 0.0
      %1971 = vmatpush1.msra.mxu0 0.0
      %1972 = vmatprep.subr.mxu0 0.0
      %1973 = vmatpush1.msra.mxu0 0.0
      %1974 = vmatprep.subr.mxu0 0.0
      %1975 = vmatpush1.msra.mxu0 0.0
      %1976 = vmatprep.subr.mxu0 0.0
      %1977 = vmatpush1.msra.mxu0 0.0
      %1978 = vmatprep.mubr.f32.mxu0 %v1912
      %1979 = vmatmul.mubr.f32.gmra.mrb[0].mxu0 %v1791
      %v1980 = vpop.f32.mrb[0].mxu0
      %v1981 = vadd.f32 %v1909, %v1980
      %v1982 = vpop.f32.mrb[0].mxu0
      %1983 = vdwg.mxu0
      %s1984 = scalar_lea.vmem %s12, 320
      %v1985 = vld [vmem:[%s1984] sm:$0xff]
      %v1986 = vld [vmem:[%s1984 + $0x8] sm:$0xff]
      %v1987 = vld [vmem:[%s1984 + $0x10] sm:$0xff]
      %v1988 = vld [vmem:[%s1984 + $0x18] sm:$0xff]
      %v1989 = vld [vmem:[%s1984 + $0x20] sm:$0xff]
      %v1990 = vld [vmem:[%s1984 + $0x28] sm:$0xff]
      %v1991 = vld [vmem:[%s1984 + $0x30] sm:$0xff]
      %v1992 = vld [vmem:[%s1984 + $0x38] sm:$0xff]
      %v1993 = vld [vmem:[%s1984 + $0x40] sm:$0xff]
      %v1994 = vld [vmem:[%s1984 + $0x48] sm:$0xff]
      %v1995 = vld [vmem:[%s1984 + $0x50] sm:$0xff]
      %v1996 = vld [vmem:[%s1984 + $0x58] sm:$0xff]
      %v1997 = vld [vmem:[%s1984 + $0x60] sm:$0xff]
      %v1998 = vld [vmem:[%s1984 + $0x68] sm:$0xff]
      %v1999 = vld [vmem:[%s1984 + $0x70] sm:$0xff]
      %v2000 = vld [vmem:[%s1984 + $0x78] sm:$0xff]
      %v2001 = vld [vmem:[%s1984 + $0x80] sm:$0xff]
      %v2002 = vld [vmem:[%s1984 + $0x88] sm:$0xff]
      %v2003 = vld [vmem:[%s1984 + $0x90] sm:$0xff]
      %v2004 = vld [vmem:[%s1984 + $0x98] sm:$0xff]
      %v2005 = vrot.slane %v1791, 2
      %v2006 = vrot.slane %v1792, 2
      %v2008 = vsel %vm1839, %v2006, 0
      %2010 = vmatprep.subr.mxu0 0.0
      %2011 = vmatpush1.msra.mxu0 %v1985
      %2012 = vmatprep.subr.mxu0 0.0
      %2013 = vmatpush1.msra.mxu0 %v1986
      %2014 = vmatprep.subr.mxu0 0.0
      %2015 = vmatpush1.msra.mxu0 %v1987
      %2016 = vmatprep.subr.mxu0 0.0
      %2017 = vmatpush1.msra.mxu0 %v1988
      %2018 = vmatprep.subr.mxu0 0.0
      %2019 = vmatpush1.msra.mxu0 %v1989
      %2020 = vmatprep.subr.mxu0 0.0
      %2021 = vmatpush1.msra.mxu0 %v1990
      %2022 = vmatprep.subr.mxu0 0.0
      %2023 = vmatpush1.msra.mxu0 %v1991
      %2024 = vmatprep.subr.mxu0 0.0
      %2025 = vmatpush1.msra.mxu0 %v1992
      %2026 = vmatprep.subr.mxu0 0.0
      %2027 = vmatpush1.msra.mxu0 %v1993
      %2028 = vmatprep.subr.mxu0 0.0
      %2029 = vmatpush1.msra.mxu0 %v1994
      %2030 = vmatprep.subr.mxu0 0.0
      %2031 = vmatpush1.msra.mxu0 %v1995
      %2032 = vmatprep.subr.mxu0 0.0
      %2033 = vmatpush1.msra.mxu0 %v1996
      %2034 = vmatprep.subr.mxu0 0.0
      %2035 = vmatpush1.msra.mxu0 %v1997
      %2036 = vmatprep.subr.mxu0 0.0
      %2037 = vmatpush1.msra.mxu0 %v1998
      %2038 = vmatprep.subr.mxu0 0.0
      %2039 = vmatpush1.msra.mxu0 %v1999
      %2040 = vmatprep.subr.mxu0 0.0
      %2041 = vmatpush1.msra.mxu0 %v2000
      %2042 = vmatprep.subr.mxu0 0.0
      %2043 = vmatpush1.msra.mxu0 %v2001
      %2044 = vmatprep.subr.mxu0 0.0
      %2045 = vmatpush1.msra.mxu0 %v2002
      %2046 = vmatprep.subr.mxu0 0.0
      %2047 = vmatpush1.msra.mxu0 %v2003
      %2048 = vmatprep.subr.mxu0 0.0
      %2049 = vmatpush1.msra.mxu0 %v2004
      %2050 = vmatprep.subr.mxu0 0.0
      %2051 = vmatpush1.msra.mxu0 0.0
      %2052 = vmatprep.subr.mxu0 0.0
      %2053 = vmatpush1.msra.mxu0 0.0
      %2054 = vmatprep.subr.mxu0 0.0
      %2055 = vmatpush1.msra.mxu0 0.0
      %2056 = vmatprep.subr.mxu0 0.0
      %2057 = vmatpush1.msra.mxu0 0.0
      %2058 = vmatprep.subr.mxu0 0.0
      %2059 = vmatpush1.msra.mxu0 0.0
      %2060 = vmatprep.subr.mxu0 0.0
      %2061 = vmatpush1.msra.mxu0 0.0
      %2062 = vmatprep.subr.mxu0 0.0
      %2063 = vmatpush1.msra.mxu0 0.0
      %2064 = vmatprep.subr.mxu0 0.0
      %2065 = vmatpush1.msra.mxu0 0.0
      %2066 = vmatprep.subr.mxu0 0.0
      %2067 = vmatpush1.msra.mxu0 0.0
      %2068 = vmatprep.subr.mxu0 0.0
      %2069 = vmatpush1.msra.mxu0 0.0
      %2070 = vmatprep.subr.mxu0 0.0
      %2071 = vmatpush1.msra.mxu0 0.0
      %2072 = vmatprep.subr.mxu0 0.0
      %2073 = vmatpush1.msra.mxu0 0.0
      %2074 = vmatprep.mubr.f32.mxu0 %v2008
      %2075 = vmatmul.mubr.f32.gmra.mrb[0].mxu0 %v2005
      %v2076 = vpop.f32.mrb[0].mxu0
      %v2077 = vadd.f32 0.0, %v2076
      %v2078 = vpop.f32.mrb[0].mxu0
      %2079 = vdwg.mxu0
      %v2080 = vadd.f32 %v1981, %v2077
      %s2081 = scalar_lea.vmem %s12, 480
      %v2082 = vld [vmem:[%s2081] sm:$0xff]
      %v2083 = vld [vmem:[%s2081 + $0x8] sm:$0xff]
      %v2084 = vld [vmem:[%s2081 + $0x10] sm:$0xff]
      %v2085 = vld [vmem:[%s2081 + $0x18] sm:$0xff]
      %v2086 = vld [vmem:[%s2081 + $0x20] sm:$0xff]
      %v2087 = vld [vmem:[%s2081 + $0x28] sm:$0xff]
      %v2088 = vld [vmem:[%s2081 + $0x30] sm:$0xff]
      %v2089 = vld [vmem:[%s2081 + $0x38] sm:$0xff]
      %v2090 = vld [vmem:[%s2081 + $0x40] sm:$0xff]
      %v2091 = vld [vmem:[%s2081 + $0x48] sm:$0xff]
      %v2092 = vld [vmem:[%s2081 + $0x50] sm:$0xff]
      %v2093 = vld [vmem:[%s2081 + $0x58] sm:$0xff]
      %v2094 = vld [vmem:[%s2081 + $0x60] sm:$0xff]
      %v2095 = vld [vmem:[%s2081 + $0x68] sm:$0xff]
      %v2096 = vld [vmem:[%s2081 + $0x70] sm:$0xff]
      %v2097 = vld [vmem:[%s2081 + $0x78] sm:$0xff]
      %v2098 = vld [vmem:[%s2081 + $0x80] sm:$0xff]
      %v2099 = vld [vmem:[%s2081 + $0x88] sm:$0xff]
      %v2100 = vld [vmem:[%s2081 + $0x90] sm:$0xff]
      %v2101 = vld [vmem:[%s2081 + $0x98] sm:$0xff]
      %v2102 = vrot.slane %v1791, 3
      %v2103 = vrot.slane %v1792, 3
      %v2105 = vsel %vm1839, %v2103, 0
      %2107 = vmatprep.subr.mxu0 0.0
      %2108 = vmatpush1.msra.mxu0 %v2082
      %2109 = vmatprep.subr.mxu0 0.0
      %2110 = vmatpush1.msra.mxu0 %v2083
      %2111 = vmatprep.subr.mxu0 0.0
      %2112 = vmatpush1.msra.mxu0 %v2084
      %2113 = vmatprep.subr.mxu0 0.0
      %2114 = vmatpush1.msra.mxu0 %v2085
      %2115 = vmatprep.subr.mxu0 0.0
      %2116 = vmatpush1.msra.mxu0 %v2086
      %2117 = vmatprep.subr.mxu0 0.0
      %2118 = vmatpush1.msra.mxu0 %v2087
      %2119 = vmatprep.subr.mxu0 0.0
      %2120 = vmatpush1.msra.mxu0 %v2088
      %2121 = vmatprep.subr.mxu0 0.0
      %2122 = vmatpush1.msra.mxu0 %v2089
      %2123 = vmatprep.subr.mxu0 0.0
      %2124 = vmatpush1.msra.mxu0 %v2090
      %2125 = vmatprep.subr.mxu0 0.0
      %2126 = vmatpush1.msra.mxu0 %v2091
      %2127 = vmatprep.subr.mxu0 0.0
      %2128 = vmatpush1.msra.mxu0 %v2092
      %2129 = vmatprep.subr.mxu0 0.0
      %2130 = vmatpush1.msra.mxu0 %v2093
      %2131 = vmatprep.subr.mxu0 0.0
      %2132 = vmatpush1.msra.mxu0 %v2094
      %2133 = vmatprep.subr.mxu0 0.0
      %2134 = vmatpush1.msra.mxu0 %v2095
      %2135 = vmatprep.subr.mxu0 0.0
      %2136 = vmatpush1.msra.mxu0 %v2096
      %2137 = vmatprep.subr.mxu0 0.0
      %2138 = vmatpush1.msra.mxu0 %v2097
      %2139 = vmatprep.subr.mxu0 0.0
      %2140 = vmatpush1.msra.mxu0 %v2098
      %2141 = vmatprep.subr.mxu0 0.0
      %2142 = vmatpush1.msra.mxu0 %v2099
      %2143 = vmatprep.subr.mxu0 0.0
      %2144 = vmatpush1.msra.mxu0 %v2100
      %2145 = vmatprep.subr.mxu0 0.0
      %2146 = vmatpush1.msra.mxu0 %v2101
      %2147 = vmatprep.subr.mxu0 0.0
      %2148 = vmatpush1.msra.mxu0 0.0
      %2149 = vmatprep.subr.mxu0 0.0
      %2150 = vmatpush1.msra.mxu0 0.0
      %2151 = vmatprep.subr.mxu0 0.0
      %2152 = vmatpush1.msra.mxu0 0.0
      %2153 = vmatprep.subr.mxu0 0.0
      %2154 = vmatpush1.msra.mxu0 0.0
      %2155 = vmatprep.subr.mxu0 0.0
      %2156 = vmatpush1.msra.mxu0 0.0
      %2157 = vmatprep.subr.mxu0 0.0
      %2158 = vmatpush1.msra.mxu0 0.0
      %2159 = vmatprep.subr.mxu0 0.0
      %2160 = vmatpush1.msra.mxu0 0.0
      %2161 = vmatprep.subr.mxu0 0.0
      %2162 = vmatpush1.msra.mxu0 0.0
      %2163 = vmatprep.subr.mxu0 0.0
      %2164 = vmatpush1.msra.mxu0 0.0
      %2165 = vmatprep.subr.mxu0 0.0
      %2166 = vmatpush1.msra.mxu0 0.0
      %2167 = vmatprep.subr.mxu0 0.0
      %2168 = vmatpush1.msra.mxu0 0.0
      %2169 = vmatprep.subr.mxu0 0.0
      %2170 = vmatpush1.msra.mxu0 0.0
      %2171 = vmatprep.mubr.f32.mxu0 %v2105
      %2172 = vmatmul.mubr.f32.gmra.mrb[0].mxu0 %v2102
      %v2173 = vpop.f32.mrb[0].mxu0
      %v2174 = vadd.f32 0.0, %v2173
      %v2175 = vpop.f32.mrb[0].mxu0
      %2176 = vdwg.mxu0
      %v2177 = vadd.f32 %v2080, %v2174
      %s2178 = scalar_lea.vmem %s12, 640
      %v2179 = vld [vmem:[%s2178] sm:$0xff]
      %v2180 = vld [vmem:[%s2178 + $0x8] sm:$0xff]
      %v2181 = vld [vmem:[%s2178 + $0x10] sm:$0xff]
      %v2182 = vld [vmem:[%s2178 + $0x18] sm:$0xff]
      %v2183 = vld [vmem:[%s2178 + $0x20] sm:$0xff]
      %v2184 = vld [vmem:[%s2178 + $0x28] sm:$0xff]
      %v2185 = vld [vmem:[%s2178 + $0x30] sm:$0xff]
      %v2186 = vld [vmem:[%s2178 + $0x38] sm:$0xff]
      %v2187 = vld [vmem:[%s2178 + $0x40] sm:$0xff]
      %v2188 = vld [vmem:[%s2178 + $0x48] sm:$0xff]
      %v2189 = vld [vmem:[%s2178 + $0x50] sm:$0xff]
      %v2190 = vld [vmem:[%s2178 + $0x58] sm:$0xff]
      %v2191 = vld [vmem:[%s2178 + $0x60] sm:$0xff]
      %v2192 = vld [vmem:[%s2178 + $0x68] sm:$0xff]
      %v2193 = vld [vmem:[%s2178 + $0x70] sm:$0xff]
      %v2194 = vld [vmem:[%s2178 + $0x78] sm:$0xff]
      %v2195 = vld [vmem:[%s2178 + $0x80] sm:$0xff]
      %v2196 = vld [vmem:[%s2178 + $0x88] sm:$0xff]
      %v2197 = vld [vmem:[%s2178 + $0x90] sm:$0xff]
      %v2198 = vld [vmem:[%s2178 + $0x98] sm:$0xff]
      %v2199 = vrot.slane %v1791, 4
      %v2200 = vrot.slane %v1792, 4
      %v2202 = vsel %vm1839, %v2200, 0
      %2204 = vmatprep.subr.mxu0 0.0
      %2205 = vmatpush1.msra.mxu0 %v2179
      %2206 = vmatprep.subr.mxu0 0.0
      %2207 = vmatpush1.msra.mxu0 %v2180
      %2208 = vmatprep.subr.mxu0 0.0
      %2209 = vmatpush1.msra.mxu0 %v2181
      %2210 = vmatprep.subr.mxu0 0.0
      %2211 = vmatpush1.msra.mxu0 %v2182
      %2212 = vmatprep.subr.mxu0 0.0
      %2213 = vmatpush1.msra.mxu0 %v2183
      %2214 = vmatprep.subr.mxu0 0.0
      %2215 = vmatpush1.msra.mxu0 %v2184
      %2216 = vmatprep.subr.mxu0 0.0
      %2217 = vmatpush1.msra.mxu0 %v2185
      %2218 = vmatprep.subr.mxu0 0.0
      %2219 = vmatpush1.msra.mxu0 %v2186
      %2220 = vmatprep.subr.mxu0 0.0
      %2221 = vmatpush1.msra.mxu0 %v2187
      %2222 = vmatprep.subr.mxu0 0.0
      %2223 = vmatpush1.msra.mxu0 %v2188
      %2224 = vmatprep.subr.mxu0 0.0
      %2225 = vmatpush1.msra.mxu0 %v2189
      %2226 = vmatprep.subr.mxu0 0.0
      %2227 = vmatpush1.msra.mxu0 %v2190
      %2228 = vmatprep.subr.mxu0 0.0
      %2229 = vmatpush1.msra.mxu0 %v2191
      %2230 = vmatprep.subr.mxu0 0.0
      %2231 = vmatpush1.msra.mxu0 %v2192
      %2232 = vmatprep.subr.mxu0 0.0
      %2233 = vmatpush1.msra.mxu0 %v2193
      %2234 = vmatprep.subr.mxu0 0.0
      %2235 = vmatpush1.msra.mxu0 %v2194
      %2236 = vmatprep.subr.mxu0 0.0
      %2237 = vmatpush1.msra.mxu0 %v2195
      %2238 = vmatprep.subr.mxu0 0.0
      %2239 = vmatpush1.msra.mxu0 %v2196
      %2240 = vmatprep.subr.mxu0 0.0
      %2241 = vmatpush1.msra.mxu0 %v2197
      %2242 = vmatprep.subr.mxu0 0.0
      %2243 = vmatpush1.msra.mxu0 %v2198
      %2244 = vmatprep.subr.mxu0 0.0
      %2245 = vmatpush1.msra.mxu0 0.0
      %2246 = vmatprep.subr.mxu0 0.0
      %2247 = vmatpush1.msra.mxu0 0.0
      %2248 = vmatprep.subr.mxu0 0.0
      %2249 = vmatpush1.msra.mxu0 0.0
      %2250 = vmatprep.subr.mxu0 0.0
      %2251 = vmatpush1.msra.mxu0 0.0
      %2252 = vmatprep.subr.mxu0 0.0
      %2253 = vmatpush1.msra.mxu0 0.0
      %2254 = vmatprep.subr.mxu0 0.0
      %2255 = vmatpush1.msra.mxu0 0.0
      %2256 = vmatprep.subr.mxu0 0.0
      %2257 = vmatpush1.msra.mxu0 0.0
      %2258 = vmatprep.subr.mxu0 0.0
      %2259 = vmatpush1.msra.mxu0 0.0
      %2260 = vmatprep.subr.mxu0 0.0
      %2261 = vmatpush1.msra.mxu0 0.0
      %2262 = vmatprep.subr.mxu0 0.0
      %2263 = vmatpush1.msra.mxu0 0.0
      %2264 = vmatprep.subr.mxu0 0.0
      %2265 = vmatpush1.msra.mxu0 0.0
      %2266 = vmatprep.subr.mxu0 0.0
      %2267 = vmatpush1.msra.mxu0 0.0
      %2268 = vmatprep.mubr.f32.mxu0 %v2202
      %2269 = vmatmul.mubr.f32.gmra.mrb[0].mxu0 %v2199
      %v2270 = vpop.f32.mrb[0].mxu0
      %v2271 = vadd.f32 0.0, %v2270
      %v2272 = vpop.f32.mrb[0].mxu0
      %2273 = vdwg.mxu0
      %v2274 = vadd.f32 %v2177, %v2271
      %s2275 = scalar_lea.vmem %s12, 800
      %v2276 = vld [vmem:[%s2275] sm:$0xff]
      %v2277 = vld [vmem:[%s2275 + $0x8] sm:$0xff]
      %v2278 = vld [vmem:[%s2275 + $0x10] sm:$0xff]
      %v2279 = vld [vmem:[%s2275 + $0x18] sm:$0xff]
      %v2280 = vld [vmem:[%s2275 + $0x20] sm:$0xff]
      %v2281 = vld [vmem:[%s2275 + $0x28] sm:$0xff]
      %v2282 = vld [vmem:[%s2275 + $0x30] sm:$0xff]
      %v2283 = vld [vmem:[%s2275 + $0x38] sm:$0xff]
      %v2284 = vld [vmem:[%s2275 + $0x40] sm:$0xff]
      %v2285 = vld [vmem:[%s2275 + $0x48] sm:$0xff]
      %v2286 = vld [vmem:[%s2275 + $0x50] sm:$0xff]
      %v2287 = vld [vmem:[%s2275 + $0x58] sm:$0xff]
      %v2288 = vld [vmem:[%s2275 + $0x60] sm:$0xff]
      %v2289 = vld [vmem:[%s2275 + $0x68] sm:$0xff]
      %v2290 = vld [vmem:[%s2275 + $0x70] sm:$0xff]
      %v2291 = vld [vmem:[%s2275 + $0x78] sm:$0xff]
      %v2292 = vld [vmem:[%s2275 + $0x80] sm:$0xff]
      %v2293 = vld [vmem:[%s2275 + $0x88] sm:$0xff]
      %v2294 = vld [vmem:[%s2275 + $0x90] sm:$0xff]
      %v2295 = vld [vmem:[%s2275 + $0x98] sm:$0xff]
      %v2296 = vrot.slane %v1791, 5
      %v2297 = vrot.slane %v1792, 5
      %v2299 = vsel %vm1839, %v2297, 0
      %2301 = vmatprep.subr.mxu0 0.0
      %2302 = vmatpush1.msra.mxu0 %v2276
      %2303 = vmatprep.subr.mxu0 0.0
      %2304 = vmatpush1.msra.mxu0 %v2277
      %2305 = vmatprep.subr.mxu0 0.0
      %2306 = vmatpush1.msra.mxu0 %v2278
      %2307 = vmatprep.subr.mxu0 0.0
      %2308 = vmatpush1.msra.mxu0 %v2279
      %2309 = vmatprep.subr.mxu0 0.0
      %2310 = vmatpush1.msra.mxu0 %v2280
      %2311 = vmatprep.subr.mxu0 0.0
      %2312 = vmatpush1.msra.mxu0 %v2281
      %2313 = vmatprep.subr.mxu0 0.0
      %2314 = vmatpush1.msra.mxu0 %v2282
      %2315 = vmatprep.subr.mxu0 0.0
      %2316 = vmatpush1.msra.mxu0 %v2283
      %2317 = vmatprep.subr.mxu0 0.0
      %2318 = vmatpush1.msra.mxu0 %v2284
      %2319 = vmatprep.subr.mxu0 0.0
      %2320 = vmatpush1.msra.mxu0 %v2285
      %2321 = vmatprep.subr.mxu0 0.0
      %2322 = vmatpush1.msra.mxu0 %v2286
      %2323 = vmatprep.subr.mxu0 0.0
      %2324 = vmatpush1.msra.mxu0 %v2287
      %2325 = vmatprep.subr.mxu0 0.0
      %2326 = vmatpush1.msra.mxu0 %v2288
      %2327 = vmatprep.subr.mxu0 0.0
      %2328 = vmatpush1.msra.mxu0 %v2289
      %2329 = vmatprep.subr.mxu0 0.0
      %2330 = vmatpush1.msra.mxu0 %v2290
      %2331 = vmatprep.subr.mxu0 0.0
      %2332 = vmatpush1.msra.mxu0 %v2291
      %2333 = vmatprep.subr.mxu0 0.0
      %2334 = vmatpush1.msra.mxu0 %v2292
      %2335 = vmatprep.subr.mxu0 0.0
      %2336 = vmatpush1.msra.mxu0 %v2293
      %2337 = vmatprep.subr.mxu0 0.0
      %2338 = vmatpush1.msra.mxu0 %v2294
      %2339 = vmatprep.subr.mxu0 0.0
      %2340 = vmatpush1.msra.mxu0 %v2295
      %2341 = vmatprep.subr.mxu0 0.0
      %2342 = vmatpush1.msra.mxu0 0.0
      %2343 = vmatprep.subr.mxu0 0.0
      %2344 = vmatpush1.msra.mxu0 0.0
      %2345 = vmatprep.subr.mxu0 0.0
      %2346 = vmatpush1.msra.mxu0 0.0
      %2347 = vmatprep.subr.mxu0 0.0
      %2348 = vmatpush1.msra.mxu0 0.0
      %2349 = vmatprep.subr.mxu0 0.0
      %2350 = vmatpush1.msra.mxu0 0.0
      %2351 = vmatprep.subr.mxu0 0.0
      %2352 = vmatpush1.msra.mxu0 0.0
      %2353 = vmatprep.subr.mxu0 0.0
      %2354 = vmatpush1.msra.mxu0 0.0
      %2355 = vmatprep.subr.mxu0 0.0
      %2356 = vmatpush1.msra.mxu0 0.0
      %2357 = vmatprep.subr.mxu0 0.0
      %2358 = vmatpush1.msra.mxu0 0.0
      %2359 = vmatprep.subr.mxu0 0.0
      %2360 = vmatpush1.msra.mxu0 0.0
      %2361 = vmatprep.subr.mxu0 0.0
      %2362 = vmatpush1.msra.mxu0 0.0
      %2363 = vmatprep.subr.mxu0 0.0
      %2364 = vmatpush1.msra.mxu0 0.0
      %2365 = vmatprep.mubr.f32.mxu0 %v2299
      %2366 = vmatmul.mubr.f32.gmra.mrb[0].mxu0 %v2296
      %v2367 = vpop.f32.mrb[0].mxu0
      %v2368 = vadd.f32 0.0, %v2367
      %v2369 = vpop.f32.mrb[0].mxu0
      %2370 = vdwg.mxu0
      %v2371 = vadd.f32 %v2274, %v2368
      %v2372 = vld [vmem:[%s13] sm:$0x1]
      %v2374 = vlaneseq
      %v2375 = vshrl.u32 %v2374, 7
      %v2376 = vsub.s32 0, %v2375
      %v2377 = vrot.slane %v2372, %v2376
      %v2379 = vmul.f32 %v2371, %v2377
      %v2380 = vld [vmem:[%s14] sm:$0x1]
      %v2382 = vlaneseq
      %v2383 = vshrl.u32 %v2382, 7
      %v2384 = vsub.s32 0, %v2383
      %v2385 = vrot.slane %v2380, %v2384
      %v2387 = vadd.f32 %v2379, %v2385
      %v2388 = vmax.f32 %v2387, 0.0
      %vm2389 = vcmask 517120
      %2390 = vst.msk [vmem:[%s506] sm:$0x3] %vm2389, %v2388
      %p2391 = scmp.lt.s32.totalorder %s26, 1
      %s2392 = scalar_select %p2391, %s26, 1
      %s2393 = smul.addr %s2392, 2
      %s2394 = scalar_lea.vmem %s15, %s2393
      // Predicated region
      $region81: #{up_forward_pallas.1} parent=79 // pred_check
        %p2395 = pneg %p369
      $region82: #{up_forward_pallas.1} parent=79 // pred_check_branch
        %2397 = sbr.rel (%p2395) target = $region84
      $region83: #{up_forward_pallas.1} parent=79 // pred_region
        _
      $region84: #{up_forward_pallas.1} parent=79 // pred_fallthru
        _
    $region80: #{up_forward_pallas.1} parent=5 // pred_fallthru
      _
    %p2398 = scmp.le.s32.totalorder 2, %s21
    // Predicated region
    $region85: #{up_forward_pallas.1} parent=5 // pred_check
      %p2399 = pneg %p2398
    $region86: #{up_forward_pallas.1} parent=5 // pred_check_branch
      %2401 = sbr.rel (%p2399) target = $region88
    $region87: #{up_forward_pallas.1} parent=5 // pred_region
      %s2402 = ssub.s32 %s21, 2
      // Predicated region
      $region89: #{up_forward_pallas.1} parent=87 // pred_check
        %p2403 = pneg %p375
      $region90: #{up_forward_pallas.1} parent=87 // pred_check_branch
        %2405 = sbr.rel (%p2403) target = $region92
      $region91: #{up_forward_pallas.1} parent=87 // pred_region
        %p2406 = scmp.lt.s32.totalorder %s27, 1
        %s2407 = scalar_select %p2406, %s27, 1
        %s2408 = smul.addr %s2407, 2
        %s2409 = scalar_lea.vmem %s15, %s2408
      $region92: #{up_forward_pallas.1} parent=87 // pred_fallthru
        _
    $region88: #{up_forward_pallas.1} parent=5 // pred_fallthru
      _
  $region6: #{up_forward_pallas.1} parent=0 // loop_footer
    %s25 = sadd.s32 1, %s21
  $region7: #{up_forward_pallas.1} parent=0 // loop_footer_branch
    %20 = sbr.rel target = $region3
  $region8: #{up_forward_pallas.1} parent=0 // loop_exit
    _

</llo_original>
